<compile_context>
chip_gen: v7x
topology: tpu7x:2x2x1
jax: 0.10.0
libtpu: 0.0.40
codegen_flags: <defaults>
</compile_context>

<pallas_src>
import functools

import jax
import jax.numpy as jnp
from jax.experimental import pallas as pl
from jax.experimental.pallas import tpu as pltpu

CP = 128  # lane-dense channel padding (one full 128-lane vreg / MXU column block)


def _leaky(x, neg_slope):
    return jnp.where(x > 0, x, neg_slope * x)


# -----------------------------------------------------------------------------
# Pallas kernels
# -----------------------------------------------------------------------------
def _gemm_bias_act_kernel(x_ref, w_ref, b_ref, o_ref, *, neg_slope, apply_act):
    # x_ref: (tm, Kc) bf16   w_ref: (Kc, CP) bf16   b_ref: (1, CP) f32
    acc = jnp.dot(x_ref[...], w_ref[...], preferred_element_type=jnp.float32)
    acc = acc + b_ref[...]
    if apply_act:
        acc = _leaky(acc, neg_slope)                         # LeakyReLU(0.1)
    o_ref[...] = acc.astype(o_ref.dtype)


def _gemm_bias_act_res_kernel(x_ref, w_ref, b_ref, r_ref, o_ref, *,
                              neg_slope, apply_act):
    acc = jnp.dot(x_ref[...], w_ref[...], preferred_element_type=jnp.float32)
    acc = acc + b_ref[...]
    if apply_act:
        acc = _leaky(acc, neg_slope)
    acc = acc + r_ref[...].astype(jnp.float32)               # fused darknet shortcut
    o_ref[...] = acc.astype(o_ref.dtype)


def _gemm_dual_out_kernel(x_ref, w1_ref, b1_ref, w2_ref, b2_ref,
                          o1_ref, o2_ref, *, neg_slope, act2):
    # stage 1: conv GEMM + bias + LeakyReLU  (output kept, e.g. for a route/residual)
    acc1 = jnp.dot(x_ref[...], w1_ref[...], preferred_element_type=jnp.float32)
    acc1 = _leaky(acc1 + b1_ref[...], neg_slope)
    h = acc1.astype(jnp.bfloat16)
    o1_ref[...] = h.astype(o1_ref.dtype)
    # stage 2: fused trailing 1x1 conv on stage-1 output (weights resident in VMEM)
    acc2 = jnp.dot(h, w2_ref[...], preferred_element_type=jnp.float32) + b2_ref[...]
    if act2:
        acc2 = _leaky(acc2, neg_slope)
    o2_ref[...] = acc2.astype(o2_ref.dtype)


def _gemm_chain_kernel(x_ref, w1_ref, b1_ref, w2_ref, b2_ref, o_ref, *,
                       neg_slope, act2):
    # same as dual-out but only the stage-2 result leaves the kernel
    acc1 = jnp.dot(x_ref[...], w1_ref[...], preferred_element_type=jnp.float32)
    h = _leaky(acc1 + b1_ref[...], neg_slope).astype(jnp.bfloat16)
    acc2 = jnp.dot(h, w2_ref[...], preferred_element_type=jnp.float32) + b2_ref[...]
    if act2:
        acc2 = _leaky(acc2, neg_slope)
    o_ref[...] = acc2.astype(o_ref.dtype)


# -----------------------------------------------------------------------------
# im2col ('same' padding), batch collapsed into M, strided output subsampling
# -----------------------------------------------------------------------------
def _im2col(x, K, stride=1):
    """x: (B,H,W,C) -> patches (B*Ho*Wo, K*K*C), Ho, Wo.

    For stride>1 only the kept output positions' patch rows are built, which is
    numerically identical to a stride-1 conv followed by output subsampling.
    """
    B, H, W, C = x.shape
    pad = (K - 1) // 2
    xp = jnp.pad(x, ((0, 0), (pad, pad), (pad, pad), (0, 0)))
    cols = []
    for kh in range(K):
        for kw in range(K):
            t = xp[:, kh:kh + H, kw:kw + W, :]
            if stride > 1:
                t = t[:, ::stride, ::stride, :]
            cols.append(t)
    patches = jnp.concatenate(cols, axis=-1)                 # (B, Ho, Wo, K*K*C)
    Ho, Wo = patches.shape[1], patches.shape[2]
    return patches.reshape(B * Ho * Wo, K * K * C), Ho, Wo


def _pick_tm(M):
    # >=256 rows per grid step when possible; "parallel" M axis feeds both v7x TCs.
    return 256 if M % 256 == 0 else M


# -----------------------------------------------------------------------------
# Conv wrappers (GEMM in Pallas)
# -----------------------------------------------------------------------------
def conv2d_fused(x, wb, *, K, stride=1, apply_act=True, neg_slope=0.1,
                 residual=None, out_dtype=jnp.bfloat16):
    """Conv2d ('same') + folded-BN bias + LeakyReLU (+ fused residual)."""
    w_flat, b = wb
    B = x.shape[0]
    patches, Ho, Wo = _im2col(x, K, stride)                  # (M, Kc) bf16
    M, Kc = patches.shape
    assert Kc == w_flat.shape[0] and Kc % CP == 0 and M % 8 == 0

    tm = _pick_tm(M)
    grid = (M // tm,)

    in_specs = [
        pl.BlockSpec((tm, Kc), lambda i: (i, 0)),
        pl.BlockSpec((Kc, CP), lambda i: (0, 0)),
        pl.BlockSpec((1, CP), lambda i: (0, 0)),
    ]
    args = [patches, w_flat, b]
    if residual is not None:
        args.append(residual.reshape(M, CP))
        in_specs.append(pl.BlockSpec((tm, CP), lambda i: (i, 0)))
        kernel = functools.partial(_gemm_bias_act_res_kernel,
                                   neg_slope=neg_slope, apply_act=apply_act)
    else:
        kernel = functools.partial(_gemm_bias_act_kernel,
                                   neg_slope=neg_slope, apply_act=apply_act)

    out = pl.pallas_call(
        kernel,
        out_shape=jax.ShapeDtypeStruct((M, CP), out_dtype),
        grid_spec=pltpu.PrefetchScalarGridSpec(
            num_scalar_prefetch=0,
            grid=grid,
            in_specs=in_specs,
            out_specs=pl.BlockSpec((tm, CP), lambda i: (i, 0)),
        ),
        compiler_params=pltpu.CompilerParams(
            dimension_semantics=("parallel",)),
    )(*args)
    return out.reshape(B, Ho, Wo, CP)


def conv2d_then_1x1(x, wb1, wb2, *, K, stride=1, act2=True, neg_slope=0.1,
                    keep_first=True, out1_dtype=jnp.bfloat16,
                    out2_dtype=jnp.bfloat16):
    """Fused [KxK conv + BN bias + LeakyReLU] -> [1x1 conv (+ LeakyReLU)].

    One pallas_call, two MXU GEMMs; the intermediate activation never leaves
    VMEM unless keep_first=True (then it is also written out, e.g. as a route
    / residual source).
    """
    w1, b1 = wb1
    w2, b2 = wb2
    B = x.shape[0]
    patches, Ho, Wo = _im2col(x, K, stride)                  # (M, Kc) bf16
    M, Kc = patches.shape
    assert Kc == w1.shape[0] and w2.shape == (CP, CP) and M % 8 == 0

    tm = _pick_tm(M)
    grid = (M // tm,)

    in_specs = [
        pl.BlockSpec((tm, Kc), lambda i: (i, 0)),
        pl.BlockSpec((Kc, CP), lambda i: (0, 0)),
        pl.BlockSpec((1, CP), lambda i: (0, 0)),
        pl.BlockSpec((CP, CP), lambda i: (0, 0)),
        pl.BlockSpec((1, CP), lambda i: (0, 0)),
    ]

    if keep_first:
        kernel = functools.partial(_gemm_dual_out_kernel,
                                   neg_slope=neg_slope, act2=act2)
        out_shape = (jax.ShapeDtypeStruct((M, CP), out1_dtype),
                     jax.ShapeDtypeStruct((M, CP), out2_dtype))
        out_specs = (pl.BlockSpec((tm, CP), lambda i: (i, 0)),
                     pl.BlockSpec((tm, CP), lambda i: (i, 0)))
    else:
        kernel = functools.partial(_gemm_chain_kernel,
                                   neg_slope=neg_slope, act2=act2)
        out_shape = jax.ShapeDtypeStruct((M, CP), out2_dtype)
        out_specs = pl.BlockSpec((tm, CP), lambda i: (i, 0))

    out = pl.pallas_call(
        kernel,
        out_shape=out_shape,
        grid_spec=pltpu.PrefetchScalarGridSpec(
            num_scalar_prefetch=0,
            grid=grid,
            in_specs=in_specs,
            out_specs=out_specs,
        ),
        compiler_params=pltpu.CompilerParams(
            dimension_semantics=("parallel",)),
    )(patches, w1, b1, w2, b2)

    if keep_first:
        y1, y2 = out
        return y1.reshape(B, Ho, Wo, CP), y2.reshape(B, Ho, Wo, CP)
    return out.reshape(B, Ho, Wo, CP)


# -----------------------------------------------------------------------------
# Deterministic parameters (BatchNorm folded, channel-padded, bf16 weights)
# -----------------------------------------------------------------------------
def _init_conv_bn(key, k, cin, cout, eps=1e-5):
    k1, k2, k3 = jax.random.split(key, 3)
    w = jax.random.normal(k1, (k, k, cin, cout), jnp.float32) / jnp.sqrt(k * k * cin)
    gamma = 1.0 + 0.1 * jax.random.normal(k2, (cout,), jnp.float32)
    beta = 0.1 * jax.random.normal(k3, (cout,), jnp.float32)
    mean = jnp.zeros((cout,), jnp.float32)
    var = jnp.ones((cout,), jnp.float32)
    scale = gamma / jnp.sqrt(var + eps)
    return w * scale, beta - mean * scale


def _init_conv_plain(key, k, cin, cout):
    w = jax.random.normal(key, (k, k, cin, cout), jnp.float32) / jnp.sqrt(k * k * cin)
    b = jnp.zeros((cout,), jnp.float32)
    return w, b


def init_yolov3_params(key, num_classes=10, num_channels=3):
    no = 3 * (5 + num_classes)   # 3 anchors per scale
    ks = jax.random.split(key, 11)
    raw = {
        "c1":  _init_conv_bn(ks[0], 3, num_channels, 8),
        "c2":  _init_conv_bn(ks[1], 3, 8, 16),          # stride-2 downsample
        "r1a": _init_conv_bn(ks[2], 1, 16, 8),
        "r1b": _init_conv_bn(ks[3], 3, 8, 16),
        "c3":  _init_conv_bn(ks[4], 3, 16, 32),         # stride-2 downsample
        "r2a": _init_conv_bn(ks[5], 1, 32, 16),
        "r2b": _init_conv_bn(ks[6], 3, 16, 32),
        "h1":  _init_conv_bn(ks[7], 1, 32, 16),
        "det1": _init_conv_plain(ks[8], 1, 16, no),
        "h2":  _init_conv_bn(ks[9], 3, 16 + 16, 16),    # after route concat
        "det2": _init_conv_plain(ks[10], 1, 16, no),
    }
    params = {}
    for name, (w, b) in raw.items():
        K, _, cin, cout = w.shape
        if name == "h2":
            # Input is the concat of two CP-padded 16-channel routes:
            # real 'up' channels live at [0:16], real 'f8' channels at [CP:CP+16].
            wp = jnp.zeros((K, K, 2 * CP, CP), jnp.float32)
            wp = wp.at[:, :, 0:16, :cout].set(w[:, :, :16, :])
            wp = wp.at[:, :, CP:CP + 16, :cout].set(w[:, :, 16:, :])
            w_flat = wp.reshape(K * K * 2 * CP, CP)
        else:
            wp = jnp.zeros((K, K, CP, CP), jnp.float32)
            wp = wp.at[:, :, :cin, :cout].set(w)
            w_flat = wp.reshape(K * K * CP, CP)
        b_pad = jnp.zeros((1, CP), jnp.float32).at[0, :b.shape[0]].set(b)
        params[name] = (w_flat.astype(jnp.bfloat16), b_pad)
    return params


# -----------------------------------------------------------------------------
# Forward pass (two detection scales, YOLOv3-style)
# -----------------------------------------------------------------------------
def yolov3_forward(params, x_nchw, num_classes=10):
    x = jnp.transpose(x_nchw, (0, 2, 3, 1))                  # NCHW -> NHWC
    B, H, W, Cin = x.shape
    # Zero-pad channels to CP (lane-dense) and cast to bf16 for the MXU.
    x = jnp.pad(x, ((0, 0), (0, 0), (0, 0), (0, CP - Cin))).astype(jnp.bfloat16)

    c1 = conv2d_fused(x, params["c1"], K=3)                  # (B,16,16,CP) [8 real]

    # stride-2 downsample fused with the residual block's 1x1 bottleneck
    c2, r1 = conv2d_then_1x1(c1, params["c2"], params["r1a"],
                             K=3, stride=2, act2=True)       # (B,8,8,CP) each
    f8 = conv2d_fused(r1, params["r1b"], K=3, residual=c2)   # 3x3 + fused shortcut

    c3, r2 = conv2d_then_1x1(f8, params["c3"], params["r2a"],
                             K=3, stride=2, act2=True)       # (B,4,4,CP) each
    f4 = conv2d_fused(r2, params["r2b"], K=3, residual=c3)

    # scale 1 (coarse, 4x4): 1x1 head conv fused with 1x1 detection conv
    h1, d1 = conv2d_then_1x1(f4, params["h1"], params["det1"], K=1, act2=False,
                             out2_dtype=jnp.float32)         # d1: (B,4,4,CP) [45 real]

    # scale 2 (fine, 8x8): nearest-neighbor upsample + route concat
    up = jnp.repeat(jnp.repeat(h1, 2, axis=1), 2, axis=2)    # (B,8,8,CP)
    cat = jnp.concatenate([up, f8], axis=-1)                 # (B,8,8,2*CP)
    d2 = conv2d_then_1x1(cat, params["h2"], params["det2"], K=3, act2=False,
                         keep_first=False,
                         out2_dtype=jnp.float32)             # (B,8,8,CP) [45 real]

    na, no = 3, 5 + num_classes

    def to_pred(d):  # (B,H,W,CP) -> (B,na,H,W,no), ultralytics raw layout
        Bp, Hp, Wp, _ = d.shape
        d = d[..., :na * no]
        return jnp.transpose(d.reshape(Bp, Hp, Wp, na, no), (0, 3, 1, 2, 4))

    return to_pred(d1), to_pred(d2)


if __name__ == "__main__":
    key = jax.random.PRNGKey(0)
    kp, kx = jax.random.split(key)

    num_classes, num_channels = 10, 3
    params = init_yolov3_params(kp, num_classes=num_classes,
                                num_channels=num_channels)

    # small input consistent with the module: batch=2, channels=3, 16x16 spatial
    x = jax.random.normal(kx, (2, num_channels, 16, 16), jnp.float32)

    fwd = jax.jit(functools.partial(yolov3_forward, num_classes=num_classes))
    out = fwd(params, x)
    out = jax.block_until_ready(out)

    assert out[0].shape == (2, 3, 4, 4, 5 + num_classes)
    assert out[1].shape == (2, 3, 8, 8, 5 + num_classes)
    assert all(bool(jnp.isfinite(o).all()) for o in out)
    print("KERNEL_OK")
</pallas_src>

<mosaic_0001>
module attributes {stable_mosaic.version = 11 : i64} {
  func.func @_gemm_bias_act_kernel(%arg0: i32, %arg1: memref<256x1152xbf16, #tpu.memory_space<vmem>>, %arg2: memref<1152x128xbf16, #tpu.memory_space<vmem>>, %arg3: memref<1x128xf32, #tpu.memory_space<vmem>>, %arg4: memref<256x128xbf16, #tpu.memory_space<vmem>>) attributes {dimension_semantics = [#tpu.dimension_semantics<parallel>], iteration_bounds = array<i64: 2>, scalar_prefetch = 0 : i64, scratch_operands = 0 : i64, tpu.core_type = #tpu.core_type<tc>, window_params = [{transform_indices = @transform_0, window_bounds = array<i64: 256, 1152>}, {pipeline_mode = #tpu.pipeline_mode<synchronous>, transform_indices = @transform_1, window_bounds = array<i64: 1152, 128>}, {pipeline_mode = #tpu.pipeline_mode<synchronous>, transform_indices = @transform_2, window_bounds = array<i64: 1, 128>}, {transform_indices = @transform_3, window_bounds = array<i64: 256, 128>}]} {
    %c0 = arith.constant 0 : index
    %c0_0 = arith.constant 0 : index
    %0 = vector.load %arg1[%c0, %c0_0] : memref<256x1152xbf16, #tpu.memory_space<vmem>>, vector<256x1152xbf16>
    %c0_1 = arith.constant 0 : index
    %c0_2 = arith.constant 0 : index
    %1 = vector.load %arg2[%c0_1, %c0_2] : memref<1152x128xbf16, #tpu.memory_space<vmem>>, vector<1152x128xbf16>
    %cst = arith.constant dense<0.000000e+00> : vector<256x128xf32>
    %2 = tpu.matmul %0, %1, %cst {dimension_numbers = #tpu.dot_dimension_numbers<[1], [0], [0], [1], [0, 0, 1, 1], [], []>} : vector<256x1152xbf16>, vector<1152x128xbf16>, vector<256x128xf32> -> vector<256x128xf32>
    %c0_3 = arith.constant 0 : index
    %c0_4 = arith.constant 0 : index
    %3 = vector.load %arg3[%c0_3, %c0_4] : memref<1x128xf32, #tpu.memory_space<vmem>>, vector<1x128xf32>
    %4 = vector.broadcast %3 : vector<1x128xf32> to vector<256x128xf32>
    %5 = arith.addf %2, %4 : vector<256x128xf32>
    %cst_5 = arith.constant 0.000000e+00 : f32
    %6 = vector.broadcast %cst_5 : f32 to vector<256x128xf32>
    %7 = arith.cmpf ogt, %5, %6 : vector<256x128xf32>
    %cst_6 = arith.constant 1.000000e-01 : f32
    %8 = vector.broadcast %cst_6 : f32 to vector<256x128xf32>
    %9 = arith.mulf %8, %5 : vector<256x128xf32>
    %10 = arith.select %7, %5, %9 : vector<256x128xi1>, vector<256x128xf32>
    %11 = arith.truncf %10 : vector<256x128xf32> to vector<256x128xbf16>
    %c0_7 = arith.constant 0 : index
    %c0_8 = arith.constant 0 : index
    %12 = vector.load %arg4[%c0_7, %c0_8] : memref<256x128xbf16, #tpu.memory_space<vmem>>, vector<256x128xbf16>
    tpu.vector_store %arg4[%c0_7, %c0_8], %11 {strides = array<i32>} : memref<256x128xbf16, #tpu.memory_space<vmem>>, vector<256x128xbf16>,
    return
  }
  func.func @transform_0(%arg0: i32) -> (i32, i32) {
    %c0_i32 = arith.constant 0 : i32
    %c0_i32_0 = arith.constant 0 : i32
    return %arg0, %c0_i32 : i32, i32
  }
  func.func @transform_1(%arg0: i32) -> (i32, i32) {
    %c0_i32 = arith.constant 0 : i32
    %c0_i32_0 = arith.constant 0 : i32
    %c0_i32_1 = arith.constant 0 : i32
    return %c0_i32, %c0_i32_0 : i32, i32
  }
  func.func @transform_2(%arg0: i32) -> (i32, i32) {
    %c0_i32 = arith.constant 0 : i32
    %c0_i32_0 = arith.constant 0 : i32
    %c0_i32_1 = arith.constant 0 : i32
    return %c0_i32, %c0_i32_0 : i32, i32
  }
  func.func @transform_3(%arg0: i32) -> (i32, i32) {
    %c0_i32 = arith.constant 0 : i32
    %c0_i32_0 = arith.constant 0 : i32
    return %arg0, %c0_i32 : i32, i32
  }
}

module attributes {stable_mosaic.version = 11 : i64} {
  func.func @_gemm_dual_out_kernel(%arg0: i32, %arg1: memref<128x1152xbf16, #tpu.memory_space<vmem>>, %arg2: memref<1152x128xbf16, #tpu.memory_space<vmem>>, %arg3: memref<1x128xf32, #tpu.memory_space<vmem>>, %arg4: memref<128x128xbf16, #tpu.memory_space<vmem>>, %arg5: memref<1x128xf32, #tpu.memory_space<vmem>>, %arg6: memref<128x128xbf16, #tpu.memory_space<vmem>>, %arg7: memref<128x128xbf16, #tpu.memory_space<vmem>>) attributes {dimension_semantics = [#tpu.dimension_semantics<parallel>], iteration_bounds = array<i64: 1>, scalar_prefetch = 0 : i64, scratch_operands = 0 : i64, tpu.core_type = #tpu.core_type<tc>, window_params = [{transform_indices = @transform_0, window_bounds = array<i64: 128, 1152>}, {pipeline_mode = #tpu.pipeline_mode<synchronous>, transform_indices = @transform_1, window_bounds = array<i64: 1152, 128>}, {pipeline_mode = #tpu.pipeline_mode<synchronous>, transform_indices = @transform_2, window_bounds = array<i64: 1, 128>}, {pipeline_mode = #tpu.pipeline_mode<synchronous>, transform_indices = @transform_3, window_bounds = array<i64: 128, 128>}, {pipeline_mode = #tpu.pipeline_mode<synchronous>, transform_indices = @transform_4, window_bounds = array<i64: 1, 128>}, {transform_indices = @transform_5, window_bounds = array<i64: 128, 128>}, {transform_indices = @transform_6, window_bounds = array<i64: 128, 128>}]} {
    %c0 = arith.constant 0 : index
    %c0_0 = arith.constant 0 : index
    %0 = vector.load %arg1[%c0, %c0_0] : memref<128x1152xbf16, #tpu.memory_space<vmem>>, vector<128x1152xbf16>
    %c0_1 = arith.constant 0 : index
    %c0_2 = arith.constant 0 : index
    %1 = vector.load %arg2[%c0_1, %c0_2] : memref<1152x128xbf16, #tpu.memory_space<vmem>>, vector<1152x128xbf16>
    %cst = arith.constant dense<0.000000e+00> : vector<128x128xf32>
    %2 = tpu.matmul %0, %1, %cst {dimension_numbers = #tpu.dot_dimension_numbers<[1], [0], [0], [1], [0, 0, 1, 1], [], []>} : vector<128x1152xbf16>, vector<1152x128xbf16>, vector<128x128xf32> -> vector<128x128xf32>
    %c0_3 = arith.constant 0 : index
    %c0_4 = arith.constant 0 : index
    %3 = vector.load %arg3[%c0_3, %c0_4] : memref<1x128xf32, #tpu.memory_space<vmem>>, vector<1x128xf32>
    %4 = vector.broadcast %3 : vector<1x128xf32> to vector<128x128xf32>
    %5 = arith.addf %2, %4 : vector<128x128xf32>
    %cst_5 = arith.constant 0.000000e+00 : f32
    %6 = vector.broadcast %cst_5 : f32 to vector<128x128xf32>
    %7 = arith.cmpf ogt, %5, %6 : vector<128x128xf32>
    %cst_6 = arith.constant 1.000000e-01 : f32
    %8 = vector.broadcast %cst_6 : f32 to vector<128x128xf32>
    %9 = arith.mulf %8, %5 : vector<128x128xf32>
    %10 = arith.select %7, %5, %9 : vector<128x128xi1>, vector<128x128xf32>
    %11 = arith.truncf %10 : vector<128x128xf32> to vector<128x128xbf16>
    %c0_7 = arith.constant 0 : index
    %c0_8 = arith.constant 0 : index
    %12 = vector.load %arg6[%c0_7, %c0_8] : memref<128x128xbf16, #tpu.memory_space<vmem>>, vector<128x128xbf16>
    tpu.vector_store %arg6[%c0_7, %c0_8], %11 {strides = array<i32>} : memref<128x128xbf16, #tpu.memory_space<vmem>>, vector<128x128xbf16>,
    %c0_9 = arith.constant 0 : index
    %c0_10 = arith.constant 0 : index
    %13 = vector.load %arg4[%c0_9, %c0_10] : memref<128x128xbf16, #tpu.memory_space<vmem>>, vector<128x128xbf16>
    %cst_11 = arith.constant dense<0.000000e+00> : vector<128x128xf32>
    %14 = tpu.matmul %11, %13, %cst_11 {dimension_numbers = #tpu.dot_dimension_numbers<[1], [0], [0], [1], [0, 0, 1, 1], [], []>} : vector<128x128xbf16>, vector<128x128xbf16>, vector<128x128xf32> -> vector<128x128xf32>
    %c0_12 = arith.constant 0 : index
    %c0_13 = arith.constant 0 : index
    %15 = vector.load %arg5[%c0_12, %c0_13] : memref<1x128xf32, #tpu.memory_space<vmem>>, vector<1x128xf32>
    %16 = vector.broadcast %15 : vector<1x128xf32> to vector<128x128xf32>
    %17 = arith.addf %14, %16 : vector<128x128xf32>
    %cst_14 = arith.constant 0.000000e+00 : f32
    %18 = vector.broadcast %cst_14 : f32 to vector<128x128xf32>
    %19 = arith.cmpf ogt, %17, %18 : vector<128x128xf32>
    %cst_15 = arith.constant 1.000000e-01 : f32
    %20 = vector.broadcast %cst_15 : f32 to vector<128x128xf32>
    %21 = arith.mulf %20, %17 : vector<128x128xf32>
    %22 = arith.select %19, %17, %21 : vector<128x128xi1>, vector<128x128xf32>
    %23 = arith.truncf %22 : vector<128x128xf32> to vector<128x128xbf16>
    %c0_16 = arith.constant 0 : index
    %c0_17 = arith.constant 0 : index
    %24 = vector.load %arg7[%c0_16, %c0_17] : memref<128x128xbf16, #tpu.memory_space<vmem>>, vector<128x128xbf16>
    tpu.vector_store %arg7[%c0_16, %c0_17], %23 {strides = array<i32>} : memref<128x128xbf16, #tpu.memory_space<vmem>>, vector<128x128xbf16>,
    return
  }
  func.func @transform_0(%arg0: i32) -> (i32, i32) {
    %c0_i32 = arith.constant 0 : i32
    %c0_i32_0 = arith.constant 0 : i32
    return %arg0, %c0_i32 : i32, i32
  }
  func.func @transform_1(%arg0: i32) -> (i32, i32) {
    %c0_i32 = arith.constant 0 : i32
    %c0_i32_0 = arith.constant 0 : i32
    %c0_i32_1 = arith.constant 0 : i32
    return %c0_i32, %c0_i32_0 : i32, i32
  }
  func.func @transform_2(%arg0: i32) -> (i32, i32) {
    %c0_i32 = arith.constant 0 : i32
    %c0_i32_0 = arith.constant 0 : i32
    %c0_i32_1 = arith.constant 0 : i32
    return %c0_i32, %c0_i32_0 : i32, i32
  }
  func.func @transform_3(%arg0: i32) -> (i32, i32) {
    %c0_i32 = arith.constant 0 : i32
    %c0_i32_0 = arith.constant 0 : i32
    %c0_i32_1 = arith.constant 0 : i32
    return %c0_i32, %c0_i32_0 : i32, i32
  }
  func.func @transform_4(%arg0: i32) -> (i32, i32) {
    %c0_i32 = arith.constant 0 : i32
    %c0_i32_0 = arith.constant 0 : i32
    %c0_i32_1 = arith.constant 0 : i32
    return %c0_i32, %c0_i32_0 : i32, i32
  }
  func.func @transform_5(%arg0: i32) -> (i32, i32) {
    %c0_i32 = arith.constant 0 : i32
    %c0_i32_0 = arith.constant 0 : i32
    return %arg0, %c0_i32 : i32, i32
  }
  func.func @transform_6(%arg0: i32) -> (i32, i32) {
    %c0_i32 = arith.constant 0 : i32
    %c0_i32_0 = arith.constant 0 : i32
    return %arg0, %c0_i32 : i32, i32
  }
}

module attributes {stable_mosaic.version = 11 : i64} {
  func.func @_gemm_bias_act_res_kernel(%arg0: i32, %arg1: memref<128x1152xbf16, #tpu.memory_space<vmem>>, %arg2: memref<1152x128xbf16, #tpu.memory_space<vmem>>, %arg3: memref<1x128xf32, #tpu.memory_space<vmem>>, %arg4: memref<128x128xbf16, #tpu.memory_space<vmem>>, %arg5: memref<128x128xbf16, #tpu.memory_space<vmem>>) attributes {dimension_semantics = [#tpu.dimension_semantics<parallel>], iteration_bounds = array<i64: 1>, scalar_prefetch = 0 : i64, scratch_operands = 0 : i64, tpu.core_type = #tpu.core_type<tc>, window_params = [{transform_indices = @transform_0, window_bounds = array<i64: 128, 1152>}, {pipeline_mode = #tpu.pipeline_mode<synchronous>, transform_indices = @transform_1, window_bounds = array<i64: 1152, 128>}, {pipeline_mode = #tpu.pipeline_mode<synchronous>, transform_indices = @transform_2, window_bounds = array<i64: 1, 128>}, {transform_indices = @transform_3, window_bounds = array<i64: 128, 128>}, {transform_indices = @transform_4, window_bounds = array<i64: 128, 128>}]} {
    %c0 = arith.constant 0 : index
    %c0_0 = arith.constant 0 : index
    %0 = vector.load %arg1[%c0, %c0_0] : memref<128x1152xbf16, #tpu.memory_space<vmem>>, vector<128x1152xbf16>
    %c0_1 = arith.constant 0 : index
    %c0_2 = arith.constant 0 : index
    %1 = vector.load %arg2[%c0_1, %c0_2] : memref<1152x128xbf16, #tpu.memory_space<vmem>>, vector<1152x128xbf16>
    %cst = arith.constant dense<0.000000e+00> : vector<128x128xf32>
    %2 = tpu.matmul %0, %1, %cst {dimension_numbers = #tpu.dot_dimension_numbers<[1], [0], [0], [1], [0, 0, 1, 1], [], []>} : vector<128x1152xbf16>, vector<1152x128xbf16>, vector<128x128xf32> -> vector<128x128xf32>
    %c0_3 = arith.constant 0 : index
    %c0_4 = arith.constant 0 : index
    %3 = vector.load %arg3[%c0_3, %c0_4] : memref<1x128xf32, #tpu.memory_space<vmem>>, vector<1x128xf32>
    %4 = vector.broadcast %3 : vector<1x128xf32> to vector<128x128xf32>
    %5 = arith.addf %2, %4 : vector<128x128xf32>
    %cst_5 = arith.constant 0.000000e+00 : f32
    %6 = vector.broadcast %cst_5 : f32 to vector<128x128xf32>
    %7 = arith.cmpf ogt, %5, %6 : vector<128x128xf32>
    %cst_6 = arith.constant 1.000000e-01 : f32
    %8 = vector.broadcast %cst_6 : f32 to vector<128x128xf32>
    %9 = arith.mulf %8, %5 : vector<128x128xf32>
    %10 = arith.select %7, %5, %9 : vector<128x128xi1>, vector<128x128xf32>
    %c0_7 = arith.constant 0 : index
    %c0_8 = arith.constant 0 : index
    %11 = vector.load %arg4[%c0_7, %c0_8] : memref<128x128xbf16, #tpu.memory_space<vmem>>, vector<128x128xbf16>
    %12 = arith.extf %11 : vector<128x128xbf16> to vector<128x128xf32>
    %13 = arith.addf %10, %12 : vector<128x128xf32>
    %14 = arith.truncf %13 : vector<128x128xf32> to vector<128x128xbf16>
    %c0_9 = arith.constant 0 : index
    %c0_10 = arith.constant 0 : index
    %15 = vector.load %arg5[%c0_9, %c0_10] : memref<128x128xbf16, #tpu.memory_space<vmem>>, vector<128x128xbf16>
    tpu.vector_store %arg5[%c0_9, %c0_10], %14 {strides = array<i32>} : memref<128x128xbf16, #tpu.memory_space<vmem>>, vector<128x128xbf16>,
    return
  }
  func.func @transform_0(%arg0: i32) -> (i32, i32) {
    %c0_i32 = arith.constant 0 : i32
    %c0_i32_0 = arith.constant 0 : i32
    return %arg0, %c0_i32 : i32, i32
  }
  func.func @transform_1(%arg0: i32) -> (i32, i32) {
    %c0_i32 = arith.constant 0 : i32
    %c0_i32_0 = arith.constant 0 : i32
    %c0_i32_1 = arith.constant 0 : i32
    return %c0_i32, %c0_i32_0 : i32, i32
  }
  func.func @transform_2(%arg0: i32) -> (i32, i32) {
    %c0_i32 = arith.constant 0 : i32
    %c0_i32_0 = arith.constant 0 : i32
    %c0_i32_1 = arith.constant 0 : i32
    return %c0_i32, %c0_i32_0 : i32, i32
  }
  func.func @transform_3(%arg0: i32) -> (i32, i32) {
    %c0_i32 = arith.constant 0 : i32
    %c0_i32_0 = arith.constant 0 : i32
    return %arg0, %c0_i32 : i32, i32
  }
  func.func @transform_4(%arg0: i32) -> (i32, i32) {
    %c0_i32 = arith.constant 0 : i32
    %c0_i32_0 = arith.constant 0 : i32
    return %arg0, %c0_i32 : i32, i32
  }
}

module attributes {stable_mosaic.version = 11 : i64} {
  func.func @_gemm_dual_out_kernel(%arg0: i32, %arg1: memref<32x1152xbf16, #tpu.memory_space<vmem>>, %arg2: memref<1152x128xbf16, #tpu.memory_space<vmem>>, %arg3: memref<1x128xf32, #tpu.memory_space<vmem>>, %arg4: memref<128x128xbf16, #tpu.memory_space<vmem>>, %arg5: memref<1x128xf32, #tpu.memory_space<vmem>>, %arg6: memref<32x128xbf16, #tpu.memory_space<vmem>>, %arg7: memref<32x128xbf16, #tpu.memory_space<vmem>>) attributes {dimension_semantics = [#tpu.dimension_semantics<parallel>], iteration_bounds = array<i64: 1>, scalar_prefetch = 0 : i64, scratch_operands = 0 : i64, tpu.core_type = #tpu.core_type<tc>, window_params = [{transform_indices = @transform_0, window_bounds = array<i64: 32, 1152>}, {pipeline_mode = #tpu.pipeline_mode<synchronous>, transform_indices = @transform_1, window_bounds = array<i64: 1152, 128>}, {pipeline_mode = #tpu.pipeline_mode<synchronous>, transform_indices = @transform_2, window_bounds = array<i64: 1, 128>}, {pipeline_mode = #tpu.pipeline_mode<synchronous>, transform_indices = @transform_3, window_bounds = array<i64: 128, 128>}, {pipeline_mode = #tpu.pipeline_mode<synchronous>, transform_indices = @transform_4, window_bounds = array<i64: 1, 128>}, {transform_indices = @transform_5, window_bounds = array<i64: 32, 128>}, {transform_indices = @transform_6, window_bounds = array<i64: 32, 128>}]} {
    %c0 = arith.constant 0 : index
    %c0_0 = arith.constant 0 : index
    %0 = vector.load %arg1[%c0, %c0_0] : memref<32x1152xbf16, #tpu.memory_space<vmem>>, vector<32x1152xbf16>
    %c0_1 = arith.constant 0 : index
    %c0_2 = arith.constant 0 : index
    %1 = vector.load %arg2[%c0_1, %c0_2] : memref<1152x128xbf16, #tpu.memory_space<vmem>>, vector<1152x128xbf16>
    %cst = arith.constant dense<0.000000e+00> : vector<32x128xf32>
    %2 = tpu.matmul %0, %1, %cst {dimension_numbers = #tpu.dot_dimension_numbers<[1], [0], [0], [1], [0, 0, 1, 1], [], []>} : vector<32x1152xbf16>, vector<1152x128xbf16>, vector<32x128xf32> -> vector<32x128xf32>
    %c0_3 = arith.constant 0 : index
    %c0_4 = arith.constant 0 : index
    %3 = vector.load %arg3[%c0_3, %c0_4] : memref<1x128xf32, #tpu.memory_space<vmem>>, vector<1x128xf32>
    %4 = vector.broadcast %3 : vector<1x128xf32> to vector<32x128xf32>
    %5 = arith.addf %2, %4 : vector<32x128xf32>
    %cst_5 = arith.constant 0.000000e+00 : f32
    %6 = vector.broadcast %cst_5 : f32 to vector<32x128xf32>
    %7 = arith.cmpf ogt, %5, %6 : vector<32x128xf32>
    %cst_6 = arith.constant 1.000000e-01 : f32
    %8 = vector.broadcast %cst_6 : f32 to vector<32x128xf32>
    %9 = arith.mulf %8, %5 : vector<32x128xf32>
    %10 = arith.select %7, %5, %9 : vector<32x128xi1>, vector<32x128xf32>
    %11 = arith.truncf %10 : vector<32x128xf32> to vector<32x128xbf16>
    %c0_7 = arith.constant 0 : index
    %c0_8 = arith.constant 0 : index
    %12 = vector.load %arg6[%c0_7, %c0_8] : memref<32x128xbf16, #tpu.memory_space<vmem>>, vector<32x128xbf16>
    tpu.vector_store %arg6[%c0_7, %c0_8], %11 {strides = array<i32>} : memref<32x128xbf16, #tpu.memory_space<vmem>>, vector<32x128xbf16>,
    %c0_9 = arith.constant 0 : index
    %c0_10 = arith.constant 0 : index
    %13 = vector.load %arg4[%c0_9, %c0_10] : memref<128x128xbf16, #tpu.memory_space<vmem>>, vector<128x128xbf16>
    %cst_11 = arith.constant dense<0.000000e+00> : vector<32x128xf32>
    %14 = tpu.matmul %11, %13, %cst_11 {dimension_numbers = #tpu.dot_dimension_numbers<[1], [0], [0], [1], [0, 0, 1, 1], [], []>} : vector<32x128xbf16>, vector<128x128xbf16>, vector<32x128xf32> -> vector<32x128xf32>
    %c0_12 = arith.constant 0 : index
    %c0_13 = arith.constant 0 : index
    %15 = vector.load %arg5[%c0_12, %c0_13] : memref<1x128xf32, #tpu.memory_space<vmem>>, vector<1x128xf32>
    %16 = vector.broadcast %15 : vector<1x128xf32> to vector<32x128xf32>
    %17 = arith.addf %14, %16 : vector<32x128xf32>
    %cst_14 = arith.constant 0.000000e+00 : f32
    %18 = vector.broadcast %cst_14 : f32 to vector<32x128xf32>
    %19 = arith.cmpf ogt, %17, %18 : vector<32x128xf32>
    %cst_15 = arith.constant 1.000000e-01 : f32
    %20 = vector.broadcast %cst_15 : f32 to vector<32x128xf32>
    %21 = arith.mulf %20, %17 : vector<32x128xf32>
    %22 = arith.select %19, %17, %21 : vector<32x128xi1>, vector<32x128xf32>
    %23 = arith.truncf %22 : vector<32x128xf32> to vector<32x128xbf16>
    %c0_16 = arith.constant 0 : index
    %c0_17 = arith.constant 0 : index
    %24 = vector.load %arg7[%c0_16, %c0_17] : memref<32x128xbf16, #tpu.memory_space<vmem>>, vector<32x128xbf16>
    tpu.vector_store %arg7[%c0_16, %c0_17], %23 {strides = array<i32>} : memref<32x128xbf16, #tpu.memory_space<vmem>>, vector<32x128xbf16>,
    return
  }
  func.func @transform_0(%arg0: i32) -> (i32, i32) {
    %c0_i32 = arith.constant 0 : i32
    %c0_i32_0 = arith.constant 0 : i32
    return %arg0, %c0_i32 : i32, i32
  }
  func.func @transform_1(%arg0: i32) -> (i32, i32) {
    %c0_i32 = arith.constant 0 : i32
    %c0_i32_0 = arith.constant 0 : i32
    %c0_i32_1 = arith.constant 0 : i32
    return %c0_i32, %c0_i32_0 : i32, i32
  }
  func.func @transform_2(%arg0: i32) -> (i32, i32) {
    %c0_i32 = arith.constant 0 : i32
    %c0_i32_0 = arith.constant 0 : i32
    %c0_i32_1 = arith.constant 0 : i32
    return %c0_i32, %c0_i32_0 : i32, i32
  }
  func.func @transform_3(%arg0: i32) -> (i32, i32) {
    %c0_i32 = arith.constant 0 : i32
    %c0_i32_0 = arith.constant 0 : i32
    %c0_i32_1 = arith.constant 0 : i32
    return %c0_i32, %c0_i32_0 : i32, i32
  }
  func.func @transform_4(%arg0: i32) -> (i32, i32) {
    %c0_i32 = arith.constant 0 : i32
    %c0_i32_0 = arith.constant 0 : i32
    %c0_i32_1 = arith.constant 0 : i32
    return %c0_i32, %c0_i32_0 : i32, i32
  }
  func.func @transform_5(%arg0: i32) -> (i32, i32) {
    %c0_i32 = arith.constant 0 : i32
    %c0_i32_0 = arith.constant 0 : i32
    return %arg0, %c0_i32 : i32, i32
  }
  func.func @transform_6(%arg0: i32) -> (i32, i32) {
    %c0_i32 = arith.constant 0 : i32
    %c0_i32_0 = arith.constant 0 : i32
    return %arg0, %c0_i32 : i32, i32
  }
}

module attributes {stable_mosaic.version = 11 : i64} {
  func.func @_gemm_bias_act_res_kernel(%arg0: i32, %arg1: memref<32x1152xbf16, #tpu.memory_space<vmem>>, %arg2: memref<1152x128xbf16, #tpu.memory_space<vmem>>, %arg3: memref<1x128xf32, #tpu.memory_space<vmem>>, %arg4: memref<32x128xbf16, #tpu.memory_space<vmem>>, %arg5: memref<32x128xbf16, #tpu.memory_space<vmem>>) attributes {dimension_semantics = [#tpu.dimension_semantics<parallel>], iteration_bounds = array<i64: 1>, scalar_prefetch = 0 : i64, scratch_operands = 0 : i64, tpu.core_type = #tpu.core_type<tc>, window_params = [{transform_indices = @transform_0, window_bounds = array<i64: 32, 1152>}, {pipeline_mode = #tpu.pipeline_mode<synchronous>, transform_indices = @transform_1, window_bounds = array<i64: 1152, 128>}, {pipeline_mode = #tpu.pipeline_mode<synchronous>, transform_indices = @transform_2, window_bounds = array<i64: 1, 128>}, {transform_indices = @transform_3, window_bounds = array<i64: 32, 128>}, {transform_indices = @transform_4, window_bounds = array<i64: 32, 128>}]} {
    %c0 = arith.constant 0 : index
    %c0_0 = arith.constant 0 : index
    %0 = vector.load %arg1[%c0, %c0_0] : memref<32x1152xbf16, #tpu.memory_space<vmem>>, vector<32x1152xbf16>
    %c0_1 = arith.constant 0 : index
    %c0_2 = arith.constant 0 : index
    %1 = vector.load %arg2[%c0_1, %c0_2] : memref<1152x128xbf16, #tpu.memory_space<vmem>>, vector<1152x128xbf16>
    %cst = arith.constant dense<0.000000e+00> : vector<32x128xf32>
    %2 = tpu.matmul %0, %1, %cst {dimension_numbers = #tpu.dot_dimension_numbers<[1], [0], [0], [1], [0, 0, 1, 1], [], []>} : vector<32x1152xbf16>, vector<1152x128xbf16>, vector<32x128xf32> -> vector<32x128xf32>
    %c0_3 = arith.constant 0 : index
    %c0_4 = arith.constant 0 : index
    %3 = vector.load %arg3[%c0_3, %c0_4] : memref<1x128xf32, #tpu.memory_space<vmem>>, vector<1x128xf32>
    %4 = vector.broadcast %3 : vector<1x128xf32> to vector<32x128xf32>
    %5 = arith.addf %2, %4 : vector<32x128xf32>
    %cst_5 = arith.constant 0.000000e+00 : f32
    %6 = vector.broadcast %cst_5 : f32 to vector<32x128xf32>
    %7 = arith.cmpf ogt, %5, %6 : vector<32x128xf32>
    %cst_6 = arith.constant 1.000000e-01 : f32
    %8 = vector.broadcast %cst_6 : f32 to vector<32x128xf32>
    %9 = arith.mulf %8, %5 : vector<32x128xf32>
    %10 = arith.select %7, %5, %9 : vector<32x128xi1>, vector<32x128xf32>
    %c0_7 = arith.constant 0 : index
    %c0_8 = arith.constant 0 : index
    %11 = vector.load %arg4[%c0_7, %c0_8] : memref<32x128xbf16, #tpu.memory_space<vmem>>, vector<32x128xbf16>
    %12 = arith.extf %11 : vector<32x128xbf16> to vector<32x128xf32>
    %13 = arith.addf %10, %12 : vector<32x128xf32>
    %14 = arith.truncf %13 : vector<32x128xf32> to vector<32x128xbf16>
    %c0_9 = arith.constant 0 : index
    %c0_10 = arith.constant 0 : index
    %15 = vector.load %arg5[%c0_9, %c0_10] : memref<32x128xbf16, #tpu.memory_space<vmem>>, vector<32x128xbf16>
    tpu.vector_store %arg5[%c0_9, %c0_10], %14 {strides = array<i32>} : memref<32x128xbf16, #tpu.memory_space<vmem>>, vector<32x128xbf16>,
    return
  }
  func.func @transform_0(%arg0: i32) -> (i32, i32) {
    %c0_i32 = arith.constant 0 : i32
    %c0_i32_0 = arith.constant 0 : i32
    return %arg0, %c0_i32 : i32, i32
  }
  func.func @transform_1(%arg0: i32) -> (i32, i32) {
    %c0_i32 = arith.constant 0 : i32
    %c0_i32_0 = arith.constant 0 : i32
    %c0_i32_1 = arith.constant 0 : i32
    return %c0_i32, %c0_i32_0 : i32, i32
  }
  func.func @transform_2(%arg0: i32) -> (i32, i32) {
    %c0_i32 = arith.constant 0 : i32
    %c0_i32_0 = arith.constant 0 : i32
    %c0_i32_1 = arith.constant 0 : i32
    return %c0_i32, %c0_i32_0 : i32, i32
  }
  func.func @transform_3(%arg0: i32) -> (i32, i32) {
    %c0_i32 = arith.constant 0 : i32
    %c0_i32_0 = arith.constant 0 : i32
    return %arg0, %c0_i32 : i32, i32
  }
  func.func @transform_4(%arg0: i32) -> (i32, i32) {
    %c0_i32 = arith.constant 0 : i32
    %c0_i32_0 = arith.constant 0 : i32
    return %arg0, %c0_i32 : i32, i32
  }
}

module attributes {stable_mosaic.version = 11 : i64} {
  func.func @_gemm_dual_out_kernel(%arg0: i32, %arg1: memref<32x128xbf16, #tpu.memory_space<vmem>>, %arg2: memref<128x128xbf16, #tpu.memory_space<vmem>>, %arg3: memref<1x128xf32, #tpu.memory_space<vmem>>, %arg4: memref<128x128xbf16, #tpu.memory_space<vmem>>, %arg5: memref<1x128xf32, #tpu.memory_space<vmem>>, %arg6: memref<32x128xbf16, #tpu.memory_space<vmem>>, %arg7: memref<32x128xf32, #tpu.memory_space<vmem>>) attributes {dimension_semantics = [#tpu.dimension_semantics<parallel>], iteration_bounds = array<i64: 1>, scalar_prefetch = 0 : i64, scratch_operands = 0 : i64, tpu.core_type = #tpu.core_type<tc>, window_params = [{transform_indices = @transform_0, window_bounds = array<i64: 32, 128>}, {pipeline_mode = #tpu.pipeline_mode<synchronous>, transform_indices = @transform_1, window_bounds = array<i64: 128, 128>}, {pipeline_mode = #tpu.pipeline_mode<synchronous>, transform_indices = @transform_2, window_bounds = array<i64: 1, 128>}, {pipeline_mode = #tpu.pipeline_mode<synchronous>, transform_indices = @transform_3, window_bounds = array<i64: 128, 128>}, {pipeline_mode = #tpu.pipeline_mode<synchronous>, transform_indices = @transform_4, window_bounds = array<i64: 1, 128>}, {transform_indices = @transform_5, window_bounds = array<i64: 32, 128>}, {transform_indices = @transform_6, window_bounds = array<i64: 32, 128>}]} {
    %c0 = arith.constant 0 : index
    %c0_0 = arith.constant 0 : index
    %0 = vector.load %arg1[%c0, %c0_0] : memref<32x128xbf16, #tpu.memory_space<vmem>>, vector<32x128xbf16>
    %c0_1 = arith.constant 0 : index
    %c0_2 = arith.constant 0 : index
    %1 = vector.load %arg2[%c0_1, %c0_2] : memref<128x128xbf16, #tpu.memory_space<vmem>>, vector<128x128xbf16>
    %cst = arith.constant dense<0.000000e+00> : vector<32x128xf32>
    %2 = tpu.matmul %0, %1, %cst {dimension_numbers = #tpu.dot_dimension_numbers<[1], [0], [0], [1], [0, 0, 1, 1], [], []>} : vector<32x128xbf16>, vector<128x128xbf16>, vector<32x128xf32> -> vector<32x128xf32>
    %c0_3 = arith.constant 0 : index
    %c0_4 = arith.constant 0 : index
    %3 = vector.load %arg3[%c0_3, %c0_4] : memref<1x128xf32, #tpu.memory_space<vmem>>, vector<1x128xf32>
    %4 = vector.broadcast %3 : vector<1x128xf32> to vector<32x128xf32>
    %5 = arith.addf %2, %4 : vector<32x128xf32>
    %cst_5 = arith.constant 0.000000e+00 : f32
    %6 = vector.broadcast %cst_5 : f32 to vector<32x128xf32>
    %7 = arith.cmpf ogt, %5, %6 : vector<32x128xf32>
    %cst_6 = arith.constant 1.000000e-01 : f32
    %8 = vector.broadcast %cst_6 : f32 to vector<32x128xf32>
    %9 = arith.mulf %8, %5 : vector<32x128xf32>
    %10 = arith.select %7, %5, %9 : vector<32x128xi1>, vector<32x128xf32>
    %11 = arith.truncf %10 : vector<32x128xf32> to vector<32x128xbf16>
    %c0_7 = arith.constant 0 : index
    %c0_8 = arith.constant 0 : index
    %12 = vector.load %arg6[%c0_7, %c0_8] : memref<32x128xbf16, #tpu.memory_space<vmem>>, vector<32x128xbf16>
    tpu.vector_store %arg6[%c0_7, %c0_8], %11 {strides = array<i32>} : memref<32x128xbf16, #tpu.memory_space<vmem>>, vector<32x128xbf16>,
    %c0_9 = arith.constant 0 : index
    %c0_10 = arith.constant 0 : index
    %13 = vector.load %arg4[%c0_9, %c0_10] : memref<128x128xbf16, #tpu.memory_space<vmem>>, vector<128x128xbf16>
    %cst_11 = arith.constant dense<0.000000e+00> : vector<32x128xf32>
    %14 = tpu.matmul %11, %13, %cst_11 {dimension_numbers = #tpu.dot_dimension_numbers<[1], [0], [0], [1], [0, 0, 1, 1], [], []>} : vector<32x128xbf16>, vector<128x128xbf16>, vector<32x128xf32> -> vector<32x128xf32>
    %c0_12 = arith.constant 0 : index
    %c0_13 = arith.constant 0 : index
    %15 = vector.load %arg5[%c0_12, %c0_13] : memref<1x128xf32, #tpu.memory_space<vmem>>, vector<1x128xf32>
    %16 = vector.broadcast %15 : vector<1x128xf32> to vector<32x128xf32>
    %17 = arith.addf %14, %16 : vector<32x128xf32>
    %c0_14 = arith.constant 0 : index
    %c0_15 = arith.constant 0 : index
    %18 = vector.load %arg7[%c0_14, %c0_15] : memref<32x128xf32, #tpu.memory_space<vmem>>, vector<32x128xf32>
    tpu.vector_store %arg7[%c0_14, %c0_15], %17 {strides = array<i32>} : memref<32x128xf32, #tpu.memory_space<vmem>>, vector<32x128xf32>,
    return
  }
  func.func @transform_0(%arg0: i32) -> (i32, i32) {
    %c0_i32 = arith.constant 0 : i32
    %c0_i32_0 = arith.constant 0 : i32
    return %arg0, %c0_i32 : i32, i32
  }
  func.func @transform_1(%arg0: i32) -> (i32, i32) {
    %c0_i32 = arith.constant 0 : i32
    %c0_i32_0 = arith.constant 0 : i32
    %c0_i32_1 = arith.constant 0 : i32
    return %c0_i32, %c0_i32_0 : i32, i32
  }
  func.func @transform_2(%arg0: i32) -> (i32, i32) {
    %c0_i32 = arith.constant 0 : i32
    %c0_i32_0 = arith.constant 0 : i32
    %c0_i32_1 = arith.constant 0 : i32
    return %c0_i32, %c0_i32_0 : i32, i32
  }
  func.func @transform_3(%arg0: i32) -> (i32, i32) {
    %c0_i32 = arith.constant 0 : i32
    %c0_i32_0 = arith.constant 0 : i32
    %c0_i32_1 = arith.constant 0 : i32
    return %c0_i32, %c0_i32_0 : i32, i32
  }
  func.func @transform_4(%arg0: i32) -> (i32, i32) {
    %c0_i32 = arith.constant 0 : i32
    %c0_i32_0 = arith.constant 0 : i32
    %c0_i32_1 = arith.constant 0 : i32
    return %c0_i32, %c0_i32_0 : i32, i32
  }
  func.func @transform_5(%arg0: i32) -> (i32, i32) {
    %c0_i32 = arith.constant 0 : i32
    %c0_i32_0 = arith.constant 0 : i32
    return %arg0, %c0_i32 : i32, i32
  }
  func.func @transform_6(%arg0: i32) -> (i32, i32) {
    %c0_i32 = arith.constant 0 : i32
    %c0_i32_0 = arith.constant 0 : i32
    return %arg0, %c0_i32 : i32, i32
  }
}

module attributes {stable_mosaic.version = 11 : i64} {
  func.func @_gemm_chain_kernel(%arg0: i32, %arg1: memref<128x2304xbf16, #tpu.memory_space<vmem>>, %arg2: memref<2304x128xbf16, #tpu.memory_space<vmem>>, %arg3: memref<1x128xf32, #tpu.memory_space<vmem>>, %arg4: memref<128x128xbf16, #tpu.memory_space<vmem>>, %arg5: memref<1x128xf32, #tpu.memory_space<vmem>>, %arg6: memref<128x128xf32, #tpu.memory_space<vmem>>) attributes {dimension_semantics = [#tpu.dimension_semantics<parallel>], iteration_bounds = array<i64: 1>, scalar_prefetch = 0 : i64, scratch_operands = 0 : i64, tpu.core_type = #tpu.core_type<tc>, window_params = [{transform_indices = @transform_0, window_bounds = array<i64: 128, 2304>}, {pipeline_mode = #tpu.pipeline_mode<synchronous>, transform_indices = @transform_1, window_bounds = array<i64: 2304, 128>}, {pipeline_mode = #tpu.pipeline_mode<synchronous>, transform_indices = @transform_2, window_bounds = array<i64: 1, 128>}, {pipeline_mode = #tpu.pipeline_mode<synchronous>, transform_indices = @transform_3, window_bounds = array<i64: 128, 128>}, {pipeline_mode = #tpu.pipeline_mode<synchronous>, transform_indices = @transform_4, window_bounds = array<i64: 1, 128>}, {transform_indices = @transform_5, window_bounds = array<i64: 128, 128>}]} {
    %c0 = arith.constant 0 : index
    %c0_0 = arith.constant 0 : index
    %0 = vector.load %arg1[%c0, %c0_0] : memref<128x2304xbf16, #tpu.memory_space<vmem>>, vector<128x2304xbf16>
    %c0_1 = arith.constant 0 : index
    %c0_2 = arith.constant 0 : index
    %1 = vector.load %arg2[%c0_1, %c0_2] : memref<2304x128xbf16, #tpu.memory_space<vmem>>, vector<2304x128xbf16>
    %cst = arith.constant dense<0.000000e+00> : vector<128x128xf32>
    %2 = tpu.matmul %0, %1, %cst {dimension_numbers = #tpu.dot_dimension_numbers<[1], [0], [0], [1], [0, 0, 1, 1], [], []>} : vector<128x2304xbf16>, vector<2304x128xbf16>, vector<128x128xf32> -> vector<128x128xf32>
    %c0_3 = arith.constant 0 : index
    %c0_4 = arith.constant 0 : index
    %3 = vector.load %arg3[%c0_3, %c0_4] : memref<1x128xf32, #tpu.memory_space<vmem>>, vector<1x128xf32>
    %4 = vector.broadcast %3 : vector<1x128xf32> to vector<128x128xf32>
    %5 = arith.addf %2, %4 : vector<128x128xf32>
    %cst_5 = arith.constant 0.000000e+00 : f32
    %6 = vector.broadcast %cst_5 : f32 to vector<128x128xf32>
    %7 = arith.cmpf ogt, %5, %6 : vector<128x128xf32>
    %cst_6 = arith.constant 1.000000e-01 : f32
    %8 = vector.broadcast %cst_6 : f32 to vector<128x128xf32>
    %9 = arith.mulf %8, %5 : vector<128x128xf32>
    %10 = arith.select %7, %5, %9 : vector<128x128xi1>, vector<128x128xf32>
    %11 = arith.truncf %10 : vector<128x128xf32> to vector<128x128xbf16>
    %c0_7 = arith.constant 0 : index
    %c0_8 = arith.constant 0 : index
    %12 = vector.load %arg4[%c0_7, %c0_8] : memref<128x128xbf16, #tpu.memory_space<vmem>>, vector<128x128xbf16>
    %cst_9 = arith.constant dense<0.000000e+00> : vector<128x128xf32>
    %13 = tpu.matmul %11, %12, %cst_9 {dimension_numbers = #tpu.dot_dimension_numbers<[1], [0], [0], [1], [0, 0, 1, 1], [], []>} : vector<128x128xbf16>, vector<128x128xbf16>, vector<128x128xf32> -> vector<128x128xf32>
    %c0_10 = arith.constant 0 : index
    %c0_11 = arith.constant 0 : index
    %14 = vector.load %arg5[%c0_10, %c0_11] : memref<1x128xf32, #tpu.memory_space<vmem>>, vector<1x128xf32>
    %15 = vector.broadcast %14 : vector<1x128xf32> to vector<128x128xf32>
    %16 = arith.addf %13, %15 : vector<128x128xf32>
    %c0_12 = arith.constant 0 : index
    %c0_13 = arith.constant 0 : index
    %17 = vector.load %arg6[%c0_12, %c0_13] : memref<128x128xf32, #tpu.memory_space<vmem>>, vector<128x128xf32>
    tpu.vector_store %arg6[%c0_12, %c0_13], %16 {strides = array<i32>} : memref<128x128xf32, #tpu.memory_space<vmem>>, vector<128x128xf32>,
    return
  }
  func.func @transform_0(%arg0: i32) -> (i32, i32) {
    %c0_i32 = arith.constant 0 : i32
    %c0_i32_0 = arith.constant 0 : i32
    return %arg0, %c0_i32 : i32, i32
  }
  func.func @transform_1(%arg0: i32) -> (i32, i32) {
    %c0_i32 = arith.constant 0 : i32
    %c0_i32_0 = arith.constant 0 : i32
    %c0_i32_1 = arith.constant 0 : i32
    return %c0_i32, %c0_i32_0 : i32, i32
  }
  func.func @transform_2(%arg0: i32) -> (i32, i32) {
    %c0_i32 = arith.constant 0 : i32
    %c0_i32_0 = arith.constant 0 : i32
    %c0_i32_1 = arith.constant 0 : i32
    return %c0_i32, %c0_i32_0 : i32, i32
  }
  func.func @transform_3(%arg0: i32) -> (i32, i32) {
    %c0_i32 = arith.constant 0 : i32
    %c0_i32_0 = arith.constant 0 : i32
    %c0_i32_1 = arith.constant 0 : i32
    return %c0_i32, %c0_i32_0 : i32, i32
  }
  func.func @transform_4(%arg0: i32) -> (i32, i32) {
    %c0_i32 = arith.constant 0 : i32
    %c0_i32_0 = arith.constant 0 : i32
    %c0_i32_1 = arith.constant 0 : i32
    return %c0_i32, %c0_i32_0 : i32, i32
  }
  func.func @transform_5(%arg0: i32) -> (i32, i32) {
    %c0_i32 = arith.constant 0 : i32
    %c0_i32_0 = arith.constant 0 : i32
    return %arg0, %c0_i32 : i32, i32
  }
}

</mosaic_0001>

<llo_original>
// kernel: yolov3_forward.7
$region0: #{yolov3_forward.7}
  #allocation0 [shape = 'u32[]', space=smem, size = 0x4, offset = 0x4, fixed_abs, tag = 'smem constant byte address 0x4 - core index']
  #allocation1 [shape = 'u32[144,128]{1,0:T(1,128)}', space=vmem, size = 0x12000, scoped, tag = 'internal scratch']
  %s0 = inlined_call_operand.vmem [shape: bf16[512,1152], index: 0, kind: input, shape index: {}]
  %s1 = inlined_call_operand.vmem [shape: bf16[1152,128], index: 1, kind: input, shape index: {}]
  %s2 = inlined_call_operand.vmem [shape: f32[1,128], index: 2, kind: input, shape index: {}]
  %s3 = inlined_call_operand.vmem [shape: bf16[512,128], index: 3, kind: output, shape index: {}]
  %s4 = sld [smem:[#allocation0]]
  $region45: #{yolov3_forward.7} parent=0
    _
  %s6 = ssub.s32 1, %s4
  %s7 = scalar_select 0, %s6, %s4
  loop: start=0, step=1, limit=4
  $region2: #{yolov3_forward.7} parent=0 // loop_pre_header
    _
  $region3: #{yolov3_forward.7} parent=0 // loop_header
    %s9 = sphi 0, %s13
    %p10 = scmp.ge.s32.totalorder %s9, 4
    %s19 = sphi 0, %s21
    %s22 = sphi 0, %s19
    %s23 = sphi 0, %s22
    %s39 = sphi 0, %s23
    %s43 = sphi 0, %s43
    %s45 = sphi 0, %s43
    %s46 = sphi 0, %s45
    %s60 = sphi 0, %s46
    %s64 = sphi 0, %s64
    %s66 = sphi 0, %s64
    %s67 = sphi 0, %s66
    %s81 = sphi 0, %s67
    %s87 = sphi 0, %s89
    %s90 = sphi 0, %s87
    %s91 = sphi 0, %s90
    %s107 = sphi 0, %s91
  $region4: #{yolov3_forward.7} parent=0 // loop_header_branch
    %12 = sbr.rel (%p10) target = $region8
  $region5: #{yolov3_forward.7} parent=0 // loop_body
    %s14 = ssub.s32 %s9, 1
    %s15 = ssub.s32 %s9, 2
    %s16 = sadd.s32 %s9, 1
    %s17 = ssub.s32 %s9, %s16
    %p18 = scmp.eq.s32.totalorder %s17, 0
    %s20 = sadd.s32 %s19, 1
    %s21 = scalar_select %p18, %s19, %s20
    %p24 = pneg %p18
    %p25 = scmp.eq.s32.totalorder %s9, 1
    %p26 = por %p24, %p25
    %p27 = scmp.ne.s32.totalorder %s19, %s22
    %p28 = scmp.eq.s32.totalorder %s9, 0
    %p29 = por %p27, %p28
    %p30 = scmp.ne.s32.totalorder %s19, %s22
    %p31 = scmp.eq.s32.totalorder %s14, 1
    %p32 = por %p30, %p31
    %p33 = scmp.ne.s32.totalorder %s22, %s23
    %p34 = scmp.eq.s32.totalorder %s14, 0
    %p35 = por %p33, %p34
    %p36 = scmp.ne.s32.totalorder %s22, %s23
    %p37 = scmp.eq.s32.totalorder %s15, 1
    %p38 = por %p36, %p37
    %p40 = scmp.ne.s32.totalorder %s23, %s39
    %p41 = scmp.eq.s32.totalorder %s15, 0
    %p42 = por %p40, %p41
    %s44 = sadd.s32 %s43, 1
    %p47 = scmp.eq.s32.totalorder %s9, 1
    %p48 = scmp.ne.s32.totalorder %s43, %s45
    %p49 = scmp.eq.s32.totalorder %s9, 0
    %p50 = por %p48, %p49
    %p51 = scmp.ne.s32.totalorder %s43, %s45
    %p52 = scmp.eq.s32.totalorder %s14, 1
    %p53 = por %p51, %p52
    %p54 = scmp.ne.s32.totalorder %s45, %s46
    %p55 = scmp.eq.s32.totalorder %s14, 0
    %p56 = por %p54, %p55
    %p57 = scmp.ne.s32.totalorder %s45, %s46
    %p58 = scmp.eq.s32.totalorder %s15, 1
    %p59 = por %p57, %p58
    %p61 = scmp.ne.s32.totalorder %s46, %s60
    %p62 = scmp.eq.s32.totalorder %s15, 0
    %p63 = por %p61, %p62
    %s65 = sadd.s32 %s64, 1
    %p68 = scmp.eq.s32.totalorder %s9, 1
    %p69 = scmp.ne.s32.totalorder %s64, %s66
    %p70 = scmp.eq.s32.totalorder %s9, 0
    %p71 = por %p69, %p70
    %p72 = scmp.ne.s32.totalorder %s64, %s66
    %p73 = scmp.eq.s32.totalorder %s14, 1
    %p74 = por %p72, %p73
    %p75 = scmp.ne.s32.totalorder %s66, %s67
    %p76 = scmp.eq.s32.totalorder %s14, 0
    %p77 = por %p75, %p76
    %p78 = scmp.ne.s32.totalorder %s66, %s67
    %p79 = scmp.eq.s32.totalorder %s15, 1
    %p80 = por %p78, %p79
    %p82 = scmp.ne.s32.totalorder %s67, %s81
    %p83 = scmp.eq.s32.totalorder %s15, 0
    %p84 = por %p82, %p83
    %s85 = ssub.s32 %s9, %s16
    %p86 = scmp.eq.s32.totalorder %s85, 0
    %s88 = sadd.s32 %s87, 1
    %s89 = scalar_select %p86, %s87, %s88
    %p92 = pneg %p86
    %p93 = scmp.eq.s32.totalorder %s9, 1
    %p94 = por %p92, %p93
    %p95 = scmp.ne.s32.totalorder %s87, %s90
    %p96 = scmp.eq.s32.totalorder %s9, 0
    %p97 = por %p95, %p96
    %p98 = scmp.ne.s32.totalorder %s87, %s90
    %p99 = scmp.eq.s32.totalorder %s14, 1
    %p100 = por %p98, %p99
    %p101 = scmp.ne.s32.totalorder %s90, %s91
    %p102 = scmp.eq.s32.totalorder %s14, 0
    %p103 = por %p101, %p102
    %p104 = scmp.ne.s32.totalorder %s90, %s91
    %p105 = scmp.eq.s32.totalorder %s15, 1
    %p106 = por %p104, %p105
    %p108 = scmp.ne.s32.totalorder %s91, %s107
    %p109 = scmp.eq.s32.totalorder %s15, 0
    %p110 = por %p108, %p109
    %p111 = scmp.le.s32.totalorder 1, %s9
    %p112 = scmp.lt.s32.totalorder %s9, 3
    %p113 = pnand %p111, %p112
    %p114 = pneg %p113
    // Predicated region
    $region9: #{yolov3_forward.7} parent=5 // pred_check
      _
    $region10: #{yolov3_forward.7} parent=5 // pred_check_branch
      %116 = sbr.rel (%p113) target = $region12
    $region11: #{yolov3_forward.7} parent=5 // pred_region
      %s117 = ssub.s32 %s9, 1
      // Predicated region
      $region13: #{yolov3_forward.7} parent=11 // pred_check
        %p118 = pneg %p56
      $region14: #{yolov3_forward.7} parent=11 // pred_check_branch
        %120 = sbr.rel (%p118) target = $region16
      $region15: #{yolov3_forward.7} parent=11 // pred_region
        _
      $region16: #{yolov3_forward.7} parent=11 // pred_fallthru
        _
      // Predicated region
      $region17: #{yolov3_forward.7} parent=11 // pred_check
        %p121 = pneg %p77
      $region18: #{yolov3_forward.7} parent=11 // pred_check_branch
        %123 = sbr.rel (%p121) target = $region20
      $region19: #{yolov3_forward.7} parent=11 // pred_region
        _
      $region20: #{yolov3_forward.7} parent=11 // pred_fallthru
        _
    $region12: #{yolov3_forward.7} parent=5 // pred_fallthru
      _
    %p124 = scmp.lt.s32.totalorder %s9, 2
    // Predicated region
    $region21: #{yolov3_forward.7} parent=5 // pred_check
      %p125 = pneg %p124
    $region22: #{yolov3_forward.7} parent=5 // pred_check_branch
      %127 = sbr.rel (%p125) target = $region24
    $region23: #{yolov3_forward.7} parent=5 // pred_region
      // Predicated region
      $region25: #{yolov3_forward.7} parent=23 // pred_check
        %p128 = pneg %p29
      $region26: #{yolov3_forward.7} parent=23 // pred_check_branch
        %130 = sbr.rel (%p128) target = $region28
      $region27: #{yolov3_forward.7} parent=23 // pred_region
        %s131 = smul.u32 32, %s9
        %p132 = scmp.lt.s32.totalorder %s131, 63
        %s133 = scalar_select %p132, %s131, 63
        %s134 = smul.addr %s133, 9
        %s135 = smul.addr %s134, 4
        %s136 = scalar_lea.vmem %s0, %s135
        %s137 = smul.u32 32, %s9
      $region28: #{yolov3_forward.7} parent=23 // pred_fallthru
        _
    $region24: #{yolov3_forward.7} parent=5 // pred_fallthru
      _
    %p138 = scmp.le.s32.totalorder 1, %s9
    %p139 = scmp.lt.s32.totalorder %s9, 3
    %p140 = pnand %p138, %p139
    %p141 = pneg %p140
    // Predicated region
    $region29: #{yolov3_forward.7} parent=5 // pred_check
      _
    $region30: #{yolov3_forward.7} parent=5 // pred_check_branch
      %143 = sbr.rel (%p140) target = $region32
    $region31: #{yolov3_forward.7} parent=5 // pred_region
      %s144 = ssub.s32 %s9, 1
      %s145 = smul.u32 32, %s14
      %p146 = scmp.lt.s32.totalorder %s145, 63
      %s147 = scalar_select %p146, %s145, 63
      %s148 = smul.addr %s147, 9
      %s149 = smul.addr %s148, 4
      %s150 = scalar_lea.vmem %s0, %s149
      %p151 = pneg %p35
      %p152 = pneg %p32
      %p153 = pneg %p56
      %p154 = pneg %p53
      %p155 = pneg %p77
      %p156 = pneg %p74
      %p157 = pneg %p103
      %p158 = pneg %p100
      %s159 = smul.u32 32, %s14
      %p160 = scmp.lt.s32.totalorder %s159, 63
      %s161 = scalar_select %p160, %s159, 63
      %s162 = smul.addr %s161, 4
      %s163 = scalar_lea.vmem %s3, %s162
      %s164 = smul.u32 32, %s14
      %p165 = scmp.lt.s32.totalorder %s164, 63
      %s166 = scalar_select %p165, %s164, 63
      %s167 = smul.addr %s166, 9
      %s168 = smul.addr %s167, 4
      %s169 = scalar_lea.vmem %s0, %s168
      %s170 = smul.u32 32, %s14
      %s171 = smul.u32 32, %s14
      %p172 = scmp.lt.s32.totalorder %s171, 63
      %s173 = scalar_select %p172, %s171, 63
      %s174 = smul.addr %s173, 4
      %s175 = scalar_lea.vmem %s3, %s174
      %s176 = smul.u32 32, %s14
      %v178 = vld [vmem:[%s169] sm:$0xff]
      %v179 = vld [vmem:[%s169 + $0x8] sm:$0xff]
      %v180 = vld [vmem:[%s169 + $0x10] sm:$0xff]
      %v181 = vld [vmem:[%s169 + $0x18] sm:$0xff]
      %v182 = vld [vmem:[%s169 + $0x20] sm:$0xf]
      %v183 = vld [vmem:[%s169 + $0x24] sm:$0xff]
      %v184 = vld [vmem:[%s169 + $0x2c] sm:$0xff]
      %v185 = vld [vmem:[%s169 + $0x34] sm:$0xff]
      %v186 = vld [vmem:[%s169 + $0x3c] sm:$0xff]
      %v187 = vld [vmem:[%s169 + $0x44] sm:$0xf]
      %v188 = vld [vmem:[%s169 + $0x48] sm:$0xff]
      %v189 = vld [vmem:[%s169 + $0x50] sm:$0xff]
      %v190 = vld [vmem:[%s169 + $0x58] sm:$0xff]
      %v191 = vld [vmem:[%s169 + $0x60] sm:$0xff]
      %v192 = vld [vmem:[%s169 + $0x68] sm:$0xf]
      %v193 = vld [vmem:[%s169 + $0x6c] sm:$0xff]
      %v194 = vld [vmem:[%s169 + $0x74] sm:$0xff]
      %v195 = vld [vmem:[%s169 + $0x7c] sm:$0xff]
      %v196 = vld [vmem:[%s169 + $0x84] sm:$0xff]
      %v197 = vld [vmem:[%s169 + $0x8c] sm:$0xf]
      %v198 = vld [vmem:[%s169 + $0x90] sm:$0xff]
      %v199 = vld [vmem:[%s169 + $0x98] sm:$0xff]
      %v200 = vld [vmem:[%s169 + $0xa0] sm:$0xff]
      %v201 = vld [vmem:[%s169 + $0xa8] sm:$0xff]
      %v202 = vld [vmem:[%s169 + $0xb0] sm:$0xf]
      %v203 = vld [vmem:[%s169 + $0xb4] sm:$0xff]
      %v204 = vld [vmem:[%s169 + $0xbc] sm:$0xff]
      %v205 = vld [vmem:[%s169 + $0xc4] sm:$0xff]
      %v206 = vld [vmem:[%s169 + $0xcc] sm:$0xff]
      %v207 = vld [vmem:[%s169 + $0xd4] sm:$0xf]
      %v208 = vld [vmem:[%s169 + $0xd8] sm:$0xff]
      %v209 = vld [vmem:[%s169 + $0xe0] sm:$0xff]
      %v210 = vld [vmem:[%s169 + $0xe8] sm:$0xff]
      %v211 = vld [vmem:[%s169 + $0xf0] sm:$0xff]
      %v212 = vld [vmem:[%s169 + $0xf8] sm:$0xf]
      %v213 = vld [vmem:[%s169 + $0xfc] sm:$0xff]
      %v214 = vld [vmem:[%s169 + $0x104] sm:$0xff]
      %v215 = vld [vmem:[%s169 + $0x10c] sm:$0xff]
      %v216 = vld [vmem:[%s169 + $0x114] sm:$0xff]
      %v217 = vld [vmem:[%s169 + $0x11c] sm:$0xf]
      %v218 = vld [vmem:[%s169 + $0x120] sm:$0xff]
      %v219 = vld [vmem:[%s169 + $0x128] sm:$0xff]
      %v220 = vld [vmem:[%s169 + $0x130] sm:$0xff]
      %v221 = vld [vmem:[%s169 + $0x138] sm:$0xff]
      %v222 = vld [vmem:[%s169 + $0x140] sm:$0xf]
      %v223 = vld [vmem:[%s169 + $0x144] sm:$0xff]
      %v224 = vld [vmem:[%s169 + $0x14c] sm:$0xff]
      %v225 = vld [vmem:[%s169 + $0x154] sm:$0xff]
      %v226 = vld [vmem:[%s169 + $0x15c] sm:$0xff]
      %v227 = vld [vmem:[%s169 + $0x164] sm:$0xf]
      %v228 = vld [vmem:[%s169 + $0x168] sm:$0xff]
      %v229 = vld [vmem:[%s169 + $0x170] sm:$0xff]
      %v230 = vld [vmem:[%s169 + $0x178] sm:$0xff]
      %v231 = vld [vmem:[%s169 + $0x180] sm:$0xff]
      %v232 = vld [vmem:[%s169 + $0x188] sm:$0xf]
      %v233 = vld [vmem:[%s169 + $0x18c] sm:$0xff]
      %v234 = vld [vmem:[%s169 + $0x194] sm:$0xff]
      %v235 = vld [vmem:[%s169 + $0x19c] sm:$0xff]
      %v236 = vld [vmem:[%s169 + $0x1a4] sm:$0xff]
      %v237 = vld [vmem:[%s169 + $0x1ac] sm:$0xf]
      %v238 = vld [vmem:[%s169 + $0x1b0] sm:$0xff]
      %v239 = vld [vmem:[%s169 + $0x1b8] sm:$0xff]
      %v240 = vld [vmem:[%s169 + $0x1c0] sm:$0xff]
      %v241 = vld [vmem:[%s169 + $0x1c8] sm:$0xff]
      %v242 = vld [vmem:[%s169 + $0x1d0] sm:$0xf]
      %v243 = vld [vmem:[%s169 + $0x1d4] sm:$0xff]
      %v244 = vld [vmem:[%s169 + $0x1dc] sm:$0xff]
      %v245 = vld [vmem:[%s169 + $0x1e4] sm:$0xff]
      %v246 = vld [vmem:[%s169 + $0x1ec] sm:$0xff]
      %v247 = vld [vmem:[%s169 + $0x1f4] sm:$0xf]
      %v248 = vld [vmem:[%s169 + $0x1f8] sm:$0xff]
      %v249 = vld [vmem:[%s169 + $0x200] sm:$0xff]
      %v250 = vld [vmem:[%s169 + $0x208] sm:$0xff]
      %v251 = vld [vmem:[%s169 + $0x210] sm:$0xff]
      %v252 = vld [vmem:[%s169 + $0x218] sm:$0xf]
      %v253 = vld [vmem:[%s169 + $0x21c] sm:$0xff]
      %v254 = vld [vmem:[%s169 + $0x224] sm:$0xff]
      %v255 = vld [vmem:[%s169 + $0x22c] sm:$0xff]
      %v256 = vld [vmem:[%s169 + $0x234] sm:$0xff]
      %v257 = vld [vmem:[%s169 + $0x23c] sm:$0xf]
      %v258 = vld [vmem:[%s169 + $0x240] sm:$0xff]
      %v259 = vld [vmem:[%s169 + $0x248] sm:$0xff]
      %v260 = vld [vmem:[%s169 + $0x250] sm:$0xff]
      %v261 = vld [vmem:[%s169 + $0x258] sm:$0xff]
      %v262 = vld [vmem:[%s169 + $0x260] sm:$0xf]
      %v263 = vld [vmem:[%s169 + $0x264] sm:$0xff]
      %v264 = vld [vmem:[%s169 + $0x26c] sm:$0xff]
      %v265 = vld [vmem:[%s169 + $0x274] sm:$0xff]
      %v266 = vld [vmem:[%s169 + $0x27c] sm:$0xff]
      %v267 = vld [vmem:[%s169 + $0x284] sm:$0xf]
      %v268 = vld [vmem:[%s169 + $0x288] sm:$0xff]
      %v269 = vld [vmem:[%s169 + $0x290] sm:$0xff]
      %v270 = vld [vmem:[%s169 + $0x298] sm:$0xff]
      %v271 = vld [vmem:[%s169 + $0x2a0] sm:$0xff]
      %v272 = vld [vmem:[%s169 + $0x2a8] sm:$0xf]
      %v273 = vld [vmem:[%s169 + $0x2ac] sm:$0xff]
      %v274 = vld [vmem:[%s169 + $0x2b4] sm:$0xff]
      %v275 = vld [vmem:[%s169 + $0x2bc] sm:$0xff]
      %v276 = vld [vmem:[%s169 + $0x2c4] sm:$0xff]
      %v277 = vld [vmem:[%s169 + $0x2cc] sm:$0xf]
      %v278 = vld [vmem:[%s169 + $0x2d0] sm:$0xff]
      %v279 = vld [vmem:[%s169 + $0x2d8] sm:$0xff]
      %v280 = vld [vmem:[%s169 + $0x2e0] sm:$0xff]
      %v281 = vld [vmem:[%s169 + $0x2e8] sm:$0xff]
      %v282 = vld [vmem:[%s169 + $0x2f0] sm:$0xf]
      %v283 = vld [vmem:[%s169 + $0x2f4] sm:$0xff]
      %v284 = vld [vmem:[%s169 + $0x2fc] sm:$0xff]
      %v285 = vld [vmem:[%s169 + $0x304] sm:$0xff]
      %v286 = vld [vmem:[%s169 + $0x30c] sm:$0xff]
      %v287 = vld [vmem:[%s169 + $0x314] sm:$0xf]
      %v288 = vld [vmem:[%s169 + $0x318] sm:$0xff]
      %v289 = vld [vmem:[%s169 + $0x320] sm:$0xff]
      %v290 = vld [vmem:[%s169 + $0x328] sm:$0xff]
      %v291 = vld [vmem:[%s169 + $0x330] sm:$0xff]
      %v292 = vld [vmem:[%s169 + $0x338] sm:$0xf]
      %v293 = vld [vmem:[%s169 + $0x33c] sm:$0xff]
      %v294 = vld [vmem:[%s169 + $0x344] sm:$0xff]
      %v295 = vld [vmem:[%s169 + $0x34c] sm:$0xff]
      %v296 = vld [vmem:[%s169 + $0x354] sm:$0xff]
      %v297 = vld [vmem:[%s169 + $0x35c] sm:$0xf]
      %v298 = vld [vmem:[%s169 + $0x360] sm:$0xff]
      %v299 = vld [vmem:[%s169 + $0x368] sm:$0xff]
      %v300 = vld [vmem:[%s169 + $0x370] sm:$0xff]
      %v301 = vld [vmem:[%s169 + $0x378] sm:$0xff]
      %v302 = vld [vmem:[%s169 + $0x380] sm:$0xf]
      %v303 = vld [vmem:[%s169 + $0x384] sm:$0xff]
      %v304 = vld [vmem:[%s169 + $0x38c] sm:$0xff]
      %v305 = vld [vmem:[%s169 + $0x394] sm:$0xff]
      %v306 = vld [vmem:[%s169 + $0x39c] sm:$0xff]
      %v307 = vld [vmem:[%s169 + $0x3a4] sm:$0xf]
      %v308 = vld [vmem:[%s169 + $0x3a8] sm:$0xff]
      %v309 = vld [vmem:[%s169 + $0x3b0] sm:$0xff]
      %v310 = vld [vmem:[%s169 + $0x3b8] sm:$0xff]
      %v311 = vld [vmem:[%s169 + $0x3c0] sm:$0xff]
      %v312 = vld [vmem:[%s169 + $0x3c8] sm:$0xf]
      %v313 = vld [vmem:[%s169 + $0x3cc] sm:$0xff]
      %v314 = vld [vmem:[%s169 + $0x3d4] sm:$0xff]
      %v315 = vld [vmem:[%s169 + $0x3dc] sm:$0xff]
      %v316 = vld [vmem:[%s169 + $0x3e4] sm:$0xff]
      %v317 = vld [vmem:[%s169 + $0x3ec] sm:$0xf]
      %v318 = vld [vmem:[%s169 + $0x3f0] sm:$0xff]
      %v319 = vld [vmem:[%s169 + $0x3f8] sm:$0xff]
      %v320 = vld [vmem:[%s169 + $0x400] sm:$0xff]
      %v321 = vld [vmem:[%s169 + $0x408] sm:$0xff]
      %v322 = vld [vmem:[%s169 + $0x410] sm:$0xf]
      %v323 = vld [vmem:[%s169 + $0x414] sm:$0xff]
      %v324 = vld [vmem:[%s169 + $0x41c] sm:$0xff]
      %v325 = vld [vmem:[%s169 + $0x424] sm:$0xff]
      %v326 = vld [vmem:[%s169 + $0x42c] sm:$0xff]
      %v327 = vld [vmem:[%s169 + $0x434] sm:$0xf]
      %v328 = vld [vmem:[%s169 + $0x438] sm:$0xff]
      %v329 = vld [vmem:[%s169 + $0x440] sm:$0xff]
      %v330 = vld [vmem:[%s169 + $0x448] sm:$0xff]
      %v331 = vld [vmem:[%s169 + $0x450] sm:$0xff]
      %v332 = vld [vmem:[%s169 + $0x458] sm:$0xf]
      %v333 = vld [vmem:[%s169 + $0x45c] sm:$0xff]
      %v334 = vld [vmem:[%s169 + $0x464] sm:$0xff]
      %v335 = vld [vmem:[%s169 + $0x46c] sm:$0xff]
      %v336 = vld [vmem:[%s169 + $0x474] sm:$0xff]
      %v337 = vld [vmem:[%s169 + $0x47c] sm:$0xf]
      %v338 = vld [vmem:[%s1] sm:$0xf]
      %v339 = vld [vmem:[%s1 + $0x4] sm:$0xf]
      %v340 = vld [vmem:[%s1 + $0x8] sm:$0xf]
      %v341 = vld [vmem:[%s1 + $0xc] sm:$0xf]
      %v342 = vld [vmem:[%s1 + $0x10] sm:$0xf]
      %v343 = vld [vmem:[%s1 + $0x14] sm:$0xf]
      %v344 = vld [vmem:[%s1 + $0x18] sm:$0xf]
      %v345 = vld [vmem:[%s1 + $0x1c] sm:$0xf]
      %v346 = vld [vmem:[%s1 + $0x20] sm:$0xf]
      %v347 = vld [vmem:[%s1 + $0x24] sm:$0xf]
      %v348 = vld [vmem:[%s1 + $0x28] sm:$0xf]
      %v349 = vld [vmem:[%s1 + $0x2c] sm:$0xf]
      %v350 = vld [vmem:[%s1 + $0x30] sm:$0xf]
      %v351 = vld [vmem:[%s1 + $0x34] sm:$0xf]
      %v352 = vld [vmem:[%s1 + $0x38] sm:$0xf]
      %v353 = vld [vmem:[%s1 + $0x3c] sm:$0xf]
      %v354 = vld [vmem:[%s1 + $0x40] sm:$0xf]
      %v355 = vld [vmem:[%s1 + $0x44] sm:$0xf]
      %v356 = vld [vmem:[%s1 + $0x48] sm:$0xf]
      %v357 = vld [vmem:[%s1 + $0x4c] sm:$0xf]
      %v358 = vld [vmem:[%s1 + $0x50] sm:$0xf]
      %v359 = vld [vmem:[%s1 + $0x54] sm:$0xf]
      %v360 = vld [vmem:[%s1 + $0x58] sm:$0xf]
      %v361 = vld [vmem:[%s1 + $0x5c] sm:$0xf]
      %v362 = vld [vmem:[%s1 + $0x60] sm:$0xf]
      %v363 = vld [vmem:[%s1 + $0x64] sm:$0xf]
      %v364 = vld [vmem:[%s1 + $0x68] sm:$0xf]
      %v365 = vld [vmem:[%s1 + $0x6c] sm:$0xf]
      %v366 = vld [vmem:[%s1 + $0x70] sm:$0xf]
      %v367 = vld [vmem:[%s1 + $0x74] sm:$0xf]
      %v368 = vld [vmem:[%s1 + $0x78] sm:$0xf]
      %v369 = vld [vmem:[%s1 + $0x7c] sm:$0xf]
      %v370 = vld [vmem:[%s1 + $0x80] sm:$0xf]
      %v371 = vld [vmem:[%s1 + $0x84] sm:$0xf]
      %v372 = vld [vmem:[%s1 + $0x88] sm:$0xf]
      %v373 = vld [vmem:[%s1 + $0x8c] sm:$0xf]
      %v374 = vld [vmem:[%s1 + $0x90] sm:$0xf]
      %v375 = vld [vmem:[%s1 + $0x94] sm:$0xf]
      %v376 = vld [vmem:[%s1 + $0x98] sm:$0xf]
      %v377 = vld [vmem:[%s1 + $0x9c] sm:$0xf]
      %v378 = vld [vmem:[%s1 + $0xa0] sm:$0xf]
      %v379 = vld [vmem:[%s1 + $0xa4] sm:$0xf]
      %v380 = vld [vmem:[%s1 + $0xa8] sm:$0xf]
      %v381 = vld [vmem:[%s1 + $0xac] sm:$0xf]
      %v382 = vld [vmem:[%s1 + $0xb0] sm:$0xf]
      %v383 = vld [vmem:[%s1 + $0xb4] sm:$0xf]
      %v384 = vld [vmem:[%s1 + $0xb8] sm:$0xf]
      %v385 = vld [vmem:[%s1 + $0xbc] sm:$0xf]
      %v386 = vld [vmem:[%s1 + $0xc0] sm:$0xf]
      %v387 = vld [vmem:[%s1 + $0xc4] sm:$0xf]
      %v388 = vld [vmem:[%s1 + $0xc8] sm:$0xf]
      %v389 = vld [vmem:[%s1 + $0xcc] sm:$0xf]
      %v390 = vld [vmem:[%s1 + $0xd0] sm:$0xf]
      %v391 = vld [vmem:[%s1 + $0xd4] sm:$0xf]
      %v392 = vld [vmem:[%s1 + $0xd8] sm:$0xf]
      %v393 = vld [vmem:[%s1 + $0xdc] sm:$0xf]
      %v394 = vld [vmem:[%s1 + $0xe0] sm:$0xf]
      %v395 = vld [vmem:[%s1 + $0xe4] sm:$0xf]
      %v396 = vld [vmem:[%s1 + $0xe8] sm:$0xf]
      %v397 = vld [vmem:[%s1 + $0xec] sm:$0xf]
      %v398 = vld [vmem:[%s1 + $0xf0] sm:$0xf]
      %v399 = vld [vmem:[%s1 + $0xf4] sm:$0xf]
      %v400 = vld [vmem:[%s1 + $0xf8] sm:$0xf]
      %v401 = vld [vmem:[%s1 + $0xfc] sm:$0xf]
      %v402 = vld [vmem:[%s1 + $0x100] sm:$0xf]
      %v403 = vld [vmem:[%s1 + $0x104] sm:$0xf]
      %v404 = vld [vmem:[%s1 + $0x108] sm:$0xf]
      %v405 = vld [vmem:[%s1 + $0x10c] sm:$0xf]
      %v406 = vld [vmem:[%s1 + $0x110] sm:$0xf]
      %v407 = vld [vmem:[%s1 + $0x114] sm:$0xf]
      %v408 = vld [vmem:[%s1 + $0x118] sm:$0xf]
      %v409 = vld [vmem:[%s1 + $0x11c] sm:$0xf]
      %v410 = vld [vmem:[%s1 + $0x120] sm:$0xf]
      %v411 = vld [vmem:[%s1 + $0x124] sm:$0xf]
      %v412 = vld [vmem:[%s1 + $0x128] sm:$0xf]
      %v413 = vld [vmem:[%s1 + $0x12c] sm:$0xf]
      %v414 = vld [vmem:[%s1 + $0x130] sm:$0xf]
      %v415 = vld [vmem:[%s1 + $0x134] sm:$0xf]
      %v416 = vld [vmem:[%s1 + $0x138] sm:$0xf]
      %v417 = vld [vmem:[%s1 + $0x13c] sm:$0xf]
      %v418 = vld [vmem:[%s1 + $0x140] sm:$0xf]
      %v419 = vld [vmem:[%s1 + $0x144] sm:$0xf]
      %v420 = vld [vmem:[%s1 + $0x148] sm:$0xf]
      %v421 = vld [vmem:[%s1 + $0x14c] sm:$0xf]
      %v422 = vld [vmem:[%s1 + $0x150] sm:$0xf]
      %v423 = vld [vmem:[%s1 + $0x154] sm:$0xf]
      %v424 = vld [vmem:[%s1 + $0x158] sm:$0xf]
      %v425 = vld [vmem:[%s1 + $0x15c] sm:$0xf]
      %v426 = vld [vmem:[%s1 + $0x160] sm:$0xf]
      %v427 = vld [vmem:[%s1 + $0x164] sm:$0xf]
      %v428 = vld [vmem:[%s1 + $0x168] sm:$0xf]
      %v429 = vld [vmem:[%s1 + $0x16c] sm:$0xf]
      %v430 = vld [vmem:[%s1 + $0x170] sm:$0xf]
      %v431 = vld [vmem:[%s1 + $0x174] sm:$0xf]
      %v432 = vld [vmem:[%s1 + $0x178] sm:$0xf]
      %v433 = vld [vmem:[%s1 + $0x17c] sm:$0xf]
      %v434 = vld [vmem:[%s1 + $0x180] sm:$0xf]
      %v435 = vld [vmem:[%s1 + $0x184] sm:$0xf]
      %v436 = vld [vmem:[%s1 + $0x188] sm:$0xf]
      %v437 = vld [vmem:[%s1 + $0x18c] sm:$0xf]
      %v438 = vld [vmem:[%s1 + $0x190] sm:$0xf]
      %v439 = vld [vmem:[%s1 + $0x194] sm:$0xf]
      %v440 = vld [vmem:[%s1 + $0x198] sm:$0xf]
      %v441 = vld [vmem:[%s1 + $0x19c] sm:$0xf]
      %v442 = vld [vmem:[%s1 + $0x1a0] sm:$0xf]
      %v443 = vld [vmem:[%s1 + $0x1a4] sm:$0xf]
      %v444 = vld [vmem:[%s1 + $0x1a8] sm:$0xf]
      %v445 = vld [vmem:[%s1 + $0x1ac] sm:$0xf]
      %v446 = vld [vmem:[%s1 + $0x1b0] sm:$0xf]
      %v447 = vld [vmem:[%s1 + $0x1b4] sm:$0xf]
      %v448 = vld [vmem:[%s1 + $0x1b8] sm:$0xf]
      %v449 = vld [vmem:[%s1 + $0x1bc] sm:$0xf]
      %v450 = vld [vmem:[%s1 + $0x1c0] sm:$0xf]
      %v451 = vld [vmem:[%s1 + $0x1c4] sm:$0xf]
      %v452 = vld [vmem:[%s1 + $0x1c8] sm:$0xf]
      %v453 = vld [vmem:[%s1 + $0x1cc] sm:$0xf]
      %v454 = vld [vmem:[%s1 + $0x1d0] sm:$0xf]
      %v455 = vld [vmem:[%s1 + $0x1d4] sm:$0xf]
      %v456 = vld [vmem:[%s1 + $0x1d8] sm:$0xf]
      %v457 = vld [vmem:[%s1 + $0x1dc] sm:$0xf]
      %v458 = vld [vmem:[%s1 + $0x1e0] sm:$0xf]
      %v459 = vld [vmem:[%s1 + $0x1e4] sm:$0xf]
      %v460 = vld [vmem:[%s1 + $0x1e8] sm:$0xf]
      %v461 = vld [vmem:[%s1 + $0x1ec] sm:$0xf]
      %v462 = vld [vmem:[%s1 + $0x1f0] sm:$0xf]
      %v463 = vld [vmem:[%s1 + $0x1f4] sm:$0xf]
      %v464 = vld [vmem:[%s1 + $0x1f8] sm:$0xf]
      %v465 = vld [vmem:[%s1 + $0x1fc] sm:$0xf]
      %v466 = vld [vmem:[%s1 + $0x200] sm:$0xf]
      %v467 = vld [vmem:[%s1 + $0x204] sm:$0xf]
      %v468 = vld [vmem:[%s1 + $0x208] sm:$0xf]
      %v469 = vld [vmem:[%s1 + $0x20c] sm:$0xf]
      %v470 = vld [vmem:[%s1 + $0x210] sm:$0xf]
      %v471 = vld [vmem:[%s1 + $0x214] sm:$0xf]
      %v472 = vld [vmem:[%s1 + $0x218] sm:$0xf]
      %v473 = vld [vmem:[%s1 + $0x21c] sm:$0xf]
      %v474 = vld [vmem:[%s1 + $0x220] sm:$0xf]
      %v475 = vld [vmem:[%s1 + $0x224] sm:$0xf]
      %v476 = vld [vmem:[%s1 + $0x228] sm:$0xf]
      %v477 = vld [vmem:[%s1 + $0x22c] sm:$0xf]
      %v478 = vld [vmem:[%s1 + $0x230] sm:$0xf]
      %v479 = vld [vmem:[%s1 + $0x234] sm:$0xf]
      %v480 = vld [vmem:[%s1 + $0x238] sm:$0xf]
      %v481 = vld [vmem:[%s1 + $0x23c] sm:$0xf]
      %v482 = vld [vmem:[%s2] sm:$0x1]
      %v484 = vlaneseq
      %v485 = vshrl.u32 %v484, 7
      %v486 = vsub.s32 0, %v485
      %v487 = vrot.slane %v482, %v486
      %v649 = vunpack.c.l.b16 %v178
      %v650 = vunpack.c.h.b16 %v178
      %v651 = vunpack.c.l.b16 %v179
      %v652 = vunpack.c.h.b16 %v179
      %v653 = vunpack.c.l.b16 %v180
      %v654 = vunpack.c.h.b16 %v180
      %v655 = vunpack.c.l.b16 %v181
      %v656 = vunpack.c.h.b16 %v181
      %v657 = vunpack.c.l.b16 %v182
      %v658 = vunpack.c.l.b16 %v183
      %v659 = vunpack.c.h.b16 %v183
      %v660 = vunpack.c.l.b16 %v184
      %v661 = vunpack.c.h.b16 %v184
      %v662 = vunpack.c.l.b16 %v185
      %v663 = vunpack.c.h.b16 %v185
      %v664 = vunpack.c.l.b16 %v186
      %v665 = vunpack.c.h.b16 %v186
      %v666 = vunpack.c.l.b16 %v187
      %v667 = vunpack.c.l.b16 %v188
      %v668 = vunpack.c.h.b16 %v188
      %v669 = vunpack.c.l.b16 %v189
      %v670 = vunpack.c.h.b16 %v189
      %v671 = vunpack.c.l.b16 %v190
      %v672 = vunpack.c.h.b16 %v190
      %v673 = vunpack.c.l.b16 %v191
      %v674 = vunpack.c.h.b16 %v191
      %v675 = vunpack.c.l.b16 %v192
      %v676 = vunpack.c.l.b16 %v193
      %v677 = vunpack.c.h.b16 %v193
      %v678 = vunpack.c.l.b16 %v194
      %v679 = vunpack.c.h.b16 %v194
      %v680 = vunpack.c.l.b16 %v195
      %v681 = vunpack.c.h.b16 %v195
      %v682 = vunpack.c.l.b16 %v196
      %v683 = vunpack.c.h.b16 %v196
      %v684 = vunpack.c.l.b16 %v197
      %v685 = vunpack.c.l.b16 %v198
      %v686 = vunpack.c.h.b16 %v198
      %v687 = vunpack.c.l.b16 %v199
      %v688 = vunpack.c.h.b16 %v199
      %v689 = vunpack.c.l.b16 %v200
      %v690 = vunpack.c.h.b16 %v200
      %v691 = vunpack.c.l.b16 %v201
      %v692 = vunpack.c.h.b16 %v201
      %v693 = vunpack.c.l.b16 %v202
      %v694 = vunpack.c.l.b16 %v203
      %v695 = vunpack.c.h.b16 %v203
      %v696 = vunpack.c.l.b16 %v204
      %v697 = vunpack.c.h.b16 %v204
      %v698 = vunpack.c.l.b16 %v205
      %v699 = vunpack.c.h.b16 %v205
      %v700 = vunpack.c.l.b16 %v206
      %v701 = vunpack.c.h.b16 %v206
      %v702 = vunpack.c.l.b16 %v207
      %v703 = vunpack.c.l.b16 %v208
      %v704 = vunpack.c.h.b16 %v208
      %v705 = vunpack.c.l.b16 %v209
      %v706 = vunpack.c.h.b16 %v209
      %v707 = vunpack.c.l.b16 %v210
      %v708 = vunpack.c.h.b16 %v210
      %v709 = vunpack.c.l.b16 %v211
      %v710 = vunpack.c.h.b16 %v211
      %v711 = vunpack.c.l.b16 %v212
      %v712 = vunpack.c.l.b16 %v213
      %v713 = vunpack.c.h.b16 %v213
      %v714 = vunpack.c.l.b16 %v214
      %v715 = vunpack.c.h.b16 %v214
      %v716 = vunpack.c.l.b16 %v215
      %v717 = vunpack.c.h.b16 %v215
      %v718 = vunpack.c.l.b16 %v216
      %v719 = vunpack.c.h.b16 %v216
      %v720 = vunpack.c.l.b16 %v217
      %v721 = vunpack.c.l.b16 %v218
      %v722 = vunpack.c.h.b16 %v218
      %v723 = vunpack.c.l.b16 %v219
      %v724 = vunpack.c.h.b16 %v219
      %v725 = vunpack.c.l.b16 %v220
      %v726 = vunpack.c.h.b16 %v220
      %v727 = vunpack.c.l.b16 %v221
      %v728 = vunpack.c.h.b16 %v221
      %v729 = vunpack.c.l.b16 %v222
      %v730 = vunpack.c.l.b16 %v223
      %v731 = vunpack.c.h.b16 %v223
      %v732 = vunpack.c.l.b16 %v224
      %v733 = vunpack.c.h.b16 %v224
      %v734 = vunpack.c.l.b16 %v225
      %v735 = vunpack.c.h.b16 %v225
      %v736 = vunpack.c.l.b16 %v226
      %v737 = vunpack.c.h.b16 %v226
      %v738 = vunpack.c.l.b16 %v227
      %v739 = vunpack.c.l.b16 %v228
      %v740 = vunpack.c.h.b16 %v228
      %v741 = vunpack.c.l.b16 %v229
      %v742 = vunpack.c.h.b16 %v229
      %v743 = vunpack.c.l.b16 %v230
      %v744 = vunpack.c.h.b16 %v230
      %v745 = vunpack.c.l.b16 %v231
      %v746 = vunpack.c.h.b16 %v231
      %v747 = vunpack.c.l.b16 %v232
      %v748 = vunpack.c.l.b16 %v233
      %v749 = vunpack.c.h.b16 %v233
      %v750 = vunpack.c.l.b16 %v234
      %v751 = vunpack.c.h.b16 %v234
      %v752 = vunpack.c.l.b16 %v235
      %v753 = vunpack.c.h.b16 %v235
      %v754 = vunpack.c.l.b16 %v236
      %v755 = vunpack.c.h.b16 %v236
      %v756 = vunpack.c.l.b16 %v237
      %v757 = vunpack.c.l.b16 %v238
      %v758 = vunpack.c.h.b16 %v238
      %v759 = vunpack.c.l.b16 %v239
      %v760 = vunpack.c.h.b16 %v239
      %v761 = vunpack.c.l.b16 %v240
      %v762 = vunpack.c.h.b16 %v240
      %v763 = vunpack.c.l.b16 %v241
      %v764 = vunpack.c.h.b16 %v241
      %v765 = vunpack.c.l.b16 %v242
      %v766 = vunpack.c.l.b16 %v243
      %v767 = vunpack.c.h.b16 %v243
      %v768 = vunpack.c.l.b16 %v244
      %v769 = vunpack.c.h.b16 %v244
      %v770 = vunpack.c.l.b16 %v245
      %v771 = vunpack.c.h.b16 %v245
      %v772 = vunpack.c.l.b16 %v246
      %v773 = vunpack.c.h.b16 %v246
      %v774 = vunpack.c.l.b16 %v247
      %v775 = vunpack.c.l.b16 %v248
      %v776 = vunpack.c.h.b16 %v248
      %v777 = vunpack.c.l.b16 %v249
      %v778 = vunpack.c.h.b16 %v249
      %v779 = vunpack.c.l.b16 %v250
      %v780 = vunpack.c.h.b16 %v250
      %v781 = vunpack.c.l.b16 %v251
      %v782 = vunpack.c.h.b16 %v251
      %v783 = vunpack.c.l.b16 %v252
      %v784 = vunpack.c.l.b16 %v253
      %v785 = vunpack.c.h.b16 %v253
      %v786 = vunpack.c.l.b16 %v254
      %v787 = vunpack.c.h.b16 %v254
      %v788 = vunpack.c.l.b16 %v255
      %v789 = vunpack.c.h.b16 %v255
      %v790 = vunpack.c.l.b16 %v256
      %v791 = vunpack.c.h.b16 %v256
      %v792 = vunpack.c.l.b16 %v257
      %v793 = vunpack.c.l.b16 %v258
      %v794 = vunpack.c.h.b16 %v258
      %v795 = vunpack.c.l.b16 %v259
      %v796 = vunpack.c.h.b16 %v259
      %v797 = vunpack.c.l.b16 %v260
      %v798 = vunpack.c.h.b16 %v260
      %v799 = vunpack.c.l.b16 %v261
      %v800 = vunpack.c.h.b16 %v261
      %v801 = vunpack.c.l.b16 %v262
      %v802 = vunpack.c.l.b16 %v263
      %v803 = vunpack.c.h.b16 %v263
      %v804 = vunpack.c.l.b16 %v264
      %v805 = vunpack.c.h.b16 %v264
      %v806 = vunpack.c.l.b16 %v265
      %v807 = vunpack.c.h.b16 %v265
      %v808 = vunpack.c.l.b16 %v266
      %v809 = vunpack.c.h.b16 %v266
      %v810 = vunpack.c.l.b16 %v267
      %v811 = vunpack.c.l.b16 %v268
      %v812 = vunpack.c.h.b16 %v268
      %v813 = vunpack.c.l.b16 %v269
      %v814 = vunpack.c.h.b16 %v269
      %v815 = vunpack.c.l.b16 %v270
      %v816 = vunpack.c.h.b16 %v270
      %v817 = vunpack.c.l.b16 %v271
      %v818 = vunpack.c.h.b16 %v271
      %v819 = vunpack.c.l.b16 %v272
      %v820 = vunpack.c.l.b16 %v273
      %v821 = vunpack.c.h.b16 %v273
      %v822 = vunpack.c.l.b16 %v274
      %v823 = vunpack.c.h.b16 %v274
      %v824 = vunpack.c.l.b16 %v275
      %v825 = vunpack.c.h.b16 %v275
      %v826 = vunpack.c.l.b16 %v276
      %v827 = vunpack.c.h.b16 %v276
      %v828 = vunpack.c.l.b16 %v277
      %v829 = vunpack.c.l.b16 %v278
      %v830 = vunpack.c.h.b16 %v278
      %v831 = vunpack.c.l.b16 %v279
      %v832 = vunpack.c.h.b16 %v279
      %v833 = vunpack.c.l.b16 %v280
      %v834 = vunpack.c.h.b16 %v280
      %v835 = vunpack.c.l.b16 %v281
      %v836 = vunpack.c.h.b16 %v281
      %v837 = vunpack.c.l.b16 %v282
      %v838 = vunpack.c.l.b16 %v283
      %v839 = vunpack.c.h.b16 %v283
      %v840 = vunpack.c.l.b16 %v284
      %v841 = vunpack.c.h.b16 %v284
      %v842 = vunpack.c.l.b16 %v285
      %v843 = vunpack.c.h.b16 %v285
      %v844 = vunpack.c.l.b16 %v286
      %v845 = vunpack.c.h.b16 %v286
      %v846 = vunpack.c.l.b16 %v287
      %v847 = vunpack.c.l.b16 %v288
      %v848 = vunpack.c.h.b16 %v288
      %v849 = vunpack.c.l.b16 %v289
      %v850 = vunpack.c.h.b16 %v289
      %v851 = vunpack.c.l.b16 %v290
      %v852 = vunpack.c.h.b16 %v290
      %v853 = vunpack.c.l.b16 %v291
      %v854 = vunpack.c.h.b16 %v291
      %v855 = vunpack.c.l.b16 %v292
      %v856 = vunpack.c.l.b16 %v293
      %v857 = vunpack.c.h.b16 %v293
      %v858 = vunpack.c.l.b16 %v294
      %v859 = vunpack.c.h.b16 %v294
      %v860 = vunpack.c.l.b16 %v295
      %v861 = vunpack.c.h.b16 %v295
      %v862 = vunpack.c.l.b16 %v296
      %v863 = vunpack.c.h.b16 %v296
      %v864 = vunpack.c.l.b16 %v297
      %v865 = vunpack.c.l.b16 %v298
      %v866 = vunpack.c.h.b16 %v298
      %v867 = vunpack.c.l.b16 %v299
      %v868 = vunpack.c.h.b16 %v299
      %v869 = vunpack.c.l.b16 %v300
      %v870 = vunpack.c.h.b16 %v300
      %v871 = vunpack.c.l.b16 %v301
      %v872 = vunpack.c.h.b16 %v301
      %v873 = vunpack.c.l.b16 %v302
      %v874 = vunpack.c.l.b16 %v303
      %v875 = vunpack.c.h.b16 %v303
      %v876 = vunpack.c.l.b16 %v304
      %v877 = vunpack.c.h.b16 %v304
      %v878 = vunpack.c.l.b16 %v305
      %v879 = vunpack.c.h.b16 %v305
      %v880 = vunpack.c.l.b16 %v306
      %v881 = vunpack.c.h.b16 %v306
      %v882 = vunpack.c.l.b16 %v307
      %v883 = vunpack.c.l.b16 %v308
      %v884 = vunpack.c.h.b16 %v308
      %v885 = vunpack.c.l.b16 %v309
      %v886 = vunpack.c.h.b16 %v309
      %v887 = vunpack.c.l.b16 %v310
      %v888 = vunpack.c.h.b16 %v310
      %v889 = vunpack.c.l.b16 %v311
      %v890 = vunpack.c.h.b16 %v311
      %v891 = vunpack.c.l.b16 %v312
      %v892 = vunpack.c.l.b16 %v313
      %v893 = vunpack.c.h.b16 %v313
      %v894 = vunpack.c.l.b16 %v314
      %v895 = vunpack.c.h.b16 %v314
      %v896 = vunpack.c.l.b16 %v315
      %v897 = vunpack.c.h.b16 %v315
      %v898 = vunpack.c.l.b16 %v316
      %v899 = vunpack.c.h.b16 %v316
      %v900 = vunpack.c.l.b16 %v317
      %v901 = vunpack.c.l.b16 %v318
      %v902 = vunpack.c.h.b16 %v318
      %v903 = vunpack.c.l.b16 %v319
      %v904 = vunpack.c.h.b16 %v319
      %v905 = vunpack.c.l.b16 %v320
      %v906 = vunpack.c.h.b16 %v320
      %v907 = vunpack.c.l.b16 %v321
      %v908 = vunpack.c.h.b16 %v321
      %v909 = vunpack.c.l.b16 %v322
      %v910 = vunpack.c.l.b16 %v323
      %v911 = vunpack.c.h.b16 %v323
      %v912 = vunpack.c.l.b16 %v324
      %v913 = vunpack.c.h.b16 %v324
      %v914 = vunpack.c.l.b16 %v325
      %v915 = vunpack.c.h.b16 %v325
      %v916 = vunpack.c.l.b16 %v326
      %v917 = vunpack.c.h.b16 %v326
      %v918 = vunpack.c.l.b16 %v327
      %v919 = vunpack.c.l.b16 %v328
      %v920 = vunpack.c.h.b16 %v328
      %v921 = vunpack.c.l.b16 %v329
      %v922 = vunpack.c.h.b16 %v329
      %v923 = vunpack.c.l.b16 %v330
      %v924 = vunpack.c.h.b16 %v330
      %v925 = vunpack.c.l.b16 %v331
      %v926 = vunpack.c.h.b16 %v331
      %v927 = vunpack.c.l.b16 %v332
      %v928 = vunpack.c.l.b16 %v333
      %v929 = vunpack.c.h.b16 %v333
      %v930 = vunpack.c.l.b16 %v334
      %v931 = vunpack.c.h.b16 %v334
      %v932 = vunpack.c.l.b16 %v335
      %v933 = vunpack.c.h.b16 %v335
      %v934 = vunpack.c.l.b16 %v336
      %v935 = vunpack.c.h.b16 %v336
      %v936 = vunpack.c.l.b16 %v337
      %v937 = vpack.c.b16 %v658, %v649
      %v938 = vpack.c.b16 %v659, %v650
      %v939 = vpack.c.b16 %v660, %v651
      %v940 = vpack.c.b16 %v661, %v652
      %v941 = vpack.c.b16 %v662, %v653
      %v942 = vpack.c.b16 %v663, %v654
      %v943 = vpack.c.b16 %v664, %v655
      %v944 = vpack.c.b16 %v665, %v656
      %v945 = vpack.c.b16 %v666, %v657
      %v946 = vpack.c.b16 %v676, %v667
      %v947 = vpack.c.b16 %v677, %v668
      %v948 = vpack.c.b16 %v678, %v669
      %v949 = vpack.c.b16 %v679, %v670
      %v950 = vpack.c.b16 %v680, %v671
      %v951 = vpack.c.b16 %v681, %v672
      %v952 = vpack.c.b16 %v682, %v673
      %v953 = vpack.c.b16 %v683, %v674
      %v954 = vpack.c.b16 %v684, %v675
      %v955 = vpack.c.b16 %v694, %v685
      %v956 = vpack.c.b16 %v695, %v686
      %v957 = vpack.c.b16 %v696, %v687
      %v958 = vpack.c.b16 %v697, %v688
      %v959 = vpack.c.b16 %v698, %v689
      %v960 = vpack.c.b16 %v699, %v690
      %v961 = vpack.c.b16 %v700, %v691
      %v962 = vpack.c.b16 %v701, %v692
      %v963 = vpack.c.b16 %v702, %v693
      %v964 = vpack.c.b16 %v712, %v703
      %v965 = vpack.c.b16 %v713, %v704
      %v966 = vpack.c.b16 %v714, %v705
      %v967 = vpack.c.b16 %v715, %v706
      %v968 = vpack.c.b16 %v716, %v707
      %v969 = vpack.c.b16 %v717, %v708
      %v970 = vpack.c.b16 %v718, %v709
      %v971 = vpack.c.b16 %v719, %v710
      %v972 = vpack.c.b16 %v720, %v711
      %v973 = vpack.c.b16 %v730, %v721
      %v974 = vpack.c.b16 %v731, %v722
      %v975 = vpack.c.b16 %v732, %v723
      %v976 = vpack.c.b16 %v733, %v724
      %v977 = vpack.c.b16 %v734, %v725
      %v978 = vpack.c.b16 %v735, %v726
      %v979 = vpack.c.b16 %v736, %v727
      %v980 = vpack.c.b16 %v737, %v728
      %v981 = vpack.c.b16 %v738, %v729
      %v982 = vpack.c.b16 %v748, %v739
      %v983 = vpack.c.b16 %v749, %v740
      %v984 = vpack.c.b16 %v750, %v741
      %v985 = vpack.c.b16 %v751, %v742
      %v986 = vpack.c.b16 %v752, %v743
      %v987 = vpack.c.b16 %v753, %v744
      %v988 = vpack.c.b16 %v754, %v745
      %v989 = vpack.c.b16 %v755, %v746
      %v990 = vpack.c.b16 %v756, %v747
      %v991 = vpack.c.b16 %v766, %v757
      %v992 = vpack.c.b16 %v767, %v758
      %v993 = vpack.c.b16 %v768, %v759
      %v994 = vpack.c.b16 %v769, %v760
      %v995 = vpack.c.b16 %v770, %v761
      %v996 = vpack.c.b16 %v771, %v762
      %v997 = vpack.c.b16 %v772, %v763
      %v998 = vpack.c.b16 %v773, %v764
      %v999 = vpack.c.b16 %v774, %v765
      %v1000 = vpack.c.b16 %v784, %v775
      %v1001 = vpack.c.b16 %v785, %v776
      %v1002 = vpack.c.b16 %v786, %v777
      %v1003 = vpack.c.b16 %v787, %v778
      %v1004 = vpack.c.b16 %v788, %v779
      %v1005 = vpack.c.b16 %v789, %v780
      %v1006 = vpack.c.b16 %v790, %v781
      %v1007 = vpack.c.b16 %v791, %v782
      %v1008 = vpack.c.b16 %v792, %v783
      %v1009 = vpack.c.b16 %v802, %v793
      %v1010 = vpack.c.b16 %v803, %v794
      %v1011 = vpack.c.b16 %v804, %v795
      %v1012 = vpack.c.b16 %v805, %v796
      %v1013 = vpack.c.b16 %v806, %v797
      %v1014 = vpack.c.b16 %v807, %v798
      %v1015 = vpack.c.b16 %v808, %v799
      %v1016 = vpack.c.b16 %v809, %v800
      %v1017 = vpack.c.b16 %v810, %v801
      %v1018 = vpack.c.b16 %v820, %v811
      %v1019 = vpack.c.b16 %v821, %v812
      %v1020 = vpack.c.b16 %v822, %v813
      %v1021 = vpack.c.b16 %v823, %v814
      %v1022 = vpack.c.b16 %v824, %v815
      %v1023 = vpack.c.b16 %v825, %v816
      %v1024 = vpack.c.b16 %v826, %v817
      %v1025 = vpack.c.b16 %v827, %v818
      %v1026 = vpack.c.b16 %v828, %v819
      %v1027 = vpack.c.b16 %v838, %v829
      %v1028 = vpack.c.b16 %v839, %v830
      %v1029 = vpack.c.b16 %v840, %v831
      %v1030 = vpack.c.b16 %v841, %v832
      %v1031 = vpack.c.b16 %v842, %v833
      %v1032 = vpack.c.b16 %v843, %v834
      %v1033 = vpack.c.b16 %v844, %v835
      %v1034 = vpack.c.b16 %v845, %v836
      %v1035 = vpack.c.b16 %v846, %v837
      %v1036 = vpack.c.b16 %v856, %v847
      %v1037 = vpack.c.b16 %v857, %v848
      %v1038 = vpack.c.b16 %v858, %v849
      %v1039 = vpack.c.b16 %v859, %v850
      %v1040 = vpack.c.b16 %v860, %v851
      %v1041 = vpack.c.b16 %v861, %v852
      %v1042 = vpack.c.b16 %v862, %v853
      %v1043 = vpack.c.b16 %v863, %v854
      %v1044 = vpack.c.b16 %v864, %v855
      %v1045 = vpack.c.b16 %v874, %v865
      %v1046 = vpack.c.b16 %v875, %v866
      %v1047 = vpack.c.b16 %v876, %v867
      %v1048 = vpack.c.b16 %v877, %v868
      %v1049 = vpack.c.b16 %v878, %v869
      %v1050 = vpack.c.b16 %v879, %v870
      %v1051 = vpack.c.b16 %v880, %v871
      %v1052 = vpack.c.b16 %v881, %v872
      %v1053 = vpack.c.b16 %v882, %v873
      %v1054 = vpack.c.b16 %v892, %v883
      %v1055 = vpack.c.b16 %v893, %v884
      %v1056 = vpack.c.b16 %v894, %v885
      %v1057 = vpack.c.b16 %v895, %v886
      %v1058 = vpack.c.b16 %v896, %v887
      %v1059 = vpack.c.b16 %v897, %v888
      %v1060 = vpack.c.b16 %v898, %v889
      %v1061 = vpack.c.b16 %v899, %v890
      %v1062 = vpack.c.b16 %v900, %v891
      %v1063 = vpack.c.b16 %v910, %v901
      %v1064 = vpack.c.b16 %v911, %v902
      %v1065 = vpack.c.b16 %v912, %v903
      %v1066 = vpack.c.b16 %v913, %v904
      %v1067 = vpack.c.b16 %v914, %v905
      %v1068 = vpack.c.b16 %v915, %v906
      %v1069 = vpack.c.b16 %v916, %v907
      %v1070 = vpack.c.b16 %v917, %v908
      %v1071 = vpack.c.b16 %v918, %v909
      %v1072 = vpack.c.b16 %v928, %v919
      %v1073 = vpack.c.b16 %v929, %v920
      %v1074 = vpack.c.b16 %v930, %v921
      %v1075 = vpack.c.b16 %v931, %v922
      %v1076 = vpack.c.b16 %v932, %v923
      %v1077 = vpack.c.b16 %v933, %v924
      %v1078 = vpack.c.b16 %v934, %v925
      %v1079 = vpack.c.b16 %v935, %v926
      %v1080 = vpack.c.b16 %v936, %v927
      %v1369 = vunpack.c.l.b16 %v338
      %v1370 = vunpack.c.l.b16 %v339
      %v1371 = vunpack.c.l.b16 %v340
      %v1372 = vunpack.c.l.b16 %v341
      %v1373 = vunpack.c.l.b16 %v342
      %v1374 = vunpack.c.l.b16 %v343
      %v1375 = vunpack.c.l.b16 %v344
      %v1376 = vunpack.c.l.b16 %v345
      %v1377 = vunpack.c.l.b16 %v346
      %v1378 = vunpack.c.l.b16 %v347
      %v1379 = vunpack.c.l.b16 %v348
      %v1380 = vunpack.c.l.b16 %v349
      %v1381 = vunpack.c.l.b16 %v350
      %v1382 = vunpack.c.l.b16 %v351
      %v1383 = vunpack.c.l.b16 %v352
      %v1384 = vunpack.c.l.b16 %v353
      %v1385 = vunpack.c.l.b16 %v354
      %v1386 = vunpack.c.l.b16 %v355
      %v1387 = vunpack.c.l.b16 %v356
      %v1388 = vunpack.c.l.b16 %v357
      %v1389 = vunpack.c.l.b16 %v358
      %v1390 = vunpack.c.l.b16 %v359
      %v1391 = vunpack.c.l.b16 %v360
      %v1392 = vunpack.c.l.b16 %v361
      %v1393 = vunpack.c.l.b16 %v362
      %v1394 = vunpack.c.l.b16 %v363
      %v1395 = vunpack.c.l.b16 %v364
      %v1396 = vunpack.c.l.b16 %v365
      %v1397 = vunpack.c.l.b16 %v366
      %v1398 = vunpack.c.l.b16 %v367
      %v1399 = vunpack.c.l.b16 %v368
      %v1400 = vunpack.c.l.b16 %v369
      %v1401 = vunpack.c.l.b16 %v370
      %v1402 = vunpack.c.l.b16 %v371
      %v1403 = vunpack.c.l.b16 %v372
      %v1404 = vunpack.c.l.b16 %v373
      %v1405 = vunpack.c.l.b16 %v374
      %v1406 = vunpack.c.l.b16 %v375
      %v1407 = vunpack.c.l.b16 %v376
      %v1408 = vunpack.c.l.b16 %v377
      %v1409 = vunpack.c.l.b16 %v378
      %v1410 = vunpack.c.l.b16 %v379
      %v1411 = vunpack.c.l.b16 %v380
      %v1412 = vunpack.c.l.b16 %v381
      %v1413 = vunpack.c.l.b16 %v382
      %v1414 = vunpack.c.l.b16 %v383
      %v1415 = vunpack.c.l.b16 %v384
      %v1416 = vunpack.c.l.b16 %v385
      %v1417 = vunpack.c.l.b16 %v386
      %v1418 = vunpack.c.l.b16 %v387
      %v1419 = vunpack.c.l.b16 %v388
      %v1420 = vunpack.c.l.b16 %v389
      %v1421 = vunpack.c.l.b16 %v390
      %v1422 = vunpack.c.l.b16 %v391
      %v1423 = vunpack.c.l.b16 %v392
      %v1424 = vunpack.c.l.b16 %v393
      %v1425 = vunpack.c.l.b16 %v394
      %v1426 = vunpack.c.l.b16 %v395
      %v1427 = vunpack.c.l.b16 %v396
      %v1428 = vunpack.c.l.b16 %v397
      %v1429 = vunpack.c.l.b16 %v398
      %v1430 = vunpack.c.l.b16 %v399
      %v1431 = vunpack.c.l.b16 %v400
      %v1432 = vunpack.c.l.b16 %v401
      %v1433 = vunpack.c.l.b16 %v402
      %v1434 = vunpack.c.l.b16 %v403
      %v1435 = vunpack.c.l.b16 %v404
      %v1436 = vunpack.c.l.b16 %v405
      %v1437 = vunpack.c.l.b16 %v406
      %v1438 = vunpack.c.l.b16 %v407
      %v1439 = vunpack.c.l.b16 %v408
      %v1440 = vunpack.c.l.b16 %v409
      %v1441 = vunpack.c.l.b16 %v410
      %v1442 = vunpack.c.l.b16 %v411
      %v1443 = vunpack.c.l.b16 %v412
      %v1444 = vunpack.c.l.b16 %v413
      %v1445 = vunpack.c.l.b16 %v414
      %v1446 = vunpack.c.l.b16 %v415
      %v1447 = vunpack.c.l.b16 %v416
      %v1448 = vunpack.c.l.b16 %v417
      %v1449 = vunpack.c.l.b16 %v418
      %v1450 = vunpack.c.l.b16 %v419
      %v1451 = vunpack.c.l.b16 %v420
      %v1452 = vunpack.c.l.b16 %v421
      %v1453 = vunpack.c.l.b16 %v422
      %v1454 = vunpack.c.l.b16 %v423
      %v1455 = vunpack.c.l.b16 %v424
      %v1456 = vunpack.c.l.b16 %v425
      %v1457 = vunpack.c.l.b16 %v426
      %v1458 = vunpack.c.l.b16 %v427
      %v1459 = vunpack.c.l.b16 %v428
      %v1460 = vunpack.c.l.b16 %v429
      %v1461 = vunpack.c.l.b16 %v430
      %v1462 = vunpack.c.l.b16 %v431
      %v1463 = vunpack.c.l.b16 %v432
      %v1464 = vunpack.c.l.b16 %v433
      %v1465 = vunpack.c.l.b16 %v434
      %v1466 = vunpack.c.l.b16 %v435
      %v1467 = vunpack.c.l.b16 %v436
      %v1468 = vunpack.c.l.b16 %v437
      %v1469 = vunpack.c.l.b16 %v438
      %v1470 = vunpack.c.l.b16 %v439
      %v1471 = vunpack.c.l.b16 %v440
      %v1472 = vunpack.c.l.b16 %v441
      %v1473 = vunpack.c.l.b16 %v442
      %v1474 = vunpack.c.l.b16 %v443
      %v1475 = vunpack.c.l.b16 %v444
      %v1476 = vunpack.c.l.b16 %v445
      %v1477 = vunpack.c.l.b16 %v446
      %v1478 = vunpack.c.l.b16 %v447
      %v1479 = vunpack.c.l.b16 %v448
      %v1480 = vunpack.c.l.b16 %v449
      %v1481 = vunpack.c.l.b16 %v450
      %v1482 = vunpack.c.l.b16 %v451
      %v1483 = vunpack.c.l.b16 %v452
      %v1484 = vunpack.c.l.b16 %v453
      %v1485 = vunpack.c.l.b16 %v454
      %v1486 = vunpack.c.l.b16 %v455
      %v1487 = vunpack.c.l.b16 %v456
      %v1488 = vunpack.c.l.b16 %v457
      %v1489 = vunpack.c.l.b16 %v458
      %v1490 = vunpack.c.l.b16 %v459
      %v1491 = vunpack.c.l.b16 %v460
      %v1492 = vunpack.c.l.b16 %v461
      %v1493 = vunpack.c.l.b16 %v462
      %v1494 = vunpack.c.l.b16 %v463
      %v1495 = vunpack.c.l.b16 %v464
      %v1496 = vunpack.c.l.b16 %v465
      %v1497 = vunpack.c.l.b16 %v466
      %v1498 = vunpack.c.l.b16 %v467
      %v1499 = vunpack.c.l.b16 %v468
      %v1500 = vunpack.c.l.b16 %v469
      %v1501 = vunpack.c.l.b16 %v470
      %v1502 = vunpack.c.l.b16 %v471
      %v1503 = vunpack.c.l.b16 %v472
      %v1504 = vunpack.c.l.b16 %v473
      %v1505 = vunpack.c.l.b16 %v474
      %v1506 = vunpack.c.l.b16 %v475
      %v1507 = vunpack.c.l.b16 %v476
      %v1508 = vunpack.c.l.b16 %v477
      %v1509 = vunpack.c.l.b16 %v478
      %v1510 = vunpack.c.l.b16 %v479
      %v1511 = vunpack.c.l.b16 %v480
      %v1512 = vunpack.c.l.b16 %v481
      %v1513 = vpack.c.b16 %v1370, %v1369
      %v1514 = vpack.c.b16 %v1372, %v1371
      %v1515 = vpack.c.b16 %v1374, %v1373
      %v1516 = vpack.c.b16 %v1376, %v1375
      %v1517 = vpack.c.b16 %v1378, %v1377
      %v1518 = vpack.c.b16 %v1380, %v1379
      %v1519 = vpack.c.b16 %v1382, %v1381
      %v1520 = vpack.c.b16 %v1384, %v1383
      %v1521 = vpack.c.b16 %v1386, %v1385
      %v1522 = vpack.c.b16 %v1388, %v1387
      %v1523 = vpack.c.b16 %v1390, %v1389
      %v1524 = vpack.c.b16 %v1392, %v1391
      %v1525 = vpack.c.b16 %v1394, %v1393
      %v1526 = vpack.c.b16 %v1396, %v1395
      %v1527 = vpack.c.b16 %v1398, %v1397
      %v1528 = vpack.c.b16 %v1400, %v1399
      %v1529 = vpack.c.b16 %v1402, %v1401
      %v1530 = vpack.c.b16 %v1404, %v1403
      %v1531 = vpack.c.b16 %v1406, %v1405
      %v1532 = vpack.c.b16 %v1408, %v1407
      %v1533 = vpack.c.b16 %v1410, %v1409
      %v1534 = vpack.c.b16 %v1412, %v1411
      %v1535 = vpack.c.b16 %v1414, %v1413
      %v1536 = vpack.c.b16 %v1416, %v1415
      %v1537 = vpack.c.b16 %v1418, %v1417
      %v1538 = vpack.c.b16 %v1420, %v1419
      %v1539 = vpack.c.b16 %v1422, %v1421
      %v1540 = vpack.c.b16 %v1424, %v1423
      %v1541 = vpack.c.b16 %v1426, %v1425
      %v1542 = vpack.c.b16 %v1428, %v1427
      %v1543 = vpack.c.b16 %v1430, %v1429
      %v1544 = vpack.c.b16 %v1432, %v1431
      %v1545 = vpack.c.b16 %v1434, %v1433
      %v1546 = vpack.c.b16 %v1436, %v1435
      %v1547 = vpack.c.b16 %v1438, %v1437
      %v1548 = vpack.c.b16 %v1440, %v1439
      %v1549 = vpack.c.b16 %v1442, %v1441
      %v1550 = vpack.c.b16 %v1444, %v1443
      %v1551 = vpack.c.b16 %v1446, %v1445
      %v1552 = vpack.c.b16 %v1448, %v1447
      %v1553 = vpack.c.b16 %v1450, %v1449
      %v1554 = vpack.c.b16 %v1452, %v1451
      %v1555 = vpack.c.b16 %v1454, %v1453
      %v1556 = vpack.c.b16 %v1456, %v1455
      %v1557 = vpack.c.b16 %v1458, %v1457
      %v1558 = vpack.c.b16 %v1460, %v1459
      %v1559 = vpack.c.b16 %v1462, %v1461
      %v1560 = vpack.c.b16 %v1464, %v1463
      %v1561 = vpack.c.b16 %v1466, %v1465
      %v1562 = vpack.c.b16 %v1468, %v1467
      %v1563 = vpack.c.b16 %v1470, %v1469
      %v1564 = vpack.c.b16 %v1472, %v1471
      %v1565 = vpack.c.b16 %v1474, %v1473
      %v1566 = vpack.c.b16 %v1476, %v1475
      %v1567 = vpack.c.b16 %v1478, %v1477
      %v1568 = vpack.c.b16 %v1480, %v1479
      %v1569 = vpack.c.b16 %v1482, %v1481
      %v1570 = vpack.c.b16 %v1484, %v1483
      %v1571 = vpack.c.b16 %v1486, %v1485
      %v1572 = vpack.c.b16 %v1488, %v1487
      %v1573 = vpack.c.b16 %v1490, %v1489
      %v1574 = vpack.c.b16 %v1492, %v1491
      %v1575 = vpack.c.b16 %v1494, %v1493
      %v1576 = vpack.c.b16 %v1496, %v1495
      %v1577 = vpack.c.b16 %v1498, %v1497
      %v1578 = vpack.c.b16 %v1500, %v1499
      %v1579 = vpack.c.b16 %v1502, %v1501
      %v1580 = vpack.c.b16 %v1504, %v1503
      %v1581 = vpack.c.b16 %v1506, %v1505
      %v1582 = vpack.c.b16 %v1508, %v1507
      %v1583 = vpack.c.b16 %v1510, %v1509
      %v1584 = vpack.c.b16 %v1512, %v1511
      %1657 = vmatprep.subr.bf16.mxu0 0
      %1658 = vmatpush1.bf16.msra.mxu0 %v1513
      %1659 = vmatprep.subr.bf16.mxu0 0
      %1660 = vmatpush1.bf16.msra.mxu0 %v1514
      %1661 = vmatprep.subr.bf16.mxu0 0
      %1662 = vmatpush1.bf16.msra.mxu0 %v1515
      %1663 = vmatprep.subr.bf16.mxu0 0
      %1664 = vmatpush1.bf16.msra.mxu0 %v1516
      %1665 = vmatprep.subr.bf16.mxu0 0
      %1666 = vmatpush1.bf16.msra.mxu0 %v1517
      %1667 = vmatprep.subr.bf16.mxu0 0
      %1668 = vmatpush1.bf16.msra.mxu0 %v1518
      %1669 = vmatprep.subr.bf16.mxu0 0
      %1670 = vmatpush1.bf16.msra.mxu0 %v1519
      %1671 = vmatprep.subr.bf16.mxu0 0
      %1672 = vmatpush1.bf16.msra.mxu0 %v1520
      %1673 = vmatprep.subr.bf16.mxu0 0
      %1674 = vmatpush1.bf16.msra.mxu0 %v1521
      %1675 = vmatprep.subr.bf16.mxu0 0
      %1676 = vmatpush1.bf16.msra.mxu0 %v1522
      %1677 = vmatprep.subr.bf16.mxu0 0
      %1678 = vmatpush1.bf16.msra.mxu0 %v1523
      %1679 = vmatprep.subr.bf16.mxu0 0
      %1680 = vmatpush1.bf16.msra.mxu0 %v1524
      %1681 = vmatprep.subr.bf16.mxu0 0
      %1682 = vmatpush1.bf16.msra.mxu0 %v1525
      %1683 = vmatprep.subr.bf16.mxu0 0
      %1684 = vmatpush1.bf16.msra.mxu0 %v1526
      %1685 = vmatprep.subr.bf16.mxu0 0
      %1686 = vmatpush1.bf16.msra.mxu0 %v1527
      %1687 = vmatprep.subr.bf16.mxu0 0
      %1688 = vmatpush1.bf16.msra.mxu0 %v1528
      %1689 = vmatprep.mubr.bf16.mxu0 %v938
      %1690 = vmatmul.mubr.bf16.gmra.mrb[0].mxu0 %v937
      %v1691 = vpop.f32.mrb[0].mxu0
      %v1692 = vadd.f32 %v487, %v1691
      %v1693 = vpop.f32.mrb[0].mxu0
      %v1694 = vpop.f32.mrb[0].mxu0
      %v1695 = vadd.f32 %v487, %v1694
      %v1696 = vpop.f32.mrb[0].mxu0
      %1697 = vmatprep.mubr.bf16.mxu0 %v947
      %1698 = vmatmul.mubr.bf16.gmra.mrb[0].mxu0 %v946
      %v1699 = vpop.f32.mrb[0].mxu0
      %v1700 = vadd.f32 %v487, %v1699
      %v1701 = vpop.f32.mrb[0].mxu0
      %v1702 = vpop.f32.mrb[0].mxu0
      %v1703 = vadd.f32 %v487, %v1702
      %v1704 = vpop.f32.mrb[0].mxu0
      %1705 = vmatprep.mubr.bf16.mxu0 %v956
      %1706 = vmatmul.mubr.bf16.gmra.mrb[0].mxu0 %v955
      %v1707 = vpop.f32.mrb[0].mxu0
      %v1708 = vadd.f32 %v487, %v1707
      %v1709 = vpop.f32.mrb[0].mxu0
      %v1710 = vpop.f32.mrb[0].mxu0
      %v1711 = vadd.f32 %v487, %v1710
      %v1712 = vpop.f32.mrb[0].mxu0
      %1713 = vmatprep.mubr.bf16.mxu0 %v965
      %1714 = vmatmul.mubr.bf16.gmra.mrb[0].mxu0 %v964
      %v1715 = vpop.f32.mrb[0].mxu0
      %v1716 = vadd.f32 %v487, %v1715
      %v1717 = vpop.f32.mrb[0].mxu0
      %v1718 = vpop.f32.mrb[0].mxu0
      %v1719 = vadd.f32 %v487, %v1718
      %v1720 = vpop.f32.mrb[0].mxu0
      %1721 = vmatprep.mubr.bf16.mxu0 %v974
      %1722 = vmatmul.mubr.bf16.gmra.mrb[0].mxu0 %v973
      %v1723 = vpop.f32.mrb[0].mxu0
      %v1724 = vadd.f32 %v487, %v1723
      %v1725 = vpop.f32.mrb[0].mxu0
      %v1726 = vpop.f32.mrb[0].mxu0
      %v1727 = vadd.f32 %v487, %v1726
      %v1728 = vpop.f32.mrb[0].mxu0
      %1729 = vmatprep.mubr.bf16.mxu0 %v983
      %1730 = vmatmul.mubr.bf16.gmra.mrb[0].mxu0 %v982
      %v1731 = vpop.f32.mrb[0].mxu0
      %v1732 = vadd.f32 %v487, %v1731
      %v1733 = vpop.f32.mrb[0].mxu0
      %v1734 = vpop.f32.mrb[0].mxu0
      %v1735 = vadd.f32 %v487, %v1734
      %v1736 = vpop.f32.mrb[0].mxu0
      %1737 = vmatprep.mubr.bf16.mxu0 %v992
      %1738 = vmatmul.mubr.bf16.gmra.mrb[0].mxu0 %v991
      %v1739 = vpop.f32.mrb[0].mxu0
      %v1740 = vadd.f32 %v487, %v1739
      %v1741 = vpop.f32.mrb[0].mxu0
      %v1742 = vpop.f32.mrb[0].mxu0
      %v1743 = vadd.f32 %v487, %v1742
      %v1744 = vpop.f32.mrb[0].mxu0
      %1745 = vmatprep.mubr.bf16.mxu0 %v1001
      %1746 = vmatmul.mubr.bf16.gmra.mrb[0].mxu0 %v1000
      %v1747 = vpop.f32.mrb[0].mxu0
      %v1748 = vadd.f32 %v487, %v1747
      %v1749 = vpop.f32.mrb[0].mxu0
      %v1750 = vpop.f32.mrb[0].mxu0
      %v1751 = vadd.f32 %v487, %v1750
      %v1752 = vpop.f32.mrb[0].mxu0
      %1753 = vmatprep.mubr.bf16.mxu0 %v1010
      %1754 = vmatmul.mubr.bf16.gmra.mrb[0].mxu0 %v1009
      %v1755 = vpop.f32.mrb[0].mxu0
      %v1756 = vadd.f32 %v487, %v1755
      %v1757 = vpop.f32.mrb[0].mxu0
      %v1758 = vpop.f32.mrb[0].mxu0
      %v1759 = vadd.f32 %v487, %v1758
      %v1760 = vpop.f32.mrb[0].mxu0
      %1761 = vmatprep.mubr.bf16.mxu0 %v1019
      %1762 = vmatmul.mubr.bf16.gmra.mrb[0].mxu0 %v1018
      %v1763 = vpop.f32.mrb[0].mxu0
      %v1764 = vadd.f32 %v487, %v1763
      %v1765 = vpop.f32.mrb[0].mxu0
      %v1766 = vpop.f32.mrb[0].mxu0
      %v1767 = vadd.f32 %v487, %v1766
      %v1768 = vpop.f32.mrb[0].mxu0
      %1769 = vmatprep.mubr.bf16.mxu0 %v1028
      %1770 = vmatmul.mubr.bf16.gmra.mrb[0].mxu0 %v1027
      %v1771 = vpop.f32.mrb[0].mxu0
      %v1772 = vadd.f32 %v487, %v1771
      %v1773 = vpop.f32.mrb[0].mxu0
      %v1774 = vpop.f32.mrb[0].mxu0
      %v1775 = vadd.f32 %v487, %v1774
      %v1776 = vpop.f32.mrb[0].mxu0
      %1777 = vmatprep.mubr.bf16.mxu0 %v1037
      %1778 = vmatmul.mubr.bf16.gmra.mrb[0].mxu0 %v1036
      %v1779 = vpop.f32.mrb[0].mxu0
      %v1780 = vadd.f32 %v487, %v1779
      %v1781 = vpop.f32.mrb[0].mxu0
      %v1782 = vpop.f32.mrb[0].mxu0
      %v1783 = vadd.f32 %v487, %v1782
      %v1784 = vpop.f32.mrb[0].mxu0
      %1785 = vmatprep.mubr.bf16.mxu0 %v1046
      %1786 = vmatmul.mubr.bf16.gmra.mrb[0].mxu0 %v1045
      %v1787 = vpop.f32.mrb[0].mxu0
      %v1788 = vadd.f32 %v487, %v1787
      %v1789 = vpop.f32.mrb[0].mxu0
      %v1790 = vpop.f32.mrb[0].mxu0
      %v1791 = vadd.f32 %v487, %v1790
      %v1792 = vpop.f32.mrb[0].mxu0
      %1793 = vmatprep.mubr.bf16.mxu0 %v1055
      %1794 = vmatmul.mubr.bf16.gmra.mrb[0].mxu0 %v1054
      %v1795 = vpop.f32.mrb[0].mxu0
      %v1796 = vadd.f32 %v487, %v1795
      %v1797 = vpop.f32.mrb[0].mxu0
      %v1798 = vpop.f32.mrb[0].mxu0
      %v1799 = vadd.f32 %v487, %v1798
      %v1800 = vpop.f32.mrb[0].mxu0
      %1801 = vmatprep.mubr.bf16.mxu0 %v1064
      %1802 = vmatmul.mubr.bf16.gmra.mrb[0].mxu0 %v1063
      %v1803 = vpop.f32.mrb[0].mxu0
      %v1804 = vadd.f32 %v487, %v1803
      %v1805 = vpop.f32.mrb[0].mxu0
      %v1806 = vpop.f32.mrb[0].mxu0
      %v1807 = vadd.f32 %v487, %v1806
      %v1808 = vpop.f32.mrb[0].mxu0
      %1809 = vmatprep.mubr.bf16.mxu0 %v1073
      %1810 = vmatmul.mubr.bf16.gmra.mrb[0].mxu0 %v1072
      %v1811 = vpop.f32.mrb[0].mxu0
      %v1812 = vadd.f32 %v487, %v1811
      %v1813 = vpop.f32.mrb[0].mxu0
      %v1814 = vpop.f32.mrb[0].mxu0
      %v1815 = vadd.f32 %v487, %v1814
      %v1816 = vpop.f32.mrb[0].mxu0
      %1817 = vdwg.mxu0
      %1818 = vmatprep.subr.bf16.mxu0 0
      %1819 = vmatpush1.bf16.msra.mxu0 %v1529
      %1820 = vmatprep.subr.bf16.mxu0 0
      %1821 = vmatpush1.bf16.msra.mxu0 %v1530
      %1822 = vmatprep.subr.bf16.mxu0 0
      %1823 = vmatpush1.bf16.msra.mxu0 %v1531
      %1824 = vmatprep.subr.bf16.mxu0 0
      %1825 = vmatpush1.bf16.msra.mxu0 %v1532
      %1826 = vmatprep.subr.bf16.mxu0 0
      %1827 = vmatpush1.bf16.msra.mxu0 %v1533
      %1828 = vmatprep.subr.bf16.mxu0 0
      %1829 = vmatpush1.bf16.msra.mxu0 %v1534
      %1830 = vmatprep.subr.bf16.mxu0 0
      %1831 = vmatpush1.bf16.msra.mxu0 %v1535
      %1832 = vmatprep.subr.bf16.mxu0 0
      %1833 = vmatpush1.bf16.msra.mxu0 %v1536
      %1834 = vmatprep.subr.bf16.mxu0 0
      %1835 = vmatpush1.bf16.msra.mxu0 %v1537
      %1836 = vmatprep.subr.bf16.mxu0 0
      %1837 = vmatpush1.bf16.msra.mxu0 %v1538
      %1838 = vmatprep.subr.bf16.mxu0 0
      %1839 = vmatpush1.bf16.msra.mxu0 %v1539
      %1840 = vmatprep.subr.bf16.mxu0 0
      %1841 = vmatpush1.bf16.msra.mxu0 %v1540
      %1842 = vmatprep.subr.bf16.mxu0 0
      %1843 = vmatpush1.bf16.msra.mxu0 %v1541
      %1844 = vmatprep.subr.bf16.mxu0 0
      %1845 = vmatpush1.bf16.msra.mxu0 %v1542
      %1846 = vmatprep.subr.bf16.mxu0 0
      %1847 = vmatpush1.bf16.msra.mxu0 %v1543
      %1848 = vmatprep.subr.bf16.mxu0 0
      %1849 = vmatpush1.bf16.msra.mxu0 %v1544
      %1850 = vmatprep.mubr.bf16.mxu0 %v940
      %1851 = vmatmul.mubr.bf16.gmra.mrb[0].mxu0 %v939
      %v1852 = vpop.f32.mrb[0].mxu0
      %v1853 = vadd.f32 %v1692, %v1852
      %v1854 = vpop.f32.mrb[0].mxu0
      %v1855 = vpop.f32.mrb[0].mxu0
      %v1856 = vadd.f32 %v1695, %v1855
      %v1857 = vpop.f32.mrb[0].mxu0
      %1858 = vmatprep.mubr.bf16.mxu0 %v949
      %1859 = vmatmul.mubr.bf16.gmra.mrb[0].mxu0 %v948
      %v1860 = vpop.f32.mrb[0].mxu0
      %v1861 = vadd.f32 %v1700, %v1860
      %v1862 = vpop.f32.mrb[0].mxu0
      %v1863 = vpop.f32.mrb[0].mxu0
      %v1864 = vadd.f32 %v1703, %v1863
      %v1865 = vpop.f32.mrb[0].mxu0
      %1866 = vmatprep.mubr.bf16.mxu0 %v958
      %1867 = vmatmul.mubr.bf16.gmra.mrb[0].mxu0 %v957
      %v1868 = vpop.f32.mrb[0].mxu0
      %v1869 = vadd.f32 %v1708, %v1868
      %v1870 = vpop.f32.mrb[0].mxu0
      %v1871 = vpop.f32.mrb[0].mxu0
      %v1872 = vadd.f32 %v1711, %v1871
      %v1873 = vpop.f32.mrb[0].mxu0
      %1874 = vmatprep.mubr.bf16.mxu0 %v967
      %1875 = vmatmul.mubr.bf16.gmra.mrb[0].mxu0 %v966
      %v1876 = vpop.f32.mrb[0].mxu0
      %v1877 = vadd.f32 %v1716, %v1876
      %v1878 = vpop.f32.mrb[0].mxu0
      %v1879 = vpop.f32.mrb[0].mxu0
      %v1880 = vadd.f32 %v1719, %v1879
      %v1881 = vpop.f32.mrb[0].mxu0
      %1882 = vmatprep.mubr.bf16.mxu0 %v976
      %1883 = vmatmul.mubr.bf16.gmra.mrb[0].mxu0 %v975
      %v1884 = vpop.f32.mrb[0].mxu0
      %v1885 = vadd.f32 %v1724, %v1884
      %v1886 = vpop.f32.mrb[0].mxu0
      %v1887 = vpop.f32.mrb[0].mxu0
      %v1888 = vadd.f32 %v1727, %v1887
      %v1889 = vpop.f32.mrb[0].mxu0
      %1890 = vmatprep.mubr.bf16.mxu0 %v985
      %1891 = vmatmul.mubr.bf16.gmra.mrb[0].mxu0 %v984
      %v1892 = vpop.f32.mrb[0].mxu0
      %v1893 = vadd.f32 %v1732, %v1892
      %v1894 = vpop.f32.mrb[0].mxu0
      %v1895 = vpop.f32.mrb[0].mxu0
      %v1896 = vadd.f32 %v1735, %v1895
      %v1897 = vpop.f32.mrb[0].mxu0
      %1898 = vmatprep.mubr.bf16.mxu0 %v994
      %1899 = vmatmul.mubr.bf16.gmra.mrb[0].mxu0 %v993
      %v1900 = vpop.f32.mrb[0].mxu0
      %v1901 = vadd.f32 %v1740, %v1900
      %v1902 = vpop.f32.mrb[0].mxu0
      %v1903 = vpop.f32.mrb[0].mxu0
      %v1904 = vadd.f32 %v1743, %v1903
      %v1905 = vpop.f32.mrb[0].mxu0
      %1906 = vmatprep.mubr.bf16.mxu0 %v1003
      %1907 = vmatmul.mubr.bf16.gmra.mrb[0].mxu0 %v1002
      %v1908 = vpop.f32.mrb[0].mxu0
      %v1909 = vadd.f32 %v1748, %v1908
      %v1910 = vpop.f32.mrb[0].mxu0
      %v1911 = vpop.f32.mrb[0].mxu0
      %v1912 = vadd.f32 %v1751, %v1911
      %v1913 = vpop.f32.mrb[0].mxu0
      %1914 = vmatprep.mubr.bf16.mxu0 %v1012
      %1915 = vmatmul.mubr.bf16.gmra.mrb[0].mxu0 %v1011
      %v1916 = vpop.f32.mrb[0].mxu0
      %v1917 = vadd.f32 %v1756, %v1916
      %v1918 = vpop.f32.mrb[0].mxu0
      %v1919 = vpop.f32.mrb[0].mxu0
      %v1920 = vadd.f32 %v1759, %v1919
      %v1921 = vpop.f32.mrb[0].mxu0
      %1922 = vmatprep.mubr.bf16.mxu0 %v1021
      %1923 = vmatmul.mubr.bf16.gmra.mrb[0].mxu0 %v1020
      %v1924 = vpop.f32.mrb[0].mxu0
      %v1925 = vadd.f32 %v1764, %v1924
      %v1926 = vpop.f32.mrb[0].mxu0
      %v1927 = vpop.f32.mrb[0].mxu0
      %v1928 = vadd.f32 %v1767, %v1927
      %v1929 = vpop.f32.mrb[0].mxu0
      %1930 = vmatprep.mubr.bf16.mxu0 %v1030
      %1931 = vmatmul.mubr.bf16.gmra.mrb[0].mxu0 %v1029
      %v1932 = vpop.f32.mrb[0].mxu0
      %v1933 = vadd.f32 %v1772, %v1932
      %v1934 = vpop.f32.mrb[0].mxu0
      %v1935 = vpop.f32.mrb[0].mxu0
      %v1936 = vadd.f32 %v1775, %v1935
      %v1937 = vpop.f32.mrb[0].mxu0
      %1938 = vmatprep.mubr.bf16.mxu0 %v1039
      %1939 = vmatmul.mubr.bf16.gmra.mrb[0].mxu0 %v1038
      %v1940 = vpop.f32.mrb[0].mxu0
      %v1941 = vadd.f32 %v1780, %v1940
      %v1942 = vpop.f32.mrb[0].mxu0
      %v1943 = vpop.f32.mrb[0].mxu0
      %v1944 = vadd.f32 %v1783, %v1943
      %v1945 = vpop.f32.mrb[0].mxu0
      %1946 = vmatprep.mubr.bf16.mxu0 %v1048
      %1947 = vmatmul.mubr.bf16.gmra.mrb[0].mxu0 %v1047
      %v1948 = vpop.f32.mrb[0].mxu0
      %v1949 = vadd.f32 %v1788, %v1948
      %v1950 = vpop.f32.mrb[0].mxu0
      %v1951 = vpop.f32.mrb[0].mxu0
      %v1952 = vadd.f32 %v1791, %v1951
      %v1953 = vpop.f32.mrb[0].mxu0
      %1954 = vmatprep.mubr.bf16.mxu0 %v1057
      %1955 = vmatmul.mubr.bf16.gmra.mrb[0].mxu0 %v1056
      %v1956 = vpop.f32.mrb[0].mxu0
      %v1957 = vadd.f32 %v1796, %v1956
      %v1958 = vpop.f32.mrb[0].mxu0
      %v1959 = vpop.f32.mrb[0].mxu0
      %v1960 = vadd.f32 %v1799, %v1959
      %v1961 = vpop.f32.mrb[0].mxu0
      %1962 = vmatprep.mubr.bf16.mxu0 %v1066
      %1963 = vmatmul.mubr.bf16.gmra.mrb[0].mxu0 %v1065
      %v1964 = vpop.f32.mrb[0].mxu0
      %v1965 = vadd.f32 %v1804, %v1964
      %v1966 = vpop.f32.mrb[0].mxu0
      %v1967 = vpop.f32.mrb[0].mxu0
      %v1968 = vadd.f32 %v1807, %v1967
      %v1969 = vpop.f32.mrb[0].mxu0
      %1970 = vmatprep.mubr.bf16.mxu0 %v1075
      %1971 = vmatmul.mubr.bf16.gmra.mrb[0].mxu0 %v1074
      %v1972 = vpop.f32.mrb[0].mxu0
      %v1973 = vadd.f32 %v1812, %v1972
      %v1974 = vpop.f32.mrb[0].mxu0
      %v1975 = vpop.f32.mrb[0].mxu0
      %v1976 = vadd.f32 %v1815, %v1975
      %v1977 = vpop.f32.mrb[0].mxu0
      %1978 = vdwg.mxu0
      %1979 = vmatprep.subr.bf16.mxu0 0
      %1980 = vmatpush1.bf16.msra.mxu0 %v1545
      %1981 = vmatprep.subr.bf16.mxu0 0
      %1982 = vmatpush1.bf16.msra.mxu0 %v1546
      %1983 = vmatprep.subr.bf16.mxu0 0
      %1984 = vmatpush1.bf16.msra.mxu0 %v1547
      %1985 = vmatprep.subr.bf16.mxu0 0
      %1986 = vmatpush1.bf16.msra.mxu0 %v1548
      %1987 = vmatprep.subr.bf16.mxu0 0
      %1988 = vmatpush1.bf16.msra.mxu0 %v1549
      %1989 = vmatprep.subr.bf16.mxu0 0
      %1990 = vmatpush1.bf16.msra.mxu0 %v1550
      %1991 = vmatprep.subr.bf16.mxu0 0
      %1992 = vmatpush1.bf16.msra.mxu0 %v1551
      %1993 = vmatprep.subr.bf16.mxu0 0
      %1994 = vmatpush1.bf16.msra.mxu0 %v1552
      %1995 = vmatprep.subr.bf16.mxu0 0
      %1996 = vmatpush1.bf16.msra.mxu0 %v1553
      %1997 = vmatprep.subr.bf16.mxu0 0
      %1998 = vmatpush1.bf16.msra.mxu0 %v1554
      %1999 = vmatprep.subr.bf16.mxu0 0
      %2000 = vmatpush1.bf16.msra.mxu0 %v1555
      %2001 = vmatprep.subr.bf16.mxu0 0
      %2002 = vmatpush1.bf16.msra.mxu0 %v1556
      %2003 = vmatprep.subr.bf16.mxu0 0
      %2004 = vmatpush1.bf16.msra.mxu0 %v1557
      %2005 = vmatprep.subr.bf16.mxu0 0
      %2006 = vmatpush1.bf16.msra.mxu0 %v1558
      %2007 = vmatprep.subr.bf16.mxu0 0
      %2008 = vmatpush1.bf16.msra.mxu0 %v1559
      %2009 = vmatprep.subr.bf16.mxu0 0
      %2010 = vmatpush1.bf16.msra.mxu0 %v1560
      %2011 = vmatprep.mubr.bf16.mxu0 %v942
      %2012 = vmatmul.mubr.bf16.gmra.mrb[0].mxu0 %v941
      %v2013 = vpop.f32.mrb[0].mxu0
      %v2014 = vadd.f32 %v1853, %v2013
      %v2015 = vpop.f32.mrb[0].mxu0
      %v2016 = vpop.f32.mrb[0].mxu0
      %v2017 = vadd.f32 %v1856, %v2016
      %v2018 = vpop.f32.mrb[0].mxu0
      %2019 = vmatprep.mubr.bf16.mxu0 %v951
      %2020 = vmatmul.mubr.bf16.gmra.mrb[0].mxu0 %v950
      %v2021 = vpop.f32.mrb[0].mxu0
      %v2022 = vadd.f32 %v1861, %v2021
      %v2023 = vpop.f32.mrb[0].mxu0
      %v2024 = vpop.f32.mrb[0].mxu0
      %v2025 = vadd.f32 %v1864, %v2024
      %v2026 = vpop.f32.mrb[0].mxu0
      %2027 = vmatprep.mubr.bf16.mxu0 %v960
      %2028 = vmatmul.mubr.bf16.gmra.mrb[0].mxu0 %v959
      %v2029 = vpop.f32.mrb[0].mxu0
      %v2030 = vadd.f32 %v1869, %v2029
      %v2031 = vpop.f32.mrb[0].mxu0
      %v2032 = vpop.f32.mrb[0].mxu0
      %v2033 = vadd.f32 %v1872, %v2032
      %v2034 = vpop.f32.mrb[0].mxu0
      %2035 = vmatprep.mubr.bf16.mxu0 %v969
      %2036 = vmatmul.mubr.bf16.gmra.mrb[0].mxu0 %v968
      %v2037 = vpop.f32.mrb[0].mxu0
      %v2038 = vadd.f32 %v1877, %v2037
      %v2039 = vpop.f32.mrb[0].mxu0
      %v2040 = vpop.f32.mrb[0].mxu0
      %v2041 = vadd.f32 %v1880, %v2040
      %v2042 = vpop.f32.mrb[0].mxu0
      %2043 = vmatprep.mubr.bf16.mxu0 %v978
      %2044 = vmatmul.mubr.bf16.gmra.mrb[0].mxu0 %v977
      %v2045 = vpop.f32.mrb[0].mxu0
      %v2046 = vadd.f32 %v1885, %v2045
      %v2047 = vpop.f32.mrb[0].mxu0
      %v2048 = vpop.f32.mrb[0].mxu0
      %v2049 = vadd.f32 %v1888, %v2048
      %v2050 = vpop.f32.mrb[0].mxu0
      %2051 = vmatprep.mubr.bf16.mxu0 %v987
      %2052 = vmatmul.mubr.bf16.gmra.mrb[0].mxu0 %v986
      %v2053 = vpop.f32.mrb[0].mxu0
      %v2054 = vadd.f32 %v1893, %v2053
      %v2055 = vpop.f32.mrb[0].mxu0
      %v2056 = vpop.f32.mrb[0].mxu0
      %v2057 = vadd.f32 %v1896, %v2056
      %v2058 = vpop.f32.mrb[0].mxu0
      %2059 = vmatprep.mubr.bf16.mxu0 %v996
      %2060 = vmatmul.mubr.bf16.gmra.mrb[0].mxu0 %v995
      %v2061 = vpop.f32.mrb[0].mxu0
      %v2062 = vadd.f32 %v1901, %v2061
      %v2063 = vpop.f32.mrb[0].mxu0
      %v2064 = vpop.f32.mrb[0].mxu0
      %v2065 = vadd.f32 %v1904, %v2064
      %v2066 = vpop.f32.mrb[0].mxu0
      %2067 = vmatprep.mubr.bf16.mxu0 %v1005
      %2068 = vmatmul.mubr.bf16.gmra.mrb[0].mxu0 %v1004
      %v2069 = vpop.f32.mrb[0].mxu0
      %v2070 = vadd.f32 %v1909, %v2069
      %v2071 = vpop.f32.mrb[0].mxu0
      %v2072 = vpop.f32.mrb[0].mxu0
      %v2073 = vadd.f32 %v1912, %v2072
      %v2074 = vpop.f32.mrb[0].mxu0
      %2075 = vmatprep.mubr.bf16.mxu0 %v1014
      %2076 = vmatmul.mubr.bf16.gmra.mrb[0].mxu0 %v1013
      %v2077 = vpop.f32.mrb[0].mxu0
      %v2078 = vadd.f32 %v1917, %v2077
      %v2079 = vpop.f32.mrb[0].mxu0
      %v2080 = vpop.f32.mrb[0].mxu0
      %v2081 = vadd.f32 %v1920, %v2080
      %v2082 = vpop.f32.mrb[0].mxu0
      %2083 = vmatprep.mubr.bf16.mxu0 %v1023
      %2084 = vmatmul.mubr.bf16.gmra.mrb[0].mxu0 %v1022
      %v2085 = vpop.f32.mrb[0].mxu0
      %v2086 = vadd.f32 %v1925, %v2085
      %v2087 = vpop.f32.mrb[0].mxu0
      %v2088 = vpop.f32.mrb[0].mxu0
      %v2089 = vadd.f32 %v1928, %v2088
      %v2090 = vpop.f32.mrb[0].mxu0
      %2091 = vmatprep.mubr.bf16.mxu0 %v1032
      %2092 = vmatmul.mubr.bf16.gmra.mrb[0].mxu0 %v1031
      %v2093 = vpop.f32.mrb[0].mxu0
      %v2094 = vadd.f32 %v1933, %v2093
      %v2095 = vpop.f32.mrb[0].mxu0
      %v2096 = vpop.f32.mrb[0].mxu0
      %v2097 = vadd.f32 %v1936, %v2096
      %v2098 = vpop.f32.mrb[0].mxu0
      %2099 = vmatprep.mubr.bf16.mxu0 %v1041
      %2100 = vmatmul.mubr.bf16.gmra.mrb[0].mxu0 %v1040
      %v2101 = vpop.f32.mrb[0].mxu0
      %v2102 = vadd.f32 %v1941, %v2101
      %v2103 = vpop.f32.mrb[0].mxu0
      %v2104 = vpop.f32.mrb[0].mxu0
      %v2105 = vadd.f32 %v1944, %v2104
      %v2106 = vpop.f32.mrb[0].mxu0
      %2107 = vmatprep.mubr.bf16.mxu0 %v1050
      %2108 = vmatmul.mubr.bf16.gmra.mrb[0].mxu0 %v1049
      %v2109 = vpop.f32.mrb[0].mxu0
      %v2110 = vadd.f32 %v1949, %v2109
      %v2111 = vpop.f32.mrb[0].mxu0
      %v2112 = vpop.f32.mrb[0].mxu0
      %v2113 = vadd.f32 %v1952, %v2112
      %v2114 = vpop.f32.mrb[0].mxu0
      %2115 = vmatprep.mubr.bf16.mxu0 %v1059
      %2116 = vmatmul.mubr.bf16.gmra.mrb[0].mxu0 %v1058
      %v2117 = vpop.f32.mrb[0].mxu0
      %v2118 = vadd.f32 %v1957, %v2117
      %v2119 = vpop.f32.mrb[0].mxu0
      %v2120 = vpop.f32.mrb[0].mxu0
      %v2121 = vadd.f32 %v1960, %v2120
      %v2122 = vpop.f32.mrb[0].mxu0
      %2123 = vmatprep.mubr.bf16.mxu0 %v1068
      %2124 = vmatmul.mubr.bf16.gmra.mrb[0].mxu0 %v1067
      %v2125 = vpop.f32.mrb[0].mxu0
      %v2126 = vadd.f32 %v1965, %v2125
      %v2127 = vpop.f32.mrb[0].mxu0
      %v2128 = vpop.f32.mrb[0].mxu0
      %v2129 = vadd.f32 %v1968, %v2128
      %v2130 = vpop.f32.mrb[0].mxu0
      %2131 = vmatprep.mubr.bf16.mxu0 %v1077
      %2132 = vmatmul.mubr.bf16.gmra.mrb[0].mxu0 %v1076
      %v2133 = vpop.f32.mrb[0].mxu0
      %v2134 = vadd.f32 %v1973, %v2133
      %v2135 = vpop.f32.mrb[0].mxu0
      %v2136 = vpop.f32.mrb[0].mxu0
      %v2137 = vadd.f32 %v1976, %v2136
      %v2138 = vpop.f32.mrb[0].mxu0
      %2139 = vdwg.mxu0
      %2140 = vmatprep.subr.bf16.mxu0 0
      %2141 = vmatpush1.bf16.msra.mxu0 %v1561
      %2142 = vmatprep.subr.bf16.mxu0 0
      %2143 = vmatpush1.bf16.msra.mxu0 %v1562
      %2144 = vmatprep.subr.bf16.mxu0 0
      %2145 = vmatpush1.bf16.msra.mxu0 %v1563
      %2146 = vmatprep.subr.bf16.mxu0 0
      %2147 = vmatpush1.bf16.msra.mxu0 %v1564
      %2148 = vmatprep.subr.bf16.mxu0 0
      %2149 = vmatpush1.bf16.msra.mxu0 %v1565
      %2150 = vmatprep.subr.bf16.mxu0 0
      %2151 = vmatpush1.bf16.msra.mxu0 %v1566
      %2152 = vmatprep.subr.bf16.mxu0 0
      %2153 = vmatpush1.bf16.msra.mxu0 %v1567
      %2154 = vmatprep.subr.bf16.mxu0 0
      %2155 = vmatpush1.bf16.msra.mxu0 %v1568
      %2156 = vmatprep.subr.bf16.mxu0 0
      %2157 = vmatpush1.bf16.msra.mxu0 %v1569
      %2158 = vmatprep.subr.bf16.mxu0 0
      %2159 = vmatpush1.bf16.msra.mxu0 %v1570
      %2160 = vmatprep.subr.bf16.mxu0 0
      %2161 = vmatpush1.bf16.msra.mxu0 %v1571
      %2162 = vmatprep.subr.bf16.mxu0 0
      %2163 = vmatpush1.bf16.msra.mxu0 %v1572
      %2164 = vmatprep.subr.bf16.mxu0 0
      %2165 = vmatpush1.bf16.msra.mxu0 %v1573
      %2166 = vmatprep.subr.bf16.mxu0 0
      %2167 = vmatpush1.bf16.msra.mxu0 %v1574
      %2168 = vmatprep.subr.bf16.mxu0 0
      %2169 = vmatpush1.bf16.msra.mxu0 %v1575
      %2170 = vmatprep.subr.bf16.mxu0 0
      %2171 = vmatpush1.bf16.msra.mxu0 %v1576
      %2172 = vmatprep.mubr.bf16.mxu0 %v944
      %2173 = vmatmul.mubr.bf16.gmra.mrb[0].mxu0 %v943
      %v2174 = vpop.f32.mrb[0].mxu0
      %v2175 = vadd.f32 %v2014, %v2174
      %v2176 = vpop.f32.mrb[0].mxu0
      %v2177 = vpop.f32.mrb[0].mxu0
      %v2178 = vadd.f32 %v2017, %v2177
      %v2179 = vpop.f32.mrb[0].mxu0
      %2180 = vmatprep.mubr.bf16.mxu0 %v953
      %2181 = vmatmul.mubr.bf16.gmra.mrb[0].mxu0 %v952
      %v2182 = vpop.f32.mrb[0].mxu0
      %v2183 = vadd.f32 %v2022, %v2182
      %v2184 = vpop.f32.mrb[0].mxu0
      %v2185 = vpop.f32.mrb[0].mxu0
      %v2186 = vadd.f32 %v2025, %v2185
      %v2187 = vpop.f32.mrb[0].mxu0
      %2188 = vmatprep.mubr.bf16.mxu0 %v962
      %2189 = vmatmul.mubr.bf16.gmra.mrb[0].mxu0 %v961
      %v2190 = vpop.f32.mrb[0].mxu0
      %v2191 = vadd.f32 %v2030, %v2190
      %v2192 = vpop.f32.mrb[0].mxu0
      %v2193 = vpop.f32.mrb[0].mxu0
      %v2194 = vadd.f32 %v2033, %v2193
      %v2195 = vpop.f32.mrb[0].mxu0
      %2196 = vmatprep.mubr.bf16.mxu0 %v971
      %2197 = vmatmul.mubr.bf16.gmra.mrb[0].mxu0 %v970
      %v2198 = vpop.f32.mrb[0].mxu0
      %v2199 = vadd.f32 %v2038, %v2198
      %v2200 = vpop.f32.mrb[0].mxu0
      %v2201 = vpop.f32.mrb[0].mxu0
      %v2202 = vadd.f32 %v2041, %v2201
      %v2203 = vpop.f32.mrb[0].mxu0
      %2204 = vmatprep.mubr.bf16.mxu0 %v980
      %2205 = vmatmul.mubr.bf16.gmra.mrb[0].mxu0 %v979
      %v2206 = vpop.f32.mrb[0].mxu0
      %v2207 = vadd.f32 %v2046, %v2206
      %v2208 = vpop.f32.mrb[0].mxu0
      %v2209 = vpop.f32.mrb[0].mxu0
      %v2210 = vadd.f32 %v2049, %v2209
      %v2211 = vpop.f32.mrb[0].mxu0
      %2212 = vmatprep.mubr.bf16.mxu0 %v989
      %2213 = vmatmul.mubr.bf16.gmra.mrb[0].mxu0 %v988
      %v2214 = vpop.f32.mrb[0].mxu0
      %v2215 = vadd.f32 %v2054, %v2214
      %v2216 = vpop.f32.mrb[0].mxu0
      %v2217 = vpop.f32.mrb[0].mxu0
      %v2218 = vadd.f32 %v2057, %v2217
      %v2219 = vpop.f32.mrb[0].mxu0
      %2220 = vmatprep.mubr.bf16.mxu0 %v998
      %2221 = vmatmul.mubr.bf16.gmra.mrb[0].mxu0 %v997
      %v2222 = vpop.f32.mrb[0].mxu0
      %v2223 = vadd.f32 %v2062, %v2222
      %v2224 = vpop.f32.mrb[0].mxu0
      %v2225 = vpop.f32.mrb[0].mxu0
      %v2226 = vadd.f32 %v2065, %v2225
      %v2227 = vpop.f32.mrb[0].mxu0
      %2228 = vmatprep.mubr.bf16.mxu0 %v1007
      %2229 = vmatmul.mubr.bf16.gmra.mrb[0].mxu0 %v1006
      %v2230 = vpop.f32.mrb[0].mxu0
      %v2231 = vadd.f32 %v2070, %v2230
      %v2232 = vpop.f32.mrb[0].mxu0
      %v2233 = vpop.f32.mrb[0].mxu0
      %v2234 = vadd.f32 %v2073, %v2233
      %v2235 = vpop.f32.mrb[0].mxu0
      %2236 = vmatprep.mubr.bf16.mxu0 %v1016
      %2237 = vmatmul.mubr.bf16.gmra.mrb[0].mxu0 %v1015
      %v2238 = vpop.f32.mrb[0].mxu0
      %v2239 = vadd.f32 %v2078, %v2238
      %v2240 = vpop.f32.mrb[0].mxu0
      %v2241 = vpop.f32.mrb[0].mxu0
      %v2242 = vadd.f32 %v2081, %v2241
      %v2243 = vpop.f32.mrb[0].mxu0
      %2244 = vmatprep.mubr.bf16.mxu0 %v1025
      %2245 = vmatmul.mubr.bf16.gmra.mrb[0].mxu0 %v1024
      %v2246 = vpop.f32.mrb[0].mxu0
      %v2247 = vadd.f32 %v2086, %v2246
      %v2248 = vpop.f32.mrb[0].mxu0
      %v2249 = vpop.f32.mrb[0].mxu0
      %v2250 = vadd.f32 %v2089, %v2249
      %v2251 = vpop.f32.mrb[0].mxu0
      %2252 = vmatprep.mubr.bf16.mxu0 %v1034
      %2253 = vmatmul.mubr.bf16.gmra.mrb[0].mxu0 %v1033
      %v2254 = vpop.f32.mrb[0].mxu0
      %v2255 = vadd.f32 %v2094, %v2254
      %v2256 = vpop.f32.mrb[0].mxu0
      %v2257 = vpop.f32.mrb[0].mxu0
      %v2258 = vadd.f32 %v2097, %v2257
      %v2259 = vpop.f32.mrb[0].mxu0
      %2260 = vmatprep.mubr.bf16.mxu0 %v1043
      %2261 = vmatmul.mubr.bf16.gmra.mrb[0].mxu0 %v1042
      %v2262 = vpop.f32.mrb[0].mxu0
      %v2263 = vadd.f32 %v2102, %v2262
      %v2264 = vpop.f32.mrb[0].mxu0
      %v2265 = vpop.f32.mrb[0].mxu0
      %v2266 = vadd.f32 %v2105, %v2265
      %v2267 = vpop.f32.mrb[0].mxu0
      %2268 = vmatprep.mubr.bf16.mxu0 %v1052
      %2269 = vmatmul.mubr.bf16.gmra.mrb[0].mxu0 %v1051
      %v2270 = vpop.f32.mrb[0].mxu0
      %v2271 = vadd.f32 %v2110, %v2270
      %v2272 = vpop.f32.mrb[0].mxu0
      %v2273 = vpop.f32.mrb[0].mxu0
      %v2274 = vadd.f32 %v2113, %v2273
      %v2275 = vpop.f32.mrb[0].mxu0
      %2276 = vmatprep.mubr.bf16.mxu0 %v1061
      %2277 = vmatmul.mubr.bf16.gmra.mrb[0].mxu0 %v1060
      %v2278 = vpop.f32.mrb[0].mxu0
      %v2279 = vadd.f32 %v2118, %v2278
      %v2280 = vpop.f32.mrb[0].mxu0
      %v2281 = vpop.f32.mrb[0].mxu0
      %v2282 = vadd.f32 %v2121, %v2281
      %v2283 = vpop.f32.mrb[0].mxu0
      %2284 = vmatprep.mubr.bf16.mxu0 %v1070
      %2285 = vmatmul.mubr.bf16.gmra.mrb[0].mxu0 %v1069
      %v2286 = vpop.f32.mrb[0].mxu0
      %v2287 = vadd.f32 %v2126, %v2286
      %v2288 = vpop.f32.mrb[0].mxu0
      %v2289 = vpop.f32.mrb[0].mxu0
      %v2290 = vadd.f32 %v2129, %v2289
      %v2291 = vpop.f32.mrb[0].mxu0
      %2292 = vmatprep.mubr.bf16.mxu0 %v1079
      %2293 = vmatmul.mubr.bf16.gmra.mrb[0].mxu0 %v1078
      %v2294 = vpop.f32.mrb[0].mxu0
      %v2295 = vadd.f32 %v2134, %v2294
      %v2296 = vpop.f32.mrb[0].mxu0
      %v2297 = vpop.f32.mrb[0].mxu0
      %v2298 = vadd.f32 %v2137, %v2297
      %v2299 = vpop.f32.mrb[0].mxu0
      %2300 = vdwg.mxu0
      %2301 = vmatprep.subr.bf16.mxu0 0
      %2302 = vmatpush1.bf16.msra.mxu0 %v1577
      %2303 = vmatprep.subr.bf16.mxu0 0
      %2304 = vmatpush1.bf16.msra.mxu0 %v1578
      %2305 = vmatprep.subr.bf16.mxu0 0
      %2306 = vmatpush1.bf16.msra.mxu0 %v1579
      %2307 = vmatprep.subr.bf16.mxu0 0
      %2308 = vmatpush1.bf16.msra.mxu0 %v1580
      %2309 = vmatprep.subr.bf16.mxu0 0
      %2310 = vmatpush1.bf16.msra.mxu0 %v1581
      %2311 = vmatprep.subr.bf16.mxu0 0
      %2312 = vmatpush1.bf16.msra.mxu0 %v1582
      %2313 = vmatprep.subr.bf16.mxu0 0
      %2314 = vmatpush1.bf16.msra.mxu0 %v1583
      %2315 = vmatprep.subr.bf16.mxu0 0
      %2316 = vmatpush1.bf16.msra.mxu0 %v1584
      %2317 = vmatprep.subr.bf16.mxu0 0
      %2318 = vmatpush1.bf16.msra.mxu0 0
      %2319 = vmatprep.subr.bf16.mxu0 0
      %2320 = vmatpush1.bf16.msra.mxu0 0
      %2321 = vmatprep.subr.bf16.mxu0 0
      %2322 = vmatpush1.bf16.msra.mxu0 0
      %2323 = vmatprep.subr.bf16.mxu0 0
      %2324 = vmatpush1.bf16.msra.mxu0 0
      %2325 = vmatprep.subr.bf16.mxu0 0
      %2326 = vmatpush1.bf16.msra.mxu0 0
      %2327 = vmatprep.subr.bf16.mxu0 0
      %2328 = vmatpush1.bf16.msra.mxu0 0
      %2329 = vmatprep.subr.bf16.mxu0 0
      %2330 = vmatpush1.bf16.msra.mxu0 0
      %2331 = vmatprep.subr.bf16.mxu0 0
      %2332 = vmatpush1.bf16.msra.mxu0 0
      %2333 = vmatprep.mubr.bf16.mxu0 0
      %2334 = vmatmul.mubr.bf16.gmra.mrb[0].mxu0 %v945
      %v2335 = vpop.f32.mrb[0].mxu0
      %v2336 = vadd.f32 %v2175, %v2335
      %v2337 = vpop.f32.mrb[0].mxu0
      %v2338 = vpop.f32.mrb[0].mxu0
      %v2339 = vadd.f32 %v2178, %v2338
      %v2340 = vpop.f32.mrb[0].mxu0
      %2341 = vmatprep.mubr.bf16.mxu0 0
      %2342 = vmatmul.mubr.bf16.gmra.mrb[0].mxu0 %v954
      %v2343 = vpop.f32.mrb[0].mxu0
      %v2344 = vadd.f32 %v2183, %v2343
      %v2345 = vpop.f32.mrb[0].mxu0
      %v2346 = vpop.f32.mrb[0].mxu0
      %v2347 = vadd.f32 %v2186, %v2346
      %v2348 = vpop.f32.mrb[0].mxu0
      %2349 = vmatprep.mubr.bf16.mxu0 0
      %2350 = vmatmul.mubr.bf16.gmra.mrb[0].mxu0 %v963
      %v2351 = vpop.f32.mrb[0].mxu0
      %v2352 = vadd.f32 %v2191, %v2351
      %v2353 = vpop.f32.mrb[0].mxu0
      %v2354 = vpop.f32.mrb[0].mxu0
      %v2355 = vadd.f32 %v2194, %v2354
      %v2356 = vpop.f32.mrb[0].mxu0
      %2357 = vmatprep.mubr.bf16.mxu0 0
      %2358 = vmatmul.mubr.bf16.gmra.mrb[0].mxu0 %v972
      %v2359 = vpop.f32.mrb[0].mxu0
      %v2360 = vadd.f32 %v2199, %v2359
      %v2361 = vpop.f32.mrb[0].mxu0
      %v2362 = vpop.f32.mrb[0].mxu0
      %v2363 = vadd.f32 %v2202, %v2362
      %v2364 = vpop.f32.mrb[0].mxu0
      %2365 = vmatprep.mubr.bf16.mxu0 0
      %2366 = vmatmul.mubr.bf16.gmra.mrb[0].mxu0 %v981
      %v2367 = vpop.f32.mrb[0].mxu0
      %v2368 = vadd.f32 %v2207, %v2367
      %v2369 = vpop.f32.mrb[0].mxu0
      %v2370 = vpop.f32.mrb[0].mxu0
      %v2371 = vadd.f32 %v2210, %v2370
      %v2372 = vpop.f32.mrb[0].mxu0
      %2373 = vmatprep.mubr.bf16.mxu0 0
      %2374 = vmatmul.mubr.bf16.gmra.mrb[0].mxu0 %v990
      %v2375 = vpop.f32.mrb[0].mxu0
      %v2376 = vadd.f32 %v2215, %v2375
      %v2377 = vpop.f32.mrb[0].mxu0
      %v2378 = vpop.f32.mrb[0].mxu0
      %v2379 = vadd.f32 %v2218, %v2378
      %v2380 = vpop.f32.mrb[0].mxu0
      %2381 = vmatprep.mubr.bf16.mxu0 0
      %2382 = vmatmul.mubr.bf16.gmra.mrb[0].mxu0 %v999
      %v2383 = vpop.f32.mrb[0].mxu0
      %v2384 = vadd.f32 %v2223, %v2383
      %v2385 = vpop.f32.mrb[0].mxu0
      %v2386 = vpop.f32.mrb[0].mxu0
      %v2387 = vadd.f32 %v2226, %v2386
      %v2388 = vpop.f32.mrb[0].mxu0
      %2389 = vmatprep.mubr.bf16.mxu0 0
      %2390 = vmatmul.mubr.bf16.gmra.mrb[0].mxu0 %v1008
      %v2391 = vpop.f32.mrb[0].mxu0
      %v2392 = vadd.f32 %v2231, %v2391
      %v2393 = vpop.f32.mrb[0].mxu0
      %v2394 = vpop.f32.mrb[0].mxu0
      %v2395 = vadd.f32 %v2234, %v2394
      %v2396 = vpop.f32.mrb[0].mxu0
      %2397 = vmatprep.mubr.bf16.mxu0 0
      %2398 = vmatmul.mubr.bf16.gmra.mrb[0].mxu0 %v1017
      %v2399 = vpop.f32.mrb[0].mxu0
      %v2400 = vadd.f32 %v2239, %v2399
      %v2401 = vpop.f32.mrb[0].mxu0
      %v2402 = vpop.f32.mrb[0].mxu0
      %v2403 = vadd.f32 %v2242, %v2402
      %v2404 = vpop.f32.mrb[0].mxu0
      %2405 = vmatprep.mubr.bf16.mxu0 0
      %2406 = vmatmul.mubr.bf16.gmra.mrb[0].mxu0 %v1026
      %v2407 = vpop.f32.mrb[0].mxu0
      %v2408 = vadd.f32 %v2247, %v2407
      %v2409 = vpop.f32.mrb[0].mxu0
      %v2410 = vpop.f32.mrb[0].mxu0
      %v2411 = vadd.f32 %v2250, %v2410
      %v2412 = vpop.f32.mrb[0].mxu0
      %2413 = vmatprep.mubr.bf16.mxu0 0
      %2414 = vmatmul.mubr.bf16.gmra.mrb[0].mxu0 %v1035
      %v2415 = vpop.f32.mrb[0].mxu0
      %v2416 = vadd.f32 %v2255, %v2415
      %v2417 = vpop.f32.mrb[0].mxu0
      %v2418 = vpop.f32.mrb[0].mxu0
      %v2419 = vadd.f32 %v2258, %v2418
      %v2420 = vpop.f32.mrb[0].mxu0
      %2421 = vmatprep.mubr.bf16.mxu0 0
      %2422 = vmatmul.mubr.bf16.gmra.mrb[0].mxu0 %v1044
      %v2423 = vpop.f32.mrb[0].mxu0
      %v2424 = vadd.f32 %v2263, %v2423
      %v2425 = vpop.f32.mrb[0].mxu0
      %v2426 = vpop.f32.mrb[0].mxu0
      %v2427 = vadd.f32 %v2266, %v2426
      %v2428 = vpop.f32.mrb[0].mxu0
      %2429 = vmatprep.mubr.bf16.mxu0 0
      %2430 = vmatmul.mubr.bf16.gmra.mrb[0].mxu0 %v1053
      %v2431 = vpop.f32.mrb[0].mxu0
      %v2432 = vadd.f32 %v2271, %v2431
      %v2433 = vpop.f32.mrb[0].mxu0
      %v2434 = vpop.f32.mrb[0].mxu0
      %v2435 = vadd.f32 %v2274, %v2434
      %v2436 = vpop.f32.mrb[0].mxu0
      %2437 = vmatprep.mubr.bf16.mxu0 0
      %2438 = vmatmul.mubr.bf16.gmra.mrb[0].mxu0 %v1062
      %v2439 = vpop.f32.mrb[0].mxu0
      %v2440 = vadd.f32 %v2279, %v2439
      %v2441 = vpop.f32.mrb[0].mxu0
      %v2442 = vpop.f32.mrb[0].mxu0
      %v2443 = vadd.f32 %v2282, %v2442
      %v2444 = vpop.f32.mrb[0].mxu0
      %2445 = vmatprep.mubr.bf16.mxu0 0
      %2446 = vmatmul.mubr.bf16.gmra.mrb[0].mxu0 %v1071
      %v2447 = vpop.f32.mrb[0].mxu0
      %v2448 = vadd.f32 %v2287, %v2447
      %v2449 = vpop.f32.mrb[0].mxu0
      %v2450 = vpop.f32.mrb[0].mxu0
      %v2451 = vadd.f32 %v2290, %v2450
      %v2452 = vpop.f32.mrb[0].mxu0
      %2453 = vmatprep.mubr.bf16.mxu0 0
      %2454 = vmatmul.mubr.bf16.gmra.mrb[0].mxu0 %v1080
      %v2455 = vpop.f32.mrb[0].mxu0
      %v2456 = vadd.f32 %v2295, %v2455
      %v2457 = vpop.f32.mrb[0].mxu0
      %v2458 = vpop.f32.mrb[0].mxu0
      %v2459 = vadd.f32 %v2298, %v2458
      %v2460 = vpop.f32.mrb[0].mxu0
      %2461 = vdwg.mxu0
      %vm2462 = vcmp.gt.f32.partialorder %v2336, 0.0
      %vm2463 = vcmp.gt.f32.partialorder %v2339, 0.0
      %vm2464 = vcmp.gt.f32.partialorder %v2344, 0.0
      %vm2465 = vcmp.gt.f32.partialorder %v2347, 0.0
      %vm2466 = vcmp.gt.f32.partialorder %v2352, 0.0
      %vm2467 = vcmp.gt.f32.partialorder %v2355, 0.0
      %vm2468 = vcmp.gt.f32.partialorder %v2360, 0.0
      %vm2469 = vcmp.gt.f32.partialorder %v2363, 0.0
      %vm2470 = vcmp.gt.f32.partialorder %v2368, 0.0
      %vm2471 = vcmp.gt.f32.partialorder %v2371, 0.0
      %vm2472 = vcmp.gt.f32.partialorder %v2376, 0.0
      %vm2473 = vcmp.gt.f32.partialorder %v2379, 0.0
      %vm2474 = vcmp.gt.f32.partialorder %v2384, 0.0
      %vm2475 = vcmp.gt.f32.partialorder %v2387, 0.0
      %vm2476 = vcmp.gt.f32.partialorder %v2392, 0.0
      %vm2477 = vcmp.gt.f32.partialorder %v2395, 0.0
      %vm2478 = vcmp.gt.f32.partialorder %v2400, 0.0
      %vm2479 = vcmp.gt.f32.partialorder %v2403, 0.0
      %vm2480 = vcmp.gt.f32.partialorder %v2408, 0.0
      %vm2481 = vcmp.gt.f32.partialorder %v2411, 0.0
      %vm2482 = vcmp.gt.f32.partialorder %v2416, 0.0
      %vm2483 = vcmp.gt.f32.partialorder %v2419, 0.0
      %vm2484 = vcmp.gt.f32.partialorder %v2424, 0.0
      %vm2485 = vcmp.gt.f32.partialorder %v2427, 0.0
      %vm2486 = vcmp.gt.f32.partialorder %v2432, 0.0
      %vm2487 = vcmp.gt.f32.partialorder %v2435, 0.0
      %vm2488 = vcmp.gt.f32.partialorder %v2440, 0.0
      %vm2489 = vcmp.gt.f32.partialorder %v2443, 0.0
      %vm2490 = vcmp.gt.f32.partialorder %v2448, 0.0
      %vm2491 = vcmp.gt.f32.partialorder %v2451, 0.0
      %vm2492 = vcmp.gt.f32.partialorder %v2456, 0.0
      %vm2493 = vcmp.gt.f32.partialorder %v2459, 0.0
      %v2494 = vmul.f32 %v2336, 0.1
      %v2495 = vmul.f32 %v2339, 0.1
      %v2496 = vmul.f32 %v2344, 0.1
      %v2497 = vmul.f32 %v2347, 0.1
      %v2498 = vmul.f32 %v2352, 0.1
      %v2499 = vmul.f32 %v2355, 0.1
      %v2500 = vmul.f32 %v2360, 0.1
      %v2501 = vmul.f32 %v2363, 0.1
      %v2502 = vmul.f32 %v2368, 0.1
      %v2503 = vmul.f32 %v2371, 0.1
      %v2504 = vmul.f32 %v2376, 0.1
      %v2505 = vmul.f32 %v2379, 0.1
      %v2506 = vmul.f32 %v2384, 0.1
      %v2507 = vmul.f32 %v2387, 0.1
      %v2508 = vmul.f32 %v2392, 0.1
      %v2509 = vmul.f32 %v2395, 0.1
      %v2510 = vmul.f32 %v2400, 0.1
      %v2511 = vmul.f32 %v2403, 0.1
      %v2512 = vmul.f32 %v2408, 0.1
      %v2513 = vmul.f32 %v2411, 0.1
      %v2514 = vmul.f32 %v2416, 0.1
      %v2515 = vmul.f32 %v2419, 0.1
      %v2516 = vmul.f32 %v2424, 0.1
      %v2517 = vmul.f32 %v2427, 0.1
      %v2518 = vmul.f32 %v2432, 0.1
      %v2519 = vmul.f32 %v2435, 0.1
      %v2520 = vmul.f32 %v2440, 0.1
      %v2521 = vmul.f32 %v2443, 0.1
      %v2522 = vmul.f32 %v2448, 0.1
      %v2523 = vmul.f32 %v2451, 0.1
      %v2524 = vmul.f32 %v2456, 0.1
      %v2525 = vmul.f32 %v2459, 0.1
      %v2526 = vsel %vm2462, %v2336, %v2494
      %v2527 = vsel %vm2463, %v2339, %v2495
      %v2528 = vsel %vm2464, %v2344, %v2496
      %v2529 = vsel %vm2465, %v2347, %v2497
      %v2530 = vsel %vm2466, %v2352, %v2498
      %v2531 = vsel %vm2467, %v2355, %v2499
      %v2532 = vsel %vm2468, %v2360, %v2500
      %v2533 = vsel %vm2469, %v2363, %v2501
      %v2534 = vsel %vm2470, %v2368, %v2502
      %v2535 = vsel %vm2471, %v2371, %v2503
      %v2536 = vsel %vm2472, %v2376, %v2504
      %v2537 = vsel %vm2473, %v2379, %v2505
      %v2538 = vsel %vm2474, %v2384, %v2506
      %v2539 = vsel %vm2475, %v2387, %v2507
      %v2540 = vsel %vm2476, %v2392, %v2508
      %v2541 = vsel %vm2477, %v2395, %v2509
      %v2542 = vsel %vm2478, %v2400, %v2510
      %v2543 = vsel %vm2479, %v2403, %v2511
      %v2544 = vsel %vm2480, %v2408, %v2512
      %v2545 = vsel %vm2481, %v2411, %v2513
      %v2546 = vsel %vm2482, %v2416, %v2514
      %v2547 = vsel %vm2483, %v2419, %v2515
      %v2548 = vsel %vm2484, %v2424, %v2516
      %v2549 = vsel %vm2485, %v2427, %v2517
      %v2550 = vsel %vm2486, %v2432, %v2518
      %v2551 = vsel %vm2487, %v2435, %v2519
      %v2552 = vsel %vm2488, %v2440, %v2520
      %v2553 = vsel %vm2489, %v2443, %v2521
      %v2554 = vsel %vm2490, %v2448, %v2522
      %v2555 = vsel %vm2491, %v2451, %v2523
      %v2556 = vsel %vm2492, %v2456, %v2524
      %v2557 = vsel %vm2493, %v2459, %v2525
      %v2558 = vpack.c.bf16 %v2527, %v2526
      %v2559 = vpack.c.bf16 %v2529, %v2528
      %v2560 = vpack.c.bf16 %v2531, %v2530
      %v2561 = vpack.c.bf16 %v2533, %v2532
      %v2562 = vpack.c.bf16 %v2535, %v2534
      %v2563 = vpack.c.bf16 %v2537, %v2536
      %v2564 = vpack.c.bf16 %v2539, %v2538
      %v2565 = vpack.c.bf16 %v2541, %v2540
      %v2566 = vpack.c.bf16 %v2543, %v2542
      %v2567 = vpack.c.bf16 %v2545, %v2544
      %v2568 = vpack.c.bf16 %v2547, %v2546
      %v2569 = vpack.c.bf16 %v2549, %v2548
      %v2570 = vpack.c.bf16 %v2551, %v2550
      %v2571 = vpack.c.bf16 %v2553, %v2552
      %v2572 = vpack.c.bf16 %v2555, %v2554
      %v2573 = vpack.c.bf16 %v2557, %v2556
      %v2590 = vunpack.c.l.b16 %v2558
      %v2591 = vunpack.c.h.b16 %v2558
      %v2592 = vunpack.c.l.b16 %v2559
      %v2593 = vunpack.c.h.b16 %v2559
      %v2594 = vunpack.c.l.b16 %v2560
      %v2595 = vunpack.c.h.b16 %v2560
      %v2596 = vunpack.c.l.b16 %v2561
      %v2597 = vunpack.c.h.b16 %v2561
      %v2598 = vunpack.c.l.b16 %v2562
      %v2599 = vunpack.c.h.b16 %v2562
      %v2600 = vunpack.c.l.b16 %v2563
      %v2601 = vunpack.c.h.b16 %v2563
      %v2602 = vunpack.c.l.b16 %v2564
      %v2603 = vunpack.c.h.b16 %v2564
      %v2604 = vunpack.c.l.b16 %v2565
      %v2605 = vunpack.c.h.b16 %v2565
      %v2606 = vunpack.c.l.b16 %v2566
      %v2607 = vunpack.c.h.b16 %v2566
      %v2608 = vunpack.c.l.b16 %v2567
      %v2609 = vunpack.c.h.b16 %v2567
      %v2610 = vunpack.c.l.b16 %v2568
      %v2611 = vunpack.c.h.b16 %v2568
      %v2612 = vunpack.c.l.b16 %v2569
      %v2613 = vunpack.c.h.b16 %v2569
      %v2614 = vunpack.c.l.b16 %v2570
      %v2615 = vunpack.c.h.b16 %v2570
      %v2616 = vunpack.c.l.b16 %v2571
      %v2617 = vunpack.c.h.b16 %v2571
      %v2618 = vunpack.c.l.b16 %v2572
      %v2619 = vunpack.c.h.b16 %v2572
      %v2620 = vunpack.c.l.b16 %v2573
      %v2621 = vunpack.c.h.b16 %v2573
      %v2622 = vpack.c.b16 %v2590, %v2590
      %v2623 = vpack.c.b16 %v2591, %v2591
      %v2624 = vpack.c.b16 %v2592, %v2592
      %v2625 = vpack.c.b16 %v2593, %v2593
      %v2626 = vpack.c.b16 %v2594, %v2594
      %v2627 = vpack.c.b16 %v2595, %v2595
      %v2628 = vpack.c.b16 %v2596, %v2596
      %v2629 = vpack.c.b16 %v2597, %v2597
      %v2630 = vpack.c.b16 %v2598, %v2598
      %v2631 = vpack.c.b16 %v2599, %v2599
      %v2632 = vpack.c.b16 %v2600, %v2600
      %v2633 = vpack.c.b16 %v2601, %v2601
      %v2634 = vpack.c.b16 %v2602, %v2602
      %v2635 = vpack.c.b16 %v2603, %v2603
      %v2636 = vpack.c.b16 %v2604, %v2604
      %v2637 = vpack.c.b16 %v2605, %v2605
      %v2638 = vpack.c.b16 %v2606, %v2606
      %v2639 = vpack.c.b16 %v2607, %v2607
      %v2640 = vpack.c.b16 %v2608, %v2608
      %v2641 = vpack.c.b16 %v2609, %v2609
      %v2642 = vpack.c.b16 %v2610, %v2610
      %v2643 = vpack.c.b16 %v2611, %v2611
      %v2644 = vpack.c.b16 %v2612, %v2612
      %v2645 = vpack.c.b16 %v2613, %v2613
      %v2646 = vpack.c.b16 %v2614, %v2614
      %v2647 = vpack.c.b16 %v2615, %v2615
      %v2648 = vpack.c.b16 %v2616, %v2616
      %v2649 = vpack.c.b16 %v2617, %v2617
      %v2650 = vpack.c.b16 %v2618, %v2618
      %v2651 = vpack.c.b16 %v2619, %v2619
      %v2652 = vpack.c.b16 %v2620, %v2620
      %v2653 = vpack.c.b16 %v2621, %v2621
      %2686 = vst [vmem:[%s175] sm:$0xf] %v2622
      %2687 = vst [vmem:[%s175 + $0x4] sm:$0xf] %v2623
      %2688 = vst [vmem:[%s175 + $0x8] sm:$0xf] %v2624
      %2689 = vst [vmem:[%s175 + $0xc] sm:$0xf] %v2625
      %2690 = vst [vmem:[%s175 + $0x10] sm:$0xf] %v2626
      %2691 = vst [vmem:[%s175 + $0x14] sm:$0xf] %v2627
      %2692 = vst [vmem:[%s175 + $0x18] sm:$0xf] %v2628
      %2693 = vst [vmem:[%s175 + $0x1c] sm:$0xf] %v2629
      %2694 = vst [vmem:[%s175 + $0x20] sm:$0xf] %v2630
      %2695 = vst [vmem:[%s175 + $0x24] sm:$0xf] %v2631
      %2696 = vst [vmem:[%s175 + $0x28] sm:$0xf] %v2632
      %2697 = vst [vmem:[%s175 + $0x2c] sm:$0xf] %v2633
      %2698 = vst [vmem:[%s175 + $0x30] sm:$0xf] %v2634
      %2699 = vst [vmem:[%s175 + $0x34] sm:$0xf] %v2635
      %2700 = vst [vmem:[%s175 + $0x38] sm:$0xf] %v2636
      %2701 = vst [vmem:[%s175 + $0x3c] sm:$0xf] %v2637
      %2702 = vst [vmem:[%s175 + $0x40] sm:$0xf] %v2638
      %2703 = vst [vmem:[%s175 + $0x44] sm:$0xf] %v2639
      %2704 = vst [vmem:[%s175 + $0x48] sm:$0xf] %v2640
      %2705 = vst [vmem:[%s175 + $0x4c] sm:$0xf] %v2641
      %2706 = vst [vmem:[%s175 + $0x50] sm:$0xf] %v2642
      %2707 = vst [vmem:[%s175 + $0x54] sm:$0xf] %v2643
      %2708 = vst [vmem:[%s175 + $0x58] sm:$0xf] %v2644
      %2709 = vst [vmem:[%s175 + $0x5c] sm:$0xf] %v2645
      %2710 = vst [vmem:[%s175 + $0x60] sm:$0xf] %v2646
      %2711 = vst [vmem:[%s175 + $0x64] sm:$0xf] %v2647
      %2712 = vst [vmem:[%s175 + $0x68] sm:$0xf] %v2648
      %2713 = vst [vmem:[%s175 + $0x6c] sm:$0xf] %v2649
      %2714 = vst [vmem:[%s175 + $0x70] sm:$0xf] %v2650
      %2715 = vst [vmem:[%s175 + $0x74] sm:$0xf] %v2651
      %2716 = vst [vmem:[%s175 + $0x78] sm:$0xf] %v2652
      %2717 = vst [vmem:[%s175 + $0x7c] sm:$0xf] %v2653
      %s2718 = smul.u32 32, %s14
      %p2719 = scmp.lt.s32.totalorder %s2718, 63
      %s2720 = scalar_select %p2719, %s2718, 63
      %s2721 = smul.addr %s2720, 4
      %s2722 = scalar_lea.vmem %s3, %s2721
      // Predicated region
      $region33: #{yolov3_forward.7} parent=31 // pred_check
        %p2723 = pneg %p100
      $region34: #{yolov3_forward.7} parent=31 // pred_check_branch
        %2725 = sbr.rel (%p2723) target = $region36
      $region35: #{yolov3_forward.7} parent=31 // pred_region
        %s2726 = smul.u32 32, %s14
      $region36: #{yolov3_forward.7} parent=31 // pred_fallthru
        _
    $region32: #{yolov3_forward.7} parent=5 // pred_fallthru
      _
    %p2727 = scmp.le.s32.totalorder 2, %s9
    // Predicated region
    $region37: #{yolov3_forward.7} parent=5 // pred_check
      %p2728 = pneg %p2727
    $region38: #{yolov3_forward.7} parent=5 // pred_check_branch
      %2730 = sbr.rel (%p2728) target = $region40
    $region39: #{yolov3_forward.7} parent=5 // pred_region
      %s2731 = ssub.s32 %s9, 2
      // Predicated region
      $region41: #{yolov3_forward.7} parent=39 // pred_check
        %p2732 = pneg %p106
      $region42: #{yolov3_forward.7} parent=39 // pred_check_branch
        %2734 = sbr.rel (%p2732) target = $region44
      $region43: #{yolov3_forward.7} parent=39 // pred_region
        %s2735 = smul.u32 32, %s15
        %p2736 = scmp.lt.s32.totalorder %s2735, 63
        %s2737 = scalar_select %p2736, %s2735, 63
        %s2738 = smul.addr %s2737, 4
        %s2739 = scalar_lea.vmem %s3, %s2738
      $region44: #{yolov3_forward.7} parent=39 // pred_fallthru
        _
    $region40: #{yolov3_forward.7} parent=5 // pred_fallthru
      _
  $region6: #{yolov3_forward.7} parent=0 // loop_footer
    %s13 = sadd.s32 1, %s9
  $region7: #{yolov3_forward.7} parent=0 // loop_footer_branch
    %8 = sbr.rel target = $region3
  $region8: #{yolov3_forward.7} parent=0 // loop_exit
    _

// kernel: yolov3_forward.8
$region0: #{yolov3_forward.8}
  #allocation0 [shape = 'u32[]', space=smem, size = 0x4, offset = 0x4, fixed_abs, tag = 'smem constant byte address 0x4 - core index']
  #allocation1 [shape = 'u32[144,128]{1,0:T(1,128)}', space=vmem, size = 0x12000, scoped, tag = 'internal scratch']
  %s0 = inlined_call_operand.vmem [shape: bf16[128,1152], index: 0, kind: input, shape index: {}]
  %s1 = inlined_call_operand.vmem [shape: bf16[1152,128], index: 1, kind: input, shape index: {}]
  %s2 = inlined_call_operand.vmem [shape: f32[1,128], index: 2, kind: input, shape index: {}]
  %s3 = inlined_call_operand.vmem [shape: bf16[128,128], index: 3, kind: input, shape index: {}]
  %s4 = inlined_call_operand.vmem [shape: f32[1,128], index: 4, kind: input, shape index: {}]
  %s5 = inlined_call_operand.vmem [shape: bf16[128,128], index: 5, kind: output, shape index: {0}]
  %s6 = inlined_call_operand.vmem [shape: bf16[128,128], index: 6, kind: output, shape index: {1}]
  %7 = xla_tuple %s5, %s6
  %s8 = sld [smem:[#allocation0]]
  $region38: #{yolov3_forward.8} parent=0
    _
  %s10 = ssub.s32 1, %s8
  %s11 = scalar_select 0, %s10, %s8
  // Predicated region
  $region2: #{yolov3_forward.8} parent=0 // pred_check
    _
  $region3: #{yolov3_forward.8} parent=0 // pred_check_branch
    %13 = sbr.rel (0) target = $region5
  $region4: #{yolov3_forward.8} parent=0 // pred_region
    _
  $region5: #{yolov3_forward.8} parent=0 // pred_fallthru
    _
  // Predicated region
  $region6: #{yolov3_forward.8} parent=0 // pred_check
    _
  $region7: #{yolov3_forward.8} parent=0 // pred_check_branch
    %15 = sbr.rel (0) target = $region9
  $region8: #{yolov3_forward.8} parent=0 // pred_region
    _
  $region9: #{yolov3_forward.8} parent=0 // pred_fallthru
    _
  // Predicated region
  $region10: #{yolov3_forward.8} parent=0 // pred_check
    _
  $region11: #{yolov3_forward.8} parent=0 // pred_check_branch
    %17 = sbr.rel (0) target = $region13
  $region12: #{yolov3_forward.8} parent=0 // pred_region
    _
  $region13: #{yolov3_forward.8} parent=0 // pred_fallthru
    _
  // Predicated region
  $region14: #{yolov3_forward.8} parent=0 // pred_check
    _
  $region15: #{yolov3_forward.8} parent=0 // pred_check_branch
    %19 = sbr.rel (0) target = $region17
  $region16: #{yolov3_forward.8} parent=0 // pred_region
    _
  $region17: #{yolov3_forward.8} parent=0 // pred_fallthru
    _
  // Predicated region
  $region18: #{yolov3_forward.8} parent=0 // pred_check
    _
  $region19: #{yolov3_forward.8} parent=0 // pred_check_branch
    %21 = sbr.rel (0) target = $region21
  $region20: #{yolov3_forward.8} parent=0 // pred_region
    _
  $region21: #{yolov3_forward.8} parent=0 // pred_fallthru
    _
  %v23 = vld [vmem:[%s0] sm:$0xff]
  %v24 = vld [vmem:[%s0 + $0x8] sm:$0xff]
  %v25 = vld [vmem:[%s0 + $0x10] sm:$0xff]
  %v26 = vld [vmem:[%s0 + $0x18] sm:$0xff]
  %v27 = vld [vmem:[%s0 + $0x20] sm:$0xf]
  %v28 = vld [vmem:[%s0 + $0x24] sm:$0xff]
  %v29 = vld [vmem:[%s0 + $0x2c] sm:$0xff]
  %v30 = vld [vmem:[%s0 + $0x34] sm:$0xff]
  %v31 = vld [vmem:[%s0 + $0x3c] sm:$0xff]
  %v32 = vld [vmem:[%s0 + $0x44] sm:$0xf]
  %v33 = vld [vmem:[%s0 + $0x48] sm:$0xff]
  %v34 = vld [vmem:[%s0 + $0x50] sm:$0xff]
  %v35 = vld [vmem:[%s0 + $0x58] sm:$0xff]
  %v36 = vld [vmem:[%s0 + $0x60] sm:$0xff]
  %v37 = vld [vmem:[%s0 + $0x68] sm:$0xf]
  %v38 = vld [vmem:[%s0 + $0x6c] sm:$0xff]
  %v39 = vld [vmem:[%s0 + $0x74] sm:$0xff]
  %v40 = vld [vmem:[%s0 + $0x7c] sm:$0xff]
  %v41 = vld [vmem:[%s0 + $0x84] sm:$0xff]
  %v42 = vld [vmem:[%s0 + $0x8c] sm:$0xf]
  %v43 = vld [vmem:[%s0 + $0x90] sm:$0xff]
  %v44 = vld [vmem:[%s0 + $0x98] sm:$0xff]
  %v45 = vld [vmem:[%s0 + $0xa0] sm:$0xff]
  %v46 = vld [vmem:[%s0 + $0xa8] sm:$0xff]
  %v47 = vld [vmem:[%s0 + $0xb0] sm:$0xf]
  %v48 = vld [vmem:[%s0 + $0xb4] sm:$0xff]
  %v49 = vld [vmem:[%s0 + $0xbc] sm:$0xff]
  %v50 = vld [vmem:[%s0 + $0xc4] sm:$0xff]
  %v51 = vld [vmem:[%s0 + $0xcc] sm:$0xff]
  %v52 = vld [vmem:[%s0 + $0xd4] sm:$0xf]
  %v53 = vld [vmem:[%s0 + $0xd8] sm:$0xff]
  %v54 = vld [vmem:[%s0 + $0xe0] sm:$0xff]
  %v55 = vld [vmem:[%s0 + $0xe8] sm:$0xff]
  %v56 = vld [vmem:[%s0 + $0xf0] sm:$0xff]
  %v57 = vld [vmem:[%s0 + $0xf8] sm:$0xf]
  %v58 = vld [vmem:[%s0 + $0xfc] sm:$0xff]
  %v59 = vld [vmem:[%s0 + $0x104] sm:$0xff]
  %v60 = vld [vmem:[%s0 + $0x10c] sm:$0xff]
  %v61 = vld [vmem:[%s0 + $0x114] sm:$0xff]
  %v62 = vld [vmem:[%s0 + $0x11c] sm:$0xf]
  %v63 = vld [vmem:[%s0 + $0x120] sm:$0xff]
  %v64 = vld [vmem:[%s0 + $0x128] sm:$0xff]
  %v65 = vld [vmem:[%s0 + $0x130] sm:$0xff]
  %v66 = vld [vmem:[%s0 + $0x138] sm:$0xff]
  %v67 = vld [vmem:[%s0 + $0x140] sm:$0xf]
  %v68 = vld [vmem:[%s0 + $0x144] sm:$0xff]
  %v69 = vld [vmem:[%s0 + $0x14c] sm:$0xff]
  %v70 = vld [vmem:[%s0 + $0x154] sm:$0xff]
  %v71 = vld [vmem:[%s0 + $0x15c] sm:$0xff]
  %v72 = vld [vmem:[%s0 + $0x164] sm:$0xf]
  %v73 = vld [vmem:[%s0 + $0x168] sm:$0xff]
  %v74 = vld [vmem:[%s0 + $0x170] sm:$0xff]
  %v75 = vld [vmem:[%s0 + $0x178] sm:$0xff]
  %v76 = vld [vmem:[%s0 + $0x180] sm:$0xff]
  %v77 = vld [vmem:[%s0 + $0x188] sm:$0xf]
  %v78 = vld [vmem:[%s0 + $0x18c] sm:$0xff]
  %v79 = vld [vmem:[%s0 + $0x194] sm:$0xff]
  %v80 = vld [vmem:[%s0 + $0x19c] sm:$0xff]
  %v81 = vld [vmem:[%s0 + $0x1a4] sm:$0xff]
  %v82 = vld [vmem:[%s0 + $0x1ac] sm:$0xf]
  %v83 = vld [vmem:[%s0 + $0x1b0] sm:$0xff]
  %v84 = vld [vmem:[%s0 + $0x1b8] sm:$0xff]
  %v85 = vld [vmem:[%s0 + $0x1c0] sm:$0xff]
  %v86 = vld [vmem:[%s0 + $0x1c8] sm:$0xff]
  %v87 = vld [vmem:[%s0 + $0x1d0] sm:$0xf]
  %v88 = vld [vmem:[%s0 + $0x1d4] sm:$0xff]
  %v89 = vld [vmem:[%s0 + $0x1dc] sm:$0xff]
  %v90 = vld [vmem:[%s0 + $0x1e4] sm:$0xff]
  %v91 = vld [vmem:[%s0 + $0x1ec] sm:$0xff]
  %v92 = vld [vmem:[%s0 + $0x1f4] sm:$0xf]
  %v93 = vld [vmem:[%s0 + $0x1f8] sm:$0xff]
  %v94 = vld [vmem:[%s0 + $0x200] sm:$0xff]
  %v95 = vld [vmem:[%s0 + $0x208] sm:$0xff]
  %v96 = vld [vmem:[%s0 + $0x210] sm:$0xff]
  %v97 = vld [vmem:[%s0 + $0x218] sm:$0xf]
  %v98 = vld [vmem:[%s0 + $0x21c] sm:$0xff]
  %v99 = vld [vmem:[%s0 + $0x224] sm:$0xff]
  %v100 = vld [vmem:[%s0 + $0x22c] sm:$0xff]
  %v101 = vld [vmem:[%s0 + $0x234] sm:$0xff]
  %v102 = vld [vmem:[%s0 + $0x23c] sm:$0xf]
  %v103 = vld [vmem:[%s1] sm:$0xf]
  %v104 = vld [vmem:[%s1 + $0x4] sm:$0xf]
  %v105 = vld [vmem:[%s1 + $0x8] sm:$0xf]
  %v106 = vld [vmem:[%s1 + $0xc] sm:$0xf]
  %v107 = vld [vmem:[%s1 + $0x10] sm:$0xf]
  %v108 = vld [vmem:[%s1 + $0x14] sm:$0xf]
  %v109 = vld [vmem:[%s1 + $0x18] sm:$0xf]
  %v110 = vld [vmem:[%s1 + $0x1c] sm:$0xf]
  %v111 = vld [vmem:[%s1 + $0x20] sm:$0xf]
  %v112 = vld [vmem:[%s1 + $0x24] sm:$0xf]
  %v113 = vld [vmem:[%s1 + $0x28] sm:$0xf]
  %v114 = vld [vmem:[%s1 + $0x2c] sm:$0xf]
  %v115 = vld [vmem:[%s1 + $0x30] sm:$0xf]
  %v116 = vld [vmem:[%s1 + $0x34] sm:$0xf]
  %v117 = vld [vmem:[%s1 + $0x38] sm:$0xf]
  %v118 = vld [vmem:[%s1 + $0x3c] sm:$0xf]
  %v119 = vld [vmem:[%s1 + $0x40] sm:$0xf]
  %v120 = vld [vmem:[%s1 + $0x44] sm:$0xf]
  %v121 = vld [vmem:[%s1 + $0x48] sm:$0xf]
  %v122 = vld [vmem:[%s1 + $0x4c] sm:$0xf]
  %v123 = vld [vmem:[%s1 + $0x50] sm:$0xf]
  %v124 = vld [vmem:[%s1 + $0x54] sm:$0xf]
  %v125 = vld [vmem:[%s1 + $0x58] sm:$0xf]
  %v126 = vld [vmem:[%s1 + $0x5c] sm:$0xf]
  %v127 = vld [vmem:[%s1 + $0x60] sm:$0xf]
  %v128 = vld [vmem:[%s1 + $0x64] sm:$0xf]
  %v129 = vld [vmem:[%s1 + $0x68] sm:$0xf]
  %v130 = vld [vmem:[%s1 + $0x6c] sm:$0xf]
  %v131 = vld [vmem:[%s1 + $0x70] sm:$0xf]
  %v132 = vld [vmem:[%s1 + $0x74] sm:$0xf]
  %v133 = vld [vmem:[%s1 + $0x78] sm:$0xf]
  %v134 = vld [vmem:[%s1 + $0x7c] sm:$0xf]
  %v135 = vld [vmem:[%s1 + $0x80] sm:$0xf]
  %v136 = vld [vmem:[%s1 + $0x84] sm:$0xf]
  %v137 = vld [vmem:[%s1 + $0x88] sm:$0xf]
  %v138 = vld [vmem:[%s1 + $0x8c] sm:$0xf]
  %v139 = vld [vmem:[%s1 + $0x90] sm:$0xf]
  %v140 = vld [vmem:[%s1 + $0x94] sm:$0xf]
  %v141 = vld [vmem:[%s1 + $0x98] sm:$0xf]
  %v142 = vld [vmem:[%s1 + $0x9c] sm:$0xf]
  %v143 = vld [vmem:[%s1 + $0xa0] sm:$0xf]
  %v144 = vld [vmem:[%s1 + $0xa4] sm:$0xf]
  %v145 = vld [vmem:[%s1 + $0xa8] sm:$0xf]
  %v146 = vld [vmem:[%s1 + $0xac] sm:$0xf]
  %v147 = vld [vmem:[%s1 + $0xb0] sm:$0xf]
  %v148 = vld [vmem:[%s1 + $0xb4] sm:$0xf]
  %v149 = vld [vmem:[%s1 + $0xb8] sm:$0xf]
  %v150 = vld [vmem:[%s1 + $0xbc] sm:$0xf]
  %v151 = vld [vmem:[%s1 + $0xc0] sm:$0xf]
  %v152 = vld [vmem:[%s1 + $0xc4] sm:$0xf]
  %v153 = vld [vmem:[%s1 + $0xc8] sm:$0xf]
  %v154 = vld [vmem:[%s1 + $0xcc] sm:$0xf]
  %v155 = vld [vmem:[%s1 + $0xd0] sm:$0xf]
  %v156 = vld [vmem:[%s1 + $0xd4] sm:$0xf]
  %v157 = vld [vmem:[%s1 + $0xd8] sm:$0xf]
  %v158 = vld [vmem:[%s1 + $0xdc] sm:$0xf]
  %v159 = vld [vmem:[%s1 + $0xe0] sm:$0xf]
  %v160 = vld [vmem:[%s1 + $0xe4] sm:$0xf]
  %v161 = vld [vmem:[%s1 + $0xe8] sm:$0xf]
  %v162 = vld [vmem:[%s1 + $0xec] sm:$0xf]
  %v163 = vld [vmem:[%s1 + $0xf0] sm:$0xf]
  %v164 = vld [vmem:[%s1 + $0xf4] sm:$0xf]
  %v165 = vld [vmem:[%s1 + $0xf8] sm:$0xf]
  %v166 = vld [vmem:[%s1 + $0xfc] sm:$0xf]
  %v167 = vld [vmem:[%s1 + $0x100] sm:$0xf]
  %v168 = vld [vmem:[%s1 + $0x104] sm:$0xf]
  %v169 = vld [vmem:[%s1 + $0x108] sm:$0xf]
  %v170 = vld [vmem:[%s1 + $0x10c] sm:$0xf]
  %v171 = vld [vmem:[%s1 + $0x110] sm:$0xf]
  %v172 = vld [vmem:[%s1 + $0x114] sm:$0xf]
  %v173 = vld [vmem:[%s1 + $0x118] sm:$0xf]
  %v174 = vld [vmem:[%s1 + $0x11c] sm:$0xf]
  %v175 = vld [vmem:[%s1 + $0x120] sm:$0xf]
  %v176 = vld [vmem:[%s1 + $0x124] sm:$0xf]
  %v177 = vld [vmem:[%s1 + $0x128] sm:$0xf]
  %v178 = vld [vmem:[%s1 + $0x12c] sm:$0xf]
  %v179 = vld [vmem:[%s1 + $0x130] sm:$0xf]
  %v180 = vld [vmem:[%s1 + $0x134] sm:$0xf]
  %v181 = vld [vmem:[%s1 + $0x138] sm:$0xf]
  %v182 = vld [vmem:[%s1 + $0x13c] sm:$0xf]
  %v183 = vld [vmem:[%s1 + $0x140] sm:$0xf]
  %v184 = vld [vmem:[%s1 + $0x144] sm:$0xf]
  %v185 = vld [vmem:[%s1 + $0x148] sm:$0xf]
  %v186 = vld [vmem:[%s1 + $0x14c] sm:$0xf]
  %v187 = vld [vmem:[%s1 + $0x150] sm:$0xf]
  %v188 = vld [vmem:[%s1 + $0x154] sm:$0xf]
  %v189 = vld [vmem:[%s1 + $0x158] sm:$0xf]
  %v190 = vld [vmem:[%s1 + $0x15c] sm:$0xf]
  %v191 = vld [vmem:[%s1 + $0x160] sm:$0xf]
  %v192 = vld [vmem:[%s1 + $0x164] sm:$0xf]
  %v193 = vld [vmem:[%s1 + $0x168] sm:$0xf]
  %v194 = vld [vmem:[%s1 + $0x16c] sm:$0xf]
  %v195 = vld [vmem:[%s1 + $0x170] sm:$0xf]
  %v196 = vld [vmem:[%s1 + $0x174] sm:$0xf]
  %v197 = vld [vmem:[%s1 + $0x178] sm:$0xf]
  %v198 = vld [vmem:[%s1 + $0x17c] sm:$0xf]
  %v199 = vld [vmem:[%s1 + $0x180] sm:$0xf]
  %v200 = vld [vmem:[%s1 + $0x184] sm:$0xf]
  %v201 = vld [vmem:[%s1 + $0x188] sm:$0xf]
  %v202 = vld [vmem:[%s1 + $0x18c] sm:$0xf]
  %v203 = vld [vmem:[%s1 + $0x190] sm:$0xf]
  %v204 = vld [vmem:[%s1 + $0x194] sm:$0xf]
  %v205 = vld [vmem:[%s1 + $0x198] sm:$0xf]
  %v206 = vld [vmem:[%s1 + $0x19c] sm:$0xf]
  %v207 = vld [vmem:[%s1 + $0x1a0] sm:$0xf]
  %v208 = vld [vmem:[%s1 + $0x1a4] sm:$0xf]
  %v209 = vld [vmem:[%s1 + $0x1a8] sm:$0xf]
  %v210 = vld [vmem:[%s1 + $0x1ac] sm:$0xf]
  %v211 = vld [vmem:[%s1 + $0x1b0] sm:$0xf]
  %v212 = vld [vmem:[%s1 + $0x1b4] sm:$0xf]
  %v213 = vld [vmem:[%s1 + $0x1b8] sm:$0xf]
  %v214 = vld [vmem:[%s1 + $0x1bc] sm:$0xf]
  %v215 = vld [vmem:[%s1 + $0x1c0] sm:$0xf]
  %v216 = vld [vmem:[%s1 + $0x1c4] sm:$0xf]
  %v217 = vld [vmem:[%s1 + $0x1c8] sm:$0xf]
  %v218 = vld [vmem:[%s1 + $0x1cc] sm:$0xf]
  %v219 = vld [vmem:[%s1 + $0x1d0] sm:$0xf]
  %v220 = vld [vmem:[%s1 + $0x1d4] sm:$0xf]
  %v221 = vld [vmem:[%s1 + $0x1d8] sm:$0xf]
  %v222 = vld [vmem:[%s1 + $0x1dc] sm:$0xf]
  %v223 = vld [vmem:[%s1 + $0x1e0] sm:$0xf]
  %v224 = vld [vmem:[%s1 + $0x1e4] sm:$0xf]
  %v225 = vld [vmem:[%s1 + $0x1e8] sm:$0xf]
  %v226 = vld [vmem:[%s1 + $0x1ec] sm:$0xf]
  %v227 = vld [vmem:[%s1 + $0x1f0] sm:$0xf]
  %v228 = vld [vmem:[%s1 + $0x1f4] sm:$0xf]
  %v229 = vld [vmem:[%s1 + $0x1f8] sm:$0xf]
  %v230 = vld [vmem:[%s1 + $0x1fc] sm:$0xf]
  %v231 = vld [vmem:[%s1 + $0x200] sm:$0xf]
  %v232 = vld [vmem:[%s1 + $0x204] sm:$0xf]
  %v233 = vld [vmem:[%s1 + $0x208] sm:$0xf]
  %v234 = vld [vmem:[%s1 + $0x20c] sm:$0xf]
  %v235 = vld [vmem:[%s1 + $0x210] sm:$0xf]
  %v236 = vld [vmem:[%s1 + $0x214] sm:$0xf]
  %v237 = vld [vmem:[%s1 + $0x218] sm:$0xf]
  %v238 = vld [vmem:[%s1 + $0x21c] sm:$0xf]
  %v239 = vld [vmem:[%s1 + $0x220] sm:$0xf]
  %v240 = vld [vmem:[%s1 + $0x224] sm:$0xf]
  %v241 = vld [vmem:[%s1 + $0x228] sm:$0xf]
  %v242 = vld [vmem:[%s1 + $0x22c] sm:$0xf]
  %v243 = vld [vmem:[%s1 + $0x230] sm:$0xf]
  %v244 = vld [vmem:[%s1 + $0x234] sm:$0xf]
  %v245 = vld [vmem:[%s1 + $0x238] sm:$0xf]
  %v246 = vld [vmem:[%s1 + $0x23c] sm:$0xf]
  %v247 = vld [vmem:[%s2] sm:$0x1]
  %v249 = vlaneseq
  %v250 = vshrl.u32 %v249, 7
  %v251 = vsub.s32 0, %v250
  %v252 = vrot.slane %v247, %v251
  %v334 = vunpack.c.l.b16 %v23
  %v335 = vunpack.c.h.b16 %v23
  %v336 = vunpack.c.l.b16 %v24
  %v337 = vunpack.c.h.b16 %v24
  %v338 = vunpack.c.l.b16 %v25
  %v339 = vunpack.c.h.b16 %v25
  %v340 = vunpack.c.l.b16 %v26
  %v341 = vunpack.c.h.b16 %v26
  %v342 = vunpack.c.l.b16 %v27
  %v343 = vunpack.c.l.b16 %v28
  %v344 = vunpack.c.h.b16 %v28
  %v345 = vunpack.c.l.b16 %v29
  %v346 = vunpack.c.h.b16 %v29
  %v347 = vunpack.c.l.b16 %v30
  %v348 = vunpack.c.h.b16 %v30
  %v349 = vunpack.c.l.b16 %v31
  %v350 = vunpack.c.h.b16 %v31
  %v351 = vunpack.c.l.b16 %v32
  %v352 = vunpack.c.l.b16 %v33
  %v353 = vunpack.c.h.b16 %v33
  %v354 = vunpack.c.l.b16 %v34
  %v355 = vunpack.c.h.b16 %v34
  %v356 = vunpack.c.l.b16 %v35
  %v357 = vunpack.c.h.b16 %v35
  %v358 = vunpack.c.l.b16 %v36
  %v359 = vunpack.c.h.b16 %v36
  %v360 = vunpack.c.l.b16 %v37
  %v361 = vunpack.c.l.b16 %v38
  %v362 = vunpack.c.h.b16 %v38
  %v363 = vunpack.c.l.b16 %v39
  %v364 = vunpack.c.h.b16 %v39
  %v365 = vunpack.c.l.b16 %v40
  %v366 = vunpack.c.h.b16 %v40
  %v367 = vunpack.c.l.b16 %v41
  %v368 = vunpack.c.h.b16 %v41
  %v369 = vunpack.c.l.b16 %v42
  %v370 = vunpack.c.l.b16 %v43
  %v371 = vunpack.c.h.b16 %v43
  %v372 = vunpack.c.l.b16 %v44
  %v373 = vunpack.c.h.b16 %v44
  %v374 = vunpack.c.l.b16 %v45
  %v375 = vunpack.c.h.b16 %v45
  %v376 = vunpack.c.l.b16 %v46
  %v377 = vunpack.c.h.b16 %v46
  %v378 = vunpack.c.l.b16 %v47
  %v379 = vunpack.c.l.b16 %v48
  %v380 = vunpack.c.h.b16 %v48
  %v381 = vunpack.c.l.b16 %v49
  %v382 = vunpack.c.h.b16 %v49
  %v383 = vunpack.c.l.b16 %v50
  %v384 = vunpack.c.h.b16 %v50
  %v385 = vunpack.c.l.b16 %v51
  %v386 = vunpack.c.h.b16 %v51
  %v387 = vunpack.c.l.b16 %v52
  %v388 = vunpack.c.l.b16 %v53
  %v389 = vunpack.c.h.b16 %v53
  %v390 = vunpack.c.l.b16 %v54
  %v391 = vunpack.c.h.b16 %v54
  %v392 = vunpack.c.l.b16 %v55
  %v393 = vunpack.c.h.b16 %v55
  %v394 = vunpack.c.l.b16 %v56
  %v395 = vunpack.c.h.b16 %v56
  %v396 = vunpack.c.l.b16 %v57
  %v397 = vunpack.c.l.b16 %v58
  %v398 = vunpack.c.h.b16 %v58
  %v399 = vunpack.c.l.b16 %v59
  %v400 = vunpack.c.h.b16 %v59
  %v401 = vunpack.c.l.b16 %v60
  %v402 = vunpack.c.h.b16 %v60
  %v403 = vunpack.c.l.b16 %v61
  %v404 = vunpack.c.h.b16 %v61
  %v405 = vunpack.c.l.b16 %v62
  %v406 = vunpack.c.l.b16 %v63
  %v407 = vunpack.c.h.b16 %v63
  %v408 = vunpack.c.l.b16 %v64
  %v409 = vunpack.c.h.b16 %v64
  %v410 = vunpack.c.l.b16 %v65
  %v411 = vunpack.c.h.b16 %v65
  %v412 = vunpack.c.l.b16 %v66
  %v413 = vunpack.c.h.b16 %v66
  %v414 = vunpack.c.l.b16 %v67
  %v415 = vunpack.c.l.b16 %v68
  %v416 = vunpack.c.h.b16 %v68
  %v417 = vunpack.c.l.b16 %v69
  %v418 = vunpack.c.h.b16 %v69
  %v419 = vunpack.c.l.b16 %v70
  %v420 = vunpack.c.h.b16 %v70
  %v421 = vunpack.c.l.b16 %v71
  %v422 = vunpack.c.h.b16 %v71
  %v423 = vunpack.c.l.b16 %v72
  %v424 = vunpack.c.l.b16 %v73
  %v425 = vunpack.c.h.b16 %v73
  %v426 = vunpack.c.l.b16 %v74
  %v427 = vunpack.c.h.b16 %v74
  %v428 = vunpack.c.l.b16 %v75
  %v429 = vunpack.c.h.b16 %v75
  %v430 = vunpack.c.l.b16 %v76
  %v431 = vunpack.c.h.b16 %v76
  %v432 = vunpack.c.l.b16 %v77
  %v433 = vunpack.c.l.b16 %v78
  %v434 = vunpack.c.h.b16 %v78
  %v435 = vunpack.c.l.b16 %v79
  %v436 = vunpack.c.h.b16 %v79
  %v437 = vunpack.c.l.b16 %v80
  %v438 = vunpack.c.h.b16 %v80
  %v439 = vunpack.c.l.b16 %v81
  %v440 = vunpack.c.h.b16 %v81
  %v441 = vunpack.c.l.b16 %v82
  %v442 = vunpack.c.l.b16 %v83
  %v443 = vunpack.c.h.b16 %v83
  %v444 = vunpack.c.l.b16 %v84
  %v445 = vunpack.c.h.b16 %v84
  %v446 = vunpack.c.l.b16 %v85
  %v447 = vunpack.c.h.b16 %v85
  %v448 = vunpack.c.l.b16 %v86
  %v449 = vunpack.c.h.b16 %v86
  %v450 = vunpack.c.l.b16 %v87
  %v451 = vunpack.c.l.b16 %v88
  %v452 = vunpack.c.h.b16 %v88
  %v453 = vunpack.c.l.b16 %v89
  %v454 = vunpack.c.h.b16 %v89
  %v455 = vunpack.c.l.b16 %v90
  %v456 = vunpack.c.h.b16 %v90
  %v457 = vunpack.c.l.b16 %v91
  %v458 = vunpack.c.h.b16 %v91
  %v459 = vunpack.c.l.b16 %v92
  %v460 = vunpack.c.l.b16 %v93
  %v461 = vunpack.c.h.b16 %v93
  %v462 = vunpack.c.l.b16 %v94
  %v463 = vunpack.c.h.b16 %v94
  %v464 = vunpack.c.l.b16 %v95
  %v465 = vunpack.c.h.b16 %v95
  %v466 = vunpack.c.l.b16 %v96
  %v467 = vunpack.c.h.b16 %v96
  %v468 = vunpack.c.l.b16 %v97
  %v469 = vunpack.c.l.b16 %v98
  %v470 = vunpack.c.h.b16 %v98
  %v471 = vunpack.c.l.b16 %v99
  %v472 = vunpack.c.h.b16 %v99
  %v473 = vunpack.c.l.b16 %v100
  %v474 = vunpack.c.h.b16 %v100
  %v475 = vunpack.c.l.b16 %v101
  %v476 = vunpack.c.h.b16 %v101
  %v477 = vunpack.c.l.b16 %v102
  %v478 = vpack.c.b16 %v343, %v334
  %v479 = vpack.c.b16 %v344, %v335
  %v480 = vpack.c.b16 %v345, %v336
  %v481 = vpack.c.b16 %v346, %v337
  %v482 = vpack.c.b16 %v347, %v338
  %v483 = vpack.c.b16 %v348, %v339
  %v484 = vpack.c.b16 %v349, %v340
  %v485 = vpack.c.b16 %v350, %v341
  %v486 = vpack.c.b16 %v351, %v342
  %v487 = vpack.c.b16 %v361, %v352
  %v488 = vpack.c.b16 %v362, %v353
  %v489 = vpack.c.b16 %v363, %v354
  %v490 = vpack.c.b16 %v364, %v355
  %v491 = vpack.c.b16 %v365, %v356
  %v492 = vpack.c.b16 %v366, %v357
  %v493 = vpack.c.b16 %v367, %v358
  %v494 = vpack.c.b16 %v368, %v359
  %v495 = vpack.c.b16 %v369, %v360
  %v496 = vpack.c.b16 %v379, %v370
  %v497 = vpack.c.b16 %v380, %v371
  %v498 = vpack.c.b16 %v381, %v372
  %v499 = vpack.c.b16 %v382, %v373
  %v500 = vpack.c.b16 %v383, %v374
  %v501 = vpack.c.b16 %v384, %v375
  %v502 = vpack.c.b16 %v385, %v376
  %v503 = vpack.c.b16 %v386, %v377
  %v504 = vpack.c.b16 %v387, %v378
  %v505 = vpack.c.b16 %v397, %v388
  %v506 = vpack.c.b16 %v398, %v389
  %v507 = vpack.c.b16 %v399, %v390
  %v508 = vpack.c.b16 %v400, %v391
  %v509 = vpack.c.b16 %v401, %v392
  %v510 = vpack.c.b16 %v402, %v393
  %v511 = vpack.c.b16 %v403, %v394
  %v512 = vpack.c.b16 %v404, %v395
  %v513 = vpack.c.b16 %v405, %v396
  %v514 = vpack.c.b16 %v415, %v406
  %v515 = vpack.c.b16 %v416, %v407
  %v516 = vpack.c.b16 %v417, %v408
  %v517 = vpack.c.b16 %v418, %v409
  %v518 = vpack.c.b16 %v419, %v410
  %v519 = vpack.c.b16 %v420, %v411
  %v520 = vpack.c.b16 %v421, %v412
  %v521 = vpack.c.b16 %v422, %v413
  %v522 = vpack.c.b16 %v423, %v414
  %v523 = vpack.c.b16 %v433, %v424
  %v524 = vpack.c.b16 %v434, %v425
  %v525 = vpack.c.b16 %v435, %v426
  %v526 = vpack.c.b16 %v436, %v427
  %v527 = vpack.c.b16 %v437, %v428
  %v528 = vpack.c.b16 %v438, %v429
  %v529 = vpack.c.b16 %v439, %v430
  %v530 = vpack.c.b16 %v440, %v431
  %v531 = vpack.c.b16 %v441, %v432
  %v532 = vpack.c.b16 %v451, %v442
  %v533 = vpack.c.b16 %v452, %v443
  %v534 = vpack.c.b16 %v453, %v444
  %v535 = vpack.c.b16 %v454, %v445
  %v536 = vpack.c.b16 %v455, %v446
  %v537 = vpack.c.b16 %v456, %v447
  %v538 = vpack.c.b16 %v457, %v448
  %v539 = vpack.c.b16 %v458, %v449
  %v540 = vpack.c.b16 %v459, %v450
  %v541 = vpack.c.b16 %v469, %v460
  %v542 = vpack.c.b16 %v470, %v461
  %v543 = vpack.c.b16 %v471, %v462
  %v544 = vpack.c.b16 %v472, %v463
  %v545 = vpack.c.b16 %v473, %v464
  %v546 = vpack.c.b16 %v474, %v465
  %v547 = vpack.c.b16 %v475, %v466
  %v548 = vpack.c.b16 %v476, %v467
  %v549 = vpack.c.b16 %v477, %v468
  %v766 = vunpack.c.l.b16 %v103
  %v767 = vunpack.c.l.b16 %v104
  %v768 = vunpack.c.l.b16 %v105
  %v769 = vunpack.c.l.b16 %v106
  %v770 = vunpack.c.l.b16 %v107
  %v771 = vunpack.c.l.b16 %v108
  %v772 = vunpack.c.l.b16 %v109
  %v773 = vunpack.c.l.b16 %v110
  %v774 = vunpack.c.l.b16 %v111
  %v775 = vunpack.c.l.b16 %v112
  %v776 = vunpack.c.l.b16 %v113
  %v777 = vunpack.c.l.b16 %v114
  %v778 = vunpack.c.l.b16 %v115
  %v779 = vunpack.c.l.b16 %v116
  %v780 = vunpack.c.l.b16 %v117
  %v781 = vunpack.c.l.b16 %v118
  %v782 = vunpack.c.l.b16 %v119
  %v783 = vunpack.c.l.b16 %v120
  %v784 = vunpack.c.l.b16 %v121
  %v785 = vunpack.c.l.b16 %v122
  %v786 = vunpack.c.l.b16 %v123
  %v787 = vunpack.c.l.b16 %v124
  %v788 = vunpack.c.l.b16 %v125
  %v789 = vunpack.c.l.b16 %v126
  %v790 = vunpack.c.l.b16 %v127
  %v791 = vunpack.c.l.b16 %v128
  %v792 = vunpack.c.l.b16 %v129
  %v793 = vunpack.c.l.b16 %v130
  %v794 = vunpack.c.l.b16 %v131
  %v795 = vunpack.c.l.b16 %v132
  %v796 = vunpack.c.l.b16 %v133
  %v797 = vunpack.c.l.b16 %v134
  %v798 = vunpack.c.l.b16 %v135
  %v799 = vunpack.c.l.b16 %v136
  %v800 = vunpack.c.l.b16 %v137
  %v801 = vunpack.c.l.b16 %v138
  %v802 = vunpack.c.l.b16 %v139
  %v803 = vunpack.c.l.b16 %v140
  %v804 = vunpack.c.l.b16 %v141
  %v805 = vunpack.c.l.b16 %v142
  %v806 = vunpack.c.l.b16 %v143
  %v807 = vunpack.c.l.b16 %v144
  %v808 = vunpack.c.l.b16 %v145
  %v809 = vunpack.c.l.b16 %v146
  %v810 = vunpack.c.l.b16 %v147
  %v811 = vunpack.c.l.b16 %v148
  %v812 = vunpack.c.l.b16 %v149
  %v813 = vunpack.c.l.b16 %v150
  %v814 = vunpack.c.l.b16 %v151
  %v815 = vunpack.c.l.b16 %v152
  %v816 = vunpack.c.l.b16 %v153
  %v817 = vunpack.c.l.b16 %v154
  %v818 = vunpack.c.l.b16 %v155
  %v819 = vunpack.c.l.b16 %v156
  %v820 = vunpack.c.l.b16 %v157
  %v821 = vunpack.c.l.b16 %v158
  %v822 = vunpack.c.l.b16 %v159
  %v823 = vunpack.c.l.b16 %v160
  %v824 = vunpack.c.l.b16 %v161
  %v825 = vunpack.c.l.b16 %v162
  %v826 = vunpack.c.l.b16 %v163
  %v827 = vunpack.c.l.b16 %v164
  %v828 = vunpack.c.l.b16 %v165
  %v829 = vunpack.c.l.b16 %v166
  %v830 = vunpack.c.l.b16 %v167
  %v831 = vunpack.c.l.b16 %v168
  %v832 = vunpack.c.l.b16 %v169
  %v833 = vunpack.c.l.b16 %v170
  %v834 = vunpack.c.l.b16 %v171
  %v835 = vunpack.c.l.b16 %v172
  %v836 = vunpack.c.l.b16 %v173
  %v837 = vunpack.c.l.b16 %v174
  %v838 = vunpack.c.l.b16 %v175
  %v839 = vunpack.c.l.b16 %v176
  %v840 = vunpack.c.l.b16 %v177
  %v841 = vunpack.c.l.b16 %v178
  %v842 = vunpack.c.l.b16 %v179
  %v843 = vunpack.c.l.b16 %v180
  %v844 = vunpack.c.l.b16 %v181
  %v845 = vunpack.c.l.b16 %v182
  %v846 = vunpack.c.l.b16 %v183
  %v847 = vunpack.c.l.b16 %v184
  %v848 = vunpack.c.l.b16 %v185
  %v849 = vunpack.c.l.b16 %v186
  %v850 = vunpack.c.l.b16 %v187
  %v851 = vunpack.c.l.b16 %v188
  %v852 = vunpack.c.l.b16 %v189
  %v853 = vunpack.c.l.b16 %v190
  %v854 = vunpack.c.l.b16 %v191
  %v855 = vunpack.c.l.b16 %v192
  %v856 = vunpack.c.l.b16 %v193
  %v857 = vunpack.c.l.b16 %v194
  %v858 = vunpack.c.l.b16 %v195
  %v859 = vunpack.c.l.b16 %v196
  %v860 = vunpack.c.l.b16 %v197
  %v861 = vunpack.c.l.b16 %v198
  %v862 = vunpack.c.l.b16 %v199
  %v863 = vunpack.c.l.b16 %v200
  %v864 = vunpack.c.l.b16 %v201
  %v865 = vunpack.c.l.b16 %v202
  %v866 = vunpack.c.l.b16 %v203
  %v867 = vunpack.c.l.b16 %v204
  %v868 = vunpack.c.l.b16 %v205
  %v869 = vunpack.c.l.b16 %v206
  %v870 = vunpack.c.l.b16 %v207
  %v871 = vunpack.c.l.b16 %v208
  %v872 = vunpack.c.l.b16 %v209
  %v873 = vunpack.c.l.b16 %v210
  %v874 = vunpack.c.l.b16 %v211
  %v875 = vunpack.c.l.b16 %v212
  %v876 = vunpack.c.l.b16 %v213
  %v877 = vunpack.c.l.b16 %v214
  %v878 = vunpack.c.l.b16 %v215
  %v879 = vunpack.c.l.b16 %v216
  %v880 = vunpack.c.l.b16 %v217
  %v881 = vunpack.c.l.b16 %v218
  %v882 = vunpack.c.l.b16 %v219
  %v883 = vunpack.c.l.b16 %v220
  %v884 = vunpack.c.l.b16 %v221
  %v885 = vunpack.c.l.b16 %v222
  %v886 = vunpack.c.l.b16 %v223
  %v887 = vunpack.c.l.b16 %v224
  %v888 = vunpack.c.l.b16 %v225
  %v889 = vunpack.c.l.b16 %v226
  %v890 = vunpack.c.l.b16 %v227
  %v891 = vunpack.c.l.b16 %v228
  %v892 = vunpack.c.l.b16 %v229
  %v893 = vunpack.c.l.b16 %v230
  %v894 = vunpack.c.l.b16 %v231
  %v895 = vunpack.c.l.b16 %v232
  %v896 = vunpack.c.l.b16 %v233
  %v897 = vunpack.c.l.b16 %v234
  %v898 = vunpack.c.l.b16 %v235
  %v899 = vunpack.c.l.b16 %v236
  %v900 = vunpack.c.l.b16 %v237
  %v901 = vunpack.c.l.b16 %v238
  %v902 = vunpack.c.l.b16 %v239
  %v903 = vunpack.c.l.b16 %v240
  %v904 = vunpack.c.l.b16 %v241
  %v905 = vunpack.c.l.b16 %v242
  %v906 = vunpack.c.l.b16 %v243
  %v907 = vunpack.c.l.b16 %v244
  %v908 = vunpack.c.l.b16 %v245
  %v909 = vunpack.c.l.b16 %v246
  %v910 = vpack.c.b16 %v767, %v766
  %v911 = vpack.c.b16 %v769, %v768
  %v912 = vpack.c.b16 %v771, %v770
  %v913 = vpack.c.b16 %v773, %v772
  %v914 = vpack.c.b16 %v775, %v774
  %v915 = vpack.c.b16 %v777, %v776
  %v916 = vpack.c.b16 %v779, %v778
  %v917 = vpack.c.b16 %v781, %v780
  %v918 = vpack.c.b16 %v783, %v782
  %v919 = vpack.c.b16 %v785, %v784
  %v920 = vpack.c.b16 %v787, %v786
  %v921 = vpack.c.b16 %v789, %v788
  %v922 = vpack.c.b16 %v791, %v790
  %v923 = vpack.c.b16 %v793, %v792
  %v924 = vpack.c.b16 %v795, %v794
  %v925 = vpack.c.b16 %v797, %v796
  %v926 = vpack.c.b16 %v799, %v798
  %v927 = vpack.c.b16 %v801, %v800
  %v928 = vpack.c.b16 %v803, %v802
  %v929 = vpack.c.b16 %v805, %v804
  %v930 = vpack.c.b16 %v807, %v806
  %v931 = vpack.c.b16 %v809, %v808
  %v932 = vpack.c.b16 %v811, %v810
  %v933 = vpack.c.b16 %v813, %v812
  %v934 = vpack.c.b16 %v815, %v814
  %v935 = vpack.c.b16 %v817, %v816
  %v936 = vpack.c.b16 %v819, %v818
  %v937 = vpack.c.b16 %v821, %v820
  %v938 = vpack.c.b16 %v823, %v822
  %v939 = vpack.c.b16 %v825, %v824
  %v940 = vpack.c.b16 %v827, %v826
  %v941 = vpack.c.b16 %v829, %v828
  %v942 = vpack.c.b16 %v831, %v830
  %v943 = vpack.c.b16 %v833, %v832
  %v944 = vpack.c.b16 %v835, %v834
  %v945 = vpack.c.b16 %v837, %v836
  %v946 = vpack.c.b16 %v839, %v838
  %v947 = vpack.c.b16 %v841, %v840
  %v948 = vpack.c.b16 %v843, %v842
  %v949 = vpack.c.b16 %v845, %v844
  %v950 = vpack.c.b16 %v847, %v846
  %v951 = vpack.c.b16 %v849, %v848
  %v952 = vpack.c.b16 %v851, %v850
  %v953 = vpack.c.b16 %v853, %v852
  %v954 = vpack.c.b16 %v855, %v854
  %v955 = vpack.c.b16 %v857, %v856
  %v956 = vpack.c.b16 %v859, %v858
  %v957 = vpack.c.b16 %v861, %v860
  %v958 = vpack.c.b16 %v863, %v862
  %v959 = vpack.c.b16 %v865, %v864
  %v960 = vpack.c.b16 %v867, %v866
  %v961 = vpack.c.b16 %v869, %v868
  %v962 = vpack.c.b16 %v871, %v870
  %v963 = vpack.c.b16 %v873, %v872
  %v964 = vpack.c.b16 %v875, %v874
  %v965 = vpack.c.b16 %v877, %v876
  %v966 = vpack.c.b16 %v879, %v878
  %v967 = vpack.c.b16 %v881, %v880
  %v968 = vpack.c.b16 %v883, %v882
  %v969 = vpack.c.b16 %v885, %v884
  %v970 = vpack.c.b16 %v887, %v886
  %v971 = vpack.c.b16 %v889, %v888
  %v972 = vpack.c.b16 %v891, %v890
  %v973 = vpack.c.b16 %v893, %v892
  %v974 = vpack.c.b16 %v895, %v894
  %v975 = vpack.c.b16 %v897, %v896
  %v976 = vpack.c.b16 %v899, %v898
  %v977 = vpack.c.b16 %v901, %v900
  %v978 = vpack.c.b16 %v903, %v902
  %v979 = vpack.c.b16 %v905, %v904
  %v980 = vpack.c.b16 %v907, %v906
  %v981 = vpack.c.b16 %v909, %v908
  %1054 = vmatprep.subr.bf16.mxu0 0
  %1055 = vmatpush1.bf16.msra.mxu0 %v910
  %1056 = vmatprep.subr.bf16.mxu0 0
  %1057 = vmatpush1.bf16.msra.mxu0 %v911
  %1058 = vmatprep.subr.bf16.mxu0 0
  %1059 = vmatpush1.bf16.msra.mxu0 %v912
  %1060 = vmatprep.subr.bf16.mxu0 0
  %1061 = vmatpush1.bf16.msra.mxu0 %v913
  %1062 = vmatprep.subr.bf16.mxu0 0
  %1063 = vmatpush1.bf16.msra.mxu0 %v914
  %1064 = vmatprep.subr.bf16.mxu0 0
  %1065 = vmatpush1.bf16.msra.mxu0 %v915
  %1066 = vmatprep.subr.bf16.mxu0 0
  %1067 = vmatpush1.bf16.msra.mxu0 %v916
  %1068 = vmatprep.subr.bf16.mxu0 0
  %1069 = vmatpush1.bf16.msra.mxu0 %v917
  %1070 = vmatprep.subr.bf16.mxu0 0
  %1071 = vmatpush1.bf16.msra.mxu0 %v918
  %1072 = vmatprep.subr.bf16.mxu0 0
  %1073 = vmatpush1.bf16.msra.mxu0 %v919
  %1074 = vmatprep.subr.bf16.mxu0 0
  %1075 = vmatpush1.bf16.msra.mxu0 %v920
  %1076 = vmatprep.subr.bf16.mxu0 0
  %1077 = vmatpush1.bf16.msra.mxu0 %v921
  %1078 = vmatprep.subr.bf16.mxu0 0
  %1079 = vmatpush1.bf16.msra.mxu0 %v922
  %1080 = vmatprep.subr.bf16.mxu0 0
  %1081 = vmatpush1.bf16.msra.mxu0 %v923
  %1082 = vmatprep.subr.bf16.mxu0 0
  %1083 = vmatpush1.bf16.msra.mxu0 %v924
  %1084 = vmatprep.subr.bf16.mxu0 0
  %1085 = vmatpush1.bf16.msra.mxu0 %v925
  %1086 = vmatprep.mubr.bf16.mxu0 %v479
  %1087 = vmatmul.mubr.bf16.gmra.mrb[0].mxu0 %v478
  %v1088 = vpop.f32.mrb[0].mxu0
  %v1089 = vadd.f32 %v252, %v1088
  %v1090 = vpop.f32.mrb[0].mxu0
  %v1091 = vpop.f32.mrb[0].mxu0
  %v1092 = vadd.f32 %v252, %v1091
  %v1093 = vpop.f32.mrb[0].mxu0
  %1094 = vmatprep.mubr.bf16.mxu0 %v488
  %1095 = vmatmul.mubr.bf16.gmra.mrb[0].mxu0 %v487
  %v1096 = vpop.f32.mrb[0].mxu0
  %v1097 = vadd.f32 %v252, %v1096
  %v1098 = vpop.f32.mrb[0].mxu0
  %v1099 = vpop.f32.mrb[0].mxu0
  %v1100 = vadd.f32 %v252, %v1099
  %v1101 = vpop.f32.mrb[0].mxu0
  %1102 = vmatprep.mubr.bf16.mxu0 %v497
  %1103 = vmatmul.mubr.bf16.gmra.mrb[0].mxu0 %v496
  %v1104 = vpop.f32.mrb[0].mxu0
  %v1105 = vadd.f32 %v252, %v1104
  %v1106 = vpop.f32.mrb[0].mxu0
  %v1107 = vpop.f32.mrb[0].mxu0
  %v1108 = vadd.f32 %v252, %v1107
  %v1109 = vpop.f32.mrb[0].mxu0
  %1110 = vmatprep.mubr.bf16.mxu0 %v506
  %1111 = vmatmul.mubr.bf16.gmra.mrb[0].mxu0 %v505
  %v1112 = vpop.f32.mrb[0].mxu0
  %v1113 = vadd.f32 %v252, %v1112
  %v1114 = vpop.f32.mrb[0].mxu0
  %v1115 = vpop.f32.mrb[0].mxu0
  %v1116 = vadd.f32 %v252, %v1115
  %v1117 = vpop.f32.mrb[0].mxu0
  %1118 = vmatprep.mubr.bf16.mxu0 %v515
  %1119 = vmatmul.mubr.bf16.gmra.mrb[0].mxu0 %v514
  %v1120 = vpop.f32.mrb[0].mxu0
  %v1121 = vadd.f32 %v252, %v1120
  %v1122 = vpop.f32.mrb[0].mxu0
  %v1123 = vpop.f32.mrb[0].mxu0
  %v1124 = vadd.f32 %v252, %v1123
  %v1125 = vpop.f32.mrb[0].mxu0
  %1126 = vmatprep.mubr.bf16.mxu0 %v524
  %1127 = vmatmul.mubr.bf16.gmra.mrb[0].mxu0 %v523
  %v1128 = vpop.f32.mrb[0].mxu0
  %v1129 = vadd.f32 %v252, %v1128
  %v1130 = vpop.f32.mrb[0].mxu0
  %v1131 = vpop.f32.mrb[0].mxu0
  %v1132 = vadd.f32 %v252, %v1131
  %v1133 = vpop.f32.mrb[0].mxu0
  %1134 = vmatprep.mubr.bf16.mxu0 %v533
  %1135 = vmatmul.mubr.bf16.gmra.mrb[0].mxu0 %v532
  %v1136 = vpop.f32.mrb[0].mxu0
  %v1137 = vadd.f32 %v252, %v1136
  %v1138 = vpop.f32.mrb[0].mxu0
  %v1139 = vpop.f32.mrb[0].mxu0
  %v1140 = vadd.f32 %v252, %v1139
  %v1141 = vpop.f32.mrb[0].mxu0
  %1142 = vmatprep.mubr.bf16.mxu0 %v542
  %1143 = vmatmul.mubr.bf16.gmra.mrb[0].mxu0 %v541
  %v1144 = vpop.f32.mrb[0].mxu0
  %v1145 = vadd.f32 %v252, %v1144
  %v1146 = vpop.f32.mrb[0].mxu0
  %v1147 = vpop.f32.mrb[0].mxu0
  %v1148 = vadd.f32 %v252, %v1147
  %v1149 = vpop.f32.mrb[0].mxu0
  %1150 = vdwg.mxu0
  %1151 = vmatprep.subr.bf16.mxu0 0
  %1152 = vmatpush1.bf16.msra.mxu0 %v926
  %1153 = vmatprep.subr.bf16.mxu0 0
  %1154 = vmatpush1.bf16.msra.mxu0 %v927
  %1155 = vmatprep.subr.bf16.mxu0 0
  %1156 = vmatpush1.bf16.msra.mxu0 %v928
  %1157 = vmatprep.subr.bf16.mxu0 0
  %1158 = vmatpush1.bf16.msra.mxu0 %v929
  %1159 = vmatprep.subr.bf16.mxu0 0
  %1160 = vmatpush1.bf16.msra.mxu0 %v930
  %1161 = vmatprep.subr.bf16.mxu0 0
  %1162 = vmatpush1.bf16.msra.mxu0 %v931
  %1163 = vmatprep.subr.bf16.mxu0 0
  %1164 = vmatpush1.bf16.msra.mxu0 %v932
  %1165 = vmatprep.subr.bf16.mxu0 0
  %1166 = vmatpush1.bf16.msra.mxu0 %v933
  %1167 = vmatprep.subr.bf16.mxu0 0
  %1168 = vmatpush1.bf16.msra.mxu0 %v934
  %1169 = vmatprep.subr.bf16.mxu0 0
  %1170 = vmatpush1.bf16.msra.mxu0 %v935
  %1171 = vmatprep.subr.bf16.mxu0 0
  %1172 = vmatpush1.bf16.msra.mxu0 %v936
  %1173 = vmatprep.subr.bf16.mxu0 0
  %1174 = vmatpush1.bf16.msra.mxu0 %v937
  %1175 = vmatprep.subr.bf16.mxu0 0
  %1176 = vmatpush1.bf16.msra.mxu0 %v938
  %1177 = vmatprep.subr.bf16.mxu0 0
  %1178 = vmatpush1.bf16.msra.mxu0 %v939
  %1179 = vmatprep.subr.bf16.mxu0 0
  %1180 = vmatpush1.bf16.msra.mxu0 %v940
  %1181 = vmatprep.subr.bf16.mxu0 0
  %1182 = vmatpush1.bf16.msra.mxu0 %v941
  %1183 = vmatprep.mubr.bf16.mxu0 %v481
  %1184 = vmatmul.mubr.bf16.gmra.mrb[0].mxu0 %v480
  %v1185 = vpop.f32.mrb[0].mxu0
  %v1186 = vadd.f32 %v1089, %v1185
  %v1187 = vpop.f32.mrb[0].mxu0
  %v1188 = vpop.f32.mrb[0].mxu0
  %v1189 = vadd.f32 %v1092, %v1188
  %v1190 = vpop.f32.mrb[0].mxu0
  %1191 = vmatprep.mubr.bf16.mxu0 %v490
  %1192 = vmatmul.mubr.bf16.gmra.mrb[0].mxu0 %v489
  %v1193 = vpop.f32.mrb[0].mxu0
  %v1194 = vadd.f32 %v1097, %v1193
  %v1195 = vpop.f32.mrb[0].mxu0
  %v1196 = vpop.f32.mrb[0].mxu0
  %v1197 = vadd.f32 %v1100, %v1196
  %v1198 = vpop.f32.mrb[0].mxu0
  %1199 = vmatprep.mubr.bf16.mxu0 %v499
  %1200 = vmatmul.mubr.bf16.gmra.mrb[0].mxu0 %v498
  %v1201 = vpop.f32.mrb[0].mxu0
  %v1202 = vadd.f32 %v1105, %v1201
  %v1203 = vpop.f32.mrb[0].mxu0
  %v1204 = vpop.f32.mrb[0].mxu0
  %v1205 = vadd.f32 %v1108, %v1204
  %v1206 = vpop.f32.mrb[0].mxu0
  %1207 = vmatprep.mubr.bf16.mxu0 %v508
  %1208 = vmatmul.mubr.bf16.gmra.mrb[0].mxu0 %v507
  %v1209 = vpop.f32.mrb[0].mxu0
  %v1210 = vadd.f32 %v1113, %v1209
  %v1211 = vpop.f32.mrb[0].mxu0
  %v1212 = vpop.f32.mrb[0].mxu0
  %v1213 = vadd.f32 %v1116, %v1212
  %v1214 = vpop.f32.mrb[0].mxu0
  %1215 = vmatprep.mubr.bf16.mxu0 %v517
  %1216 = vmatmul.mubr.bf16.gmra.mrb[0].mxu0 %v516
  %v1217 = vpop.f32.mrb[0].mxu0
  %v1218 = vadd.f32 %v1121, %v1217
  %v1219 = vpop.f32.mrb[0].mxu0
  %v1220 = vpop.f32.mrb[0].mxu0
  %v1221 = vadd.f32 %v1124, %v1220
  %v1222 = vpop.f32.mrb[0].mxu0
  %1223 = vmatprep.mubr.bf16.mxu0 %v526
  %1224 = vmatmul.mubr.bf16.gmra.mrb[0].mxu0 %v525
  %v1225 = vpop.f32.mrb[0].mxu0
  %v1226 = vadd.f32 %v1129, %v1225
  %v1227 = vpop.f32.mrb[0].mxu0
  %v1228 = vpop.f32.mrb[0].mxu0
  %v1229 = vadd.f32 %v1132, %v1228
  %v1230 = vpop.f32.mrb[0].mxu0
  %1231 = vmatprep.mubr.bf16.mxu0 %v535
  %1232 = vmatmul.mubr.bf16.gmra.mrb[0].mxu0 %v534
  %v1233 = vpop.f32.mrb[0].mxu0
  %v1234 = vadd.f32 %v1137, %v1233
  %v1235 = vpop.f32.mrb[0].mxu0
  %v1236 = vpop.f32.mrb[0].mxu0
  %v1237 = vadd.f32 %v1140, %v1236
  %v1238 = vpop.f32.mrb[0].mxu0
  %1239 = vmatprep.mubr.bf16.mxu0 %v544
  %1240 = vmatmul.mubr.bf16.gmra.mrb[0].mxu0 %v543
  %v1241 = vpop.f32.mrb[0].mxu0
  %v1242 = vadd.f32 %v1145, %v1241
  %v1243 = vpop.f32.mrb[0].mxu0
  %v1244 = vpop.f32.mrb[0].mxu0
  %v1245 = vadd.f32 %v1148, %v1244
  %v1246 = vpop.f32.mrb[0].mxu0
  %1247 = vdwg.mxu0
  %1248 = vmatprep.subr.bf16.mxu0 0
  %1249 = vmatpush1.bf16.msra.mxu0 %v942
  %1250 = vmatprep.subr.bf16.mxu0 0
  %1251 = vmatpush1.bf16.msra.mxu0 %v943
  %1252 = vmatprep.subr.bf16.mxu0 0
  %1253 = vmatpush1.bf16.msra.mxu0 %v944
  %1254 = vmatprep.subr.bf16.mxu0 0
  %1255 = vmatpush1.bf16.msra.mxu0 %v945
  %1256 = vmatprep.subr.bf16.mxu0 0
  %1257 = vmatpush1.bf16.msra.mxu0 %v946
  %1258 = vmatprep.subr.bf16.mxu0 0
  %1259 = vmatpush1.bf16.msra.mxu0 %v947
  %1260 = vmatprep.subr.bf16.mxu0 0
  %1261 = vmatpush1.bf16.msra.mxu0 %v948
  %1262 = vmatprep.subr.bf16.mxu0 0
  %1263 = vmatpush1.bf16.msra.mxu0 %v949
  %1264 = vmatprep.subr.bf16.mxu0 0
  %1265 = vmatpush1.bf16.msra.mxu0 %v950
  %1266 = vmatprep.subr.bf16.mxu0 0
  %1267 = vmatpush1.bf16.msra.mxu0 %v951
  %1268 = vmatprep.subr.bf16.mxu0 0
  %1269 = vmatpush1.bf16.msra.mxu0 %v952
  %1270 = vmatprep.subr.bf16.mxu0 0
  %1271 = vmatpush1.bf16.msra.mxu0 %v953
  %1272 = vmatprep.subr.bf16.mxu0 0
  %1273 = vmatpush1.bf16.msra.mxu0 %v954
  %1274 = vmatprep.subr.bf16.mxu0 0
  %1275 = vmatpush1.bf16.msra.mxu0 %v955
  %1276 = vmatprep.subr.bf16.mxu0 0
  %1277 = vmatpush1.bf16.msra.mxu0 %v956
  %1278 = vmatprep.subr.bf16.mxu0 0
  %1279 = vmatpush1.bf16.msra.mxu0 %v957
  %1280 = vmatprep.mubr.bf16.mxu0 %v483
  %1281 = vmatmul.mubr.bf16.gmra.mrb[0].mxu0 %v482
  %v1282 = vpop.f32.mrb[0].mxu0
  %v1283 = vadd.f32 %v1186, %v1282
  %v1284 = vpop.f32.mrb[0].mxu0
  %v1285 = vpop.f32.mrb[0].mxu0
  %v1286 = vadd.f32 %v1189, %v1285
  %v1287 = vpop.f32.mrb[0].mxu0
  %1288 = vmatprep.mubr.bf16.mxu0 %v492
  %1289 = vmatmul.mubr.bf16.gmra.mrb[0].mxu0 %v491
  %v1290 = vpop.f32.mrb[0].mxu0
  %v1291 = vadd.f32 %v1194, %v1290
  %v1292 = vpop.f32.mrb[0].mxu0
  %v1293 = vpop.f32.mrb[0].mxu0
  %v1294 = vadd.f32 %v1197, %v1293
  %v1295 = vpop.f32.mrb[0].mxu0
  %1296 = vmatprep.mubr.bf16.mxu0 %v501
  %1297 = vmatmul.mubr.bf16.gmra.mrb[0].mxu0 %v500
  %v1298 = vpop.f32.mrb[0].mxu0
  %v1299 = vadd.f32 %v1202, %v1298
  %v1300 = vpop.f32.mrb[0].mxu0
  %v1301 = vpop.f32.mrb[0].mxu0
  %v1302 = vadd.f32 %v1205, %v1301
  %v1303 = vpop.f32.mrb[0].mxu0
  %1304 = vmatprep.mubr.bf16.mxu0 %v510
  %1305 = vmatmul.mubr.bf16.gmra.mrb[0].mxu0 %v509
  %v1306 = vpop.f32.mrb[0].mxu0
  %v1307 = vadd.f32 %v1210, %v1306
  %v1308 = vpop.f32.mrb[0].mxu0
  %v1309 = vpop.f32.mrb[0].mxu0
  %v1310 = vadd.f32 %v1213, %v1309
  %v1311 = vpop.f32.mrb[0].mxu0
  %1312 = vmatprep.mubr.bf16.mxu0 %v519
  %1313 = vmatmul.mubr.bf16.gmra.mrb[0].mxu0 %v518
  %v1314 = vpop.f32.mrb[0].mxu0
  %v1315 = vadd.f32 %v1218, %v1314
  %v1316 = vpop.f32.mrb[0].mxu0
  %v1317 = vpop.f32.mrb[0].mxu0
  %v1318 = vadd.f32 %v1221, %v1317
  %v1319 = vpop.f32.mrb[0].mxu0
  %1320 = vmatprep.mubr.bf16.mxu0 %v528
  %1321 = vmatmul.mubr.bf16.gmra.mrb[0].mxu0 %v527
  %v1322 = vpop.f32.mrb[0].mxu0
  %v1323 = vadd.f32 %v1226, %v1322
  %v1324 = vpop.f32.mrb[0].mxu0
  %v1325 = vpop.f32.mrb[0].mxu0
  %v1326 = vadd.f32 %v1229, %v1325
  %v1327 = vpop.f32.mrb[0].mxu0
  %1328 = vmatprep.mubr.bf16.mxu0 %v537
  %1329 = vmatmul.mubr.bf16.gmra.mrb[0].mxu0 %v536
  %v1330 = vpop.f32.mrb[0].mxu0
  %v1331 = vadd.f32 %v1234, %v1330
  %v1332 = vpop.f32.mrb[0].mxu0
  %v1333 = vpop.f32.mrb[0].mxu0
  %v1334 = vadd.f32 %v1237, %v1333
  %v1335 = vpop.f32.mrb[0].mxu0
  %1336 = vmatprep.mubr.bf16.mxu0 %v546
  %1337 = vmatmul.mubr.bf16.gmra.mrb[0].mxu0 %v545
  %v1338 = vpop.f32.mrb[0].mxu0
  %v1339 = vadd.f32 %v1242, %v1338
  %v1340 = vpop.f32.mrb[0].mxu0
  %v1341 = vpop.f32.mrb[0].mxu0
  %v1342 = vadd.f32 %v1245, %v1341
  %v1343 = vpop.f32.mrb[0].mxu0
  %1344 = vdwg.mxu0
  %1345 = vmatprep.subr.bf16.mxu0 0
  %1346 = vmatpush1.bf16.msra.mxu0 %v958
  %1347 = vmatprep.subr.bf16.mxu0 0
  %1348 = vmatpush1.bf16.msra.mxu0 %v959
  %1349 = vmatprep.subr.bf16.mxu0 0
  %1350 = vmatpush1.bf16.msra.mxu0 %v960
  %1351 = vmatprep.subr.bf16.mxu0 0
  %1352 = vmatpush1.bf16.msra.mxu0 %v961
  %1353 = vmatprep.subr.bf16.mxu0 0
  %1354 = vmatpush1.bf16.msra.mxu0 %v962
  %1355 = vmatprep.subr.bf16.mxu0 0
  %1356 = vmatpush1.bf16.msra.mxu0 %v963
  %1357 = vmatprep.subr.bf16.mxu0 0
  %1358 = vmatpush1.bf16.msra.mxu0 %v964
  %1359 = vmatprep.subr.bf16.mxu0 0
  %1360 = vmatpush1.bf16.msra.mxu0 %v965
  %1361 = vmatprep.subr.bf16.mxu0 0
  %1362 = vmatpush1.bf16.msra.mxu0 %v966
  %1363 = vmatprep.subr.bf16.mxu0 0
  %1364 = vmatpush1.bf16.msra.mxu0 %v967
  %1365 = vmatprep.subr.bf16.mxu0 0
  %1366 = vmatpush1.bf16.msra.mxu0 %v968
  %1367 = vmatprep.subr.bf16.mxu0 0
  %1368 = vmatpush1.bf16.msra.mxu0 %v969
  %1369 = vmatprep.subr.bf16.mxu0 0
  %1370 = vmatpush1.bf16.msra.mxu0 %v970
  %1371 = vmatprep.subr.bf16.mxu0 0
  %1372 = vmatpush1.bf16.msra.mxu0 %v971
  %1373 = vmatprep.subr.bf16.mxu0 0
  %1374 = vmatpush1.bf16.msra.mxu0 %v972
  %1375 = vmatprep.subr.bf16.mxu0 0
  %1376 = vmatpush1.bf16.msra.mxu0 %v973
  %1377 = vmatprep.mubr.bf16.mxu0 %v485
  %1378 = vmatmul.mubr.bf16.gmra.mrb[0].mxu0 %v484
  %v1379 = vpop.f32.mrb[0].mxu0
  %v1380 = vadd.f32 %v1283, %v1379
  %v1381 = vpop.f32.mrb[0].mxu0
  %v1382 = vpop.f32.mrb[0].mxu0
  %v1383 = vadd.f32 %v1286, %v1382
  %v1384 = vpop.f32.mrb[0].mxu0
  %1385 = vmatprep.mubr.bf16.mxu0 %v494
  %1386 = vmatmul.mubr.bf16.gmra.mrb[0].mxu0 %v493
  %v1387 = vpop.f32.mrb[0].mxu0
  %v1388 = vadd.f32 %v1291, %v1387
  %v1389 = vpop.f32.mrb[0].mxu0
  %v1390 = vpop.f32.mrb[0].mxu0
  %v1391 = vadd.f32 %v1294, %v1390
  %v1392 = vpop.f32.mrb[0].mxu0
  %1393 = vmatprep.mubr.bf16.mxu0 %v503
  %1394 = vmatmul.mubr.bf16.gmra.mrb[0].mxu0 %v502
  %v1395 = vpop.f32.mrb[0].mxu0
  %v1396 = vadd.f32 %v1299, %v1395
  %v1397 = vpop.f32.mrb[0].mxu0
  %v1398 = vpop.f32.mrb[0].mxu0
  %v1399 = vadd.f32 %v1302, %v1398
  %v1400 = vpop.f32.mrb[0].mxu0
  %1401 = vmatprep.mubr.bf16.mxu0 %v512
  %1402 = vmatmul.mubr.bf16.gmra.mrb[0].mxu0 %v511
  %v1403 = vpop.f32.mrb[0].mxu0
  %v1404 = vadd.f32 %v1307, %v1403
  %v1405 = vpop.f32.mrb[0].mxu0
  %v1406 = vpop.f32.mrb[0].mxu0
  %v1407 = vadd.f32 %v1310, %v1406
  %v1408 = vpop.f32.mrb[0].mxu0
  %1409 = vmatprep.mubr.bf16.mxu0 %v521
  %1410 = vmatmul.mubr.bf16.gmra.mrb[0].mxu0 %v520
  %v1411 = vpop.f32.mrb[0].mxu0
  %v1412 = vadd.f32 %v1315, %v1411
  %v1413 = vpop.f32.mrb[0].mxu0
  %v1414 = vpop.f32.mrb[0].mxu0
  %v1415 = vadd.f32 %v1318, %v1414
  %v1416 = vpop.f32.mrb[0].mxu0
  %1417 = vmatprep.mubr.bf16.mxu0 %v530
  %1418 = vmatmul.mubr.bf16.gmra.mrb[0].mxu0 %v529
  %v1419 = vpop.f32.mrb[0].mxu0
  %v1420 = vadd.f32 %v1323, %v1419
  %v1421 = vpop.f32.mrb[0].mxu0
  %v1422 = vpop.f32.mrb[0].mxu0
  %v1423 = vadd.f32 %v1326, %v1422
  %v1424 = vpop.f32.mrb[0].mxu0
  %1425 = vmatprep.mubr.bf16.mxu0 %v539
  %1426 = vmatmul.mubr.bf16.gmra.mrb[0].mxu0 %v538
  %v1427 = vpop.f32.mrb[0].mxu0
  %v1428 = vadd.f32 %v1331, %v1427
  %v1429 = vpop.f32.mrb[0].mxu0
  %v1430 = vpop.f32.mrb[0].mxu0
  %v1431 = vadd.f32 %v1334, %v1430
  %v1432 = vpop.f32.mrb[0].mxu0
  %1433 = vmatprep.mubr.bf16.mxu0 %v548
  %1434 = vmatmul.mubr.bf16.gmra.mrb[0].mxu0 %v547
  %v1435 = vpop.f32.mrb[0].mxu0
  %v1436 = vadd.f32 %v1339, %v1435
  %v1437 = vpop.f32.mrb[0].mxu0
  %v1438 = vpop.f32.mrb[0].mxu0
  %v1439 = vadd.f32 %v1342, %v1438
  %v1440 = vpop.f32.mrb[0].mxu0
  %1441 = vdwg.mxu0
  %1442 = vmatprep.subr.bf16.mxu0 0
  %1443 = vmatpush1.bf16.msra.mxu0 %v974
  %1444 = vmatprep.subr.bf16.mxu0 0
  %1445 = vmatpush1.bf16.msra.mxu0 %v975
  %1446 = vmatprep.subr.bf16.mxu0 0
  %1447 = vmatpush1.bf16.msra.mxu0 %v976
  %1448 = vmatprep.subr.bf16.mxu0 0
  %1449 = vmatpush1.bf16.msra.mxu0 %v977
  %1450 = vmatprep.subr.bf16.mxu0 0
  %1451 = vmatpush1.bf16.msra.mxu0 %v978
  %1452 = vmatprep.subr.bf16.mxu0 0
  %1453 = vmatpush1.bf16.msra.mxu0 %v979
  %1454 = vmatprep.subr.bf16.mxu0 0
  %1455 = vmatpush1.bf16.msra.mxu0 %v980
  %1456 = vmatprep.subr.bf16.mxu0 0
  %1457 = vmatpush1.bf16.msra.mxu0 %v981
  %1458 = vmatprep.subr.bf16.mxu0 0
  %1459 = vmatpush1.bf16.msra.mxu0 0
  %1460 = vmatprep.subr.bf16.mxu0 0
  %1461 = vmatpush1.bf16.msra.mxu0 0
  %1462 = vmatprep.subr.bf16.mxu0 0
  %1463 = vmatpush1.bf16.msra.mxu0 0
  %1464 = vmatprep.subr.bf16.mxu0 0
  %1465 = vmatpush1.bf16.msra.mxu0 0
  %1466 = vmatprep.subr.bf16.mxu0 0
  %1467 = vmatpush1.bf16.msra.mxu0 0
  %1468 = vmatprep.subr.bf16.mxu0 0
  %1469 = vmatpush1.bf16.msra.mxu0 0
  %1470 = vmatprep.subr.bf16.mxu0 0
  %1471 = vmatpush1.bf16.msra.mxu0 0
  %1472 = vmatprep.subr.bf16.mxu0 0
  %1473 = vmatpush1.bf16.msra.mxu0 0
  %1474 = vmatprep.mubr.bf16.mxu0 0
  %1475 = vmatmul.mubr.bf16.gmra.mrb[0].mxu0 %v486
  %v1476 = vpop.f32.mrb[0].mxu0
  %v1477 = vadd.f32 %v1380, %v1476
  %v1478 = vpop.f32.mrb[0].mxu0
  %v1479 = vpop.f32.mrb[0].mxu0
  %v1480 = vadd.f32 %v1383, %v1479
  %v1481 = vpop.f32.mrb[0].mxu0
  %1482 = vmatprep.mubr.bf16.mxu0 0
  %1483 = vmatmul.mubr.bf16.gmra.mrb[0].mxu0 %v495
  %v1484 = vpop.f32.mrb[0].mxu0
  %v1485 = vadd.f32 %v1388, %v1484
  %v1486 = vpop.f32.mrb[0].mxu0
  %v1487 = vpop.f32.mrb[0].mxu0
  %v1488 = vadd.f32 %v1391, %v1487
  %v1489 = vpop.f32.mrb[0].mxu0
  %1490 = vmatprep.mubr.bf16.mxu0 0
  %1491 = vmatmul.mubr.bf16.gmra.mrb[0].mxu0 %v504
  %v1492 = vpop.f32.mrb[0].mxu0
  %v1493 = vadd.f32 %v1396, %v1492
  %v1494 = vpop.f32.mrb[0].mxu0
  %v1495 = vpop.f32.mrb[0].mxu0
  %v1496 = vadd.f32 %v1399, %v1495
  %v1497 = vpop.f32.mrb[0].mxu0
  %1498 = vmatprep.mubr.bf16.mxu0 0
  %1499 = vmatmul.mubr.bf16.gmra.mrb[0].mxu0 %v513
  %v1500 = vpop.f32.mrb[0].mxu0
  %v1501 = vadd.f32 %v1404, %v1500
  %v1502 = vpop.f32.mrb[0].mxu0
  %v1503 = vpop.f32.mrb[0].mxu0
  %v1504 = vadd.f32 %v1407, %v1503
  %v1505 = vpop.f32.mrb[0].mxu0
  %1506 = vmatprep.mubr.bf16.mxu0 0
  %1507 = vmatmul.mubr.bf16.gmra.mrb[0].mxu0 %v522
  %v1508 = vpop.f32.mrb[0].mxu0
  %v1509 = vadd.f32 %v1412, %v1508
  %v1510 = vpop.f32.mrb[0].mxu0
  %v1511 = vpop.f32.mrb[0].mxu0
  %v1512 = vadd.f32 %v1415, %v1511
  %v1513 = vpop.f32.mrb[0].mxu0
  %1514 = vmatprep.mubr.bf16.mxu0 0
  %1515 = vmatmul.mubr.bf16.gmra.mrb[0].mxu0 %v531
  %v1516 = vpop.f32.mrb[0].mxu0
  %v1517 = vadd.f32 %v1420, %v1516
  %v1518 = vpop.f32.mrb[0].mxu0
  %v1519 = vpop.f32.mrb[0].mxu0
  %v1520 = vadd.f32 %v1423, %v1519
  %v1521 = vpop.f32.mrb[0].mxu0
  %1522 = vmatprep.mubr.bf16.mxu0 0
  %1523 = vmatmul.mubr.bf16.gmra.mrb[0].mxu0 %v540
  %v1524 = vpop.f32.mrb[0].mxu0
  %v1525 = vadd.f32 %v1428, %v1524
  %v1526 = vpop.f32.mrb[0].mxu0
  %v1527 = vpop.f32.mrb[0].mxu0
  %v1528 = vadd.f32 %v1431, %v1527
  %v1529 = vpop.f32.mrb[0].mxu0
  %1530 = vmatprep.mubr.bf16.mxu0 0
  %1531 = vmatmul.mubr.bf16.gmra.mrb[0].mxu0 %v549
  %v1532 = vpop.f32.mrb[0].mxu0
  %v1533 = vadd.f32 %v1436, %v1532
  %v1534 = vpop.f32.mrb[0].mxu0
  %v1535 = vpop.f32.mrb[0].mxu0
  %v1536 = vadd.f32 %v1439, %v1535
  %v1537 = vpop.f32.mrb[0].mxu0
  %1538 = vdwg.mxu0
  %vm1539 = vcmp.gt.f32.partialorder %v1477, 0.0
  %vm1540 = vcmp.gt.f32.partialorder %v1480, 0.0
  %vm1541 = vcmp.gt.f32.partialorder %v1485, 0.0
  %vm1542 = vcmp.gt.f32.partialorder %v1488, 0.0
  %vm1543 = vcmp.gt.f32.partialorder %v1493, 0.0
  %vm1544 = vcmp.gt.f32.partialorder %v1496, 0.0
  %vm1545 = vcmp.gt.f32.partialorder %v1501, 0.0
  %vm1546 = vcmp.gt.f32.partialorder %v1504, 0.0
  %vm1547 = vcmp.gt.f32.partialorder %v1509, 0.0
  %vm1548 = vcmp.gt.f32.partialorder %v1512, 0.0
  %vm1549 = vcmp.gt.f32.partialorder %v1517, 0.0
  %vm1550 = vcmp.gt.f32.partialorder %v1520, 0.0
  %vm1551 = vcmp.gt.f32.partialorder %v1525, 0.0
  %vm1552 = vcmp.gt.f32.partialorder %v1528, 0.0
  %vm1553 = vcmp.gt.f32.partialorder %v1533, 0.0
  %vm1554 = vcmp.gt.f32.partialorder %v1536, 0.0
  %v1555 = vmul.f32 %v1477, 0.1
  %v1556 = vmul.f32 %v1480, 0.1
  %v1557 = vmul.f32 %v1485, 0.1
  %v1558 = vmul.f32 %v1488, 0.1
  %v1559 = vmul.f32 %v1493, 0.1
  %v1560 = vmul.f32 %v1496, 0.1
  %v1561 = vmul.f32 %v1501, 0.1
  %v1562 = vmul.f32 %v1504, 0.1
  %v1563 = vmul.f32 %v1509, 0.1
  %v1564 = vmul.f32 %v1512, 0.1
  %v1565 = vmul.f32 %v1517, 0.1
  %v1566 = vmul.f32 %v1520, 0.1
  %v1567 = vmul.f32 %v1525, 0.1
  %v1568 = vmul.f32 %v1528, 0.1
  %v1569 = vmul.f32 %v1533, 0.1
  %v1570 = vmul.f32 %v1536, 0.1
  %v1571 = vsel %vm1539, %v1477, %v1555
  %v1572 = vsel %vm1540, %v1480, %v1556
  %v1573 = vsel %vm1541, %v1485, %v1557
  %v1574 = vsel %vm1542, %v1488, %v1558
  %v1575 = vsel %vm1543, %v1493, %v1559
  %v1576 = vsel %vm1544, %v1496, %v1560
  %v1577 = vsel %vm1545, %v1501, %v1561
  %v1578 = vsel %vm1546, %v1504, %v1562
  %v1579 = vsel %vm1547, %v1509, %v1563
  %v1580 = vsel %vm1548, %v1512, %v1564
  %v1581 = vsel %vm1549, %v1517, %v1565
  %v1582 = vsel %vm1550, %v1520, %v1566
  %v1583 = vsel %vm1551, %v1525, %v1567
  %v1584 = vsel %vm1552, %v1528, %v1568
  %v1585 = vsel %vm1553, %v1533, %v1569
  %v1586 = vsel %vm1554, %v1536, %v1570
  %v1587 = vpack.c.bf16 %v1572, %v1571
  %v1588 = vpack.c.bf16 %v1574, %v1573
  %v1589 = vpack.c.bf16 %v1576, %v1575
  %v1590 = vpack.c.bf16 %v1578, %v1577
  %v1591 = vpack.c.bf16 %v1580, %v1579
  %v1592 = vpack.c.bf16 %v1582, %v1581
  %v1593 = vpack.c.bf16 %v1584, %v1583
  %v1594 = vpack.c.bf16 %v1586, %v1585
  %v1603 = vunpack.c.l.b16 %v1587
  %v1604 = vunpack.c.h.b16 %v1587
  %v1605 = vunpack.c.l.b16 %v1588
  %v1606 = vunpack.c.h.b16 %v1588
  %v1607 = vunpack.c.l.b16 %v1589
  %v1608 = vunpack.c.h.b16 %v1589
  %v1609 = vunpack.c.l.b16 %v1590
  %v1610 = vunpack.c.h.b16 %v1590
  %v1611 = vunpack.c.l.b16 %v1591
  %v1612 = vunpack.c.h.b16 %v1591
  %v1613 = vunpack.c.l.b16 %v1592
  %v1614 = vunpack.c.h.b16 %v1592
  %v1615 = vunpack.c.l.b16 %v1593
  %v1616 = vunpack.c.h.b16 %v1593
  %v1617 = vunpack.c.l.b16 %v1594
  %v1618 = vunpack.c.h.b16 %v1594
  %v1619 = vpack.c.b16 %v1603, %v1603
  %v1620 = vpack.c.b16 %v1604, %v1604
  %v1621 = vpack.c.b16 %v1605, %v1605
  %v1622 = vpack.c.b16 %v1606, %v1606
  %v1623 = vpack.c.b16 %v1607, %v1607
  %v1624 = vpack.c.b16 %v1608, %v1608
  %v1625 = vpack.c.b16 %v1609, %v1609
  %v1626 = vpack.c.b16 %v1610, %v1610
  %v1627 = vpack.c.b16 %v1611, %v1611
  %v1628 = vpack.c.b16 %v1612, %v1612
  %v1629 = vpack.c.b16 %v1613, %v1613
  %v1630 = vpack.c.b16 %v1614, %v1614
  %v1631 = vpack.c.b16 %v1615, %v1615
  %v1632 = vpack.c.b16 %v1616, %v1616
  %v1633 = vpack.c.b16 %v1617, %v1617
  %v1634 = vpack.c.b16 %v1618, %v1618
  %1651 = vst [vmem:[%s5] sm:$0xf] %v1619
  %1652 = vst [vmem:[%s5 + $0x4] sm:$0xf] %v1620
  %1653 = vst [vmem:[%s5 + $0x8] sm:$0xf] %v1621
  %1654 = vst [vmem:[%s5 + $0xc] sm:$0xf] %v1622
  %1655 = vst [vmem:[%s5 + $0x10] sm:$0xf] %v1623
  %1656 = vst [vmem:[%s5 + $0x14] sm:$0xf] %v1624
  %1657 = vst [vmem:[%s5 + $0x18] sm:$0xf] %v1625
  %1658 = vst [vmem:[%s5 + $0x1c] sm:$0xf] %v1626
  %1659 = vst [vmem:[%s5 + $0x20] sm:$0xf] %v1627
  %1660 = vst [vmem:[%s5 + $0x24] sm:$0xf] %v1628
  %1661 = vst [vmem:[%s5 + $0x28] sm:$0xf] %v1629
  %1662 = vst [vmem:[%s5 + $0x2c] sm:$0xf] %v1630
  %1663 = vst [vmem:[%s5 + $0x30] sm:$0xf] %v1631
  %1664 = vst [vmem:[%s5 + $0x34] sm:$0xf] %v1632
  %1665 = vst [vmem:[%s5 + $0x38] sm:$0xf] %v1633
  %1666 = vst [vmem:[%s5 + $0x3c] sm:$0xf] %v1634
  %v1667 = vld [vmem:[%s3] sm:$0xf]
  %v1668 = vld [vmem:[%s3 + $0x4] sm:$0xf]
  %v1669 = vld [vmem:[%s3 + $0x8] sm:$0xf]
  %v1670 = vld [vmem:[%s3 + $0xc] sm:$0xf]
  %v1671 = vld [vmem:[%s3 + $0x10] sm:$0xf]
  %v1672 = vld [vmem:[%s3 + $0x14] sm:$0xf]
  %v1673 = vld [vmem:[%s3 + $0x18] sm:$0xf]
  %v1674 = vld [vmem:[%s3 + $0x1c] sm:$0xf]
  %v1675 = vld [vmem:[%s3 + $0x20] sm:$0xf]
  %v1676 = vld [vmem:[%s3 + $0x24] sm:$0xf]
  %v1677 = vld [vmem:[%s3 + $0x28] sm:$0xf]
  %v1678 = vld [vmem:[%s3 + $0x2c] sm:$0xf]
  %v1679 = vld [vmem:[%s3 + $0x30] sm:$0xf]
  %v1680 = vld [vmem:[%s3 + $0x34] sm:$0xf]
  %v1681 = vld [vmem:[%s3 + $0x38] sm:$0xf]
  %v1682 = vld [vmem:[%s3 + $0x3c] sm:$0xf]
  %v1683 = vld [vmem:[%s4] sm:$0x1]
  %v1685 = vlaneseq
  %v1686 = vshrl.u32 %v1685, 7
  %v1687 = vsub.s32 0, %v1686
  %v1688 = vrot.slane %v1683, %v1687
  %v1706 = vunpack.c.l.b16 %v1667
  %v1707 = vunpack.c.l.b16 %v1668
  %v1708 = vunpack.c.l.b16 %v1669
  %v1709 = vunpack.c.l.b16 %v1670
  %v1710 = vunpack.c.l.b16 %v1671
  %v1711 = vunpack.c.l.b16 %v1672
  %v1712 = vunpack.c.l.b16 %v1673
  %v1713 = vunpack.c.l.b16 %v1674
  %v1714 = vunpack.c.l.b16 %v1675
  %v1715 = vunpack.c.l.b16 %v1676
  %v1716 = vunpack.c.l.b16 %v1677
  %v1717 = vunpack.c.l.b16 %v1678
  %v1718 = vunpack.c.l.b16 %v1679
  %v1719 = vunpack.c.l.b16 %v1680
  %v1720 = vunpack.c.l.b16 %v1681
  %v1721 = vunpack.c.l.b16 %v1682
  %v1722 = vpack.c.b16 %v1707, %v1706
  %v1723 = vpack.c.b16 %v1709, %v1708
  %v1724 = vpack.c.b16 %v1711, %v1710
  %v1725 = vpack.c.b16 %v1713, %v1712
  %v1726 = vpack.c.b16 %v1715, %v1714
  %v1727 = vpack.c.b16 %v1717, %v1716
  %v1728 = vpack.c.b16 %v1719, %v1718
  %v1729 = vpack.c.b16 %v1721, %v1720
  %1738 = vmatprep.subr.bf16.mxu0 0
  %1739 = vmatpush1.bf16.msra.mxu0 %v1722
  %1740 = vmatprep.subr.bf16.mxu0 0
  %1741 = vmatpush1.bf16.msra.mxu0 %v1723
  %1742 = vmatprep.subr.bf16.mxu0 0
  %1743 = vmatpush1.bf16.msra.mxu0 %v1724
  %1744 = vmatprep.subr.bf16.mxu0 0
  %1745 = vmatpush1.bf16.msra.mxu0 %v1725
  %1746 = vmatprep.subr.bf16.mxu0 0
  %1747 = vmatpush1.bf16.msra.mxu0 %v1726
  %1748 = vmatprep.subr.bf16.mxu0 0
  %1749 = vmatpush1.bf16.msra.mxu0 %v1727
  %1750 = vmatprep.subr.bf16.mxu0 0
  %1751 = vmatpush1.bf16.msra.mxu0 %v1728
  %1752 = vmatprep.subr.bf16.mxu0 0
  %1753 = vmatpush1.bf16.msra.mxu0 %v1729
  %1754 = vmatprep.subr.bf16.mxu0 0
  %1755 = vmatpush1.bf16.msra.mxu0 0
  %1756 = vmatprep.subr.bf16.mxu0 0
  %1757 = vmatpush1.bf16.msra.mxu0 0
  %1758 = vmatprep.subr.bf16.mxu0 0
  %1759 = vmatpush1.bf16.msra.mxu0 0
  %1760 = vmatprep.subr.bf16.mxu0 0
  %1761 = vmatpush1.bf16.msra.mxu0 0
  %1762 = vmatprep.subr.bf16.mxu0 0
  %1763 = vmatpush1.bf16.msra.mxu0 0
  %1764 = vmatprep.subr.bf16.mxu0 0
  %1765 = vmatpush1.bf16.msra.mxu0 0
  %1766 = vmatprep.subr.bf16.mxu0 0
  %1767 = vmatpush1.bf16.msra.mxu0 0
  %1768 = vmatprep.subr.bf16.mxu0 0
  %1769 = vmatpush1.bf16.msra.mxu0 0
  %1770 = vmatprep.mubr.bf16.mxu0 0
  %1771 = vmatmul.mubr.bf16.gmra.mrb[0].mxu0 %v1587
  %v1772 = vpop.f32.mrb[0].mxu0
  %v1773 = vadd.f32 %v1688, %v1772
  %v1774 = vpop.f32.mrb[0].mxu0
  %v1775 = vpop.f32.mrb[0].mxu0
  %v1776 = vadd.f32 %v1688, %v1775
  %v1777 = vpop.f32.mrb[0].mxu0
  %1778 = vmatprep.mubr.bf16.mxu0 0
  %1779 = vmatmul.mubr.bf16.gmra.mrb[0].mxu0 %v1588
  %v1780 = vpop.f32.mrb[0].mxu0
  %v1781 = vadd.f32 %v1688, %v1780
  %v1782 = vpop.f32.mrb[0].mxu0
  %v1783 = vpop.f32.mrb[0].mxu0
  %v1784 = vadd.f32 %v1688, %v1783
  %v1785 = vpop.f32.mrb[0].mxu0
  %1786 = vmatprep.mubr.bf16.mxu0 0
  %1787 = vmatmul.mubr.bf16.gmra.mrb[0].mxu0 %v1589
  %v1788 = vpop.f32.mrb[0].mxu0
  %v1789 = vadd.f32 %v1688, %v1788
  %v1790 = vpop.f32.mrb[0].mxu0
  %v1791 = vpop.f32.mrb[0].mxu0
  %v1792 = vadd.f32 %v1688, %v1791
  %v1793 = vpop.f32.mrb[0].mxu0
  %1794 = vmatprep.mubr.bf16.mxu0 0
  %1795 = vmatmul.mubr.bf16.gmra.mrb[0].mxu0 %v1590
  %v1796 = vpop.f32.mrb[0].mxu0
  %v1797 = vadd.f32 %v1688, %v1796
  %v1798 = vpop.f32.mrb[0].mxu0
  %v1799 = vpop.f32.mrb[0].mxu0
  %v1800 = vadd.f32 %v1688, %v1799
  %v1801 = vpop.f32.mrb[0].mxu0
  %1802 = vmatprep.mubr.bf16.mxu0 0
  %1803 = vmatmul.mubr.bf16.gmra.mrb[0].mxu0 %v1591
  %v1804 = vpop.f32.mrb[0].mxu0
  %v1805 = vadd.f32 %v1688, %v1804
  %v1806 = vpop.f32.mrb[0].mxu0
  %v1807 = vpop.f32.mrb[0].mxu0
  %v1808 = vadd.f32 %v1688, %v1807
  %v1809 = vpop.f32.mrb[0].mxu0
  %1810 = vmatprep.mubr.bf16.mxu0 0
  %1811 = vmatmul.mubr.bf16.gmra.mrb[0].mxu0 %v1592
  %v1812 = vpop.f32.mrb[0].mxu0
  %v1813 = vadd.f32 %v1688, %v1812
  %v1814 = vpop.f32.mrb[0].mxu0
  %v1815 = vpop.f32.mrb[0].mxu0
  %v1816 = vadd.f32 %v1688, %v1815
  %v1817 = vpop.f32.mrb[0].mxu0
  %1818 = vmatprep.mubr.bf16.mxu0 0
  %1819 = vmatmul.mubr.bf16.gmra.mrb[0].mxu0 %v1593
  %v1820 = vpop.f32.mrb[0].mxu0
  %v1821 = vadd.f32 %v1688, %v1820
  %v1822 = vpop.f32.mrb[0].mxu0
  %v1823 = vpop.f32.mrb[0].mxu0
  %v1824 = vadd.f32 %v1688, %v1823
  %v1825 = vpop.f32.mrb[0].mxu0
  %1826 = vmatprep.mubr.bf16.mxu0 0
  %1827 = vmatmul.mubr.bf16.gmra.mrb[0].mxu0 %v1594
  %v1828 = vpop.f32.mrb[0].mxu0
  %v1829 = vadd.f32 %v1688, %v1828
  %v1830 = vpop.f32.mrb[0].mxu0
  %v1831 = vpop.f32.mrb[0].mxu0
  %v1832 = vadd.f32 %v1688, %v1831
  %v1833 = vpop.f32.mrb[0].mxu0
  %1834 = vdwg.mxu0
  %vm1835 = vcmp.gt.f32.partialorder %v1773, 0.0
  %vm1836 = vcmp.gt.f32.partialorder %v1776, 0.0
  %vm1837 = vcmp.gt.f32.partialorder %v1781, 0.0
  %vm1838 = vcmp.gt.f32.partialorder %v1784, 0.0
  %vm1839 = vcmp.gt.f32.partialorder %v1789, 0.0
  %vm1840 = vcmp.gt.f32.partialorder %v1792, 0.0
  %vm1841 = vcmp.gt.f32.partialorder %v1797, 0.0
  %vm1842 = vcmp.gt.f32.partialorder %v1800, 0.0
  %vm1843 = vcmp.gt.f32.partialorder %v1805, 0.0
  %vm1844 = vcmp.gt.f32.partialorder %v1808, 0.0
  %vm1845 = vcmp.gt.f32.partialorder %v1813, 0.0
  %vm1846 = vcmp.gt.f32.partialorder %v1816, 0.0
  %vm1847 = vcmp.gt.f32.partialorder %v1821, 0.0
  %vm1848 = vcmp.gt.f32.partialorder %v1824, 0.0
  %vm1849 = vcmp.gt.f32.partialorder %v1829, 0.0
  %vm1850 = vcmp.gt.f32.partialorder %v1832, 0.0
  %v1851 = vmul.f32 %v1773, 0.1
  %v1852 = vmul.f32 %v1776, 0.1
  %v1853 = vmul.f32 %v1781, 0.1
  %v1854 = vmul.f32 %v1784, 0.1
  %v1855 = vmul.f32 %v1789, 0.1
  %v1856 = vmul.f32 %v1792, 0.1
  %v1857 = vmul.f32 %v1797, 0.1
  %v1858 = vmul.f32 %v1800, 0.1
  %v1859 = vmul.f32 %v1805, 0.1
  %v1860 = vmul.f32 %v1808, 0.1
  %v1861 = vmul.f32 %v1813, 0.1
  %v1862 = vmul.f32 %v1816, 0.1
  %v1863 = vmul.f32 %v1821, 0.1
  %v1864 = vmul.f32 %v1824, 0.1
  %v1865 = vmul.f32 %v1829, 0.1
  %v1866 = vmul.f32 %v1832, 0.1
  %v1867 = vsel %vm1835, %v1773, %v1851
  %v1868 = vsel %vm1836, %v1776, %v1852
  %v1869 = vsel %vm1837, %v1781, %v1853
  %v1870 = vsel %vm1838, %v1784, %v1854
  %v1871 = vsel %vm1839, %v1789, %v1855
  %v1872 = vsel %vm1840, %v1792, %v1856
  %v1873 = vsel %vm1841, %v1797, %v1857
  %v1874 = vsel %vm1842, %v1800, %v1858
  %v1875 = vsel %vm1843, %v1805, %v1859
  %v1876 = vsel %vm1844, %v1808, %v1860
  %v1877 = vsel %vm1845, %v1813, %v1861
  %v1878 = vsel %vm1846, %v1816, %v1862
  %v1879 = vsel %vm1847, %v1821, %v1863
  %v1880 = vsel %vm1848, %v1824, %v1864
  %v1881 = vsel %vm1849, %v1829, %v1865
  %v1882 = vsel %vm1850, %v1832, %v1866
  %v1883 = vpack.c.bf16 %v1868, %v1867
  %v1884 = vpack.c.bf16 %v1870, %v1869
  %v1885 = vpack.c.bf16 %v1872, %v1871
  %v1886 = vpack.c.bf16 %v1874, %v1873
  %v1887 = vpack.c.bf16 %v1876, %v1875
  %v1888 = vpack.c.bf16 %v1878, %v1877
  %v1889 = vpack.c.bf16 %v1880, %v1879
  %v1890 = vpack.c.bf16 %v1882, %v1881
  %v1899 = vunpack.c.l.b16 %v1883
  %v1900 = vunpack.c.h.b16 %v1883
  %v1901 = vunpack.c.l.b16 %v1884
  %v1902 = vunpack.c.h.b16 %v1884
  %v1903 = vunpack.c.l.b16 %v1885
  %v1904 = vunpack.c.h.b16 %v1885
  %v1905 = vunpack.c.l.b16 %v1886
  %v1906 = vunpack.c.h.b16 %v1886
  %v1907 = vunpack.c.l.b16 %v1887
  %v1908 = vunpack.c.h.b16 %v1887
  %v1909 = vunpack.c.l.b16 %v1888
  %v1910 = vunpack.c.h.b16 %v1888
  %v1911 = vunpack.c.l.b16 %v1889
  %v1912 = vunpack.c.h.b16 %v1889
  %v1913 = vunpack.c.l.b16 %v1890
  %v1914 = vunpack.c.h.b16 %v1890
  %v1915 = vpack.c.b16 %v1899, %v1899
  %v1916 = vpack.c.b16 %v1900, %v1900
  %v1917 = vpack.c.b16 %v1901, %v1901
  %v1918 = vpack.c.b16 %v1902, %v1902
  %v1919 = vpack.c.b16 %v1903, %v1903
  %v1920 = vpack.c.b16 %v1904, %v1904
  %v1921 = vpack.c.b16 %v1905, %v1905
  %v1922 = vpack.c.b16 %v1906, %v1906
  %v1923 = vpack.c.b16 %v1907, %v1907
  %v1924 = vpack.c.b16 %v1908, %v1908
  %v1925 = vpack.c.b16 %v1909, %v1909
  %v1926 = vpack.c.b16 %v1910, %v1910
  %v1927 = vpack.c.b16 %v1911, %v1911
  %v1928 = vpack.c.b16 %v1912, %v1912
  %v1929 = vpack.c.b16 %v1913, %v1913
  %v1930 = vpack.c.b16 %v1914, %v1914
  %1947 = vst [vmem:[%s6] sm:$0xf] %v1915
  %1948 = vst [vmem:[%s6 + $0x4] sm:$0xf] %v1916
  %1949 = vst [vmem:[%s6 + $0x8] sm:$0xf] %v1917
  %1950 = vst [vmem:[%s6 + $0xc] sm:$0xf] %v1918
  %1951 = vst [vmem:[%s6 + $0x10] sm:$0xf] %v1919
  %1952 = vst [vmem:[%s6 + $0x14] sm:$0xf] %v1920
  %1953 = vst [vmem:[%s6 + $0x18] sm:$0xf] %v1921
  %1954 = vst [vmem:[%s6 + $0x1c] sm:$0xf] %v1922
  %1955 = vst [vmem:[%s6 + $0x20] sm:$0xf] %v1923
  %1956 = vst [vmem:[%s6 + $0x24] sm:$0xf] %v1924
  %1957 = vst [vmem:[%s6 + $0x28] sm:$0xf] %v1925
  %1958 = vst [vmem:[%s6 + $0x2c] sm:$0xf] %v1926
  %1959 = vst [vmem:[%s6 + $0x30] sm:$0xf] %v1927
  %1960 = vst [vmem:[%s6 + $0x34] sm:$0xf] %v1928
  %1961 = vst [vmem:[%s6 + $0x38] sm:$0xf] %v1929
  %1962 = vst [vmem:[%s6 + $0x3c] sm:$0xf] %v1930
  // Predicated region
  $region22: #{yolov3_forward.8} parent=0 // pred_check
    _
  $region23: #{yolov3_forward.8} parent=0 // pred_check_branch
    %1964 = sbr.rel (0) target = $region25
  $region24: #{yolov3_forward.8} parent=0 // pred_region
    _
  $region25: #{yolov3_forward.8} parent=0 // pred_fallthru
    _
  // Predicated region
  $region26: #{yolov3_forward.8} parent=0 // pred_check
    _
  $region27: #{yolov3_forward.8} parent=0 // pred_check_branch
    %1966 = sbr.rel (0) target = $region29
  $region28: #{yolov3_forward.8} parent=0 // pred_region
    _
  $region29: #{yolov3_forward.8} parent=0 // pred_fallthru
    _
  // Predicated region
  $region30: #{yolov3_forward.8} parent=0 // pred_check
    _
  $region31: #{yolov3_forward.8} parent=0 // pred_check_branch
    %1968 = sbr.rel (0) target = $region33
  $region32: #{yolov3_forward.8} parent=0 // pred_region
    _
  $region33: #{yolov3_forward.8} parent=0 // pred_fallthru
    _
  // Predicated region
  $region34: #{yolov3_forward.8} parent=0 // pred_check
    _
  $region35: #{yolov3_forward.8} parent=0 // pred_check_branch
    %1970 = sbr.rel (0) target = $region37
  $region36: #{yolov3_forward.8} parent=0 // pred_region
    _
  $region37: #{yolov3_forward.8} parent=0 // pred_fallthru
    _

// kernel: yolov3_forward.9
$region0: #{yolov3_forward.9}
  #allocation0 [shape = 'u32[]', space=smem, size = 0x4, offset = 0x4, fixed_abs, tag = 'smem constant byte address 0x4 - core index']
  #allocation1 [shape = 'u32[144,128]{1,0:T(1,128)}', space=vmem, size = 0x12000, scoped, tag = 'internal scratch']
  %s0 = inlined_call_operand.vmem [shape: bf16[128,1152], index: 0, kind: input, shape index: {}]
  %s1 = inlined_call_operand.vmem [shape: bf16[1152,128], index: 1, kind: input, shape index: {}]
  %s2 = inlined_call_operand.vmem [shape: f32[1,128], index: 2, kind: input, shape index: {}]
  %s3 = inlined_call_operand.vmem [shape: bf16[128,128], index: 3, kind: input, shape index: {}]
  %s4 = inlined_call_operand.vmem [shape: bf16[128,128], index: 4, kind: output, shape index: {}]
  %s5 = sld [smem:[#allocation0]]
  $region26: #{yolov3_forward.9} parent=0
    _
  %s7 = ssub.s32 1, %s5
  %s8 = scalar_select 0, %s7, %s5
  // Predicated region
  $region2: #{yolov3_forward.9} parent=0 // pred_check
    _
  $region3: #{yolov3_forward.9} parent=0 // pred_check_branch
    %10 = sbr.rel (0) target = $region5
  $region4: #{yolov3_forward.9} parent=0 // pred_region
    _
  $region5: #{yolov3_forward.9} parent=0 // pred_fallthru
    _
  // Predicated region
  $region6: #{yolov3_forward.9} parent=0 // pred_check
    _
  $region7: #{yolov3_forward.9} parent=0 // pred_check_branch
    %12 = sbr.rel (0) target = $region9
  $region8: #{yolov3_forward.9} parent=0 // pred_region
    _
  $region9: #{yolov3_forward.9} parent=0 // pred_fallthru
    _
  // Predicated region
  $region10: #{yolov3_forward.9} parent=0 // pred_check
    _
  $region11: #{yolov3_forward.9} parent=0 // pred_check_branch
    %14 = sbr.rel (0) target = $region13
  $region12: #{yolov3_forward.9} parent=0 // pred_region
    _
  $region13: #{yolov3_forward.9} parent=0 // pred_fallthru
    _
  // Predicated region
  $region14: #{yolov3_forward.9} parent=0 // pred_check
    _
  $region15: #{yolov3_forward.9} parent=0 // pred_check_branch
    %16 = sbr.rel (0) target = $region17
  $region16: #{yolov3_forward.9} parent=0 // pred_region
    _
  $region17: #{yolov3_forward.9} parent=0 // pred_fallthru
    _
  %v18 = vld [vmem:[%s0] sm:$0xff]
  %v19 = vld [vmem:[%s0 + $0x8] sm:$0xff]
  %v20 = vld [vmem:[%s0 + $0x10] sm:$0xff]
  %v21 = vld [vmem:[%s0 + $0x18] sm:$0xff]
  %v22 = vld [vmem:[%s0 + $0x20] sm:$0xf]
  %v23 = vld [vmem:[%s0 + $0x24] sm:$0xff]
  %v24 = vld [vmem:[%s0 + $0x2c] sm:$0xff]
  %v25 = vld [vmem:[%s0 + $0x34] sm:$0xff]
  %v26 = vld [vmem:[%s0 + $0x3c] sm:$0xff]
  %v27 = vld [vmem:[%s0 + $0x44] sm:$0xf]
  %v28 = vld [vmem:[%s0 + $0x48] sm:$0xff]
  %v29 = vld [vmem:[%s0 + $0x50] sm:$0xff]
  %v30 = vld [vmem:[%s0 + $0x58] sm:$0xff]
  %v31 = vld [vmem:[%s0 + $0x60] sm:$0xff]
  %v32 = vld [vmem:[%s0 + $0x68] sm:$0xf]
  %v33 = vld [vmem:[%s0 + $0x6c] sm:$0xff]
  %v34 = vld [vmem:[%s0 + $0x74] sm:$0xff]
  %v35 = vld [vmem:[%s0 + $0x7c] sm:$0xff]
  %v36 = vld [vmem:[%s0 + $0x84] sm:$0xff]
  %v37 = vld [vmem:[%s0 + $0x8c] sm:$0xf]
  %v38 = vld [vmem:[%s0 + $0x90] sm:$0xff]
  %v39 = vld [vmem:[%s0 + $0x98] sm:$0xff]
  %v40 = vld [vmem:[%s0 + $0xa0] sm:$0xff]
  %v41 = vld [vmem:[%s0 + $0xa8] sm:$0xff]
  %v42 = vld [vmem:[%s0 + $0xb0] sm:$0xf]
  %v43 = vld [vmem:[%s0 + $0xb4] sm:$0xff]
  %v44 = vld [vmem:[%s0 + $0xbc] sm:$0xff]
  %v45 = vld [vmem:[%s0 + $0xc4] sm:$0xff]
  %v46 = vld [vmem:[%s0 + $0xcc] sm:$0xff]
  %v47 = vld [vmem:[%s0 + $0xd4] sm:$0xf]
  %v48 = vld [vmem:[%s0 + $0xd8] sm:$0xff]
  %v49 = vld [vmem:[%s0 + $0xe0] sm:$0xff]
  %v50 = vld [vmem:[%s0 + $0xe8] sm:$0xff]
  %v51 = vld [vmem:[%s0 + $0xf0] sm:$0xff]
  %v52 = vld [vmem:[%s0 + $0xf8] sm:$0xf]
  %v53 = vld [vmem:[%s0 + $0xfc] sm:$0xff]
  %v54 = vld [vmem:[%s0 + $0x104] sm:$0xff]
  %v55 = vld [vmem:[%s0 + $0x10c] sm:$0xff]
  %v56 = vld [vmem:[%s0 + $0x114] sm:$0xff]
  %v57 = vld [vmem:[%s0 + $0x11c] sm:$0xf]
  %v58 = vld [vmem:[%s0 + $0x120] sm:$0xff]
  %v59 = vld [vmem:[%s0 + $0x128] sm:$0xff]
  %v60 = vld [vmem:[%s0 + $0x130] sm:$0xff]
  %v61 = vld [vmem:[%s0 + $0x138] sm:$0xff]
  %v62 = vld [vmem:[%s0 + $0x140] sm:$0xf]
  %v63 = vld [vmem:[%s0 + $0x144] sm:$0xff]
  %v64 = vld [vmem:[%s0 + $0x14c] sm:$0xff]
  %v65 = vld [vmem:[%s0 + $0x154] sm:$0xff]
  %v66 = vld [vmem:[%s0 + $0x15c] sm:$0xff]
  %v67 = vld [vmem:[%s0 + $0x164] sm:$0xf]
  %v68 = vld [vmem:[%s0 + $0x168] sm:$0xff]
  %v69 = vld [vmem:[%s0 + $0x170] sm:$0xff]
  %v70 = vld [vmem:[%s0 + $0x178] sm:$0xff]
  %v71 = vld [vmem:[%s0 + $0x180] sm:$0xff]
  %v72 = vld [vmem:[%s0 + $0x188] sm:$0xf]
  %v73 = vld [vmem:[%s0 + $0x18c] sm:$0xff]
  %v74 = vld [vmem:[%s0 + $0x194] sm:$0xff]
  %v75 = vld [vmem:[%s0 + $0x19c] sm:$0xff]
  %v76 = vld [vmem:[%s0 + $0x1a4] sm:$0xff]
  %v77 = vld [vmem:[%s0 + $0x1ac] sm:$0xf]
  %v78 = vld [vmem:[%s0 + $0x1b0] sm:$0xff]
  %v79 = vld [vmem:[%s0 + $0x1b8] sm:$0xff]
  %v80 = vld [vmem:[%s0 + $0x1c0] sm:$0xff]
  %v81 = vld [vmem:[%s0 + $0x1c8] sm:$0xff]
  %v82 = vld [vmem:[%s0 + $0x1d0] sm:$0xf]
  %v83 = vld [vmem:[%s0 + $0x1d4] sm:$0xff]
  %v84 = vld [vmem:[%s0 + $0x1dc] sm:$0xff]
  %v85 = vld [vmem:[%s0 + $0x1e4] sm:$0xff]
  %v86 = vld [vmem:[%s0 + $0x1ec] sm:$0xff]
  %v87 = vld [vmem:[%s0 + $0x1f4] sm:$0xf]
  %v88 = vld [vmem:[%s0 + $0x1f8] sm:$0xff]
  %v89 = vld [vmem:[%s0 + $0x200] sm:$0xff]
  %v90 = vld [vmem:[%s0 + $0x208] sm:$0xff]
  %v91 = vld [vmem:[%s0 + $0x210] sm:$0xff]
  %v92 = vld [vmem:[%s0 + $0x218] sm:$0xf]
  %v93 = vld [vmem:[%s0 + $0x21c] sm:$0xff]
  %v94 = vld [vmem:[%s0 + $0x224] sm:$0xff]
  %v95 = vld [vmem:[%s0 + $0x22c] sm:$0xff]
  %v96 = vld [vmem:[%s0 + $0x234] sm:$0xff]
  %v97 = vld [vmem:[%s0 + $0x23c] sm:$0xf]
  %v98 = vld [vmem:[%s1] sm:$0xf]
  %v99 = vld [vmem:[%s1 + $0x4] sm:$0xf]
  %v100 = vld [vmem:[%s1 + $0x8] sm:$0xf]
  %v101 = vld [vmem:[%s1 + $0xc] sm:$0xf]
  %v102 = vld [vmem:[%s1 + $0x10] sm:$0xf]
  %v103 = vld [vmem:[%s1 + $0x14] sm:$0xf]
  %v104 = vld [vmem:[%s1 + $0x18] sm:$0xf]
  %v105 = vld [vmem:[%s1 + $0x1c] sm:$0xf]
  %v106 = vld [vmem:[%s1 + $0x20] sm:$0xf]
  %v107 = vld [vmem:[%s1 + $0x24] sm:$0xf]
  %v108 = vld [vmem:[%s1 + $0x28] sm:$0xf]
  %v109 = vld [vmem:[%s1 + $0x2c] sm:$0xf]
  %v110 = vld [vmem:[%s1 + $0x30] sm:$0xf]
  %v111 = vld [vmem:[%s1 + $0x34] sm:$0xf]
  %v112 = vld [vmem:[%s1 + $0x38] sm:$0xf]
  %v113 = vld [vmem:[%s1 + $0x3c] sm:$0xf]
  %v114 = vld [vmem:[%s1 + $0x40] sm:$0xf]
  %v115 = vld [vmem:[%s1 + $0x44] sm:$0xf]
  %v116 = vld [vmem:[%s1 + $0x48] sm:$0xf]
  %v117 = vld [vmem:[%s1 + $0x4c] sm:$0xf]
  %v118 = vld [vmem:[%s1 + $0x50] sm:$0xf]
  %v119 = vld [vmem:[%s1 + $0x54] sm:$0xf]
  %v120 = vld [vmem:[%s1 + $0x58] sm:$0xf]
  %v121 = vld [vmem:[%s1 + $0x5c] sm:$0xf]
  %v122 = vld [vmem:[%s1 + $0x60] sm:$0xf]
  %v123 = vld [vmem:[%s1 + $0x64] sm:$0xf]
  %v124 = vld [vmem:[%s1 + $0x68] sm:$0xf]
  %v125 = vld [vmem:[%s1 + $0x6c] sm:$0xf]
  %v126 = vld [vmem:[%s1 + $0x70] sm:$0xf]
  %v127 = vld [vmem:[%s1 + $0x74] sm:$0xf]
  %v128 = vld [vmem:[%s1 + $0x78] sm:$0xf]
  %v129 = vld [vmem:[%s1 + $0x7c] sm:$0xf]
  %v130 = vld [vmem:[%s1 + $0x80] sm:$0xf]
  %v131 = vld [vmem:[%s1 + $0x84] sm:$0xf]
  %v132 = vld [vmem:[%s1 + $0x88] sm:$0xf]
  %v133 = vld [vmem:[%s1 + $0x8c] sm:$0xf]
  %v134 = vld [vmem:[%s1 + $0x90] sm:$0xf]
  %v135 = vld [vmem:[%s1 + $0x94] sm:$0xf]
  %v136 = vld [vmem:[%s1 + $0x98] sm:$0xf]
  %v137 = vld [vmem:[%s1 + $0x9c] sm:$0xf]
  %v138 = vld [vmem:[%s1 + $0xa0] sm:$0xf]
  %v139 = vld [vmem:[%s1 + $0xa4] sm:$0xf]
  %v140 = vld [vmem:[%s1 + $0xa8] sm:$0xf]
  %v141 = vld [vmem:[%s1 + $0xac] sm:$0xf]
  %v142 = vld [vmem:[%s1 + $0xb0] sm:$0xf]
  %v143 = vld [vmem:[%s1 + $0xb4] sm:$0xf]
  %v144 = vld [vmem:[%s1 + $0xb8] sm:$0xf]
  %v145 = vld [vmem:[%s1 + $0xbc] sm:$0xf]
  %v146 = vld [vmem:[%s1 + $0xc0] sm:$0xf]
  %v147 = vld [vmem:[%s1 + $0xc4] sm:$0xf]
  %v148 = vld [vmem:[%s1 + $0xc8] sm:$0xf]
  %v149 = vld [vmem:[%s1 + $0xcc] sm:$0xf]
  %v150 = vld [vmem:[%s1 + $0xd0] sm:$0xf]
  %v151 = vld [vmem:[%s1 + $0xd4] sm:$0xf]
  %v152 = vld [vmem:[%s1 + $0xd8] sm:$0xf]
  %v153 = vld [vmem:[%s1 + $0xdc] sm:$0xf]
  %v154 = vld [vmem:[%s1 + $0xe0] sm:$0xf]
  %v155 = vld [vmem:[%s1 + $0xe4] sm:$0xf]
  %v156 = vld [vmem:[%s1 + $0xe8] sm:$0xf]
  %v157 = vld [vmem:[%s1 + $0xec] sm:$0xf]
  %v158 = vld [vmem:[%s1 + $0xf0] sm:$0xf]
  %v159 = vld [vmem:[%s1 + $0xf4] sm:$0xf]
  %v160 = vld [vmem:[%s1 + $0xf8] sm:$0xf]
  %v161 = vld [vmem:[%s1 + $0xfc] sm:$0xf]
  %v162 = vld [vmem:[%s1 + $0x100] sm:$0xf]
  %v163 = vld [vmem:[%s1 + $0x104] sm:$0xf]
  %v164 = vld [vmem:[%s1 + $0x108] sm:$0xf]
  %v165 = vld [vmem:[%s1 + $0x10c] sm:$0xf]
  %v166 = vld [vmem:[%s1 + $0x110] sm:$0xf]
  %v167 = vld [vmem:[%s1 + $0x114] sm:$0xf]
  %v168 = vld [vmem:[%s1 + $0x118] sm:$0xf]
  %v169 = vld [vmem:[%s1 + $0x11c] sm:$0xf]
  %v170 = vld [vmem:[%s1 + $0x120] sm:$0xf]
  %v171 = vld [vmem:[%s1 + $0x124] sm:$0xf]
  %v172 = vld [vmem:[%s1 + $0x128] sm:$0xf]
  %v173 = vld [vmem:[%s1 + $0x12c] sm:$0xf]
  %v174 = vld [vmem:[%s1 + $0x130] sm:$0xf]
  %v175 = vld [vmem:[%s1 + $0x134] sm:$0xf]
  %v176 = vld [vmem:[%s1 + $0x138] sm:$0xf]
  %v177 = vld [vmem:[%s1 + $0x13c] sm:$0xf]
  %v178 = vld [vmem:[%s1 + $0x140] sm:$0xf]
  %v179 = vld [vmem:[%s1 + $0x144] sm:$0xf]
  %v180 = vld [vmem:[%s1 + $0x148] sm:$0xf]
  %v181 = vld [vmem:[%s1 + $0x14c] sm:$0xf]
  %v182 = vld [vmem:[%s1 + $0x150] sm:$0xf]
  %v183 = vld [vmem:[%s1 + $0x154] sm:$0xf]
  %v184 = vld [vmem:[%s1 + $0x158] sm:$0xf]
  %v185 = vld [vmem:[%s1 + $0x15c] sm:$0xf]
  %v186 = vld [vmem:[%s1 + $0x160] sm:$0xf]
  %v187 = vld [vmem:[%s1 + $0x164] sm:$0xf]
  %v188 = vld [vmem:[%s1 + $0x168] sm:$0xf]
  %v189 = vld [vmem:[%s1 + $0x16c] sm:$0xf]
  %v190 = vld [vmem:[%s1 + $0x170] sm:$0xf]
  %v191 = vld [vmem:[%s1 + $0x174] sm:$0xf]
  %v192 = vld [vmem:[%s1 + $0x178] sm:$0xf]
  %v193 = vld [vmem:[%s1 + $0x17c] sm:$0xf]
  %v194 = vld [vmem:[%s1 + $0x180] sm:$0xf]
  %v195 = vld [vmem:[%s1 + $0x184] sm:$0xf]
  %v196 = vld [vmem:[%s1 + $0x188] sm:$0xf]
  %v197 = vld [vmem:[%s1 + $0x18c] sm:$0xf]
  %v198 = vld [vmem:[%s1 + $0x190] sm:$0xf]
  %v199 = vld [vmem:[%s1 + $0x194] sm:$0xf]
  %v200 = vld [vmem:[%s1 + $0x198] sm:$0xf]
  %v201 = vld [vmem:[%s1 + $0x19c] sm:$0xf]
  %v202 = vld [vmem:[%s1 + $0x1a0] sm:$0xf]
  %v203 = vld [vmem:[%s1 + $0x1a4] sm:$0xf]
  %v204 = vld [vmem:[%s1 + $0x1a8] sm:$0xf]
  %v205 = vld [vmem:[%s1 + $0x1ac] sm:$0xf]
  %v206 = vld [vmem:[%s1 + $0x1b0] sm:$0xf]
  %v207 = vld [vmem:[%s1 + $0x1b4] sm:$0xf]
  %v208 = vld [vmem:[%s1 + $0x1b8] sm:$0xf]
  %v209 = vld [vmem:[%s1 + $0x1bc] sm:$0xf]
  %v210 = vld [vmem:[%s1 + $0x1c0] sm:$0xf]
  %v211 = vld [vmem:[%s1 + $0x1c4] sm:$0xf]
  %v212 = vld [vmem:[%s1 + $0x1c8] sm:$0xf]
  %v213 = vld [vmem:[%s1 + $0x1cc] sm:$0xf]
  %v214 = vld [vmem:[%s1 + $0x1d0] sm:$0xf]
  %v215 = vld [vmem:[%s1 + $0x1d4] sm:$0xf]
  %v216 = vld [vmem:[%s1 + $0x1d8] sm:$0xf]
  %v217 = vld [vmem:[%s1 + $0x1dc] sm:$0xf]
  %v218 = vld [vmem:[%s1 + $0x1e0] sm:$0xf]
  %v219 = vld [vmem:[%s1 + $0x1e4] sm:$0xf]
  %v220 = vld [vmem:[%s1 + $0x1e8] sm:$0xf]
  %v221 = vld [vmem:[%s1 + $0x1ec] sm:$0xf]
  %v222 = vld [vmem:[%s1 + $0x1f0] sm:$0xf]
  %v223 = vld [vmem:[%s1 + $0x1f4] sm:$0xf]
  %v224 = vld [vmem:[%s1 + $0x1f8] sm:$0xf]
  %v225 = vld [vmem:[%s1 + $0x1fc] sm:$0xf]
  %v226 = vld [vmem:[%s1 + $0x200] sm:$0xf]
  %v227 = vld [vmem:[%s1 + $0x204] sm:$0xf]
  %v228 = vld [vmem:[%s1 + $0x208] sm:$0xf]
  %v229 = vld [vmem:[%s1 + $0x20c] sm:$0xf]
  %v230 = vld [vmem:[%s1 + $0x210] sm:$0xf]
  %v231 = vld [vmem:[%s1 + $0x214] sm:$0xf]
  %v232 = vld [vmem:[%s1 + $0x218] sm:$0xf]
  %v233 = vld [vmem:[%s1 + $0x21c] sm:$0xf]
  %v234 = vld [vmem:[%s1 + $0x220] sm:$0xf]
  %v235 = vld [vmem:[%s1 + $0x224] sm:$0xf]
  %v236 = vld [vmem:[%s1 + $0x228] sm:$0xf]
  %v237 = vld [vmem:[%s1 + $0x22c] sm:$0xf]
  %v238 = vld [vmem:[%s1 + $0x230] sm:$0xf]
  %v239 = vld [vmem:[%s1 + $0x234] sm:$0xf]
  %v240 = vld [vmem:[%s1 + $0x238] sm:$0xf]
  %v241 = vld [vmem:[%s1 + $0x23c] sm:$0xf]
  %v242 = vld [vmem:[%s2] sm:$0x1]
  %v244 = vlaneseq
  %v245 = vshrl.u32 %v244, 7
  %v246 = vsub.s32 0, %v245
  %v247 = vrot.slane %v242, %v246
  %v329 = vunpack.c.l.b16 %v18
  %v330 = vunpack.c.h.b16 %v18
  %v331 = vunpack.c.l.b16 %v19
  %v332 = vunpack.c.h.b16 %v19
  %v333 = vunpack.c.l.b16 %v20
  %v334 = vunpack.c.h.b16 %v20
  %v335 = vunpack.c.l.b16 %v21
  %v336 = vunpack.c.h.b16 %v21
  %v337 = vunpack.c.l.b16 %v22
  %v338 = vunpack.c.l.b16 %v23
  %v339 = vunpack.c.h.b16 %v23
  %v340 = vunpack.c.l.b16 %v24
  %v341 = vunpack.c.h.b16 %v24
  %v342 = vunpack.c.l.b16 %v25
  %v343 = vunpack.c.h.b16 %v25
  %v344 = vunpack.c.l.b16 %v26
  %v345 = vunpack.c.h.b16 %v26
  %v346 = vunpack.c.l.b16 %v27
  %v347 = vunpack.c.l.b16 %v28
  %v348 = vunpack.c.h.b16 %v28
  %v349 = vunpack.c.l.b16 %v29
  %v350 = vunpack.c.h.b16 %v29
  %v351 = vunpack.c.l.b16 %v30
  %v352 = vunpack.c.h.b16 %v30
  %v353 = vunpack.c.l.b16 %v31
  %v354 = vunpack.c.h.b16 %v31
  %v355 = vunpack.c.l.b16 %v32
  %v356 = vunpack.c.l.b16 %v33
  %v357 = vunpack.c.h.b16 %v33
  %v358 = vunpack.c.l.b16 %v34
  %v359 = vunpack.c.h.b16 %v34
  %v360 = vunpack.c.l.b16 %v35
  %v361 = vunpack.c.h.b16 %v35
  %v362 = vunpack.c.l.b16 %v36
  %v363 = vunpack.c.h.b16 %v36
  %v364 = vunpack.c.l.b16 %v37
  %v365 = vunpack.c.l.b16 %v38
  %v366 = vunpack.c.h.b16 %v38
  %v367 = vunpack.c.l.b16 %v39
  %v368 = vunpack.c.h.b16 %v39
  %v369 = vunpack.c.l.b16 %v40
  %v370 = vunpack.c.h.b16 %v40
  %v371 = vunpack.c.l.b16 %v41
  %v372 = vunpack.c.h.b16 %v41
  %v373 = vunpack.c.l.b16 %v42
  %v374 = vunpack.c.l.b16 %v43
  %v375 = vunpack.c.h.b16 %v43
  %v376 = vunpack.c.l.b16 %v44
  %v377 = vunpack.c.h.b16 %v44
  %v378 = vunpack.c.l.b16 %v45
  %v379 = vunpack.c.h.b16 %v45
  %v380 = vunpack.c.l.b16 %v46
  %v381 = vunpack.c.h.b16 %v46
  %v382 = vunpack.c.l.b16 %v47
  %v383 = vunpack.c.l.b16 %v48
  %v384 = vunpack.c.h.b16 %v48
  %v385 = vunpack.c.l.b16 %v49
  %v386 = vunpack.c.h.b16 %v49
  %v387 = vunpack.c.l.b16 %v50
  %v388 = vunpack.c.h.b16 %v50
  %v389 = vunpack.c.l.b16 %v51
  %v390 = vunpack.c.h.b16 %v51
  %v391 = vunpack.c.l.b16 %v52
  %v392 = vunpack.c.l.b16 %v53
  %v393 = vunpack.c.h.b16 %v53
  %v394 = vunpack.c.l.b16 %v54
  %v395 = vunpack.c.h.b16 %v54
  %v396 = vunpack.c.l.b16 %v55
  %v397 = vunpack.c.h.b16 %v55
  %v398 = vunpack.c.l.b16 %v56
  %v399 = vunpack.c.h.b16 %v56
  %v400 = vunpack.c.l.b16 %v57
  %v401 = vunpack.c.l.b16 %v58
  %v402 = vunpack.c.h.b16 %v58
  %v403 = vunpack.c.l.b16 %v59
  %v404 = vunpack.c.h.b16 %v59
  %v405 = vunpack.c.l.b16 %v60
  %v406 = vunpack.c.h.b16 %v60
  %v407 = vunpack.c.l.b16 %v61
  %v408 = vunpack.c.h.b16 %v61
  %v409 = vunpack.c.l.b16 %v62
  %v410 = vunpack.c.l.b16 %v63
  %v411 = vunpack.c.h.b16 %v63
  %v412 = vunpack.c.l.b16 %v64
  %v413 = vunpack.c.h.b16 %v64
  %v414 = vunpack.c.l.b16 %v65
  %v415 = vunpack.c.h.b16 %v65
  %v416 = vunpack.c.l.b16 %v66
  %v417 = vunpack.c.h.b16 %v66
  %v418 = vunpack.c.l.b16 %v67
  %v419 = vunpack.c.l.b16 %v68
  %v420 = vunpack.c.h.b16 %v68
  %v421 = vunpack.c.l.b16 %v69
  %v422 = vunpack.c.h.b16 %v69
  %v423 = vunpack.c.l.b16 %v70
  %v424 = vunpack.c.h.b16 %v70
  %v425 = vunpack.c.l.b16 %v71
  %v426 = vunpack.c.h.b16 %v71
  %v427 = vunpack.c.l.b16 %v72
  %v428 = vunpack.c.l.b16 %v73
  %v429 = vunpack.c.h.b16 %v73
  %v430 = vunpack.c.l.b16 %v74
  %v431 = vunpack.c.h.b16 %v74
  %v432 = vunpack.c.l.b16 %v75
  %v433 = vunpack.c.h.b16 %v75
  %v434 = vunpack.c.l.b16 %v76
  %v435 = vunpack.c.h.b16 %v76
  %v436 = vunpack.c.l.b16 %v77
  %v437 = vunpack.c.l.b16 %v78
  %v438 = vunpack.c.h.b16 %v78
  %v439 = vunpack.c.l.b16 %v79
  %v440 = vunpack.c.h.b16 %v79
  %v441 = vunpack.c.l.b16 %v80
  %v442 = vunpack.c.h.b16 %v80
  %v443 = vunpack.c.l.b16 %v81
  %v444 = vunpack.c.h.b16 %v81
  %v445 = vunpack.c.l.b16 %v82
  %v446 = vunpack.c.l.b16 %v83
  %v447 = vunpack.c.h.b16 %v83
  %v448 = vunpack.c.l.b16 %v84
  %v449 = vunpack.c.h.b16 %v84
  %v450 = vunpack.c.l.b16 %v85
  %v451 = vunpack.c.h.b16 %v85
  %v452 = vunpack.c.l.b16 %v86
  %v453 = vunpack.c.h.b16 %v86
  %v454 = vunpack.c.l.b16 %v87
  %v455 = vunpack.c.l.b16 %v88
  %v456 = vunpack.c.h.b16 %v88
  %v457 = vunpack.c.l.b16 %v89
  %v458 = vunpack.c.h.b16 %v89
  %v459 = vunpack.c.l.b16 %v90
  %v460 = vunpack.c.h.b16 %v90
  %v461 = vunpack.c.l.b16 %v91
  %v462 = vunpack.c.h.b16 %v91
  %v463 = vunpack.c.l.b16 %v92
  %v464 = vunpack.c.l.b16 %v93
  %v465 = vunpack.c.h.b16 %v93
  %v466 = vunpack.c.l.b16 %v94
  %v467 = vunpack.c.h.b16 %v94
  %v468 = vunpack.c.l.b16 %v95
  %v469 = vunpack.c.h.b16 %v95
  %v470 = vunpack.c.l.b16 %v96
  %v471 = vunpack.c.h.b16 %v96
  %v472 = vunpack.c.l.b16 %v97
  %v473 = vpack.c.b16 %v338, %v329
  %v474 = vpack.c.b16 %v339, %v330
  %v475 = vpack.c.b16 %v340, %v331
  %v476 = vpack.c.b16 %v341, %v332
  %v477 = vpack.c.b16 %v342, %v333
  %v478 = vpack.c.b16 %v343, %v334
  %v479 = vpack.c.b16 %v344, %v335
  %v480 = vpack.c.b16 %v345, %v336
  %v481 = vpack.c.b16 %v346, %v337
  %v482 = vpack.c.b16 %v356, %v347
  %v483 = vpack.c.b16 %v357, %v348
  %v484 = vpack.c.b16 %v358, %v349
  %v485 = vpack.c.b16 %v359, %v350
  %v486 = vpack.c.b16 %v360, %v351
  %v487 = vpack.c.b16 %v361, %v352
  %v488 = vpack.c.b16 %v362, %v353
  %v489 = vpack.c.b16 %v363, %v354
  %v490 = vpack.c.b16 %v364, %v355
  %v491 = vpack.c.b16 %v374, %v365
  %v492 = vpack.c.b16 %v375, %v366
  %v493 = vpack.c.b16 %v376, %v367
  %v494 = vpack.c.b16 %v377, %v368
  %v495 = vpack.c.b16 %v378, %v369
  %v496 = vpack.c.b16 %v379, %v370
  %v497 = vpack.c.b16 %v380, %v371
  %v498 = vpack.c.b16 %v381, %v372
  %v499 = vpack.c.b16 %v382, %v373
  %v500 = vpack.c.b16 %v392, %v383
  %v501 = vpack.c.b16 %v393, %v384
  %v502 = vpack.c.b16 %v394, %v385
  %v503 = vpack.c.b16 %v395, %v386
  %v504 = vpack.c.b16 %v396, %v387
  %v505 = vpack.c.b16 %v397, %v388
  %v506 = vpack.c.b16 %v398, %v389
  %v507 = vpack.c.b16 %v399, %v390
  %v508 = vpack.c.b16 %v400, %v391
  %v509 = vpack.c.b16 %v410, %v401
  %v510 = vpack.c.b16 %v411, %v402
  %v511 = vpack.c.b16 %v412, %v403
  %v512 = vpack.c.b16 %v413, %v404
  %v513 = vpack.c.b16 %v414, %v405
  %v514 = vpack.c.b16 %v415, %v406
  %v515 = vpack.c.b16 %v416, %v407
  %v516 = vpack.c.b16 %v417, %v408
  %v517 = vpack.c.b16 %v418, %v409
  %v518 = vpack.c.b16 %v428, %v419
  %v519 = vpack.c.b16 %v429, %v420
  %v520 = vpack.c.b16 %v430, %v421
  %v521 = vpack.c.b16 %v431, %v422
  %v522 = vpack.c.b16 %v432, %v423
  %v523 = vpack.c.b16 %v433, %v424
  %v524 = vpack.c.b16 %v434, %v425
  %v525 = vpack.c.b16 %v435, %v426
  %v526 = vpack.c.b16 %v436, %v427
  %v527 = vpack.c.b16 %v446, %v437
  %v528 = vpack.c.b16 %v447, %v438
  %v529 = vpack.c.b16 %v448, %v439
  %v530 = vpack.c.b16 %v449, %v440
  %v531 = vpack.c.b16 %v450, %v441
  %v532 = vpack.c.b16 %v451, %v442
  %v533 = vpack.c.b16 %v452, %v443
  %v534 = vpack.c.b16 %v453, %v444
  %v535 = vpack.c.b16 %v454, %v445
  %v536 = vpack.c.b16 %v464, %v455
  %v537 = vpack.c.b16 %v465, %v456
  %v538 = vpack.c.b16 %v466, %v457
  %v539 = vpack.c.b16 %v467, %v458
  %v540 = vpack.c.b16 %v468, %v459
  %v541 = vpack.c.b16 %v469, %v460
  %v542 = vpack.c.b16 %v470, %v461
  %v543 = vpack.c.b16 %v471, %v462
  %v544 = vpack.c.b16 %v472, %v463
  %v761 = vunpack.c.l.b16 %v98
  %v762 = vunpack.c.l.b16 %v99
  %v763 = vunpack.c.l.b16 %v100
  %v764 = vunpack.c.l.b16 %v101
  %v765 = vunpack.c.l.b16 %v102
  %v766 = vunpack.c.l.b16 %v103
  %v767 = vunpack.c.l.b16 %v104
  %v768 = vunpack.c.l.b16 %v105
  %v769 = vunpack.c.l.b16 %v106
  %v770 = vunpack.c.l.b16 %v107
  %v771 = vunpack.c.l.b16 %v108
  %v772 = vunpack.c.l.b16 %v109
  %v773 = vunpack.c.l.b16 %v110
  %v774 = vunpack.c.l.b16 %v111
  %v775 = vunpack.c.l.b16 %v112
  %v776 = vunpack.c.l.b16 %v113
  %v777 = vunpack.c.l.b16 %v114
  %v778 = vunpack.c.l.b16 %v115
  %v779 = vunpack.c.l.b16 %v116
  %v780 = vunpack.c.l.b16 %v117
  %v781 = vunpack.c.l.b16 %v118
  %v782 = vunpack.c.l.b16 %v119
  %v783 = vunpack.c.l.b16 %v120
  %v784 = vunpack.c.l.b16 %v121
  %v785 = vunpack.c.l.b16 %v122
  %v786 = vunpack.c.l.b16 %v123
  %v787 = vunpack.c.l.b16 %v124
  %v788 = vunpack.c.l.b16 %v125
  %v789 = vunpack.c.l.b16 %v126
  %v790 = vunpack.c.l.b16 %v127
  %v791 = vunpack.c.l.b16 %v128
  %v792 = vunpack.c.l.b16 %v129
  %v793 = vunpack.c.l.b16 %v130
  %v794 = vunpack.c.l.b16 %v131
  %v795 = vunpack.c.l.b16 %v132
  %v796 = vunpack.c.l.b16 %v133
  %v797 = vunpack.c.l.b16 %v134
  %v798 = vunpack.c.l.b16 %v135
  %v799 = vunpack.c.l.b16 %v136
  %v800 = vunpack.c.l.b16 %v137
  %v801 = vunpack.c.l.b16 %v138
  %v802 = vunpack.c.l.b16 %v139
  %v803 = vunpack.c.l.b16 %v140
  %v804 = vunpack.c.l.b16 %v141
  %v805 = vunpack.c.l.b16 %v142
  %v806 = vunpack.c.l.b16 %v143
  %v807 = vunpack.c.l.b16 %v144
  %v808 = vunpack.c.l.b16 %v145
  %v809 = vunpack.c.l.b16 %v146
  %v810 = vunpack.c.l.b16 %v147
  %v811 = vunpack.c.l.b16 %v148
  %v812 = vunpack.c.l.b16 %v149
  %v813 = vunpack.c.l.b16 %v150
  %v814 = vunpack.c.l.b16 %v151
  %v815 = vunpack.c.l.b16 %v152
  %v816 = vunpack.c.l.b16 %v153
  %v817 = vunpack.c.l.b16 %v154
  %v818 = vunpack.c.l.b16 %v155
  %v819 = vunpack.c.l.b16 %v156
  %v820 = vunpack.c.l.b16 %v157
  %v821 = vunpack.c.l.b16 %v158
  %v822 = vunpack.c.l.b16 %v159
  %v823 = vunpack.c.l.b16 %v160
  %v824 = vunpack.c.l.b16 %v161
  %v825 = vunpack.c.l.b16 %v162
  %v826 = vunpack.c.l.b16 %v163
  %v827 = vunpack.c.l.b16 %v164
  %v828 = vunpack.c.l.b16 %v165
  %v829 = vunpack.c.l.b16 %v166
  %v830 = vunpack.c.l.b16 %v167
  %v831 = vunpack.c.l.b16 %v168
  %v832 = vunpack.c.l.b16 %v169
  %v833 = vunpack.c.l.b16 %v170
  %v834 = vunpack.c.l.b16 %v171
  %v835 = vunpack.c.l.b16 %v172
  %v836 = vunpack.c.l.b16 %v173
  %v837 = vunpack.c.l.b16 %v174
  %v838 = vunpack.c.l.b16 %v175
  %v839 = vunpack.c.l.b16 %v176
  %v840 = vunpack.c.l.b16 %v177
  %v841 = vunpack.c.l.b16 %v178
  %v842 = vunpack.c.l.b16 %v179
  %v843 = vunpack.c.l.b16 %v180
  %v844 = vunpack.c.l.b16 %v181
  %v845 = vunpack.c.l.b16 %v182
  %v846 = vunpack.c.l.b16 %v183
  %v847 = vunpack.c.l.b16 %v184
  %v848 = vunpack.c.l.b16 %v185
  %v849 = vunpack.c.l.b16 %v186
  %v850 = vunpack.c.l.b16 %v187
  %v851 = vunpack.c.l.b16 %v188
  %v852 = vunpack.c.l.b16 %v189
  %v853 = vunpack.c.l.b16 %v190
  %v854 = vunpack.c.l.b16 %v191
  %v855 = vunpack.c.l.b16 %v192
  %v856 = vunpack.c.l.b16 %v193
  %v857 = vunpack.c.l.b16 %v194
  %v858 = vunpack.c.l.b16 %v195
  %v859 = vunpack.c.l.b16 %v196
  %v860 = vunpack.c.l.b16 %v197
  %v861 = vunpack.c.l.b16 %v198
  %v862 = vunpack.c.l.b16 %v199
  %v863 = vunpack.c.l.b16 %v200
  %v864 = vunpack.c.l.b16 %v201
  %v865 = vunpack.c.l.b16 %v202
  %v866 = vunpack.c.l.b16 %v203
  %v867 = vunpack.c.l.b16 %v204
  %v868 = vunpack.c.l.b16 %v205
  %v869 = vunpack.c.l.b16 %v206
  %v870 = vunpack.c.l.b16 %v207
  %v871 = vunpack.c.l.b16 %v208
  %v872 = vunpack.c.l.b16 %v209
  %v873 = vunpack.c.l.b16 %v210
  %v874 = vunpack.c.l.b16 %v211
  %v875 = vunpack.c.l.b16 %v212
  %v876 = vunpack.c.l.b16 %v213
  %v877 = vunpack.c.l.b16 %v214
  %v878 = vunpack.c.l.b16 %v215
  %v879 = vunpack.c.l.b16 %v216
  %v880 = vunpack.c.l.b16 %v217
  %v881 = vunpack.c.l.b16 %v218
  %v882 = vunpack.c.l.b16 %v219
  %v883 = vunpack.c.l.b16 %v220
  %v884 = vunpack.c.l.b16 %v221
  %v885 = vunpack.c.l.b16 %v222
  %v886 = vunpack.c.l.b16 %v223
  %v887 = vunpack.c.l.b16 %v224
  %v888 = vunpack.c.l.b16 %v225
  %v889 = vunpack.c.l.b16 %v226
  %v890 = vunpack.c.l.b16 %v227
  %v891 = vunpack.c.l.b16 %v228
  %v892 = vunpack.c.l.b16 %v229
  %v893 = vunpack.c.l.b16 %v230
  %v894 = vunpack.c.l.b16 %v231
  %v895 = vunpack.c.l.b16 %v232
  %v896 = vunpack.c.l.b16 %v233
  %v897 = vunpack.c.l.b16 %v234
  %v898 = vunpack.c.l.b16 %v235
  %v899 = vunpack.c.l.b16 %v236
  %v900 = vunpack.c.l.b16 %v237
  %v901 = vunpack.c.l.b16 %v238
  %v902 = vunpack.c.l.b16 %v239
  %v903 = vunpack.c.l.b16 %v240
  %v904 = vunpack.c.l.b16 %v241
  %v905 = vpack.c.b16 %v762, %v761
  %v906 = vpack.c.b16 %v764, %v763
  %v907 = vpack.c.b16 %v766, %v765
  %v908 = vpack.c.b16 %v768, %v767
  %v909 = vpack.c.b16 %v770, %v769
  %v910 = vpack.c.b16 %v772, %v771
  %v911 = vpack.c.b16 %v774, %v773
  %v912 = vpack.c.b16 %v776, %v775
  %v913 = vpack.c.b16 %v778, %v777
  %v914 = vpack.c.b16 %v780, %v779
  %v915 = vpack.c.b16 %v782, %v781
  %v916 = vpack.c.b16 %v784, %v783
  %v917 = vpack.c.b16 %v786, %v785
  %v918 = vpack.c.b16 %v788, %v787
  %v919 = vpack.c.b16 %v790, %v789
  %v920 = vpack.c.b16 %v792, %v791
  %v921 = vpack.c.b16 %v794, %v793
  %v922 = vpack.c.b16 %v796, %v795
  %v923 = vpack.c.b16 %v798, %v797
  %v924 = vpack.c.b16 %v800, %v799
  %v925 = vpack.c.b16 %v802, %v801
  %v926 = vpack.c.b16 %v804, %v803
  %v927 = vpack.c.b16 %v806, %v805
  %v928 = vpack.c.b16 %v808, %v807
  %v929 = vpack.c.b16 %v810, %v809
  %v930 = vpack.c.b16 %v812, %v811
  %v931 = vpack.c.b16 %v814, %v813
  %v932 = vpack.c.b16 %v816, %v815
  %v933 = vpack.c.b16 %v818, %v817
  %v934 = vpack.c.b16 %v820, %v819
  %v935 = vpack.c.b16 %v822, %v821
  %v936 = vpack.c.b16 %v824, %v823
  %v937 = vpack.c.b16 %v826, %v825
  %v938 = vpack.c.b16 %v828, %v827
  %v939 = vpack.c.b16 %v830, %v829
  %v940 = vpack.c.b16 %v832, %v831
  %v941 = vpack.c.b16 %v834, %v833
  %v942 = vpack.c.b16 %v836, %v835
  %v943 = vpack.c.b16 %v838, %v837
  %v944 = vpack.c.b16 %v840, %v839
  %v945 = vpack.c.b16 %v842, %v841
  %v946 = vpack.c.b16 %v844, %v843
  %v947 = vpack.c.b16 %v846, %v845
  %v948 = vpack.c.b16 %v848, %v847
  %v949 = vpack.c.b16 %v850, %v849
  %v950 = vpack.c.b16 %v852, %v851
  %v951 = vpack.c.b16 %v854, %v853
  %v952 = vpack.c.b16 %v856, %v855
  %v953 = vpack.c.b16 %v858, %v857
  %v954 = vpack.c.b16 %v860, %v859
  %v955 = vpack.c.b16 %v862, %v861
  %v956 = vpack.c.b16 %v864, %v863
  %v957 = vpack.c.b16 %v866, %v865
  %v958 = vpack.c.b16 %v868, %v867
  %v959 = vpack.c.b16 %v870, %v869
  %v960 = vpack.c.b16 %v872, %v871
  %v961 = vpack.c.b16 %v874, %v873
  %v962 = vpack.c.b16 %v876, %v875
  %v963 = vpack.c.b16 %v878, %v877
  %v964 = vpack.c.b16 %v880, %v879
  %v965 = vpack.c.b16 %v882, %v881
  %v966 = vpack.c.b16 %v884, %v883
  %v967 = vpack.c.b16 %v886, %v885
  %v968 = vpack.c.b16 %v888, %v887
  %v969 = vpack.c.b16 %v890, %v889
  %v970 = vpack.c.b16 %v892, %v891
  %v971 = vpack.c.b16 %v894, %v893
  %v972 = vpack.c.b16 %v896, %v895
  %v973 = vpack.c.b16 %v898, %v897
  %v974 = vpack.c.b16 %v900, %v899
  %v975 = vpack.c.b16 %v902, %v901
  %v976 = vpack.c.b16 %v904, %v903
  %1049 = vmatprep.subr.bf16.mxu0 0
  %1050 = vmatpush1.bf16.msra.mxu0 %v905
  %1051 = vmatprep.subr.bf16.mxu0 0
  %1052 = vmatpush1.bf16.msra.mxu0 %v906
  %1053 = vmatprep.subr.bf16.mxu0 0
  %1054 = vmatpush1.bf16.msra.mxu0 %v907
  %1055 = vmatprep.subr.bf16.mxu0 0
  %1056 = vmatpush1.bf16.msra.mxu0 %v908
  %1057 = vmatprep.subr.bf16.mxu0 0
  %1058 = vmatpush1.bf16.msra.mxu0 %v909
  %1059 = vmatprep.subr.bf16.mxu0 0
  %1060 = vmatpush1.bf16.msra.mxu0 %v910
  %1061 = vmatprep.subr.bf16.mxu0 0
  %1062 = vmatpush1.bf16.msra.mxu0 %v911
  %1063 = vmatprep.subr.bf16.mxu0 0
  %1064 = vmatpush1.bf16.msra.mxu0 %v912
  %1065 = vmatprep.subr.bf16.mxu0 0
  %1066 = vmatpush1.bf16.msra.mxu0 %v913
  %1067 = vmatprep.subr.bf16.mxu0 0
  %1068 = vmatpush1.bf16.msra.mxu0 %v914
  %1069 = vmatprep.subr.bf16.mxu0 0
  %1070 = vmatpush1.bf16.msra.mxu0 %v915
  %1071 = vmatprep.subr.bf16.mxu0 0
  %1072 = vmatpush1.bf16.msra.mxu0 %v916
  %1073 = vmatprep.subr.bf16.mxu0 0
  %1074 = vmatpush1.bf16.msra.mxu0 %v917
  %1075 = vmatprep.subr.bf16.mxu0 0
  %1076 = vmatpush1.bf16.msra.mxu0 %v918
  %1077 = vmatprep.subr.bf16.mxu0 0
  %1078 = vmatpush1.bf16.msra.mxu0 %v919
  %1079 = vmatprep.subr.bf16.mxu0 0
  %1080 = vmatpush1.bf16.msra.mxu0 %v920
  %1081 = vmatprep.mubr.bf16.mxu0 %v474
  %1082 = vmatmul.mubr.bf16.gmra.mrb[0].mxu0 %v473
  %v1083 = vpop.f32.mrb[0].mxu0
  %v1084 = vadd.f32 %v247, %v1083
  %v1085 = vpop.f32.mrb[0].mxu0
  %v1086 = vpop.f32.mrb[0].mxu0
  %v1087 = vadd.f32 %v247, %v1086
  %v1088 = vpop.f32.mrb[0].mxu0
  %1089 = vmatprep.mubr.bf16.mxu0 %v483
  %1090 = vmatmul.mubr.bf16.gmra.mrb[0].mxu0 %v482
  %v1091 = vpop.f32.mrb[0].mxu0
  %v1092 = vadd.f32 %v247, %v1091
  %v1093 = vpop.f32.mrb[0].mxu0
  %v1094 = vpop.f32.mrb[0].mxu0
  %v1095 = vadd.f32 %v247, %v1094
  %v1096 = vpop.f32.mrb[0].mxu0
  %1097 = vmatprep.mubr.bf16.mxu0 %v492
  %1098 = vmatmul.mubr.bf16.gmra.mrb[0].mxu0 %v491
  %v1099 = vpop.f32.mrb[0].mxu0
  %v1100 = vadd.f32 %v247, %v1099
  %v1101 = vpop.f32.mrb[0].mxu0
  %v1102 = vpop.f32.mrb[0].mxu0
  %v1103 = vadd.f32 %v247, %v1102
  %v1104 = vpop.f32.mrb[0].mxu0
  %1105 = vmatprep.mubr.bf16.mxu0 %v501
  %1106 = vmatmul.mubr.bf16.gmra.mrb[0].mxu0 %v500
  %v1107 = vpop.f32.mrb[0].mxu0
  %v1108 = vadd.f32 %v247, %v1107
  %v1109 = vpop.f32.mrb[0].mxu0
  %v1110 = vpop.f32.mrb[0].mxu0
  %v1111 = vadd.f32 %v247, %v1110
  %v1112 = vpop.f32.mrb[0].mxu0
  %1113 = vmatprep.mubr.bf16.mxu0 %v510
  %1114 = vmatmul.mubr.bf16.gmra.mrb[0].mxu0 %v509
  %v1115 = vpop.f32.mrb[0].mxu0
  %v1116 = vadd.f32 %v247, %v1115
  %v1117 = vpop.f32.mrb[0].mxu0
  %v1118 = vpop.f32.mrb[0].mxu0
  %v1119 = vadd.f32 %v247, %v1118
  %v1120 = vpop.f32.mrb[0].mxu0
  %1121 = vmatprep.mubr.bf16.mxu0 %v519
  %1122 = vmatmul.mubr.bf16.gmra.mrb[0].mxu0 %v518
  %v1123 = vpop.f32.mrb[0].mxu0
  %v1124 = vadd.f32 %v247, %v1123
  %v1125 = vpop.f32.mrb[0].mxu0
  %v1126 = vpop.f32.mrb[0].mxu0
  %v1127 = vadd.f32 %v247, %v1126
  %v1128 = vpop.f32.mrb[0].mxu0
  %1129 = vmatprep.mubr.bf16.mxu0 %v528
  %1130 = vmatmul.mubr.bf16.gmra.mrb[0].mxu0 %v527
  %v1131 = vpop.f32.mrb[0].mxu0
  %v1132 = vadd.f32 %v247, %v1131
  %v1133 = vpop.f32.mrb[0].mxu0
  %v1134 = vpop.f32.mrb[0].mxu0
  %v1135 = vadd.f32 %v247, %v1134
  %v1136 = vpop.f32.mrb[0].mxu0
  %1137 = vmatprep.mubr.bf16.mxu0 %v537
  %1138 = vmatmul.mubr.bf16.gmra.mrb[0].mxu0 %v536
  %v1139 = vpop.f32.mrb[0].mxu0
  %v1140 = vadd.f32 %v247, %v1139
  %v1141 = vpop.f32.mrb[0].mxu0
  %v1142 = vpop.f32.mrb[0].mxu0
  %v1143 = vadd.f32 %v247, %v1142
  %v1144 = vpop.f32.mrb[0].mxu0
  %1145 = vdwg.mxu0
  %1146 = vmatprep.subr.bf16.mxu0 0
  %1147 = vmatpush1.bf16.msra.mxu0 %v921
  %1148 = vmatprep.subr.bf16.mxu0 0
  %1149 = vmatpush1.bf16.msra.mxu0 %v922
  %1150 = vmatprep.subr.bf16.mxu0 0
  %1151 = vmatpush1.bf16.msra.mxu0 %v923
  %1152 = vmatprep.subr.bf16.mxu0 0
  %1153 = vmatpush1.bf16.msra.mxu0 %v924
  %1154 = vmatprep.subr.bf16.mxu0 0
  %1155 = vmatpush1.bf16.msra.mxu0 %v925
  %1156 = vmatprep.subr.bf16.mxu0 0
  %1157 = vmatpush1.bf16.msra.mxu0 %v926
  %1158 = vmatprep.subr.bf16.mxu0 0
  %1159 = vmatpush1.bf16.msra.mxu0 %v927
  %1160 = vmatprep.subr.bf16.mxu0 0
  %1161 = vmatpush1.bf16.msra.mxu0 %v928
  %1162 = vmatprep.subr.bf16.mxu0 0
  %1163 = vmatpush1.bf16.msra.mxu0 %v929
  %1164 = vmatprep.subr.bf16.mxu0 0
  %1165 = vmatpush1.bf16.msra.mxu0 %v930
  %1166 = vmatprep.subr.bf16.mxu0 0
  %1167 = vmatpush1.bf16.msra.mxu0 %v931
  %1168 = vmatprep.subr.bf16.mxu0 0
  %1169 = vmatpush1.bf16.msra.mxu0 %v932
  %1170 = vmatprep.subr.bf16.mxu0 0
  %1171 = vmatpush1.bf16.msra.mxu0 %v933
  %1172 = vmatprep.subr.bf16.mxu0 0
  %1173 = vmatpush1.bf16.msra.mxu0 %v934
  %1174 = vmatprep.subr.bf16.mxu0 0
  %1175 = vmatpush1.bf16.msra.mxu0 %v935
  %1176 = vmatprep.subr.bf16.mxu0 0
  %1177 = vmatpush1.bf16.msra.mxu0 %v936
  %1178 = vmatprep.mubr.bf16.mxu0 %v476
  %1179 = vmatmul.mubr.bf16.gmra.mrb[0].mxu0 %v475
  %v1180 = vpop.f32.mrb[0].mxu0
  %v1181 = vadd.f32 %v1084, %v1180
  %v1182 = vpop.f32.mrb[0].mxu0
  %v1183 = vpop.f32.mrb[0].mxu0
  %v1184 = vadd.f32 %v1087, %v1183
  %v1185 = vpop.f32.mrb[0].mxu0
  %1186 = vmatprep.mubr.bf16.mxu0 %v485
  %1187 = vmatmul.mubr.bf16.gmra.mrb[0].mxu0 %v484
  %v1188 = vpop.f32.mrb[0].mxu0
  %v1189 = vadd.f32 %v1092, %v1188
  %v1190 = vpop.f32.mrb[0].mxu0
  %v1191 = vpop.f32.mrb[0].mxu0
  %v1192 = vadd.f32 %v1095, %v1191
  %v1193 = vpop.f32.mrb[0].mxu0
  %1194 = vmatprep.mubr.bf16.mxu0 %v494
  %1195 = vmatmul.mubr.bf16.gmra.mrb[0].mxu0 %v493
  %v1196 = vpop.f32.mrb[0].mxu0
  %v1197 = vadd.f32 %v1100, %v1196
  %v1198 = vpop.f32.mrb[0].mxu0
  %v1199 = vpop.f32.mrb[0].mxu0
  %v1200 = vadd.f32 %v1103, %v1199
  %v1201 = vpop.f32.mrb[0].mxu0
  %1202 = vmatprep.mubr.bf16.mxu0 %v503
  %1203 = vmatmul.mubr.bf16.gmra.mrb[0].mxu0 %v502
  %v1204 = vpop.f32.mrb[0].mxu0
  %v1205 = vadd.f32 %v1108, %v1204
  %v1206 = vpop.f32.mrb[0].mxu0
  %v1207 = vpop.f32.mrb[0].mxu0
  %v1208 = vadd.f32 %v1111, %v1207
  %v1209 = vpop.f32.mrb[0].mxu0
  %1210 = vmatprep.mubr.bf16.mxu0 %v512
  %1211 = vmatmul.mubr.bf16.gmra.mrb[0].mxu0 %v511
  %v1212 = vpop.f32.mrb[0].mxu0
  %v1213 = vadd.f32 %v1116, %v1212
  %v1214 = vpop.f32.mrb[0].mxu0
  %v1215 = vpop.f32.mrb[0].mxu0
  %v1216 = vadd.f32 %v1119, %v1215
  %v1217 = vpop.f32.mrb[0].mxu0
  %1218 = vmatprep.mubr.bf16.mxu0 %v521
  %1219 = vmatmul.mubr.bf16.gmra.mrb[0].mxu0 %v520
  %v1220 = vpop.f32.mrb[0].mxu0
  %v1221 = vadd.f32 %v1124, %v1220
  %v1222 = vpop.f32.mrb[0].mxu0
  %v1223 = vpop.f32.mrb[0].mxu0
  %v1224 = vadd.f32 %v1127, %v1223
  %v1225 = vpop.f32.mrb[0].mxu0
  %1226 = vmatprep.mubr.bf16.mxu0 %v530
  %1227 = vmatmul.mubr.bf16.gmra.mrb[0].mxu0 %v529
  %v1228 = vpop.f32.mrb[0].mxu0
  %v1229 = vadd.f32 %v1132, %v1228
  %v1230 = vpop.f32.mrb[0].mxu0
  %v1231 = vpop.f32.mrb[0].mxu0
  %v1232 = vadd.f32 %v1135, %v1231
  %v1233 = vpop.f32.mrb[0].mxu0
  %1234 = vmatprep.mubr.bf16.mxu0 %v539
  %1235 = vmatmul.mubr.bf16.gmra.mrb[0].mxu0 %v538
  %v1236 = vpop.f32.mrb[0].mxu0
  %v1237 = vadd.f32 %v1140, %v1236
  %v1238 = vpop.f32.mrb[0].mxu0
  %v1239 = vpop.f32.mrb[0].mxu0
  %v1240 = vadd.f32 %v1143, %v1239
  %v1241 = vpop.f32.mrb[0].mxu0
  %1242 = vdwg.mxu0
  %1243 = vmatprep.subr.bf16.mxu0 0
  %1244 = vmatpush1.bf16.msra.mxu0 %v937
  %1245 = vmatprep.subr.bf16.mxu0 0
  %1246 = vmatpush1.bf16.msra.mxu0 %v938
  %1247 = vmatprep.subr.bf16.mxu0 0
  %1248 = vmatpush1.bf16.msra.mxu0 %v939
  %1249 = vmatprep.subr.bf16.mxu0 0
  %1250 = vmatpush1.bf16.msra.mxu0 %v940
  %1251 = vmatprep.subr.bf16.mxu0 0
  %1252 = vmatpush1.bf16.msra.mxu0 %v941
  %1253 = vmatprep.subr.bf16.mxu0 0
  %1254 = vmatpush1.bf16.msra.mxu0 %v942
  %1255 = vmatprep.subr.bf16.mxu0 0
  %1256 = vmatpush1.bf16.msra.mxu0 %v943
  %1257 = vmatprep.subr.bf16.mxu0 0
  %1258 = vmatpush1.bf16.msra.mxu0 %v944
  %1259 = vmatprep.subr.bf16.mxu0 0
  %1260 = vmatpush1.bf16.msra.mxu0 %v945
  %1261 = vmatprep.subr.bf16.mxu0 0
  %1262 = vmatpush1.bf16.msra.mxu0 %v946
  %1263 = vmatprep.subr.bf16.mxu0 0
  %1264 = vmatpush1.bf16.msra.mxu0 %v947
  %1265 = vmatprep.subr.bf16.mxu0 0
  %1266 = vmatpush1.bf16.msra.mxu0 %v948
  %1267 = vmatprep.subr.bf16.mxu0 0
  %1268 = vmatpush1.bf16.msra.mxu0 %v949
  %1269 = vmatprep.subr.bf16.mxu0 0
  %1270 = vmatpush1.bf16.msra.mxu0 %v950
  %1271 = vmatprep.subr.bf16.mxu0 0
  %1272 = vmatpush1.bf16.msra.mxu0 %v951
  %1273 = vmatprep.subr.bf16.mxu0 0
  %1274 = vmatpush1.bf16.msra.mxu0 %v952
  %1275 = vmatprep.mubr.bf16.mxu0 %v478
  %1276 = vmatmul.mubr.bf16.gmra.mrb[0].mxu0 %v477
  %v1277 = vpop.f32.mrb[0].mxu0
  %v1278 = vadd.f32 %v1181, %v1277
  %v1279 = vpop.f32.mrb[0].mxu0
  %v1280 = vpop.f32.mrb[0].mxu0
  %v1281 = vadd.f32 %v1184, %v1280
  %v1282 = vpop.f32.mrb[0].mxu0
  %1283 = vmatprep.mubr.bf16.mxu0 %v487
  %1284 = vmatmul.mubr.bf16.gmra.mrb[0].mxu0 %v486
  %v1285 = vpop.f32.mrb[0].mxu0
  %v1286 = vadd.f32 %v1189, %v1285
  %v1287 = vpop.f32.mrb[0].mxu0
  %v1288 = vpop.f32.mrb[0].mxu0
  %v1289 = vadd.f32 %v1192, %v1288
  %v1290 = vpop.f32.mrb[0].mxu0
  %1291 = vmatprep.mubr.bf16.mxu0 %v496
  %1292 = vmatmul.mubr.bf16.gmra.mrb[0].mxu0 %v495
  %v1293 = vpop.f32.mrb[0].mxu0
  %v1294 = vadd.f32 %v1197, %v1293
  %v1295 = vpop.f32.mrb[0].mxu0
  %v1296 = vpop.f32.mrb[0].mxu0
  %v1297 = vadd.f32 %v1200, %v1296
  %v1298 = vpop.f32.mrb[0].mxu0
  %1299 = vmatprep.mubr.bf16.mxu0 %v505
  %1300 = vmatmul.mubr.bf16.gmra.mrb[0].mxu0 %v504
  %v1301 = vpop.f32.mrb[0].mxu0
  %v1302 = vadd.f32 %v1205, %v1301
  %v1303 = vpop.f32.mrb[0].mxu0
  %v1304 = vpop.f32.mrb[0].mxu0
  %v1305 = vadd.f32 %v1208, %v1304
  %v1306 = vpop.f32.mrb[0].mxu0
  %1307 = vmatprep.mubr.bf16.mxu0 %v514
  %1308 = vmatmul.mubr.bf16.gmra.mrb[0].mxu0 %v513
  %v1309 = vpop.f32.mrb[0].mxu0
  %v1310 = vadd.f32 %v1213, %v1309
  %v1311 = vpop.f32.mrb[0].mxu0
  %v1312 = vpop.f32.mrb[0].mxu0
  %v1313 = vadd.f32 %v1216, %v1312
  %v1314 = vpop.f32.mrb[0].mxu0
  %1315 = vmatprep.mubr.bf16.mxu0 %v523
  %1316 = vmatmul.mubr.bf16.gmra.mrb[0].mxu0 %v522
  %v1317 = vpop.f32.mrb[0].mxu0
  %v1318 = vadd.f32 %v1221, %v1317
  %v1319 = vpop.f32.mrb[0].mxu0
  %v1320 = vpop.f32.mrb[0].mxu0
  %v1321 = vadd.f32 %v1224, %v1320
  %v1322 = vpop.f32.mrb[0].mxu0
  %1323 = vmatprep.mubr.bf16.mxu0 %v532
  %1324 = vmatmul.mubr.bf16.gmra.mrb[0].mxu0 %v531
  %v1325 = vpop.f32.mrb[0].mxu0
  %v1326 = vadd.f32 %v1229, %v1325
  %v1327 = vpop.f32.mrb[0].mxu0
  %v1328 = vpop.f32.mrb[0].mxu0
  %v1329 = vadd.f32 %v1232, %v1328
  %v1330 = vpop.f32.mrb[0].mxu0
  %1331 = vmatprep.mubr.bf16.mxu0 %v541
  %1332 = vmatmul.mubr.bf16.gmra.mrb[0].mxu0 %v540
  %v1333 = vpop.f32.mrb[0].mxu0
  %v1334 = vadd.f32 %v1237, %v1333
  %v1335 = vpop.f32.mrb[0].mxu0
  %v1336 = vpop.f32.mrb[0].mxu0
  %v1337 = vadd.f32 %v1240, %v1336
  %v1338 = vpop.f32.mrb[0].mxu0
  %1339 = vdwg.mxu0
  %1340 = vmatprep.subr.bf16.mxu0 0
  %1341 = vmatpush1.bf16.msra.mxu0 %v953
  %1342 = vmatprep.subr.bf16.mxu0 0
  %1343 = vmatpush1.bf16.msra.mxu0 %v954
  %1344 = vmatprep.subr.bf16.mxu0 0
  %1345 = vmatpush1.bf16.msra.mxu0 %v955
  %1346 = vmatprep.subr.bf16.mxu0 0
  %1347 = vmatpush1.bf16.msra.mxu0 %v956
  %1348 = vmatprep.subr.bf16.mxu0 0
  %1349 = vmatpush1.bf16.msra.mxu0 %v957
  %1350 = vmatprep.subr.bf16.mxu0 0
  %1351 = vmatpush1.bf16.msra.mxu0 %v958
  %1352 = vmatprep.subr.bf16.mxu0 0
  %1353 = vmatpush1.bf16.msra.mxu0 %v959
  %1354 = vmatprep.subr.bf16.mxu0 0
  %1355 = vmatpush1.bf16.msra.mxu0 %v960
  %1356 = vmatprep.subr.bf16.mxu0 0
  %1357 = vmatpush1.bf16.msra.mxu0 %v961
  %1358 = vmatprep.subr.bf16.mxu0 0
  %1359 = vmatpush1.bf16.msra.mxu0 %v962
  %1360 = vmatprep.subr.bf16.mxu0 0
  %1361 = vmatpush1.bf16.msra.mxu0 %v963
  %1362 = vmatprep.subr.bf16.mxu0 0
  %1363 = vmatpush1.bf16.msra.mxu0 %v964
  %1364 = vmatprep.subr.bf16.mxu0 0
  %1365 = vmatpush1.bf16.msra.mxu0 %v965
  %1366 = vmatprep.subr.bf16.mxu0 0
  %1367 = vmatpush1.bf16.msra.mxu0 %v966
  %1368 = vmatprep.subr.bf16.mxu0 0
  %1369 = vmatpush1.bf16.msra.mxu0 %v967
  %1370 = vmatprep.subr.bf16.mxu0 0
  %1371 = vmatpush1.bf16.msra.mxu0 %v968
  %1372 = vmatprep.mubr.bf16.mxu0 %v480
  %1373 = vmatmul.mubr.bf16.gmra.mrb[0].mxu0 %v479
  %v1374 = vpop.f32.mrb[0].mxu0
  %v1375 = vadd.f32 %v1278, %v1374
  %v1376 = vpop.f32.mrb[0].mxu0
  %v1377 = vpop.f32.mrb[0].mxu0
  %v1378 = vadd.f32 %v1281, %v1377
  %v1379 = vpop.f32.mrb[0].mxu0
  %1380 = vmatprep.mubr.bf16.mxu0 %v489
  %1381 = vmatmul.mubr.bf16.gmra.mrb[0].mxu0 %v488
  %v1382 = vpop.f32.mrb[0].mxu0
  %v1383 = vadd.f32 %v1286, %v1382
  %v1384 = vpop.f32.mrb[0].mxu0
  %v1385 = vpop.f32.mrb[0].mxu0
  %v1386 = vadd.f32 %v1289, %v1385
  %v1387 = vpop.f32.mrb[0].mxu0
  %1388 = vmatprep.mubr.bf16.mxu0 %v498
  %1389 = vmatmul.mubr.bf16.gmra.mrb[0].mxu0 %v497
  %v1390 = vpop.f32.mrb[0].mxu0
  %v1391 = vadd.f32 %v1294, %v1390
  %v1392 = vpop.f32.mrb[0].mxu0
  %v1393 = vpop.f32.mrb[0].mxu0
  %v1394 = vadd.f32 %v1297, %v1393
  %v1395 = vpop.f32.mrb[0].mxu0
  %1396 = vmatprep.mubr.bf16.mxu0 %v507
  %1397 = vmatmul.mubr.bf16.gmra.mrb[0].mxu0 %v506
  %v1398 = vpop.f32.mrb[0].mxu0
  %v1399 = vadd.f32 %v1302, %v1398
  %v1400 = vpop.f32.mrb[0].mxu0
  %v1401 = vpop.f32.mrb[0].mxu0
  %v1402 = vadd.f32 %v1305, %v1401
  %v1403 = vpop.f32.mrb[0].mxu0
  %1404 = vmatprep.mubr.bf16.mxu0 %v516
  %1405 = vmatmul.mubr.bf16.gmra.mrb[0].mxu0 %v515
  %v1406 = vpop.f32.mrb[0].mxu0
  %v1407 = vadd.f32 %v1310, %v1406
  %v1408 = vpop.f32.mrb[0].mxu0
  %v1409 = vpop.f32.mrb[0].mxu0
  %v1410 = vadd.f32 %v1313, %v1409
  %v1411 = vpop.f32.mrb[0].mxu0
  %1412 = vmatprep.mubr.bf16.mxu0 %v525
  %1413 = vmatmul.mubr.bf16.gmra.mrb[0].mxu0 %v524
  %v1414 = vpop.f32.mrb[0].mxu0
  %v1415 = vadd.f32 %v1318, %v1414
  %v1416 = vpop.f32.mrb[0].mxu0
  %v1417 = vpop.f32.mrb[0].mxu0
  %v1418 = vadd.f32 %v1321, %v1417
  %v1419 = vpop.f32.mrb[0].mxu0
  %1420 = vmatprep.mubr.bf16.mxu0 %v534
  %1421 = vmatmul.mubr.bf16.gmra.mrb[0].mxu0 %v533
  %v1422 = vpop.f32.mrb[0].mxu0
  %v1423 = vadd.f32 %v1326, %v1422
  %v1424 = vpop.f32.mrb[0].mxu0
  %v1425 = vpop.f32.mrb[0].mxu0
  %v1426 = vadd.f32 %v1329, %v1425
  %v1427 = vpop.f32.mrb[0].mxu0
  %1428 = vmatprep.mubr.bf16.mxu0 %v543
  %1429 = vmatmul.mubr.bf16.gmra.mrb[0].mxu0 %v542
  %v1430 = vpop.f32.mrb[0].mxu0
  %v1431 = vadd.f32 %v1334, %v1430
  %v1432 = vpop.f32.mrb[0].mxu0
  %v1433 = vpop.f32.mrb[0].mxu0
  %v1434 = vadd.f32 %v1337, %v1433
  %v1435 = vpop.f32.mrb[0].mxu0
  %1436 = vdwg.mxu0
  %1437 = vmatprep.subr.bf16.mxu0 0
  %1438 = vmatpush1.bf16.msra.mxu0 %v969
  %1439 = vmatprep.subr.bf16.mxu0 0
  %1440 = vmatpush1.bf16.msra.mxu0 %v970
  %1441 = vmatprep.subr.bf16.mxu0 0
  %1442 = vmatpush1.bf16.msra.mxu0 %v971
  %1443 = vmatprep.subr.bf16.mxu0 0
  %1444 = vmatpush1.bf16.msra.mxu0 %v972
  %1445 = vmatprep.subr.bf16.mxu0 0
  %1446 = vmatpush1.bf16.msra.mxu0 %v973
  %1447 = vmatprep.subr.bf16.mxu0 0
  %1448 = vmatpush1.bf16.msra.mxu0 %v974
  %1449 = vmatprep.subr.bf16.mxu0 0
  %1450 = vmatpush1.bf16.msra.mxu0 %v975
  %1451 = vmatprep.subr.bf16.mxu0 0
  %1452 = vmatpush1.bf16.msra.mxu0 %v976
  %1453 = vmatprep.subr.bf16.mxu0 0
  %1454 = vmatpush1.bf16.msra.mxu0 0
  %1455 = vmatprep.subr.bf16.mxu0 0
  %1456 = vmatpush1.bf16.msra.mxu0 0
  %1457 = vmatprep.subr.bf16.mxu0 0
  %1458 = vmatpush1.bf16.msra.mxu0 0
  %1459 = vmatprep.subr.bf16.mxu0 0
  %1460 = vmatpush1.bf16.msra.mxu0 0
  %1461 = vmatprep.subr.bf16.mxu0 0
  %1462 = vmatpush1.bf16.msra.mxu0 0
  %1463 = vmatprep.subr.bf16.mxu0 0
  %1464 = vmatpush1.bf16.msra.mxu0 0
  %1465 = vmatprep.subr.bf16.mxu0 0
  %1466 = vmatpush1.bf16.msra.mxu0 0
  %1467 = vmatprep.subr.bf16.mxu0 0
  %1468 = vmatpush1.bf16.msra.mxu0 0
  %1469 = vmatprep.mubr.bf16.mxu0 0
  %1470 = vmatmul.mubr.bf16.gmra.mrb[0].mxu0 %v481
  %v1471 = vpop.f32.mrb[0].mxu0
  %v1472 = vadd.f32 %v1375, %v1471
  %v1473 = vpop.f32.mrb[0].mxu0
  %v1474 = vpop.f32.mrb[0].mxu0
  %v1475 = vadd.f32 %v1378, %v1474
  %v1476 = vpop.f32.mrb[0].mxu0
  %1477 = vmatprep.mubr.bf16.mxu0 0
  %1478 = vmatmul.mubr.bf16.gmra.mrb[0].mxu0 %v490
  %v1479 = vpop.f32.mrb[0].mxu0
  %v1480 = vadd.f32 %v1383, %v1479
  %v1481 = vpop.f32.mrb[0].mxu0
  %v1482 = vpop.f32.mrb[0].mxu0
  %v1483 = vadd.f32 %v1386, %v1482
  %v1484 = vpop.f32.mrb[0].mxu0
  %1485 = vmatprep.mubr.bf16.mxu0 0
  %1486 = vmatmul.mubr.bf16.gmra.mrb[0].mxu0 %v499
  %v1487 = vpop.f32.mrb[0].mxu0
  %v1488 = vadd.f32 %v1391, %v1487
  %v1489 = vpop.f32.mrb[0].mxu0
  %v1490 = vpop.f32.mrb[0].mxu0
  %v1491 = vadd.f32 %v1394, %v1490
  %v1492 = vpop.f32.mrb[0].mxu0
  %1493 = vmatprep.mubr.bf16.mxu0 0
  %1494 = vmatmul.mubr.bf16.gmra.mrb[0].mxu0 %v508
  %v1495 = vpop.f32.mrb[0].mxu0
  %v1496 = vadd.f32 %v1399, %v1495
  %v1497 = vpop.f32.mrb[0].mxu0
  %v1498 = vpop.f32.mrb[0].mxu0
  %v1499 = vadd.f32 %v1402, %v1498
  %v1500 = vpop.f32.mrb[0].mxu0
  %1501 = vmatprep.mubr.bf16.mxu0 0
  %1502 = vmatmul.mubr.bf16.gmra.mrb[0].mxu0 %v517
  %v1503 = vpop.f32.mrb[0].mxu0
  %v1504 = vadd.f32 %v1407, %v1503
  %v1505 = vpop.f32.mrb[0].mxu0
  %v1506 = vpop.f32.mrb[0].mxu0
  %v1507 = vadd.f32 %v1410, %v1506
  %v1508 = vpop.f32.mrb[0].mxu0
  %1509 = vmatprep.mubr.bf16.mxu0 0
  %1510 = vmatmul.mubr.bf16.gmra.mrb[0].mxu0 %v526
  %v1511 = vpop.f32.mrb[0].mxu0
  %v1512 = vadd.f32 %v1415, %v1511
  %v1513 = vpop.f32.mrb[0].mxu0
  %v1514 = vpop.f32.mrb[0].mxu0
  %v1515 = vadd.f32 %v1418, %v1514
  %v1516 = vpop.f32.mrb[0].mxu0
  %1517 = vmatprep.mubr.bf16.mxu0 0
  %1518 = vmatmul.mubr.bf16.gmra.mrb[0].mxu0 %v535
  %v1519 = vpop.f32.mrb[0].mxu0
  %v1520 = vadd.f32 %v1423, %v1519
  %v1521 = vpop.f32.mrb[0].mxu0
  %v1522 = vpop.f32.mrb[0].mxu0
  %v1523 = vadd.f32 %v1426, %v1522
  %v1524 = vpop.f32.mrb[0].mxu0
  %1525 = vmatprep.mubr.bf16.mxu0 0
  %1526 = vmatmul.mubr.bf16.gmra.mrb[0].mxu0 %v544
  %v1527 = vpop.f32.mrb[0].mxu0
  %v1528 = vadd.f32 %v1431, %v1527
  %v1529 = vpop.f32.mrb[0].mxu0
  %v1530 = vpop.f32.mrb[0].mxu0
  %v1531 = vadd.f32 %v1434, %v1530
  %v1532 = vpop.f32.mrb[0].mxu0
  %1533 = vdwg.mxu0
  %vm1534 = vcmp.gt.f32.partialorder %v1472, 0.0
  %vm1535 = vcmp.gt.f32.partialorder %v1475, 0.0
  %vm1536 = vcmp.gt.f32.partialorder %v1480, 0.0
  %vm1537 = vcmp.gt.f32.partialorder %v1483, 0.0
  %vm1538 = vcmp.gt.f32.partialorder %v1488, 0.0
  %vm1539 = vcmp.gt.f32.partialorder %v1491, 0.0
  %vm1540 = vcmp.gt.f32.partialorder %v1496, 0.0
  %vm1541 = vcmp.gt.f32.partialorder %v1499, 0.0
  %vm1542 = vcmp.gt.f32.partialorder %v1504, 0.0
  %vm1543 = vcmp.gt.f32.partialorder %v1507, 0.0
  %vm1544 = vcmp.gt.f32.partialorder %v1512, 0.0
  %vm1545 = vcmp.gt.f32.partialorder %v1515, 0.0
  %vm1546 = vcmp.gt.f32.partialorder %v1520, 0.0
  %vm1547 = vcmp.gt.f32.partialorder %v1523, 0.0
  %vm1548 = vcmp.gt.f32.partialorder %v1528, 0.0
  %vm1549 = vcmp.gt.f32.partialorder %v1531, 0.0
  %v1550 = vmul.f32 %v1472, 0.1
  %v1551 = vmul.f32 %v1475, 0.1
  %v1552 = vmul.f32 %v1480, 0.1
  %v1553 = vmul.f32 %v1483, 0.1
  %v1554 = vmul.f32 %v1488, 0.1
  %v1555 = vmul.f32 %v1491, 0.1
  %v1556 = vmul.f32 %v1496, 0.1
  %v1557 = vmul.f32 %v1499, 0.1
  %v1558 = vmul.f32 %v1504, 0.1
  %v1559 = vmul.f32 %v1507, 0.1
  %v1560 = vmul.f32 %v1512, 0.1
  %v1561 = vmul.f32 %v1515, 0.1
  %v1562 = vmul.f32 %v1520, 0.1
  %v1563 = vmul.f32 %v1523, 0.1
  %v1564 = vmul.f32 %v1528, 0.1
  %v1565 = vmul.f32 %v1531, 0.1
  %v1566 = vsel %vm1534, %v1472, %v1550
  %v1567 = vsel %vm1535, %v1475, %v1551
  %v1568 = vsel %vm1536, %v1480, %v1552
  %v1569 = vsel %vm1537, %v1483, %v1553
  %v1570 = vsel %vm1538, %v1488, %v1554
  %v1571 = vsel %vm1539, %v1491, %v1555
  %v1572 = vsel %vm1540, %v1496, %v1556
  %v1573 = vsel %vm1541, %v1499, %v1557
  %v1574 = vsel %vm1542, %v1504, %v1558
  %v1575 = vsel %vm1543, %v1507, %v1559
  %v1576 = vsel %vm1544, %v1512, %v1560
  %v1577 = vsel %vm1545, %v1515, %v1561
  %v1578 = vsel %vm1546, %v1520, %v1562
  %v1579 = vsel %vm1547, %v1523, %v1563
  %v1580 = vsel %vm1548, %v1528, %v1564
  %v1581 = vsel %vm1549, %v1531, %v1565
  %v1582 = vld [vmem:[%s3] sm:$0xf]
  %v1583 = vld [vmem:[%s3 + $0x4] sm:$0xf]
  %v1584 = vld [vmem:[%s3 + $0x8] sm:$0xf]
  %v1585 = vld [vmem:[%s3 + $0xc] sm:$0xf]
  %v1586 = vld [vmem:[%s3 + $0x10] sm:$0xf]
  %v1587 = vld [vmem:[%s3 + $0x14] sm:$0xf]
  %v1588 = vld [vmem:[%s3 + $0x18] sm:$0xf]
  %v1589 = vld [vmem:[%s3 + $0x1c] sm:$0xf]
  %v1590 = vld [vmem:[%s3 + $0x20] sm:$0xf]
  %v1591 = vld [vmem:[%s3 + $0x24] sm:$0xf]
  %v1592 = vld [vmem:[%s3 + $0x28] sm:$0xf]
  %v1593 = vld [vmem:[%s3 + $0x2c] sm:$0xf]
  %v1594 = vld [vmem:[%s3 + $0x30] sm:$0xf]
  %v1595 = vld [vmem:[%s3 + $0x34] sm:$0xf]
  %v1596 = vld [vmem:[%s3 + $0x38] sm:$0xf]
  %v1597 = vld [vmem:[%s3 + $0x3c] sm:$0xf]
  %v1598 = vunpack.c.l.bf16 %v1582
  %v1599 = vunpack.c.l.bf16 %v1583
  %v1600 = vunpack.c.l.bf16 %v1584
  %v1601 = vunpack.c.l.bf16 %v1585
  %v1602 = vunpack.c.l.bf16 %v1586
  %v1603 = vunpack.c.l.bf16 %v1587
  %v1604 = vunpack.c.l.bf16 %v1588
  %v1605 = vunpack.c.l.bf16 %v1589
  %v1606 = vunpack.c.l.bf16 %v1590
  %v1607 = vunpack.c.l.bf16 %v1591
  %v1608 = vunpack.c.l.bf16 %v1592
  %v1609 = vunpack.c.l.bf16 %v1593
  %v1610 = vunpack.c.l.bf16 %v1594
  %v1611 = vunpack.c.l.bf16 %v1595
  %v1612 = vunpack.c.l.bf16 %v1596
  %v1613 = vunpack.c.l.bf16 %v1597
  %v1614 = vadd.f32 %v1566, %v1598
  %v1615 = vadd.f32 %v1567, %v1599
  %v1616 = vadd.f32 %v1568, %v1600
  %v1617 = vadd.f32 %v1569, %v1601
  %v1618 = vadd.f32 %v1570, %v1602
  %v1619 = vadd.f32 %v1571, %v1603
  %v1620 = vadd.f32 %v1572, %v1604
  %v1621 = vadd.f32 %v1573, %v1605
  %v1622 = vadd.f32 %v1574, %v1606
  %v1623 = vadd.f32 %v1575, %v1607
  %v1624 = vadd.f32 %v1576, %v1608
  %v1625 = vadd.f32 %v1577, %v1609
  %v1626 = vadd.f32 %v1578, %v1610
  %v1627 = vadd.f32 %v1579, %v1611
  %v1628 = vadd.f32 %v1580, %v1612
  %v1629 = vadd.f32 %v1581, %v1613
  %v1630 = vpack.c.bf16 %v1615, %v1614
  %v1631 = vpack.c.bf16 %v1617, %v1616
  %v1632 = vpack.c.bf16 %v1619, %v1618
  %v1633 = vpack.c.bf16 %v1621, %v1620
  %v1634 = vpack.c.bf16 %v1623, %v1622
  %v1635 = vpack.c.bf16 %v1625, %v1624
  %v1636 = vpack.c.bf16 %v1627, %v1626
  %v1637 = vpack.c.bf16 %v1629, %v1628
  %v1646 = vunpack.c.l.b16 %v1630
  %v1647 = vunpack.c.h.b16 %v1630
  %v1648 = vunpack.c.l.b16 %v1631
  %v1649 = vunpack.c.h.b16 %v1631
  %v1650 = vunpack.c.l.b16 %v1632
  %v1651 = vunpack.c.h.b16 %v1632
  %v1652 = vunpack.c.l.b16 %v1633
  %v1653 = vunpack.c.h.b16 %v1633
  %v1654 = vunpack.c.l.b16 %v1634
  %v1655 = vunpack.c.h.b16 %v1634
  %v1656 = vunpack.c.l.b16 %v1635
  %v1657 = vunpack.c.h.b16 %v1635
  %v1658 = vunpack.c.l.b16 %v1636
  %v1659 = vunpack.c.h.b16 %v1636
  %v1660 = vunpack.c.l.b16 %v1637
  %v1661 = vunpack.c.h.b16 %v1637
  %v1662 = vpack.c.b16 %v1646, %v1646
  %v1663 = vpack.c.b16 %v1647, %v1647
  %v1664 = vpack.c.b16 %v1648, %v1648
  %v1665 = vpack.c.b16 %v1649, %v1649
  %v1666 = vpack.c.b16 %v1650, %v1650
  %v1667 = vpack.c.b16 %v1651, %v1651
  %v1668 = vpack.c.b16 %v1652, %v1652
  %v1669 = vpack.c.b16 %v1653, %v1653
  %v1670 = vpack.c.b16 %v1654, %v1654
  %v1671 = vpack.c.b16 %v1655, %v1655
  %v1672 = vpack.c.b16 %v1656, %v1656
  %v1673 = vpack.c.b16 %v1657, %v1657
  %v1674 = vpack.c.b16 %v1658, %v1658
  %v1675 = vpack.c.b16 %v1659, %v1659
  %v1676 = vpack.c.b16 %v1660, %v1660
  %v1677 = vpack.c.b16 %v1661, %v1661
  %1694 = vst [vmem:[%s4] sm:$0xf] %v1662
  %1695 = vst [vmem:[%s4 + $0x4] sm:$0xf] %v1663
  %1696 = vst [vmem:[%s4 + $0x8] sm:$0xf] %v1664
  %1697 = vst [vmem:[%s4 + $0xc] sm:$0xf] %v1665
  %1698 = vst [vmem:[%s4 + $0x10] sm:$0xf] %v1666
  %1699 = vst [vmem:[%s4 + $0x14] sm:$0xf] %v1667
  %1700 = vst [vmem:[%s4 + $0x18] sm:$0xf] %v1668
  %1701 = vst [vmem:[%s4 + $0x1c] sm:$0xf] %v1669
  %1702 = vst [vmem:[%s4 + $0x20] sm:$0xf] %v1670
  %1703 = vst [vmem:[%s4 + $0x24] sm:$0xf] %v1671
  %1704 = vst [vmem:[%s4 + $0x28] sm:$0xf] %v1672
  %1705 = vst [vmem:[%s4 + $0x2c] sm:$0xf] %v1673
  %1706 = vst [vmem:[%s4 + $0x30] sm:$0xf] %v1674
  %1707 = vst [vmem:[%s4 + $0x34] sm:$0xf] %v1675
  %1708 = vst [vmem:[%s4 + $0x38] sm:$0xf] %v1676
  %1709 = vst [vmem:[%s4 + $0x3c] sm:$0xf] %v1677
  // Predicated region
  $region18: #{yolov3_forward.9} parent=0 // pred_check
    _
  $region19: #{yolov3_forward.9} parent=0 // pred_check_branch
    %1711 = sbr.rel (0) target = $region21
  $region20: #{yolov3_forward.9} parent=0 // pred_region
    _
  $region21: #{yolov3_forward.9} parent=0 // pred_fallthru
    _
  // Predicated region
  $region22: #{yolov3_forward.9} parent=0 // pred_check
    _
  $region23: #{yolov3_forward.9} parent=0 // pred_check_branch
    %1713 = sbr.rel (0) target = $region25
  $region24: #{yolov3_forward.9} parent=0 // pred_region
    _
  $region25: #{yolov3_forward.9} parent=0 // pred_fallthru
    _

// kernel: yolov3_forward.12
$region0: #{yolov3_forward.12}
  #allocation0 [shape = 'u32[]', space=smem, size = 0x4, offset = 0x4, fixed_abs, tag = 'smem constant byte address 0x4 - core index']
  #allocation1 [shape = 'u32[144,128]{1,0:T(1,128)}', space=vmem, size = 0x12000, scoped, tag = 'internal scratch']
  %s0 = inlined_call_operand.vmem [shape: bf16[32,128], index: 0, kind: input, shape index: {}]
  %s1 = inlined_call_operand.vmem [shape: bf16[128,128], index: 1, kind: input, shape index: {}]
  %s2 = inlined_call_operand.vmem [shape: f32[1,128], index: 2, kind: input, shape index: {}]
  %s3 = inlined_call_operand.vmem [shape: bf16[128,128], index: 3, kind: input, shape index: {}]
  %s4 = inlined_call_operand.vmem [shape: f32[1,128], index: 4, kind: input, shape index: {}]
  %s5 = inlined_call_operand.vmem [shape: bf16[32,128], index: 5, kind: output, shape index: {0}]
  %s6 = inlined_call_operand.vmem [shape: f32[32,128], index: 6, kind: output, shape index: {1}]
  %7 = xla_tuple %s5, %s6
  %s8 = sld [smem:[#allocation0]]
  $region38: #{yolov3_forward.12} parent=0
    _
  %s10 = ssub.s32 1, %s8
  %s11 = scalar_select 0, %s10, %s8
  // Predicated region
  $region2: #{yolov3_forward.12} parent=0 // pred_check
    _
  $region3: #{yolov3_forward.12} parent=0 // pred_check_branch
    %13 = sbr.rel (0) target = $region5
  $region4: #{yolov3_forward.12} parent=0 // pred_region
    _
  $region5: #{yolov3_forward.12} parent=0 // pred_fallthru
    _
  // Predicated region
  $region6: #{yolov3_forward.12} parent=0 // pred_check
    _
  $region7: #{yolov3_forward.12} parent=0 // pred_check_branch
    %15 = sbr.rel (0) target = $region9
  $region8: #{yolov3_forward.12} parent=0 // pred_region
    _
  $region9: #{yolov3_forward.12} parent=0 // pred_fallthru
    _
  // Predicated region
  $region10: #{yolov3_forward.12} parent=0 // pred_check
    _
  $region11: #{yolov3_forward.12} parent=0 // pred_check_branch
    %17 = sbr.rel (0) target = $region13
  $region12: #{yolov3_forward.12} parent=0 // pred_region
    _
  $region13: #{yolov3_forward.12} parent=0 // pred_fallthru
    _
  // Predicated region
  $region14: #{yolov3_forward.12} parent=0 // pred_check
    _
  $region15: #{yolov3_forward.12} parent=0 // pred_check_branch
    %19 = sbr.rel (0) target = $region17
  $region16: #{yolov3_forward.12} parent=0 // pred_region
    _
  $region17: #{yolov3_forward.12} parent=0 // pred_fallthru
    _
  // Predicated region
  $region18: #{yolov3_forward.12} parent=0 // pred_check
    _
  $region19: #{yolov3_forward.12} parent=0 // pred_check_branch
    %21 = sbr.rel (0) target = $region21
  $region20: #{yolov3_forward.12} parent=0 // pred_region
    _
  $region21: #{yolov3_forward.12} parent=0 // pred_fallthru
    _
  %v23 = vld [vmem:[%s0] sm:$0xf]
  %v24 = vld [vmem:[%s0 + $0x4] sm:$0xf]
  %v25 = vld [vmem:[%s0 + $0x8] sm:$0xf]
  %v26 = vld [vmem:[%s0 + $0xc] sm:$0xf]
  %v27 = vld [vmem:[%s1] sm:$0xf]
  %v28 = vld [vmem:[%s1 + $0x4] sm:$0xf]
  %v29 = vld [vmem:[%s1 + $0x8] sm:$0xf]
  %v30 = vld [vmem:[%s1 + $0xc] sm:$0xf]
  %v31 = vld [vmem:[%s1 + $0x10] sm:$0xf]
  %v32 = vld [vmem:[%s1 + $0x14] sm:$0xf]
  %v33 = vld [vmem:[%s1 + $0x18] sm:$0xf]
  %v34 = vld [vmem:[%s1 + $0x1c] sm:$0xf]
  %v35 = vld [vmem:[%s1 + $0x20] sm:$0xf]
  %v36 = vld [vmem:[%s1 + $0x24] sm:$0xf]
  %v37 = vld [vmem:[%s1 + $0x28] sm:$0xf]
  %v38 = vld [vmem:[%s1 + $0x2c] sm:$0xf]
  %v39 = vld [vmem:[%s1 + $0x30] sm:$0xf]
  %v40 = vld [vmem:[%s1 + $0x34] sm:$0xf]
  %v41 = vld [vmem:[%s1 + $0x38] sm:$0xf]
  %v42 = vld [vmem:[%s1 + $0x3c] sm:$0xf]
  %v43 = vld [vmem:[%s2] sm:$0x1]
  %v45 = vlaneseq
  %v46 = vshrl.u32 %v45, 7
  %v47 = vsub.s32 0, %v46
  %v48 = vrot.slane %v43, %v47
  %v54 = vunpack.c.l.b16 %v23
  %v55 = vunpack.c.l.b16 %v24
  %v56 = vunpack.c.l.b16 %v25
  %v57 = vunpack.c.l.b16 %v26
  %v58 = vpack.c.b16 %v55, %v54
  %v59 = vpack.c.b16 %v57, %v56
  %v78 = vunpack.c.l.b16 %v27
  %v79 = vunpack.c.l.b16 %v28
  %v80 = vunpack.c.l.b16 %v29
  %v81 = vunpack.c.l.b16 %v30
  %v82 = vunpack.c.l.b16 %v31
  %v83 = vunpack.c.l.b16 %v32
  %v84 = vunpack.c.l.b16 %v33
  %v85 = vunpack.c.l.b16 %v34
  %v86 = vunpack.c.l.b16 %v35
  %v87 = vunpack.c.l.b16 %v36
  %v88 = vunpack.c.l.b16 %v37
  %v89 = vunpack.c.l.b16 %v38
  %v90 = vunpack.c.l.b16 %v39
  %v91 = vunpack.c.l.b16 %v40
  %v92 = vunpack.c.l.b16 %v41
  %v93 = vunpack.c.l.b16 %v42
  %v94 = vpack.c.b16 %v79, %v78
  %v95 = vpack.c.b16 %v81, %v80
  %v96 = vpack.c.b16 %v83, %v82
  %v97 = vpack.c.b16 %v85, %v84
  %v98 = vpack.c.b16 %v87, %v86
  %v99 = vpack.c.b16 %v89, %v88
  %v100 = vpack.c.b16 %v91, %v90
  %v101 = vpack.c.b16 %v93, %v92
  %110 = vmatprep.subr.bf16.mxu0 0
  %111 = vmatpush1.bf16.msra.mxu0 %v94
  %112 = vmatprep.subr.bf16.mxu0 0
  %113 = vmatpush1.bf16.msra.mxu0 %v95
  %114 = vmatprep.subr.bf16.mxu0 0
  %115 = vmatpush1.bf16.msra.mxu0 %v96
  %116 = vmatprep.subr.bf16.mxu0 0
  %117 = vmatpush1.bf16.msra.mxu0 %v97
  %118 = vmatprep.subr.bf16.mxu0 0
  %119 = vmatpush1.bf16.msra.mxu0 %v98
  %120 = vmatprep.subr.bf16.mxu0 0
  %121 = vmatpush1.bf16.msra.mxu0 %v99
  %122 = vmatprep.subr.bf16.mxu0 0
  %123 = vmatpush1.bf16.msra.mxu0 %v100
  %124 = vmatprep.subr.bf16.mxu0 0
  %125 = vmatpush1.bf16.msra.mxu0 %v101
  %126 = vmatprep.subr.bf16.mxu0 0
  %127 = vmatpush1.bf16.msra.mxu0 0
  %128 = vmatprep.subr.bf16.mxu0 0
  %129 = vmatpush1.bf16.msra.mxu0 0
  %130 = vmatprep.subr.bf16.mxu0 0
  %131 = vmatpush1.bf16.msra.mxu0 0
  %132 = vmatprep.subr.bf16.mxu0 0
  %133 = vmatpush1.bf16.msra.mxu0 0
  %134 = vmatprep.subr.bf16.mxu0 0
  %135 = vmatpush1.bf16.msra.mxu0 0
  %136 = vmatprep.subr.bf16.mxu0 0
  %137 = vmatpush1.bf16.msra.mxu0 0
  %138 = vmatprep.subr.bf16.mxu0 0
  %139 = vmatpush1.bf16.msra.mxu0 0
  %140 = vmatprep.subr.bf16.mxu0 0
  %141 = vmatpush1.bf16.msra.mxu0 0
  %142 = vmatprep.mubr.bf16.mxu0 0
  %143 = vmatmul.mubr.bf16.gmra.mrb[0].mxu0 %v58
  %v144 = vpop.f32.mrb[0].mxu0
  %v145 = vadd.f32 %v48, %v144
  %v146 = vpop.f32.mrb[0].mxu0
  %v147 = vpop.f32.mrb[0].mxu0
  %v148 = vadd.f32 %v48, %v147
  %v149 = vpop.f32.mrb[0].mxu0
  %150 = vmatprep.mubr.bf16.mxu0 0
  %151 = vmatmul.mubr.bf16.gmra.mrb[0].mxu0 %v59
  %v152 = vpop.f32.mrb[0].mxu0
  %v153 = vadd.f32 %v48, %v152
  %v154 = vpop.f32.mrb[0].mxu0
  %v155 = vpop.f32.mrb[0].mxu0
  %v156 = vadd.f32 %v48, %v155
  %v157 = vpop.f32.mrb[0].mxu0
  %158 = vdwg.mxu0
  %vm159 = vcmp.gt.f32.partialorder %v145, 0.0
  %vm160 = vcmp.gt.f32.partialorder %v148, 0.0
  %vm161 = vcmp.gt.f32.partialorder %v153, 0.0
  %vm162 = vcmp.gt.f32.partialorder %v156, 0.0
  %v163 = vmul.f32 %v145, 0.1
  %v164 = vmul.f32 %v148, 0.1
  %v165 = vmul.f32 %v153, 0.1
  %v166 = vmul.f32 %v156, 0.1
  %v167 = vsel %vm159, %v145, %v163
  %v168 = vsel %vm160, %v148, %v164
  %v169 = vsel %vm161, %v153, %v165
  %v170 = vsel %vm162, %v156, %v166
  %v171 = vpack.c.bf16 %v168, %v167
  %v172 = vpack.c.bf16 %v170, %v169
  %v175 = vunpack.c.l.b16 %v171
  %v176 = vunpack.c.h.b16 %v171
  %v177 = vunpack.c.l.b16 %v172
  %v178 = vunpack.c.h.b16 %v172
  %v179 = vpack.c.b16 %v175, %v175
  %v180 = vpack.c.b16 %v176, %v176
  %v181 = vpack.c.b16 %v177, %v177
  %v182 = vpack.c.b16 %v178, %v178
  %187 = vst [vmem:[%s5] sm:$0xf] %v179
  %188 = vst [vmem:[%s5 + $0x4] sm:$0xf] %v180
  %189 = vst [vmem:[%s5 + $0x8] sm:$0xf] %v181
  %190 = vst [vmem:[%s5 + $0xc] sm:$0xf] %v182
  %v191 = vld [vmem:[%s3] sm:$0xf]
  %v192 = vld [vmem:[%s3 + $0x4] sm:$0xf]
  %v193 = vld [vmem:[%s3 + $0x8] sm:$0xf]
  %v194 = vld [vmem:[%s3 + $0xc] sm:$0xf]
  %v195 = vld [vmem:[%s3 + $0x10] sm:$0xf]
  %v196 = vld [vmem:[%s3 + $0x14] sm:$0xf]
  %v197 = vld [vmem:[%s3 + $0x18] sm:$0xf]
  %v198 = vld [vmem:[%s3 + $0x1c] sm:$0xf]
  %v199 = vld [vmem:[%s3 + $0x20] sm:$0xf]
  %v200 = vld [vmem:[%s3 + $0x24] sm:$0xf]
  %v201 = vld [vmem:[%s3 + $0x28] sm:$0xf]
  %v202 = vld [vmem:[%s3 + $0x2c] sm:$0xf]
  %v203 = vld [vmem:[%s3 + $0x30] sm:$0xf]
  %v204 = vld [vmem:[%s3 + $0x34] sm:$0xf]
  %v205 = vld [vmem:[%s3 + $0x38] sm:$0xf]
  %v206 = vld [vmem:[%s3 + $0x3c] sm:$0xf]
  %v207 = vld [vmem:[%s4] sm:$0x1]
  %v209 = vlaneseq
  %v210 = vshrl.u32 %v209, 7
  %v211 = vsub.s32 0, %v210
  %v212 = vrot.slane %v207, %v211
  %v230 = vunpack.c.l.b16 %v191
  %v231 = vunpack.c.l.b16 %v192
  %v232 = vunpack.c.l.b16 %v193
  %v233 = vunpack.c.l.b16 %v194
  %v234 = vunpack.c.l.b16 %v195
  %v235 = vunpack.c.l.b16 %v196
  %v236 = vunpack.c.l.b16 %v197
  %v237 = vunpack.c.l.b16 %v198
  %v238 = vunpack.c.l.b16 %v199
  %v239 = vunpack.c.l.b16 %v200
  %v240 = vunpack.c.l.b16 %v201
  %v241 = vunpack.c.l.b16 %v202
  %v242 = vunpack.c.l.b16 %v203
  %v243 = vunpack.c.l.b16 %v204
  %v244 = vunpack.c.l.b16 %v205
  %v245 = vunpack.c.l.b16 %v206
  %v246 = vpack.c.b16 %v231, %v230
  %v247 = vpack.c.b16 %v233, %v232
  %v248 = vpack.c.b16 %v235, %v234
  %v249 = vpack.c.b16 %v237, %v236
  %v250 = vpack.c.b16 %v239, %v238
  %v251 = vpack.c.b16 %v241, %v240
  %v252 = vpack.c.b16 %v243, %v242
  %v253 = vpack.c.b16 %v245, %v244
  %262 = vmatprep.subr.bf16.mxu0 0
  %263 = vmatpush1.bf16.msra.mxu0 %v246
  %264 = vmatprep.subr.bf16.mxu0 0
  %265 = vmatpush1.bf16.msra.mxu0 %v247
  %266 = vmatprep.subr.bf16.mxu0 0
  %267 = vmatpush1.bf16.msra.mxu0 %v248
  %268 = vmatprep.subr.bf16.mxu0 0
  %269 = vmatpush1.bf16.msra.mxu0 %v249
  %270 = vmatprep.subr.bf16.mxu0 0
  %271 = vmatpush1.bf16.msra.mxu0 %v250
  %272 = vmatprep.subr.bf16.mxu0 0
  %273 = vmatpush1.bf16.msra.mxu0 %v251
  %274 = vmatprep.subr.bf16.mxu0 0
  %275 = vmatpush1.bf16.msra.mxu0 %v252
  %276 = vmatprep.subr.bf16.mxu0 0
  %277 = vmatpush1.bf16.msra.mxu0 %v253
  %278 = vmatprep.subr.bf16.mxu0 0
  %279 = vmatpush1.bf16.msra.mxu0 0
  %280 = vmatprep.subr.bf16.mxu0 0
  %281 = vmatpush1.bf16.msra.mxu0 0
  %282 = vmatprep.subr.bf16.mxu0 0
  %283 = vmatpush1.bf16.msra.mxu0 0
  %284 = vmatprep.subr.bf16.mxu0 0
  %285 = vmatpush1.bf16.msra.mxu0 0
  %286 = vmatprep.subr.bf16.mxu0 0
  %287 = vmatpush1.bf16.msra.mxu0 0
  %288 = vmatprep.subr.bf16.mxu0 0
  %289 = vmatpush1.bf16.msra.mxu0 0
  %290 = vmatprep.subr.bf16.mxu0 0
  %291 = vmatpush1.bf16.msra.mxu0 0
  %292 = vmatprep.subr.bf16.mxu0 0
  %293 = vmatpush1.bf16.msra.mxu0 0
  %294 = vmatprep.mubr.bf16.mxu0 0
  %295 = vmatmul.mubr.bf16.gmra.mrb[0].mxu0 %v171
  %v296 = vpop.f32.mrb[0].mxu0
  %v297 = vadd.f32 %v212, %v296
  %v298 = vpop.f32.mrb[0].mxu0
  %v299 = vpop.f32.mrb[0].mxu0
  %v300 = vadd.f32 %v212, %v299
  %v301 = vpop.f32.mrb[0].mxu0
  %302 = vmatprep.mubr.bf16.mxu0 0
  %303 = vmatmul.mubr.bf16.gmra.mrb[0].mxu0 %v172
  %v304 = vpop.f32.mrb[0].mxu0
  %v305 = vadd.f32 %v212, %v304
  %v306 = vpop.f32.mrb[0].mxu0
  %v307 = vpop.f32.mrb[0].mxu0
  %v308 = vadd.f32 %v212, %v307
  %v309 = vpop.f32.mrb[0].mxu0
  %310 = vdwg.mxu0
  %311 = vst [vmem:[%s6] sm:$0xff] %v297
  %312 = vst [vmem:[%s6 + $0x8] sm:$0xff] %v300
  %313 = vst [vmem:[%s6 + $0x10] sm:$0xff] %v305
  %314 = vst [vmem:[%s6 + $0x18] sm:$0xff] %v308
  // Predicated region
  $region22: #{yolov3_forward.12} parent=0 // pred_check
    _
  $region23: #{yolov3_forward.12} parent=0 // pred_check_branch
    %316 = sbr.rel (0) target = $region25
  $region24: #{yolov3_forward.12} parent=0 // pred_region
    _
  $region25: #{yolov3_forward.12} parent=0 // pred_fallthru
    _
  // Predicated region
  $region26: #{yolov3_forward.12} parent=0 // pred_check
    _
  $region27: #{yolov3_forward.12} parent=0 // pred_check_branch
    %318 = sbr.rel (0) target = $region29
  $region28: #{yolov3_forward.12} parent=0 // pred_region
    _
  $region29: #{yolov3_forward.12} parent=0 // pred_fallthru
    _
  // Predicated region
  $region30: #{yolov3_forward.12} parent=0 // pred_check
    _
  $region31: #{yolov3_forward.12} parent=0 // pred_check_branch
    %320 = sbr.rel (0) target = $region33
  $region32: #{yolov3_forward.12} parent=0 // pred_region
    _
  $region33: #{yolov3_forward.12} parent=0 // pred_fallthru
    _
  // Predicated region
  $region34: #{yolov3_forward.12} parent=0 // pred_check
    _
  $region35: #{yolov3_forward.12} parent=0 // pred_check_branch
    %322 = sbr.rel (0) target = $region37
  $region36: #{yolov3_forward.12} parent=0 // pred_region
    _
  $region37: #{yolov3_forward.12} parent=0 // pred_fallthru
    _

// kernel: yolov3_forward.10
$region0: #{yolov3_forward.10}
  #allocation0 [shape = 'u32[]', space=smem, size = 0x4, offset = 0x4, fixed_abs, tag = 'smem constant byte address 0x4 - core index']
  #allocation1 [shape = 'u32[144,128]{1,0:T(1,128)}', space=vmem, size = 0x12000, scoped, tag = 'internal scratch']
  %s0 = inlined_call_operand.vmem [shape: bf16[32,1152], index: 0, kind: input, shape index: {}]
  %s1 = inlined_call_operand.vmem [shape: bf16[1152,128], index: 1, kind: input, shape index: {}]
  %s2 = inlined_call_operand.vmem [shape: f32[1,128], index: 2, kind: input, shape index: {}]
  %s3 = inlined_call_operand.vmem [shape: bf16[128,128], index: 3, kind: input, shape index: {}]
  %s4 = inlined_call_operand.vmem [shape: f32[1,128], index: 4, kind: input, shape index: {}]
  %s5 = inlined_call_operand.vmem [shape: bf16[32,128], index: 5, kind: output, shape index: {0}]
  %s6 = inlined_call_operand.vmem [shape: bf16[32,128], index: 6, kind: output, shape index: {1}]
  %7 = xla_tuple %s5, %s6
  %s8 = sld [smem:[#allocation0]]
  $region38: #{yolov3_forward.10} parent=0
    _
  %s10 = ssub.s32 1, %s8
  %s11 = scalar_select 0, %s10, %s8
  // Predicated region
  $region2: #{yolov3_forward.10} parent=0 // pred_check
    _
  $region3: #{yolov3_forward.10} parent=0 // pred_check_branch
    %13 = sbr.rel (0) target = $region5
  $region4: #{yolov3_forward.10} parent=0 // pred_region
    _
  $region5: #{yolov3_forward.10} parent=0 // pred_fallthru
    _
  // Predicated region
  $region6: #{yolov3_forward.10} parent=0 // pred_check
    _
  $region7: #{yolov3_forward.10} parent=0 // pred_check_branch
    %15 = sbr.rel (0) target = $region9
  $region8: #{yolov3_forward.10} parent=0 // pred_region
    _
  $region9: #{yolov3_forward.10} parent=0 // pred_fallthru
    _
  // Predicated region
  $region10: #{yolov3_forward.10} parent=0 // pred_check
    _
  $region11: #{yolov3_forward.10} parent=0 // pred_check_branch
    %17 = sbr.rel (0) target = $region13
  $region12: #{yolov3_forward.10} parent=0 // pred_region
    _
  $region13: #{yolov3_forward.10} parent=0 // pred_fallthru
    _
  // Predicated region
  $region14: #{yolov3_forward.10} parent=0 // pred_check
    _
  $region15: #{yolov3_forward.10} parent=0 // pred_check_branch
    %19 = sbr.rel (0) target = $region17
  $region16: #{yolov3_forward.10} parent=0 // pred_region
    _
  $region17: #{yolov3_forward.10} parent=0 // pred_fallthru
    _
  // Predicated region
  $region18: #{yolov3_forward.10} parent=0 // pred_check
    _
  $region19: #{yolov3_forward.10} parent=0 // pred_check_branch
    %21 = sbr.rel (0) target = $region21
  $region20: #{yolov3_forward.10} parent=0 // pred_region
    _
  $region21: #{yolov3_forward.10} parent=0 // pred_fallthru
    _
  %v23 = vld [vmem:[%s0] sm:$0xff]
  %v24 = vld [vmem:[%s0 + $0x8] sm:$0xff]
  %v25 = vld [vmem:[%s0 + $0x10] sm:$0xff]
  %v26 = vld [vmem:[%s0 + $0x18] sm:$0xff]
  %v27 = vld [vmem:[%s0 + $0x20] sm:$0xf]
  %v28 = vld [vmem:[%s0 + $0x24] sm:$0xff]
  %v29 = vld [vmem:[%s0 + $0x2c] sm:$0xff]
  %v30 = vld [vmem:[%s0 + $0x34] sm:$0xff]
  %v31 = vld [vmem:[%s0 + $0x3c] sm:$0xff]
  %v32 = vld [vmem:[%s0 + $0x44] sm:$0xf]
  %v33 = vld [vmem:[%s0 + $0x48] sm:$0xff]
  %v34 = vld [vmem:[%s0 + $0x50] sm:$0xff]
  %v35 = vld [vmem:[%s0 + $0x58] sm:$0xff]
  %v36 = vld [vmem:[%s0 + $0x60] sm:$0xff]
  %v37 = vld [vmem:[%s0 + $0x68] sm:$0xf]
  %v38 = vld [vmem:[%s0 + $0x6c] sm:$0xff]
  %v39 = vld [vmem:[%s0 + $0x74] sm:$0xff]
  %v40 = vld [vmem:[%s0 + $0x7c] sm:$0xff]
  %v41 = vld [vmem:[%s0 + $0x84] sm:$0xff]
  %v42 = vld [vmem:[%s0 + $0x8c] sm:$0xf]
  %v43 = vld [vmem:[%s1] sm:$0xf]
  %v44 = vld [vmem:[%s1 + $0x4] sm:$0xf]
  %v45 = vld [vmem:[%s1 + $0x8] sm:$0xf]
  %v46 = vld [vmem:[%s1 + $0xc] sm:$0xf]
  %v47 = vld [vmem:[%s1 + $0x10] sm:$0xf]
  %v48 = vld [vmem:[%s1 + $0x14] sm:$0xf]
  %v49 = vld [vmem:[%s1 + $0x18] sm:$0xf]
  %v50 = vld [vmem:[%s1 + $0x1c] sm:$0xf]
  %v51 = vld [vmem:[%s1 + $0x20] sm:$0xf]
  %v52 = vld [vmem:[%s1 + $0x24] sm:$0xf]
  %v53 = vld [vmem:[%s1 + $0x28] sm:$0xf]
  %v54 = vld [vmem:[%s1 + $0x2c] sm:$0xf]
  %v55 = vld [vmem:[%s1 + $0x30] sm:$0xf]
  %v56 = vld [vmem:[%s1 + $0x34] sm:$0xf]
  %v57 = vld [vmem:[%s1 + $0x38] sm:$0xf]
  %v58 = vld [vmem:[%s1 + $0x3c] sm:$0xf]
  %v59 = vld [vmem:[%s1 + $0x40] sm:$0xf]
  %v60 = vld [vmem:[%s1 + $0x44] sm:$0xf]
  %v61 = vld [vmem:[%s1 + $0x48] sm:$0xf]
  %v62 = vld [vmem:[%s1 + $0x4c] sm:$0xf]
  %v63 = vld [vmem:[%s1 + $0x50] sm:$0xf]
  %v64 = vld [vmem:[%s1 + $0x54] sm:$0xf]
  %v65 = vld [vmem:[%s1 + $0x58] sm:$0xf]
  %v66 = vld [vmem:[%s1 + $0x5c] sm:$0xf]
  %v67 = vld [vmem:[%s1 + $0x60] sm:$0xf]
  %v68 = vld [vmem:[%s1 + $0x64] sm:$0xf]
  %v69 = vld [vmem:[%s1 + $0x68] sm:$0xf]
  %v70 = vld [vmem:[%s1 + $0x6c] sm:$0xf]
  %v71 = vld [vmem:[%s1 + $0x70] sm:$0xf]
  %v72 = vld [vmem:[%s1 + $0x74] sm:$0xf]
  %v73 = vld [vmem:[%s1 + $0x78] sm:$0xf]
  %v74 = vld [vmem:[%s1 + $0x7c] sm:$0xf]
  %v75 = vld [vmem:[%s1 + $0x80] sm:$0xf]
  %v76 = vld [vmem:[%s1 + $0x84] sm:$0xf]
  %v77 = vld [vmem:[%s1 + $0x88] sm:$0xf]
  %v78 = vld [vmem:[%s1 + $0x8c] sm:$0xf]
  %v79 = vld [vmem:[%s1 + $0x90] sm:$0xf]
  %v80 = vld [vmem:[%s1 + $0x94] sm:$0xf]
  %v81 = vld [vmem:[%s1 + $0x98] sm:$0xf]
  %v82 = vld [vmem:[%s1 + $0x9c] sm:$0xf]
  %v83 = vld [vmem:[%s1 + $0xa0] sm:$0xf]
  %v84 = vld [vmem:[%s1 + $0xa4] sm:$0xf]
  %v85 = vld [vmem:[%s1 + $0xa8] sm:$0xf]
  %v86 = vld [vmem:[%s1 + $0xac] sm:$0xf]
  %v87 = vld [vmem:[%s1 + $0xb0] sm:$0xf]
  %v88 = vld [vmem:[%s1 + $0xb4] sm:$0xf]
  %v89 = vld [vmem:[%s1 + $0xb8] sm:$0xf]
  %v90 = vld [vmem:[%s1 + $0xbc] sm:$0xf]
  %v91 = vld [vmem:[%s1 + $0xc0] sm:$0xf]
  %v92 = vld [vmem:[%s1 + $0xc4] sm:$0xf]
  %v93 = vld [vmem:[%s1 + $0xc8] sm:$0xf]
  %v94 = vld [vmem:[%s1 + $0xcc] sm:$0xf]
  %v95 = vld [vmem:[%s1 + $0xd0] sm:$0xf]
  %v96 = vld [vmem:[%s1 + $0xd4] sm:$0xf]
  %v97 = vld [vmem:[%s1 + $0xd8] sm:$0xf]
  %v98 = vld [vmem:[%s1 + $0xdc] sm:$0xf]
  %v99 = vld [vmem:[%s1 + $0xe0] sm:$0xf]
  %v100 = vld [vmem:[%s1 + $0xe4] sm:$0xf]
  %v101 = vld [vmem:[%s1 + $0xe8] sm:$0xf]
  %v102 = vld [vmem:[%s1 + $0xec] sm:$0xf]
  %v103 = vld [vmem:[%s1 + $0xf0] sm:$0xf]
  %v104 = vld [vmem:[%s1 + $0xf4] sm:$0xf]
  %v105 = vld [vmem:[%s1 + $0xf8] sm:$0xf]
  %v106 = vld [vmem:[%s1 + $0xfc] sm:$0xf]
  %v107 = vld [vmem:[%s1 + $0x100] sm:$0xf]
  %v108 = vld [vmem:[%s1 + $0x104] sm:$0xf]
  %v109 = vld [vmem:[%s1 + $0x108] sm:$0xf]
  %v110 = vld [vmem:[%s1 + $0x10c] sm:$0xf]
  %v111 = vld [vmem:[%s1 + $0x110] sm:$0xf]
  %v112 = vld [vmem:[%s1 + $0x114] sm:$0xf]
  %v113 = vld [vmem:[%s1 + $0x118] sm:$0xf]
  %v114 = vld [vmem:[%s1 + $0x11c] sm:$0xf]
  %v115 = vld [vmem:[%s1 + $0x120] sm:$0xf]
  %v116 = vld [vmem:[%s1 + $0x124] sm:$0xf]
  %v117 = vld [vmem:[%s1 + $0x128] sm:$0xf]
  %v118 = vld [vmem:[%s1 + $0x12c] sm:$0xf]
  %v119 = vld [vmem:[%s1 + $0x130] sm:$0xf]
  %v120 = vld [vmem:[%s1 + $0x134] sm:$0xf]
  %v121 = vld [vmem:[%s1 + $0x138] sm:$0xf]
  %v122 = vld [vmem:[%s1 + $0x13c] sm:$0xf]
  %v123 = vld [vmem:[%s1 + $0x140] sm:$0xf]
  %v124 = vld [vmem:[%s1 + $0x144] sm:$0xf]
  %v125 = vld [vmem:[%s1 + $0x148] sm:$0xf]
  %v126 = vld [vmem:[%s1 + $0x14c] sm:$0xf]
  %v127 = vld [vmem:[%s1 + $0x150] sm:$0xf]
  %v128 = vld [vmem:[%s1 + $0x154] sm:$0xf]
  %v129 = vld [vmem:[%s1 + $0x158] sm:$0xf]
  %v130 = vld [vmem:[%s1 + $0x15c] sm:$0xf]
  %v131 = vld [vmem:[%s1 + $0x160] sm:$0xf]
  %v132 = vld [vmem:[%s1 + $0x164] sm:$0xf]
  %v133 = vld [vmem:[%s1 + $0x168] sm:$0xf]
  %v134 = vld [vmem:[%s1 + $0x16c] sm:$0xf]
  %v135 = vld [vmem:[%s1 + $0x170] sm:$0xf]
  %v136 = vld [vmem:[%s1 + $0x174] sm:$0xf]
  %v137 = vld [vmem:[%s1 + $0x178] sm:$0xf]
  %v138 = vld [vmem:[%s1 + $0x17c] sm:$0xf]
  %v139 = vld [vmem:[%s1 + $0x180] sm:$0xf]
  %v140 = vld [vmem:[%s1 + $0x184] sm:$0xf]
  %v141 = vld [vmem:[%s1 + $0x188] sm:$0xf]
  %v142 = vld [vmem:[%s1 + $0x18c] sm:$0xf]
  %v143 = vld [vmem:[%s1 + $0x190] sm:$0xf]
  %v144 = vld [vmem:[%s1 + $0x194] sm:$0xf]
  %v145 = vld [vmem:[%s1 + $0x198] sm:$0xf]
  %v146 = vld [vmem:[%s1 + $0x19c] sm:$0xf]
  %v147 = vld [vmem:[%s1 + $0x1a0] sm:$0xf]
  %v148 = vld [vmem:[%s1 + $0x1a4] sm:$0xf]
  %v149 = vld [vmem:[%s1 + $0x1a8] sm:$0xf]
  %v150 = vld [vmem:[%s1 + $0x1ac] sm:$0xf]
  %v151 = vld [vmem:[%s1 + $0x1b0] sm:$0xf]
  %v152 = vld [vmem:[%s1 + $0x1b4] sm:$0xf]
  %v153 = vld [vmem:[%s1 + $0x1b8] sm:$0xf]
  %v154 = vld [vmem:[%s1 + $0x1bc] sm:$0xf]
  %v155 = vld [vmem:[%s1 + $0x1c0] sm:$0xf]
  %v156 = vld [vmem:[%s1 + $0x1c4] sm:$0xf]
  %v157 = vld [vmem:[%s1 + $0x1c8] sm:$0xf]
  %v158 = vld [vmem:[%s1 + $0x1cc] sm:$0xf]
  %v159 = vld [vmem:[%s1 + $0x1d0] sm:$0xf]
  %v160 = vld [vmem:[%s1 + $0x1d4] sm:$0xf]
  %v161 = vld [vmem:[%s1 + $0x1d8] sm:$0xf]
  %v162 = vld [vmem:[%s1 + $0x1dc] sm:$0xf]
  %v163 = vld [vmem:[%s1 + $0x1e0] sm:$0xf]
  %v164 = vld [vmem:[%s1 + $0x1e4] sm:$0xf]
  %v165 = vld [vmem:[%s1 + $0x1e8] sm:$0xf]
  %v166 = vld [vmem:[%s1 + $0x1ec] sm:$0xf]
  %v167 = vld [vmem:[%s1 + $0x1f0] sm:$0xf]
  %v168 = vld [vmem:[%s1 + $0x1f4] sm:$0xf]
  %v169 = vld [vmem:[%s1 + $0x1f8] sm:$0xf]
  %v170 = vld [vmem:[%s1 + $0x1fc] sm:$0xf]
  %v171 = vld [vmem:[%s1 + $0x200] sm:$0xf]
  %v172 = vld [vmem:[%s1 + $0x204] sm:$0xf]
  %v173 = vld [vmem:[%s1 + $0x208] sm:$0xf]
  %v174 = vld [vmem:[%s1 + $0x20c] sm:$0xf]
  %v175 = vld [vmem:[%s1 + $0x210] sm:$0xf]
  %v176 = vld [vmem:[%s1 + $0x214] sm:$0xf]
  %v177 = vld [vmem:[%s1 + $0x218] sm:$0xf]
  %v178 = vld [vmem:[%s1 + $0x21c] sm:$0xf]
  %v179 = vld [vmem:[%s1 + $0x220] sm:$0xf]
  %v180 = vld [vmem:[%s1 + $0x224] sm:$0xf]
  %v181 = vld [vmem:[%s1 + $0x228] sm:$0xf]
  %v182 = vld [vmem:[%s1 + $0x22c] sm:$0xf]
  %v183 = vld [vmem:[%s1 + $0x230] sm:$0xf]
  %v184 = vld [vmem:[%s1 + $0x234] sm:$0xf]
  %v185 = vld [vmem:[%s1 + $0x238] sm:$0xf]
  %v186 = vld [vmem:[%s1 + $0x23c] sm:$0xf]
  %v187 = vld [vmem:[%s2] sm:$0x1]
  %v189 = vlaneseq
  %v190 = vshrl.u32 %v189, 7
  %v191 = vsub.s32 0, %v190
  %v192 = vrot.slane %v187, %v191
  %v214 = vunpack.c.l.b16 %v23
  %v215 = vunpack.c.h.b16 %v23
  %v216 = vunpack.c.l.b16 %v24
  %v217 = vunpack.c.h.b16 %v24
  %v218 = vunpack.c.l.b16 %v25
  %v219 = vunpack.c.h.b16 %v25
  %v220 = vunpack.c.l.b16 %v26
  %v221 = vunpack.c.h.b16 %v26
  %v222 = vunpack.c.l.b16 %v27
  %v223 = vunpack.c.l.b16 %v28
  %v224 = vunpack.c.h.b16 %v28
  %v225 = vunpack.c.l.b16 %v29
  %v226 = vunpack.c.h.b16 %v29
  %v227 = vunpack.c.l.b16 %v30
  %v228 = vunpack.c.h.b16 %v30
  %v229 = vunpack.c.l.b16 %v31
  %v230 = vunpack.c.h.b16 %v31
  %v231 = vunpack.c.l.b16 %v32
  %v232 = vunpack.c.l.b16 %v33
  %v233 = vunpack.c.h.b16 %v33
  %v234 = vunpack.c.l.b16 %v34
  %v235 = vunpack.c.h.b16 %v34
  %v236 = vunpack.c.l.b16 %v35
  %v237 = vunpack.c.h.b16 %v35
  %v238 = vunpack.c.l.b16 %v36
  %v239 = vunpack.c.h.b16 %v36
  %v240 = vunpack.c.l.b16 %v37
  %v241 = vunpack.c.l.b16 %v38
  %v242 = vunpack.c.h.b16 %v38
  %v243 = vunpack.c.l.b16 %v39
  %v244 = vunpack.c.h.b16 %v39
  %v245 = vunpack.c.l.b16 %v40
  %v246 = vunpack.c.h.b16 %v40
  %v247 = vunpack.c.l.b16 %v41
  %v248 = vunpack.c.h.b16 %v41
  %v249 = vunpack.c.l.b16 %v42
  %v250 = vpack.c.b16 %v223, %v214
  %v251 = vpack.c.b16 %v224, %v215
  %v252 = vpack.c.b16 %v225, %v216
  %v253 = vpack.c.b16 %v226, %v217
  %v254 = vpack.c.b16 %v227, %v218
  %v255 = vpack.c.b16 %v228, %v219
  %v256 = vpack.c.b16 %v229, %v220
  %v257 = vpack.c.b16 %v230, %v221
  %v258 = vpack.c.b16 %v231, %v222
  %v259 = vpack.c.b16 %v241, %v232
  %v260 = vpack.c.b16 %v242, %v233
  %v261 = vpack.c.b16 %v243, %v234
  %v262 = vpack.c.b16 %v244, %v235
  %v263 = vpack.c.b16 %v245, %v236
  %v264 = vpack.c.b16 %v246, %v237
  %v265 = vpack.c.b16 %v247, %v238
  %v266 = vpack.c.b16 %v248, %v239
  %v267 = vpack.c.b16 %v249, %v240
  %v430 = vunpack.c.l.b16 %v43
  %v431 = vunpack.c.l.b16 %v44
  %v432 = vunpack.c.l.b16 %v45
  %v433 = vunpack.c.l.b16 %v46
  %v434 = vunpack.c.l.b16 %v47
  %v435 = vunpack.c.l.b16 %v48
  %v436 = vunpack.c.l.b16 %v49
  %v437 = vunpack.c.l.b16 %v50
  %v438 = vunpack.c.l.b16 %v51
  %v439 = vunpack.c.l.b16 %v52
  %v440 = vunpack.c.l.b16 %v53
  %v441 = vunpack.c.l.b16 %v54
  %v442 = vunpack.c.l.b16 %v55
  %v443 = vunpack.c.l.b16 %v56
  %v444 = vunpack.c.l.b16 %v57
  %v445 = vunpack.c.l.b16 %v58
  %v446 = vunpack.c.l.b16 %v59
  %v447 = vunpack.c.l.b16 %v60
  %v448 = vunpack.c.l.b16 %v61
  %v449 = vunpack.c.l.b16 %v62
  %v450 = vunpack.c.l.b16 %v63
  %v451 = vunpack.c.l.b16 %v64
  %v452 = vunpack.c.l.b16 %v65
  %v453 = vunpack.c.l.b16 %v66
  %v454 = vunpack.c.l.b16 %v67
  %v455 = vunpack.c.l.b16 %v68
  %v456 = vunpack.c.l.b16 %v69
  %v457 = vunpack.c.l.b16 %v70
  %v458 = vunpack.c.l.b16 %v71
  %v459 = vunpack.c.l.b16 %v72
  %v460 = vunpack.c.l.b16 %v73
  %v461 = vunpack.c.l.b16 %v74
  %v462 = vunpack.c.l.b16 %v75
  %v463 = vunpack.c.l.b16 %v76
  %v464 = vunpack.c.l.b16 %v77
  %v465 = vunpack.c.l.b16 %v78
  %v466 = vunpack.c.l.b16 %v79
  %v467 = vunpack.c.l.b16 %v80
  %v468 = vunpack.c.l.b16 %v81
  %v469 = vunpack.c.l.b16 %v82
  %v470 = vunpack.c.l.b16 %v83
  %v471 = vunpack.c.l.b16 %v84
  %v472 = vunpack.c.l.b16 %v85
  %v473 = vunpack.c.l.b16 %v86
  %v474 = vunpack.c.l.b16 %v87
  %v475 = vunpack.c.l.b16 %v88
  %v476 = vunpack.c.l.b16 %v89
  %v477 = vunpack.c.l.b16 %v90
  %v478 = vunpack.c.l.b16 %v91
  %v479 = vunpack.c.l.b16 %v92
  %v480 = vunpack.c.l.b16 %v93
  %v481 = vunpack.c.l.b16 %v94
  %v482 = vunpack.c.l.b16 %v95
  %v483 = vunpack.c.l.b16 %v96
  %v484 = vunpack.c.l.b16 %v97
  %v485 = vunpack.c.l.b16 %v98
  %v486 = vunpack.c.l.b16 %v99
  %v487 = vunpack.c.l.b16 %v100
  %v488 = vunpack.c.l.b16 %v101
  %v489 = vunpack.c.l.b16 %v102
  %v490 = vunpack.c.l.b16 %v103
  %v491 = vunpack.c.l.b16 %v104
  %v492 = vunpack.c.l.b16 %v105
  %v493 = vunpack.c.l.b16 %v106
  %v494 = vunpack.c.l.b16 %v107
  %v495 = vunpack.c.l.b16 %v108
  %v496 = vunpack.c.l.b16 %v109
  %v497 = vunpack.c.l.b16 %v110
  %v498 = vunpack.c.l.b16 %v111
  %v499 = vunpack.c.l.b16 %v112
  %v500 = vunpack.c.l.b16 %v113
  %v501 = vunpack.c.l.b16 %v114
  %v502 = vunpack.c.l.b16 %v115
  %v503 = vunpack.c.l.b16 %v116
  %v504 = vunpack.c.l.b16 %v117
  %v505 = vunpack.c.l.b16 %v118
  %v506 = vunpack.c.l.b16 %v119
  %v507 = vunpack.c.l.b16 %v120
  %v508 = vunpack.c.l.b16 %v121
  %v509 = vunpack.c.l.b16 %v122
  %v510 = vunpack.c.l.b16 %v123
  %v511 = vunpack.c.l.b16 %v124
  %v512 = vunpack.c.l.b16 %v125
  %v513 = vunpack.c.l.b16 %v126
  %v514 = vunpack.c.l.b16 %v127
  %v515 = vunpack.c.l.b16 %v128
  %v516 = vunpack.c.l.b16 %v129
  %v517 = vunpack.c.l.b16 %v130
  %v518 = vunpack.c.l.b16 %v131
  %v519 = vunpack.c.l.b16 %v132
  %v520 = vunpack.c.l.b16 %v133
  %v521 = vunpack.c.l.b16 %v134
  %v522 = vunpack.c.l.b16 %v135
  %v523 = vunpack.c.l.b16 %v136
  %v524 = vunpack.c.l.b16 %v137
  %v525 = vunpack.c.l.b16 %v138
  %v526 = vunpack.c.l.b16 %v139
  %v527 = vunpack.c.l.b16 %v140
  %v528 = vunpack.c.l.b16 %v141
  %v529 = vunpack.c.l.b16 %v142
  %v530 = vunpack.c.l.b16 %v143
  %v531 = vunpack.c.l.b16 %v144
  %v532 = vunpack.c.l.b16 %v145
  %v533 = vunpack.c.l.b16 %v146
  %v534 = vunpack.c.l.b16 %v147
  %v535 = vunpack.c.l.b16 %v148
  %v536 = vunpack.c.l.b16 %v149
  %v537 = vunpack.c.l.b16 %v150
  %v538 = vunpack.c.l.b16 %v151
  %v539 = vunpack.c.l.b16 %v152
  %v540 = vunpack.c.l.b16 %v153
  %v541 = vunpack.c.l.b16 %v154
  %v542 = vunpack.c.l.b16 %v155
  %v543 = vunpack.c.l.b16 %v156
  %v544 = vunpack.c.l.b16 %v157
  %v545 = vunpack.c.l.b16 %v158
  %v546 = vunpack.c.l.b16 %v159
  %v547 = vunpack.c.l.b16 %v160
  %v548 = vunpack.c.l.b16 %v161
  %v549 = vunpack.c.l.b16 %v162
  %v550 = vunpack.c.l.b16 %v163
  %v551 = vunpack.c.l.b16 %v164
  %v552 = vunpack.c.l.b16 %v165
  %v553 = vunpack.c.l.b16 %v166
  %v554 = vunpack.c.l.b16 %v167
  %v555 = vunpack.c.l.b16 %v168
  %v556 = vunpack.c.l.b16 %v169
  %v557 = vunpack.c.l.b16 %v170
  %v558 = vunpack.c.l.b16 %v171
  %v559 = vunpack.c.l.b16 %v172
  %v560 = vunpack.c.l.b16 %v173
  %v561 = vunpack.c.l.b16 %v174
  %v562 = vunpack.c.l.b16 %v175
  %v563 = vunpack.c.l.b16 %v176
  %v564 = vunpack.c.l.b16 %v177
  %v565 = vunpack.c.l.b16 %v178
  %v566 = vunpack.c.l.b16 %v179
  %v567 = vunpack.c.l.b16 %v180
  %v568 = vunpack.c.l.b16 %v181
  %v569 = vunpack.c.l.b16 %v182
  %v570 = vunpack.c.l.b16 %v183
  %v571 = vunpack.c.l.b16 %v184
  %v572 = vunpack.c.l.b16 %v185
  %v573 = vunpack.c.l.b16 %v186
  %v574 = vpack.c.b16 %v431, %v430
  %v575 = vpack.c.b16 %v433, %v432
  %v576 = vpack.c.b16 %v435, %v434
  %v577 = vpack.c.b16 %v437, %v436
  %v578 = vpack.c.b16 %v439, %v438
  %v579 = vpack.c.b16 %v441, %v440
  %v580 = vpack.c.b16 %v443, %v442
  %v581 = vpack.c.b16 %v445, %v444
  %v582 = vpack.c.b16 %v447, %v446
  %v583 = vpack.c.b16 %v449, %v448
  %v584 = vpack.c.b16 %v451, %v450
  %v585 = vpack.c.b16 %v453, %v452
  %v586 = vpack.c.b16 %v455, %v454
  %v587 = vpack.c.b16 %v457, %v456
  %v588 = vpack.c.b16 %v459, %v458
  %v589 = vpack.c.b16 %v461, %v460
  %v590 = vpack.c.b16 %v463, %v462
  %v591 = vpack.c.b16 %v465, %v464
  %v592 = vpack.c.b16 %v467, %v466
  %v593 = vpack.c.b16 %v469, %v468
  %v594 = vpack.c.b16 %v471, %v470
  %v595 = vpack.c.b16 %v473, %v472
  %v596 = vpack.c.b16 %v475, %v474
  %v597 = vpack.c.b16 %v477, %v476
  %v598 = vpack.c.b16 %v479, %v478
  %v599 = vpack.c.b16 %v481, %v480
  %v600 = vpack.c.b16 %v483, %v482
  %v601 = vpack.c.b16 %v485, %v484
  %v602 = vpack.c.b16 %v487, %v486
  %v603 = vpack.c.b16 %v489, %v488
  %v604 = vpack.c.b16 %v491, %v490
  %v605 = vpack.c.b16 %v493, %v492
  %v606 = vpack.c.b16 %v495, %v494
  %v607 = vpack.c.b16 %v497, %v496
  %v608 = vpack.c.b16 %v499, %v498
  %v609 = vpack.c.b16 %v501, %v500
  %v610 = vpack.c.b16 %v503, %v502
  %v611 = vpack.c.b16 %v505, %v504
  %v612 = vpack.c.b16 %v507, %v506
  %v613 = vpack.c.b16 %v509, %v508
  %v614 = vpack.c.b16 %v511, %v510
  %v615 = vpack.c.b16 %v513, %v512
  %v616 = vpack.c.b16 %v515, %v514
  %v617 = vpack.c.b16 %v517, %v516
  %v618 = vpack.c.b16 %v519, %v518
  %v619 = vpack.c.b16 %v521, %v520
  %v620 = vpack.c.b16 %v523, %v522
  %v621 = vpack.c.b16 %v525, %v524
  %v622 = vpack.c.b16 %v527, %v526
  %v623 = vpack.c.b16 %v529, %v528
  %v624 = vpack.c.b16 %v531, %v530
  %v625 = vpack.c.b16 %v533, %v532
  %v626 = vpack.c.b16 %v535, %v534
  %v627 = vpack.c.b16 %v537, %v536
  %v628 = vpack.c.b16 %v539, %v538
  %v629 = vpack.c.b16 %v541, %v540
  %v630 = vpack.c.b16 %v543, %v542
  %v631 = vpack.c.b16 %v545, %v544
  %v632 = vpack.c.b16 %v547, %v546
  %v633 = vpack.c.b16 %v549, %v548
  %v634 = vpack.c.b16 %v551, %v550
  %v635 = vpack.c.b16 %v553, %v552
  %v636 = vpack.c.b16 %v555, %v554
  %v637 = vpack.c.b16 %v557, %v556
  %v638 = vpack.c.b16 %v559, %v558
  %v639 = vpack.c.b16 %v561, %v560
  %v640 = vpack.c.b16 %v563, %v562
  %v641 = vpack.c.b16 %v565, %v564
  %v642 = vpack.c.b16 %v567, %v566
  %v643 = vpack.c.b16 %v569, %v568
  %v644 = vpack.c.b16 %v571, %v570
  %v645 = vpack.c.b16 %v573, %v572
  %718 = vmatprep.subr.bf16.mxu0 0
  %719 = vmatpush1.bf16.msra.mxu0 %v574
  %720 = vmatprep.subr.bf16.mxu0 0
  %721 = vmatpush1.bf16.msra.mxu0 %v575
  %722 = vmatprep.subr.bf16.mxu0 0
  %723 = vmatpush1.bf16.msra.mxu0 %v576
  %724 = vmatprep.subr.bf16.mxu0 0
  %725 = vmatpush1.bf16.msra.mxu0 %v577
  %726 = vmatprep.subr.bf16.mxu0 0
  %727 = vmatpush1.bf16.msra.mxu0 %v578
  %728 = vmatprep.subr.bf16.mxu0 0
  %729 = vmatpush1.bf16.msra.mxu0 %v579
  %730 = vmatprep.subr.bf16.mxu0 0
  %731 = vmatpush1.bf16.msra.mxu0 %v580
  %732 = vmatprep.subr.bf16.mxu0 0
  %733 = vmatpush1.bf16.msra.mxu0 %v581
  %734 = vmatprep.subr.bf16.mxu0 0
  %735 = vmatpush1.bf16.msra.mxu0 %v582
  %736 = vmatprep.subr.bf16.mxu0 0
  %737 = vmatpush1.bf16.msra.mxu0 %v583
  %738 = vmatprep.subr.bf16.mxu0 0
  %739 = vmatpush1.bf16.msra.mxu0 %v584
  %740 = vmatprep.subr.bf16.mxu0 0
  %741 = vmatpush1.bf16.msra.mxu0 %v585
  %742 = vmatprep.subr.bf16.mxu0 0
  %743 = vmatpush1.bf16.msra.mxu0 %v586
  %744 = vmatprep.subr.bf16.mxu0 0
  %745 = vmatpush1.bf16.msra.mxu0 %v587
  %746 = vmatprep.subr.bf16.mxu0 0
  %747 = vmatpush1.bf16.msra.mxu0 %v588
  %748 = vmatprep.subr.bf16.mxu0 0
  %749 = vmatpush1.bf16.msra.mxu0 %v589
  %750 = vmatprep.mubr.bf16.mxu0 %v251
  %751 = vmatmul.mubr.bf16.gmra.mrb[0].mxu0 %v250
  %v752 = vpop.f32.mrb[0].mxu0
  %v753 = vadd.f32 %v192, %v752
  %v754 = vpop.f32.mrb[0].mxu0
  %v755 = vpop.f32.mrb[0].mxu0
  %v756 = vadd.f32 %v192, %v755
  %v757 = vpop.f32.mrb[0].mxu0
  %758 = vmatprep.mubr.bf16.mxu0 %v260
  %759 = vmatmul.mubr.bf16.gmra.mrb[0].mxu0 %v259
  %v760 = vpop.f32.mrb[0].mxu0
  %v761 = vadd.f32 %v192, %v760
  %v762 = vpop.f32.mrb[0].mxu0
  %v763 = vpop.f32.mrb[0].mxu0
  %v764 = vadd.f32 %v192, %v763
  %v765 = vpop.f32.mrb[0].mxu0
  %766 = vdwg.mxu0
  %767 = vmatprep.subr.bf16.mxu0 0
  %768 = vmatpush1.bf16.msra.mxu0 %v590
  %769 = vmatprep.subr.bf16.mxu0 0
  %770 = vmatpush1.bf16.msra.mxu0 %v591
  %771 = vmatprep.subr.bf16.mxu0 0
  %772 = vmatpush1.bf16.msra.mxu0 %v592
  %773 = vmatprep.subr.bf16.mxu0 0
  %774 = vmatpush1.bf16.msra.mxu0 %v593
  %775 = vmatprep.subr.bf16.mxu0 0
  %776 = vmatpush1.bf16.msra.mxu0 %v594
  %777 = vmatprep.subr.bf16.mxu0 0
  %778 = vmatpush1.bf16.msra.mxu0 %v595
  %779 = vmatprep.subr.bf16.mxu0 0
  %780 = vmatpush1.bf16.msra.mxu0 %v596
  %781 = vmatprep.subr.bf16.mxu0 0
  %782 = vmatpush1.bf16.msra.mxu0 %v597
  %783 = vmatprep.subr.bf16.mxu0 0
  %784 = vmatpush1.bf16.msra.mxu0 %v598
  %785 = vmatprep.subr.bf16.mxu0 0
  %786 = vmatpush1.bf16.msra.mxu0 %v599
  %787 = vmatprep.subr.bf16.mxu0 0
  %788 = vmatpush1.bf16.msra.mxu0 %v600
  %789 = vmatprep.subr.bf16.mxu0 0
  %790 = vmatpush1.bf16.msra.mxu0 %v601
  %791 = vmatprep.subr.bf16.mxu0 0
  %792 = vmatpush1.bf16.msra.mxu0 %v602
  %793 = vmatprep.subr.bf16.mxu0 0
  %794 = vmatpush1.bf16.msra.mxu0 %v603
  %795 = vmatprep.subr.bf16.mxu0 0
  %796 = vmatpush1.bf16.msra.mxu0 %v604
  %797 = vmatprep.subr.bf16.mxu0 0
  %798 = vmatpush1.bf16.msra.mxu0 %v605
  %799 = vmatprep.mubr.bf16.mxu0 %v253
  %800 = vmatmul.mubr.bf16.gmra.mrb[0].mxu0 %v252
  %v801 = vpop.f32.mrb[0].mxu0
  %v802 = vadd.f32 %v753, %v801
  %v803 = vpop.f32.mrb[0].mxu0
  %v804 = vpop.f32.mrb[0].mxu0
  %v805 = vadd.f32 %v756, %v804
  %v806 = vpop.f32.mrb[0].mxu0
  %807 = vmatprep.mubr.bf16.mxu0 %v262
  %808 = vmatmul.mubr.bf16.gmra.mrb[0].mxu0 %v261
  %v809 = vpop.f32.mrb[0].mxu0
  %v810 = vadd.f32 %v761, %v809
  %v811 = vpop.f32.mrb[0].mxu0
  %v812 = vpop.f32.mrb[0].mxu0
  %v813 = vadd.f32 %v764, %v812
  %v814 = vpop.f32.mrb[0].mxu0
  %815 = vdwg.mxu0
  %816 = vmatprep.subr.bf16.mxu0 0
  %817 = vmatpush1.bf16.msra.mxu0 %v606
  %818 = vmatprep.subr.bf16.mxu0 0
  %819 = vmatpush1.bf16.msra.mxu0 %v607
  %820 = vmatprep.subr.bf16.mxu0 0
  %821 = vmatpush1.bf16.msra.mxu0 %v608
  %822 = vmatprep.subr.bf16.mxu0 0
  %823 = vmatpush1.bf16.msra.mxu0 %v609
  %824 = vmatprep.subr.bf16.mxu0 0
  %825 = vmatpush1.bf16.msra.mxu0 %v610
  %826 = vmatprep.subr.bf16.mxu0 0
  %827 = vmatpush1.bf16.msra.mxu0 %v611
  %828 = vmatprep.subr.bf16.mxu0 0
  %829 = vmatpush1.bf16.msra.mxu0 %v612
  %830 = vmatprep.subr.bf16.mxu0 0
  %831 = vmatpush1.bf16.msra.mxu0 %v613
  %832 = vmatprep.subr.bf16.mxu0 0
  %833 = vmatpush1.bf16.msra.mxu0 %v614
  %834 = vmatprep.subr.bf16.mxu0 0
  %835 = vmatpush1.bf16.msra.mxu0 %v615
  %836 = vmatprep.subr.bf16.mxu0 0
  %837 = vmatpush1.bf16.msra.mxu0 %v616
  %838 = vmatprep.subr.bf16.mxu0 0
  %839 = vmatpush1.bf16.msra.mxu0 %v617
  %840 = vmatprep.subr.bf16.mxu0 0
  %841 = vmatpush1.bf16.msra.mxu0 %v618
  %842 = vmatprep.subr.bf16.mxu0 0
  %843 = vmatpush1.bf16.msra.mxu0 %v619
  %844 = vmatprep.subr.bf16.mxu0 0
  %845 = vmatpush1.bf16.msra.mxu0 %v620
  %846 = vmatprep.subr.bf16.mxu0 0
  %847 = vmatpush1.bf16.msra.mxu0 %v621
  %848 = vmatprep.mubr.bf16.mxu0 %v255
  %849 = vmatmul.mubr.bf16.gmra.mrb[0].mxu0 %v254
  %v850 = vpop.f32.mrb[0].mxu0
  %v851 = vadd.f32 %v802, %v850
  %v852 = vpop.f32.mrb[0].mxu0
  %v853 = vpop.f32.mrb[0].mxu0
  %v854 = vadd.f32 %v805, %v853
  %v855 = vpop.f32.mrb[0].mxu0
  %856 = vmatprep.mubr.bf16.mxu0 %v264
  %857 = vmatmul.mubr.bf16.gmra.mrb[0].mxu0 %v263
  %v858 = vpop.f32.mrb[0].mxu0
  %v859 = vadd.f32 %v810, %v858
  %v860 = vpop.f32.mrb[0].mxu0
  %v861 = vpop.f32.mrb[0].mxu0
  %v862 = vadd.f32 %v813, %v861
  %v863 = vpop.f32.mrb[0].mxu0
  %864 = vdwg.mxu0
  %865 = vmatprep.subr.bf16.mxu0 0
  %866 = vmatpush1.bf16.msra.mxu0 %v622
  %867 = vmatprep.subr.bf16.mxu0 0
  %868 = vmatpush1.bf16.msra.mxu0 %v623
  %869 = vmatprep.subr.bf16.mxu0 0
  %870 = vmatpush1.bf16.msra.mxu0 %v624
  %871 = vmatprep.subr.bf16.mxu0 0
  %872 = vmatpush1.bf16.msra.mxu0 %v625
  %873 = vmatprep.subr.bf16.mxu0 0
  %874 = vmatpush1.bf16.msra.mxu0 %v626
  %875 = vmatprep.subr.bf16.mxu0 0
  %876 = vmatpush1.bf16.msra.mxu0 %v627
  %877 = vmatprep.subr.bf16.mxu0 0
  %878 = vmatpush1.bf16.msra.mxu0 %v628
  %879 = vmatprep.subr.bf16.mxu0 0
  %880 = vmatpush1.bf16.msra.mxu0 %v629
  %881 = vmatprep.subr.bf16.mxu0 0
  %882 = vmatpush1.bf16.msra.mxu0 %v630
  %883 = vmatprep.subr.bf16.mxu0 0
  %884 = vmatpush1.bf16.msra.mxu0 %v631
  %885 = vmatprep.subr.bf16.mxu0 0
  %886 = vmatpush1.bf16.msra.mxu0 %v632
  %887 = vmatprep.subr.bf16.mxu0 0
  %888 = vmatpush1.bf16.msra.mxu0 %v633
  %889 = vmatprep.subr.bf16.mxu0 0
  %890 = vmatpush1.bf16.msra.mxu0 %v634
  %891 = vmatprep.subr.bf16.mxu0 0
  %892 = vmatpush1.bf16.msra.mxu0 %v635
  %893 = vmatprep.subr.bf16.mxu0 0
  %894 = vmatpush1.bf16.msra.mxu0 %v636
  %895 = vmatprep.subr.bf16.mxu0 0
  %896 = vmatpush1.bf16.msra.mxu0 %v637
  %897 = vmatprep.mubr.bf16.mxu0 %v257
  %898 = vmatmul.mubr.bf16.gmra.mrb[0].mxu0 %v256
  %v899 = vpop.f32.mrb[0].mxu0
  %v900 = vadd.f32 %v851, %v899
  %v901 = vpop.f32.mrb[0].mxu0
  %v902 = vpop.f32.mrb[0].mxu0
  %v903 = vadd.f32 %v854, %v902
  %v904 = vpop.f32.mrb[0].mxu0
  %905 = vmatprep.mubr.bf16.mxu0 %v266
  %906 = vmatmul.mubr.bf16.gmra.mrb[0].mxu0 %v265
  %v907 = vpop.f32.mrb[0].mxu0
  %v908 = vadd.f32 %v859, %v907
  %v909 = vpop.f32.mrb[0].mxu0
  %v910 = vpop.f32.mrb[0].mxu0
  %v911 = vadd.f32 %v862, %v910
  %v912 = vpop.f32.mrb[0].mxu0
  %913 = vdwg.mxu0
  %914 = vmatprep.subr.bf16.mxu0 0
  %915 = vmatpush1.bf16.msra.mxu0 %v638
  %916 = vmatprep.subr.bf16.mxu0 0
  %917 = vmatpush1.bf16.msra.mxu0 %v639
  %918 = vmatprep.subr.bf16.mxu0 0
  %919 = vmatpush1.bf16.msra.mxu0 %v640
  %920 = vmatprep.subr.bf16.mxu0 0
  %921 = vmatpush1.bf16.msra.mxu0 %v641
  %922 = vmatprep.subr.bf16.mxu0 0
  %923 = vmatpush1.bf16.msra.mxu0 %v642
  %924 = vmatprep.subr.bf16.mxu0 0
  %925 = vmatpush1.bf16.msra.mxu0 %v643
  %926 = vmatprep.subr.bf16.mxu0 0
  %927 = vmatpush1.bf16.msra.mxu0 %v644
  %928 = vmatprep.subr.bf16.mxu0 0
  %929 = vmatpush1.bf16.msra.mxu0 %v645
  %930 = vmatprep.subr.bf16.mxu0 0
  %931 = vmatpush1.bf16.msra.mxu0 0
  %932 = vmatprep.subr.bf16.mxu0 0
  %933 = vmatpush1.bf16.msra.mxu0 0
  %934 = vmatprep.subr.bf16.mxu0 0
  %935 = vmatpush1.bf16.msra.mxu0 0
  %936 = vmatprep.subr.bf16.mxu0 0
  %937 = vmatpush1.bf16.msra.mxu0 0
  %938 = vmatprep.subr.bf16.mxu0 0
  %939 = vmatpush1.bf16.msra.mxu0 0
  %940 = vmatprep.subr.bf16.mxu0 0
  %941 = vmatpush1.bf16.msra.mxu0 0
  %942 = vmatprep.subr.bf16.mxu0 0
  %943 = vmatpush1.bf16.msra.mxu0 0
  %944 = vmatprep.subr.bf16.mxu0 0
  %945 = vmatpush1.bf16.msra.mxu0 0
  %946 = vmatprep.mubr.bf16.mxu0 0
  %947 = vmatmul.mubr.bf16.gmra.mrb[0].mxu0 %v258
  %v948 = vpop.f32.mrb[0].mxu0
  %v949 = vadd.f32 %v900, %v948
  %v950 = vpop.f32.mrb[0].mxu0
  %v951 = vpop.f32.mrb[0].mxu0
  %v952 = vadd.f32 %v903, %v951
  %v953 = vpop.f32.mrb[0].mxu0
  %954 = vmatprep.mubr.bf16.mxu0 0
  %955 = vmatmul.mubr.bf16.gmra.mrb[0].mxu0 %v267
  %v956 = vpop.f32.mrb[0].mxu0
  %v957 = vadd.f32 %v908, %v956
  %v958 = vpop.f32.mrb[0].mxu0
  %v959 = vpop.f32.mrb[0].mxu0
  %v960 = vadd.f32 %v911, %v959
  %v961 = vpop.f32.mrb[0].mxu0
  %962 = vdwg.mxu0
  %vm963 = vcmp.gt.f32.partialorder %v949, 0.0
  %vm964 = vcmp.gt.f32.partialorder %v952, 0.0
  %vm965 = vcmp.gt.f32.partialorder %v957, 0.0
  %vm966 = vcmp.gt.f32.partialorder %v960, 0.0
  %v967 = vmul.f32 %v949, 0.1
  %v968 = vmul.f32 %v952, 0.1
  %v969 = vmul.f32 %v957, 0.1
  %v970 = vmul.f32 %v960, 0.1
  %v971 = vsel %vm963, %v949, %v967
  %v972 = vsel %vm964, %v952, %v968
  %v973 = vsel %vm965, %v957, %v969
  %v974 = vsel %vm966, %v960, %v970
  %v975 = vpack.c.bf16 %v972, %v971
  %v976 = vpack.c.bf16 %v974, %v973
  %v979 = vunpack.c.l.b16 %v975
  %v980 = vunpack.c.h.b16 %v975
  %v981 = vunpack.c.l.b16 %v976
  %v982 = vunpack.c.h.b16 %v976
  %v983 = vpack.c.b16 %v979, %v979
  %v984 = vpack.c.b16 %v980, %v980
  %v985 = vpack.c.b16 %v981, %v981
  %v986 = vpack.c.b16 %v982, %v982
  %991 = vst [vmem:[%s5] sm:$0xf] %v983
  %992 = vst [vmem:[%s5 + $0x4] sm:$0xf] %v984
  %993 = vst [vmem:[%s5 + $0x8] sm:$0xf] %v985
  %994 = vst [vmem:[%s5 + $0xc] sm:$0xf] %v986
  %v995 = vld [vmem:[%s3] sm:$0xf]
  %v996 = vld [vmem:[%s3 + $0x4] sm:$0xf]
  %v997 = vld [vmem:[%s3 + $0x8] sm:$0xf]
  %v998 = vld [vmem:[%s3 + $0xc] sm:$0xf]
  %v999 = vld [vmem:[%s3 + $0x10] sm:$0xf]
  %v1000 = vld [vmem:[%s3 + $0x14] sm:$0xf]
  %v1001 = vld [vmem:[%s3 + $0x18] sm:$0xf]
  %v1002 = vld [vmem:[%s3 + $0x1c] sm:$0xf]
  %v1003 = vld [vmem:[%s3 + $0x20] sm:$0xf]
  %v1004 = vld [vmem:[%s3 + $0x24] sm:$0xf]
  %v1005 = vld [vmem:[%s3 + $0x28] sm:$0xf]
  %v1006 = vld [vmem:[%s3 + $0x2c] sm:$0xf]
  %v1007 = vld [vmem:[%s3 + $0x30] sm:$0xf]
  %v1008 = vld [vmem:[%s3 + $0x34] sm:$0xf]
  %v1009 = vld [vmem:[%s3 + $0x38] sm:$0xf]
  %v1010 = vld [vmem:[%s3 + $0x3c] sm:$0xf]
  %v1011 = vld [vmem:[%s4] sm:$0x1]
  %v1013 = vlaneseq
  %v1014 = vshrl.u32 %v1013, 7
  %v1015 = vsub.s32 0, %v1014
  %v1016 = vrot.slane %v1011, %v1015
  %v1034 = vunpack.c.l.b16 %v995
  %v1035 = vunpack.c.l.b16 %v996
  %v1036 = vunpack.c.l.b16 %v997
  %v1037 = vunpack.c.l.b16 %v998
  %v1038 = vunpack.c.l.b16 %v999
  %v1039 = vunpack.c.l.b16 %v1000
  %v1040 = vunpack.c.l.b16 %v1001
  %v1041 = vunpack.c.l.b16 %v1002
  %v1042 = vunpack.c.l.b16 %v1003
  %v1043 = vunpack.c.l.b16 %v1004
  %v1044 = vunpack.c.l.b16 %v1005
  %v1045 = vunpack.c.l.b16 %v1006
  %v1046 = vunpack.c.l.b16 %v1007
  %v1047 = vunpack.c.l.b16 %v1008
  %v1048 = vunpack.c.l.b16 %v1009
  %v1049 = vunpack.c.l.b16 %v1010
  %v1050 = vpack.c.b16 %v1035, %v1034
  %v1051 = vpack.c.b16 %v1037, %v1036
  %v1052 = vpack.c.b16 %v1039, %v1038
  %v1053 = vpack.c.b16 %v1041, %v1040
  %v1054 = vpack.c.b16 %v1043, %v1042
  %v1055 = vpack.c.b16 %v1045, %v1044
  %v1056 = vpack.c.b16 %v1047, %v1046
  %v1057 = vpack.c.b16 %v1049, %v1048
  %1066 = vmatprep.subr.bf16.mxu0 0
  %1067 = vmatpush1.bf16.msra.mxu0 %v1050
  %1068 = vmatprep.subr.bf16.mxu0 0
  %1069 = vmatpush1.bf16.msra.mxu0 %v1051
  %1070 = vmatprep.subr.bf16.mxu0 0
  %1071 = vmatpush1.bf16.msra.mxu0 %v1052
  %1072 = vmatprep.subr.bf16.mxu0 0
  %1073 = vmatpush1.bf16.msra.mxu0 %v1053
  %1074 = vmatprep.subr.bf16.mxu0 0
  %1075 = vmatpush1.bf16.msra.mxu0 %v1054
  %1076 = vmatprep.subr.bf16.mxu0 0
  %1077 = vmatpush1.bf16.msra.mxu0 %v1055
  %1078 = vmatprep.subr.bf16.mxu0 0
  %1079 = vmatpush1.bf16.msra.mxu0 %v1056
  %1080 = vmatprep.subr.bf16.mxu0 0
  %1081 = vmatpush1.bf16.msra.mxu0 %v1057
  %1082 = vmatprep.subr.bf16.mxu0 0
  %1083 = vmatpush1.bf16.msra.mxu0 0
  %1084 = vmatprep.subr.bf16.mxu0 0
  %1085 = vmatpush1.bf16.msra.mxu0 0
  %1086 = vmatprep.subr.bf16.mxu0 0
  %1087 = vmatpush1.bf16.msra.mxu0 0
  %1088 = vmatprep.subr.bf16.mxu0 0
  %1089 = vmatpush1.bf16.msra.mxu0 0
  %1090 = vmatprep.subr.bf16.mxu0 0
  %1091 = vmatpush1.bf16.msra.mxu0 0
  %1092 = vmatprep.subr.bf16.mxu0 0
  %1093 = vmatpush1.bf16.msra.mxu0 0
  %1094 = vmatprep.subr.bf16.mxu0 0
  %1095 = vmatpush1.bf16.msra.mxu0 0
  %1096 = vmatprep.subr.bf16.mxu0 0
  %1097 = vmatpush1.bf16.msra.mxu0 0
  %1098 = vmatprep.mubr.bf16.mxu0 0
  %1099 = vmatmul.mubr.bf16.gmra.mrb[0].mxu0 %v975
  %v1100 = vpop.f32.mrb[0].mxu0
  %v1101 = vadd.f32 %v1016, %v1100
  %v1102 = vpop.f32.mrb[0].mxu0
  %v1103 = vpop.f32.mrb[0].mxu0
  %v1104 = vadd.f32 %v1016, %v1103
  %v1105 = vpop.f32.mrb[0].mxu0
  %1106 = vmatprep.mubr.bf16.mxu0 0
  %1107 = vmatmul.mubr.bf16.gmra.mrb[0].mxu0 %v976
  %v1108 = vpop.f32.mrb[0].mxu0
  %v1109 = vadd.f32 %v1016, %v1108
  %v1110 = vpop.f32.mrb[0].mxu0
  %v1111 = vpop.f32.mrb[0].mxu0
  %v1112 = vadd.f32 %v1016, %v1111
  %v1113 = vpop.f32.mrb[0].mxu0
  %1114 = vdwg.mxu0
  %vm1115 = vcmp.gt.f32.partialorder %v1101, 0.0
  %vm1116 = vcmp.gt.f32.partialorder %v1104, 0.0
  %vm1117 = vcmp.gt.f32.partialorder %v1109, 0.0
  %vm1118 = vcmp.gt.f32.partialorder %v1112, 0.0
  %v1119 = vmul.f32 %v1101, 0.1
  %v1120 = vmul.f32 %v1104, 0.1
  %v1121 = vmul.f32 %v1109, 0.1
  %v1122 = vmul.f32 %v1112, 0.1
  %v1123 = vsel %vm1115, %v1101, %v1119
  %v1124 = vsel %vm1116, %v1104, %v1120
  %v1125 = vsel %vm1117, %v1109, %v1121
  %v1126 = vsel %vm1118, %v1112, %v1122
  %v1127 = vpack.c.bf16 %v1124, %v1123
  %v1128 = vpack.c.bf16 %v1126, %v1125
  %v1131 = vunpack.c.l.b16 %v1127
  %v1132 = vunpack.c.h.b16 %v1127
  %v1133 = vunpack.c.l.b16 %v1128
  %v1134 = vunpack.c.h.b16 %v1128
  %v1135 = vpack.c.b16 %v1131, %v1131
  %v1136 = vpack.c.b16 %v1132, %v1132
  %v1137 = vpack.c.b16 %v1133, %v1133
  %v1138 = vpack.c.b16 %v1134, %v1134
  %1143 = vst [vmem:[%s6] sm:$0xf] %v1135
  %1144 = vst [vmem:[%s6 + $0x4] sm:$0xf] %v1136
  %1145 = vst [vmem:[%s6 + $0x8] sm:$0xf] %v1137
  %1146 = vst [vmem:[%s6 + $0xc] sm:$0xf] %v1138
  // Predicated region
  $region22: #{yolov3_forward.10} parent=0 // pred_check
    _
  $region23: #{yolov3_forward.10} parent=0 // pred_check_branch
    %1148 = sbr.rel (0) target = $region25
  $region24: #{yolov3_forward.10} parent=0 // pred_region
    _
  $region25: #{yolov3_forward.10} parent=0 // pred_fallthru
    _
  // Predicated region
  $region26: #{yolov3_forward.10} parent=0 // pred_check
    _
  $region27: #{yolov3_forward.10} parent=0 // pred_check_branch
    %1150 = sbr.rel (0) target = $region29
  $region28: #{yolov3_forward.10} parent=0 // pred_region
    _
  $region29: #{yolov3_forward.10} parent=0 // pred_fallthru
    _
  // Predicated region
  $region30: #{yolov3_forward.10} parent=0 // pred_check
    _
  $region31: #{yolov3_forward.10} parent=0 // pred_check_branch
    %1152 = sbr.rel (0) target = $region33
  $region32: #{yolov3_forward.10} parent=0 // pred_region
    _
  $region33: #{yolov3_forward.10} parent=0 // pred_fallthru
    _
  // Predicated region
  $region34: #{yolov3_forward.10} parent=0 // pred_check
    _
  $region35: #{yolov3_forward.10} parent=0 // pred_check_branch
    %1154 = sbr.rel (0) target = $region37
  $region36: #{yolov3_forward.10} parent=0 // pred_region
    _
  $region37: #{yolov3_forward.10} parent=0 // pred_fallthru
    _

// kernel: yolov3_forward.11
$region0: #{yolov3_forward.11}
  #allocation0 [shape = 'u32[]', space=smem, size = 0x4, offset = 0x4, fixed_abs, tag = 'smem constant byte address 0x4 - core index']
  #allocation1 [shape = 'u32[144,128]{1,0:T(1,128)}', space=vmem, size = 0x12000, scoped, tag = 'internal scratch']
  %s0 = inlined_call_operand.vmem [shape: bf16[32,1152], index: 0, kind: input, shape index: {}]
  %s1 = inlined_call_operand.vmem [shape: bf16[1152,128], index: 1, kind: input, shape index: {}]
  %s2 = inlined_call_operand.vmem [shape: f32[1,128], index: 2, kind: input, shape index: {}]
  %s3 = inlined_call_operand.vmem [shape: bf16[32,128], index: 3, kind: input, shape index: {}]
  %s4 = inlined_call_operand.vmem [shape: bf16[32,128], index: 4, kind: output, shape index: {}]
  %s5 = sld [smem:[#allocation0]]
  $region26: #{yolov3_forward.11} parent=0
    _
  %s7 = ssub.s32 1, %s5
  %s8 = scalar_select 0, %s7, %s5
  // Predicated region
  $region2: #{yolov3_forward.11} parent=0 // pred_check
    _
  $region3: #{yolov3_forward.11} parent=0 // pred_check_branch
    %10 = sbr.rel (0) target = $region5
  $region4: #{yolov3_forward.11} parent=0 // pred_region
    _
  $region5: #{yolov3_forward.11} parent=0 // pred_fallthru
    _
  // Predicated region
  $region6: #{yolov3_forward.11} parent=0 // pred_check
    _
  $region7: #{yolov3_forward.11} parent=0 // pred_check_branch
    %12 = sbr.rel (0) target = $region9
  $region8: #{yolov3_forward.11} parent=0 // pred_region
    _
  $region9: #{yolov3_forward.11} parent=0 // pred_fallthru
    _
  // Predicated region
  $region10: #{yolov3_forward.11} parent=0 // pred_check
    _
  $region11: #{yolov3_forward.11} parent=0 // pred_check_branch
    %14 = sbr.rel (0) target = $region13
  $region12: #{yolov3_forward.11} parent=0 // pred_region
    _
  $region13: #{yolov3_forward.11} parent=0 // pred_fallthru
    _
  // Predicated region
  $region14: #{yolov3_forward.11} parent=0 // pred_check
    _
  $region15: #{yolov3_forward.11} parent=0 // pred_check_branch
    %16 = sbr.rel (0) target = $region17
  $region16: #{yolov3_forward.11} parent=0 // pred_region
    _
  $region17: #{yolov3_forward.11} parent=0 // pred_fallthru
    _
  %v18 = vld [vmem:[%s0] sm:$0xff]
  %v19 = vld [vmem:[%s0 + $0x8] sm:$0xff]
  %v20 = vld [vmem:[%s0 + $0x10] sm:$0xff]
  %v21 = vld [vmem:[%s0 + $0x18] sm:$0xff]
  %v22 = vld [vmem:[%s0 + $0x20] sm:$0xf]
  %v23 = vld [vmem:[%s0 + $0x24] sm:$0xff]
  %v24 = vld [vmem:[%s0 + $0x2c] sm:$0xff]
  %v25 = vld [vmem:[%s0 + $0x34] sm:$0xff]
  %v26 = vld [vmem:[%s0 + $0x3c] sm:$0xff]
  %v27 = vld [vmem:[%s0 + $0x44] sm:$0xf]
  %v28 = vld [vmem:[%s0 + $0x48] sm:$0xff]
  %v29 = vld [vmem:[%s0 + $0x50] sm:$0xff]
  %v30 = vld [vmem:[%s0 + $0x58] sm:$0xff]
  %v31 = vld [vmem:[%s0 + $0x60] sm:$0xff]
  %v32 = vld [vmem:[%s0 + $0x68] sm:$0xf]
  %v33 = vld [vmem:[%s0 + $0x6c] sm:$0xff]
  %v34 = vld [vmem:[%s0 + $0x74] sm:$0xff]
  %v35 = vld [vmem:[%s0 + $0x7c] sm:$0xff]
  %v36 = vld [vmem:[%s0 + $0x84] sm:$0xff]
  %v37 = vld [vmem:[%s0 + $0x8c] sm:$0xf]
  %v38 = vld [vmem:[%s1] sm:$0xf]
  %v39 = vld [vmem:[%s1 + $0x4] sm:$0xf]
  %v40 = vld [vmem:[%s1 + $0x8] sm:$0xf]
  %v41 = vld [vmem:[%s1 + $0xc] sm:$0xf]
  %v42 = vld [vmem:[%s1 + $0x10] sm:$0xf]
  %v43 = vld [vmem:[%s1 + $0x14] sm:$0xf]
  %v44 = vld [vmem:[%s1 + $0x18] sm:$0xf]
  %v45 = vld [vmem:[%s1 + $0x1c] sm:$0xf]
  %v46 = vld [vmem:[%s1 + $0x20] sm:$0xf]
  %v47 = vld [vmem:[%s1 + $0x24] sm:$0xf]
  %v48 = vld [vmem:[%s1 + $0x28] sm:$0xf]
  %v49 = vld [vmem:[%s1 + $0x2c] sm:$0xf]
  %v50 = vld [vmem:[%s1 + $0x30] sm:$0xf]
  %v51 = vld [vmem:[%s1 + $0x34] sm:$0xf]
  %v52 = vld [vmem:[%s1 + $0x38] sm:$0xf]
  %v53 = vld [vmem:[%s1 + $0x3c] sm:$0xf]
  %v54 = vld [vmem:[%s1 + $0x40] sm:$0xf]
  %v55 = vld [vmem:[%s1 + $0x44] sm:$0xf]
  %v56 = vld [vmem:[%s1 + $0x48] sm:$0xf]
  %v57 = vld [vmem:[%s1 + $0x4c] sm:$0xf]
  %v58 = vld [vmem:[%s1 + $0x50] sm:$0xf]
  %v59 = vld [vmem:[%s1 + $0x54] sm:$0xf]
  %v60 = vld [vmem:[%s1 + $0x58] sm:$0xf]
  %v61 = vld [vmem:[%s1 + $0x5c] sm:$0xf]
  %v62 = vld [vmem:[%s1 + $0x60] sm:$0xf]
  %v63 = vld [vmem:[%s1 + $0x64] sm:$0xf]
  %v64 = vld [vmem:[%s1 + $0x68] sm:$0xf]
  %v65 = vld [vmem:[%s1 + $0x6c] sm:$0xf]
  %v66 = vld [vmem:[%s1 + $0x70] sm:$0xf]
  %v67 = vld [vmem:[%s1 + $0x74] sm:$0xf]
  %v68 = vld [vmem:[%s1 + $0x78] sm:$0xf]
  %v69 = vld [vmem:[%s1 + $0x7c] sm:$0xf]
  %v70 = vld [vmem:[%s1 + $0x80] sm:$0xf]
  %v71 = vld [vmem:[%s1 + $0x84] sm:$0xf]
  %v72 = vld [vmem:[%s1 + $0x88] sm:$0xf]
  %v73 = vld [vmem:[%s1 + $0x8c] sm:$0xf]
  %v74 = vld [vmem:[%s1 + $0x90] sm:$0xf]
  %v75 = vld [vmem:[%s1 + $0x94] sm:$0xf]
  %v76 = vld [vmem:[%s1 + $0x98] sm:$0xf]
  %v77 = vld [vmem:[%s1 + $0x9c] sm:$0xf]
  %v78 = vld [vmem:[%s1 + $0xa0] sm:$0xf]
  %v79 = vld [vmem:[%s1 + $0xa4] sm:$0xf]
  %v80 = vld [vmem:[%s1 + $0xa8] sm:$0xf]
  %v81 = vld [vmem:[%s1 + $0xac] sm:$0xf]
  %v82 = vld [vmem:[%s1 + $0xb0] sm:$0xf]
  %v83 = vld [vmem:[%s1 + $0xb4] sm:$0xf]
  %v84 = vld [vmem:[%s1 + $0xb8] sm:$0xf]
  %v85 = vld [vmem:[%s1 + $0xbc] sm:$0xf]
  %v86 = vld [vmem:[%s1 + $0xc0] sm:$0xf]
  %v87 = vld [vmem:[%s1 + $0xc4] sm:$0xf]
  %v88 = vld [vmem:[%s1 + $0xc8] sm:$0xf]
  %v89 = vld [vmem:[%s1 + $0xcc] sm:$0xf]
  %v90 = vld [vmem:[%s1 + $0xd0] sm:$0xf]
  %v91 = vld [vmem:[%s1 + $0xd4] sm:$0xf]
  %v92 = vld [vmem:[%s1 + $0xd8] sm:$0xf]
  %v93 = vld [vmem:[%s1 + $0xdc] sm:$0xf]
  %v94 = vld [vmem:[%s1 + $0xe0] sm:$0xf]
  %v95 = vld [vmem:[%s1 + $0xe4] sm:$0xf]
  %v96 = vld [vmem:[%s1 + $0xe8] sm:$0xf]
  %v97 = vld [vmem:[%s1 + $0xec] sm:$0xf]
  %v98 = vld [vmem:[%s1 + $0xf0] sm:$0xf]
  %v99 = vld [vmem:[%s1 + $0xf4] sm:$0xf]
  %v100 = vld [vmem:[%s1 + $0xf8] sm:$0xf]
  %v101 = vld [vmem:[%s1 + $0xfc] sm:$0xf]
  %v102 = vld [vmem:[%s1 + $0x100] sm:$0xf]
  %v103 = vld [vmem:[%s1 + $0x104] sm:$0xf]
  %v104 = vld [vmem:[%s1 + $0x108] sm:$0xf]
  %v105 = vld [vmem:[%s1 + $0x10c] sm:$0xf]
  %v106 = vld [vmem:[%s1 + $0x110] sm:$0xf]
  %v107 = vld [vmem:[%s1 + $0x114] sm:$0xf]
  %v108 = vld [vmem:[%s1 + $0x118] sm:$0xf]
  %v109 = vld [vmem:[%s1 + $0x11c] sm:$0xf]
  %v110 = vld [vmem:[%s1 + $0x120] sm:$0xf]
  %v111 = vld [vmem:[%s1 + $0x124] sm:$0xf]
  %v112 = vld [vmem:[%s1 + $0x128] sm:$0xf]
  %v113 = vld [vmem:[%s1 + $0x12c] sm:$0xf]
  %v114 = vld [vmem:[%s1 + $0x130] sm:$0xf]
  %v115 = vld [vmem:[%s1 + $0x134] sm:$0xf]
  %v116 = vld [vmem:[%s1 + $0x138] sm:$0xf]
  %v117 = vld [vmem:[%s1 + $0x13c] sm:$0xf]
  %v118 = vld [vmem:[%s1 + $0x140] sm:$0xf]
  %v119 = vld [vmem:[%s1 + $0x144] sm:$0xf]
  %v120 = vld [vmem:[%s1 + $0x148] sm:$0xf]
  %v121 = vld [vmem:[%s1 + $0x14c] sm:$0xf]
  %v122 = vld [vmem:[%s1 + $0x150] sm:$0xf]
  %v123 = vld [vmem:[%s1 + $0x154] sm:$0xf]
  %v124 = vld [vmem:[%s1 + $0x158] sm:$0xf]
  %v125 = vld [vmem:[%s1 + $0x15c] sm:$0xf]
  %v126 = vld [vmem:[%s1 + $0x160] sm:$0xf]
  %v127 = vld [vmem:[%s1 + $0x164] sm:$0xf]
  %v128 = vld [vmem:[%s1 + $0x168] sm:$0xf]
  %v129 = vld [vmem:[%s1 + $0x16c] sm:$0xf]
  %v130 = vld [vmem:[%s1 + $0x170] sm:$0xf]
  %v131 = vld [vmem:[%s1 + $0x174] sm:$0xf]
  %v132 = vld [vmem:[%s1 + $0x178] sm:$0xf]
  %v133 = vld [vmem:[%s1 + $0x17c] sm:$0xf]
  %v134 = vld [vmem:[%s1 + $0x180] sm:$0xf]
  %v135 = vld [vmem:[%s1 + $0x184] sm:$0xf]
  %v136 = vld [vmem:[%s1 + $0x188] sm:$0xf]
  %v137 = vld [vmem:[%s1 + $0x18c] sm:$0xf]
  %v138 = vld [vmem:[%s1 + $0x190] sm:$0xf]
  %v139 = vld [vmem:[%s1 + $0x194] sm:$0xf]
  %v140 = vld [vmem:[%s1 + $0x198] sm:$0xf]
  %v141 = vld [vmem:[%s1 + $0x19c] sm:$0xf]
  %v142 = vld [vmem:[%s1 + $0x1a0] sm:$0xf]
  %v143 = vld [vmem:[%s1 + $0x1a4] sm:$0xf]
  %v144 = vld [vmem:[%s1 + $0x1a8] sm:$0xf]
  %v145 = vld [vmem:[%s1 + $0x1ac] sm:$0xf]
  %v146 = vld [vmem:[%s1 + $0x1b0] sm:$0xf]
  %v147 = vld [vmem:[%s1 + $0x1b4] sm:$0xf]
  %v148 = vld [vmem:[%s1 + $0x1b8] sm:$0xf]
  %v149 = vld [vmem:[%s1 + $0x1bc] sm:$0xf]
  %v150 = vld [vmem:[%s1 + $0x1c0] sm:$0xf]
  %v151 = vld [vmem:[%s1 + $0x1c4] sm:$0xf]
  %v152 = vld [vmem:[%s1 + $0x1c8] sm:$0xf]
  %v153 = vld [vmem:[%s1 + $0x1cc] sm:$0xf]
  %v154 = vld [vmem:[%s1 + $0x1d0] sm:$0xf]
  %v155 = vld [vmem:[%s1 + $0x1d4] sm:$0xf]
  %v156 = vld [vmem:[%s1 + $0x1d8] sm:$0xf]
  %v157 = vld [vmem:[%s1 + $0x1dc] sm:$0xf]
  %v158 = vld [vmem:[%s1 + $0x1e0] sm:$0xf]
  %v159 = vld [vmem:[%s1 + $0x1e4] sm:$0xf]
  %v160 = vld [vmem:[%s1 + $0x1e8] sm:$0xf]
  %v161 = vld [vmem:[%s1 + $0x1ec] sm:$0xf]
  %v162 = vld [vmem:[%s1 + $0x1f0] sm:$0xf]
  %v163 = vld [vmem:[%s1 + $0x1f4] sm:$0xf]
  %v164 = vld [vmem:[%s1 + $0x1f8] sm:$0xf]
  %v165 = vld [vmem:[%s1 + $0x1fc] sm:$0xf]
  %v166 = vld [vmem:[%s1 + $0x200] sm:$0xf]
  %v167 = vld [vmem:[%s1 + $0x204] sm:$0xf]
  %v168 = vld [vmem:[%s1 + $0x208] sm:$0xf]
  %v169 = vld [vmem:[%s1 + $0x20c] sm:$0xf]
  %v170 = vld [vmem:[%s1 + $0x210] sm:$0xf]
  %v171 = vld [vmem:[%s1 + $0x214] sm:$0xf]
  %v172 = vld [vmem:[%s1 + $0x218] sm:$0xf]
  %v173 = vld [vmem:[%s1 + $0x21c] sm:$0xf]
  %v174 = vld [vmem:[%s1 + $0x220] sm:$0xf]
  %v175 = vld [vmem:[%s1 + $0x224] sm:$0xf]
  %v176 = vld [vmem:[%s1 + $0x228] sm:$0xf]
  %v177 = vld [vmem:[%s1 + $0x22c] sm:$0xf]
  %v178 = vld [vmem:[%s1 + $0x230] sm:$0xf]
  %v179 = vld [vmem:[%s1 + $0x234] sm:$0xf]
  %v180 = vld [vmem:[%s1 + $0x238] sm:$0xf]
  %v181 = vld [vmem:[%s1 + $0x23c] sm:$0xf]
  %v182 = vld [vmem:[%s2] sm:$0x1]
  %v184 = vlaneseq
  %v185 = vshrl.u32 %v184, 7
  %v186 = vsub.s32 0, %v185
  %v187 = vrot.slane %v182, %v186
  %v209 = vunpack.c.l.b16 %v18
  %v210 = vunpack.c.h.b16 %v18
  %v211 = vunpack.c.l.b16 %v19
  %v212 = vunpack.c.h.b16 %v19
  %v213 = vunpack.c.l.b16 %v20
  %v214 = vunpack.c.h.b16 %v20
  %v215 = vunpack.c.l.b16 %v21
  %v216 = vunpack.c.h.b16 %v21
  %v217 = vunpack.c.l.b16 %v22
  %v218 = vunpack.c.l.b16 %v23
  %v219 = vunpack.c.h.b16 %v23
  %v220 = vunpack.c.l.b16 %v24
  %v221 = vunpack.c.h.b16 %v24
  %v222 = vunpack.c.l.b16 %v25
  %v223 = vunpack.c.h.b16 %v25
  %v224 = vunpack.c.l.b16 %v26
  %v225 = vunpack.c.h.b16 %v26
  %v226 = vunpack.c.l.b16 %v27
  %v227 = vunpack.c.l.b16 %v28
  %v228 = vunpack.c.h.b16 %v28
  %v229 = vunpack.c.l.b16 %v29
  %v230 = vunpack.c.h.b16 %v29
  %v231 = vunpack.c.l.b16 %v30
  %v232 = vunpack.c.h.b16 %v30
  %v233 = vunpack.c.l.b16 %v31
  %v234 = vunpack.c.h.b16 %v31
  %v235 = vunpack.c.l.b16 %v32
  %v236 = vunpack.c.l.b16 %v33
  %v237 = vunpack.c.h.b16 %v33
  %v238 = vunpack.c.l.b16 %v34
  %v239 = vunpack.c.h.b16 %v34
  %v240 = vunpack.c.l.b16 %v35
  %v241 = vunpack.c.h.b16 %v35
  %v242 = vunpack.c.l.b16 %v36
  %v243 = vunpack.c.h.b16 %v36
  %v244 = vunpack.c.l.b16 %v37
  %v245 = vpack.c.b16 %v218, %v209
  %v246 = vpack.c.b16 %v219, %v210
  %v247 = vpack.c.b16 %v220, %v211
  %v248 = vpack.c.b16 %v221, %v212
  %v249 = vpack.c.b16 %v222, %v213
  %v250 = vpack.c.b16 %v223, %v214
  %v251 = vpack.c.b16 %v224, %v215
  %v252 = vpack.c.b16 %v225, %v216
  %v253 = vpack.c.b16 %v226, %v217
  %v254 = vpack.c.b16 %v236, %v227
  %v255 = vpack.c.b16 %v237, %v228
  %v256 = vpack.c.b16 %v238, %v229
  %v257 = vpack.c.b16 %v239, %v230
  %v258 = vpack.c.b16 %v240, %v231
  %v259 = vpack.c.b16 %v241, %v232
  %v260 = vpack.c.b16 %v242, %v233
  %v261 = vpack.c.b16 %v243, %v234
  %v262 = vpack.c.b16 %v244, %v235
  %v425 = vunpack.c.l.b16 %v38
  %v426 = vunpack.c.l.b16 %v39
  %v427 = vunpack.c.l.b16 %v40
  %v428 = vunpack.c.l.b16 %v41
  %v429 = vunpack.c.l.b16 %v42
  %v430 = vunpack.c.l.b16 %v43
  %v431 = vunpack.c.l.b16 %v44
  %v432 = vunpack.c.l.b16 %v45
  %v433 = vunpack.c.l.b16 %v46
  %v434 = vunpack.c.l.b16 %v47
  %v435 = vunpack.c.l.b16 %v48
  %v436 = vunpack.c.l.b16 %v49
  %v437 = vunpack.c.l.b16 %v50
  %v438 = vunpack.c.l.b16 %v51
  %v439 = vunpack.c.l.b16 %v52
  %v440 = vunpack.c.l.b16 %v53
  %v441 = vunpack.c.l.b16 %v54
  %v442 = vunpack.c.l.b16 %v55
  %v443 = vunpack.c.l.b16 %v56
  %v444 = vunpack.c.l.b16 %v57
  %v445 = vunpack.c.l.b16 %v58
  %v446 = vunpack.c.l.b16 %v59
  %v447 = vunpack.c.l.b16 %v60
  %v448 = vunpack.c.l.b16 %v61
  %v449 = vunpack.c.l.b16 %v62
  %v450 = vunpack.c.l.b16 %v63
  %v451 = vunpack.c.l.b16 %v64
  %v452 = vunpack.c.l.b16 %v65
  %v453 = vunpack.c.l.b16 %v66
  %v454 = vunpack.c.l.b16 %v67
  %v455 = vunpack.c.l.b16 %v68
  %v456 = vunpack.c.l.b16 %v69
  %v457 = vunpack.c.l.b16 %v70
  %v458 = vunpack.c.l.b16 %v71
  %v459 = vunpack.c.l.b16 %v72
  %v460 = vunpack.c.l.b16 %v73
  %v461 = vunpack.c.l.b16 %v74
  %v462 = vunpack.c.l.b16 %v75
  %v463 = vunpack.c.l.b16 %v76
  %v464 = vunpack.c.l.b16 %v77
  %v465 = vunpack.c.l.b16 %v78
  %v466 = vunpack.c.l.b16 %v79
  %v467 = vunpack.c.l.b16 %v80
  %v468 = vunpack.c.l.b16 %v81
  %v469 = vunpack.c.l.b16 %v82
  %v470 = vunpack.c.l.b16 %v83
  %v471 = vunpack.c.l.b16 %v84
  %v472 = vunpack.c.l.b16 %v85
  %v473 = vunpack.c.l.b16 %v86
  %v474 = vunpack.c.l.b16 %v87
  %v475 = vunpack.c.l.b16 %v88
  %v476 = vunpack.c.l.b16 %v89
  %v477 = vunpack.c.l.b16 %v90
  %v478 = vunpack.c.l.b16 %v91
  %v479 = vunpack.c.l.b16 %v92
  %v480 = vunpack.c.l.b16 %v93
  %v481 = vunpack.c.l.b16 %v94
  %v482 = vunpack.c.l.b16 %v95
  %v483 = vunpack.c.l.b16 %v96
  %v484 = vunpack.c.l.b16 %v97
  %v485 = vunpack.c.l.b16 %v98
  %v486 = vunpack.c.l.b16 %v99
  %v487 = vunpack.c.l.b16 %v100
  %v488 = vunpack.c.l.b16 %v101
  %v489 = vunpack.c.l.b16 %v102
  %v490 = vunpack.c.l.b16 %v103
  %v491 = vunpack.c.l.b16 %v104
  %v492 = vunpack.c.l.b16 %v105
  %v493 = vunpack.c.l.b16 %v106
  %v494 = vunpack.c.l.b16 %v107
  %v495 = vunpack.c.l.b16 %v108
  %v496 = vunpack.c.l.b16 %v109
  %v497 = vunpack.c.l.b16 %v110
  %v498 = vunpack.c.l.b16 %v111
  %v499 = vunpack.c.l.b16 %v112
  %v500 = vunpack.c.l.b16 %v113
  %v501 = vunpack.c.l.b16 %v114
  %v502 = vunpack.c.l.b16 %v115
  %v503 = vunpack.c.l.b16 %v116
  %v504 = vunpack.c.l.b16 %v117
  %v505 = vunpack.c.l.b16 %v118
  %v506 = vunpack.c.l.b16 %v119
  %v507 = vunpack.c.l.b16 %v120
  %v508 = vunpack.c.l.b16 %v121
  %v509 = vunpack.c.l.b16 %v122
  %v510 = vunpack.c.l.b16 %v123
  %v511 = vunpack.c.l.b16 %v124
  %v512 = vunpack.c.l.b16 %v125
  %v513 = vunpack.c.l.b16 %v126
  %v514 = vunpack.c.l.b16 %v127
  %v515 = vunpack.c.l.b16 %v128
  %v516 = vunpack.c.l.b16 %v129
  %v517 = vunpack.c.l.b16 %v130
  %v518 = vunpack.c.l.b16 %v131
  %v519 = vunpack.c.l.b16 %v132
  %v520 = vunpack.c.l.b16 %v133
  %v521 = vunpack.c.l.b16 %v134
  %v522 = vunpack.c.l.b16 %v135
  %v523 = vunpack.c.l.b16 %v136
  %v524 = vunpack.c.l.b16 %v137
  %v525 = vunpack.c.l.b16 %v138
  %v526 = vunpack.c.l.b16 %v139
  %v527 = vunpack.c.l.b16 %v140
  %v528 = vunpack.c.l.b16 %v141
  %v529 = vunpack.c.l.b16 %v142
  %v530 = vunpack.c.l.b16 %v143
  %v531 = vunpack.c.l.b16 %v144
  %v532 = vunpack.c.l.b16 %v145
  %v533 = vunpack.c.l.b16 %v146
  %v534 = vunpack.c.l.b16 %v147
  %v535 = vunpack.c.l.b16 %v148
  %v536 = vunpack.c.l.b16 %v149
  %v537 = vunpack.c.l.b16 %v150
  %v538 = vunpack.c.l.b16 %v151
  %v539 = vunpack.c.l.b16 %v152
  %v540 = vunpack.c.l.b16 %v153
  %v541 = vunpack.c.l.b16 %v154
  %v542 = vunpack.c.l.b16 %v155
  %v543 = vunpack.c.l.b16 %v156
  %v544 = vunpack.c.l.b16 %v157
  %v545 = vunpack.c.l.b16 %v158
  %v546 = vunpack.c.l.b16 %v159
  %v547 = vunpack.c.l.b16 %v160
  %v548 = vunpack.c.l.b16 %v161
  %v549 = vunpack.c.l.b16 %v162
  %v550 = vunpack.c.l.b16 %v163
  %v551 = vunpack.c.l.b16 %v164
  %v552 = vunpack.c.l.b16 %v165
  %v553 = vunpack.c.l.b16 %v166
  %v554 = vunpack.c.l.b16 %v167
  %v555 = vunpack.c.l.b16 %v168
  %v556 = vunpack.c.l.b16 %v169
  %v557 = vunpack.c.l.b16 %v170
  %v558 = vunpack.c.l.b16 %v171
  %v559 = vunpack.c.l.b16 %v172
  %v560 = vunpack.c.l.b16 %v173
  %v561 = vunpack.c.l.b16 %v174
  %v562 = vunpack.c.l.b16 %v175
  %v563 = vunpack.c.l.b16 %v176
  %v564 = vunpack.c.l.b16 %v177
  %v565 = vunpack.c.l.b16 %v178
  %v566 = vunpack.c.l.b16 %v179
  %v567 = vunpack.c.l.b16 %v180
  %v568 = vunpack.c.l.b16 %v181
  %v569 = vpack.c.b16 %v426, %v425
  %v570 = vpack.c.b16 %v428, %v427
  %v571 = vpack.c.b16 %v430, %v429
  %v572 = vpack.c.b16 %v432, %v431
  %v573 = vpack.c.b16 %v434, %v433
  %v574 = vpack.c.b16 %v436, %v435
  %v575 = vpack.c.b16 %v438, %v437
  %v576 = vpack.c.b16 %v440, %v439
  %v577 = vpack.c.b16 %v442, %v441
  %v578 = vpack.c.b16 %v444, %v443
  %v579 = vpack.c.b16 %v446, %v445
  %v580 = vpack.c.b16 %v448, %v447
  %v581 = vpack.c.b16 %v450, %v449
  %v582 = vpack.c.b16 %v452, %v451
  %v583 = vpack.c.b16 %v454, %v453
  %v584 = vpack.c.b16 %v456, %v455
  %v585 = vpack.c.b16 %v458, %v457
  %v586 = vpack.c.b16 %v460, %v459
  %v587 = vpack.c.b16 %v462, %v461
  %v588 = vpack.c.b16 %v464, %v463
  %v589 = vpack.c.b16 %v466, %v465
  %v590 = vpack.c.b16 %v468, %v467
  %v591 = vpack.c.b16 %v470, %v469
  %v592 = vpack.c.b16 %v472, %v471
  %v593 = vpack.c.b16 %v474, %v473
  %v594 = vpack.c.b16 %v476, %v475
  %v595 = vpack.c.b16 %v478, %v477
  %v596 = vpack.c.b16 %v480, %v479
  %v597 = vpack.c.b16 %v482, %v481
  %v598 = vpack.c.b16 %v484, %v483
  %v599 = vpack.c.b16 %v486, %v485
  %v600 = vpack.c.b16 %v488, %v487
  %v601 = vpack.c.b16 %v490, %v489
  %v602 = vpack.c.b16 %v492, %v491
  %v603 = vpack.c.b16 %v494, %v493
  %v604 = vpack.c.b16 %v496, %v495
  %v605 = vpack.c.b16 %v498, %v497
  %v606 = vpack.c.b16 %v500, %v499
  %v607 = vpack.c.b16 %v502, %v501
  %v608 = vpack.c.b16 %v504, %v503
  %v609 = vpack.c.b16 %v506, %v505
  %v610 = vpack.c.b16 %v508, %v507
  %v611 = vpack.c.b16 %v510, %v509
  %v612 = vpack.c.b16 %v512, %v511
  %v613 = vpack.c.b16 %v514, %v513
  %v614 = vpack.c.b16 %v516, %v515
  %v615 = vpack.c.b16 %v518, %v517
  %v616 = vpack.c.b16 %v520, %v519
  %v617 = vpack.c.b16 %v522, %v521
  %v618 = vpack.c.b16 %v524, %v523
  %v619 = vpack.c.b16 %v526, %v525
  %v620 = vpack.c.b16 %v528, %v527
  %v621 = vpack.c.b16 %v530, %v529
  %v622 = vpack.c.b16 %v532, %v531
  %v623 = vpack.c.b16 %v534, %v533
  %v624 = vpack.c.b16 %v536, %v535
  %v625 = vpack.c.b16 %v538, %v537
  %v626 = vpack.c.b16 %v540, %v539
  %v627 = vpack.c.b16 %v542, %v541
  %v628 = vpack.c.b16 %v544, %v543
  %v629 = vpack.c.b16 %v546, %v545
  %v630 = vpack.c.b16 %v548, %v547
  %v631 = vpack.c.b16 %v550, %v549
  %v632 = vpack.c.b16 %v552, %v551
  %v633 = vpack.c.b16 %v554, %v553
  %v634 = vpack.c.b16 %v556, %v555
  %v635 = vpack.c.b16 %v558, %v557
  %v636 = vpack.c.b16 %v560, %v559
  %v637 = vpack.c.b16 %v562, %v561
  %v638 = vpack.c.b16 %v564, %v563
  %v639 = vpack.c.b16 %v566, %v565
  %v640 = vpack.c.b16 %v568, %v567
  %713 = vmatprep.subr.bf16.mxu0 0
  %714 = vmatpush1.bf16.msra.mxu0 %v569
  %715 = vmatprep.subr.bf16.mxu0 0
  %716 = vmatpush1.bf16.msra.mxu0 %v570
  %717 = vmatprep.subr.bf16.mxu0 0
  %718 = vmatpush1.bf16.msra.mxu0 %v571
  %719 = vmatprep.subr.bf16.mxu0 0
  %720 = vmatpush1.bf16.msra.mxu0 %v572
  %721 = vmatprep.subr.bf16.mxu0 0
  %722 = vmatpush1.bf16.msra.mxu0 %v573
  %723 = vmatprep.subr.bf16.mxu0 0
  %724 = vmatpush1.bf16.msra.mxu0 %v574
  %725 = vmatprep.subr.bf16.mxu0 0
  %726 = vmatpush1.bf16.msra.mxu0 %v575
  %727 = vmatprep.subr.bf16.mxu0 0
  %728 = vmatpush1.bf16.msra.mxu0 %v576
  %729 = vmatprep.subr.bf16.mxu0 0
  %730 = vmatpush1.bf16.msra.mxu0 %v577
  %731 = vmatprep.subr.bf16.mxu0 0
  %732 = vmatpush1.bf16.msra.mxu0 %v578
  %733 = vmatprep.subr.bf16.mxu0 0
  %734 = vmatpush1.bf16.msra.mxu0 %v579
  %735 = vmatprep.subr.bf16.mxu0 0
  %736 = vmatpush1.bf16.msra.mxu0 %v580
  %737 = vmatprep.subr.bf16.mxu0 0
  %738 = vmatpush1.bf16.msra.mxu0 %v581
  %739 = vmatprep.subr.bf16.mxu0 0
  %740 = vmatpush1.bf16.msra.mxu0 %v582
  %741 = vmatprep.subr.bf16.mxu0 0
  %742 = vmatpush1.bf16.msra.mxu0 %v583
  %743 = vmatprep.subr.bf16.mxu0 0
  %744 = vmatpush1.bf16.msra.mxu0 %v584
  %745 = vmatprep.mubr.bf16.mxu0 %v246
  %746 = vmatmul.mubr.bf16.gmra.mrb[0].mxu0 %v245
  %v747 = vpop.f32.mrb[0].mxu0
  %v748 = vadd.f32 %v187, %v747
  %v749 = vpop.f32.mrb[0].mxu0
  %v750 = vpop.f32.mrb[0].mxu0
  %v751 = vadd.f32 %v187, %v750
  %v752 = vpop.f32.mrb[0].mxu0
  %753 = vmatprep.mubr.bf16.mxu0 %v255
  %754 = vmatmul.mubr.bf16.gmra.mrb[0].mxu0 %v254
  %v755 = vpop.f32.mrb[0].mxu0
  %v756 = vadd.f32 %v187, %v755
  %v757 = vpop.f32.mrb[0].mxu0
  %v758 = vpop.f32.mrb[0].mxu0
  %v759 = vadd.f32 %v187, %v758
  %v760 = vpop.f32.mrb[0].mxu0
  %761 = vdwg.mxu0
  %762 = vmatprep.subr.bf16.mxu0 0
  %763 = vmatpush1.bf16.msra.mxu0 %v585
  %764 = vmatprep.subr.bf16.mxu0 0
  %765 = vmatpush1.bf16.msra.mxu0 %v586
  %766 = vmatprep.subr.bf16.mxu0 0
  %767 = vmatpush1.bf16.msra.mxu0 %v587
  %768 = vmatprep.subr.bf16.mxu0 0
  %769 = vmatpush1.bf16.msra.mxu0 %v588
  %770 = vmatprep.subr.bf16.mxu0 0
  %771 = vmatpush1.bf16.msra.mxu0 %v589
  %772 = vmatprep.subr.bf16.mxu0 0
  %773 = vmatpush1.bf16.msra.mxu0 %v590
  %774 = vmatprep.subr.bf16.mxu0 0
  %775 = vmatpush1.bf16.msra.mxu0 %v591
  %776 = vmatprep.subr.bf16.mxu0 0
  %777 = vmatpush1.bf16.msra.mxu0 %v592
  %778 = vmatprep.subr.bf16.mxu0 0
  %779 = vmatpush1.bf16.msra.mxu0 %v593
  %780 = vmatprep.subr.bf16.mxu0 0
  %781 = vmatpush1.bf16.msra.mxu0 %v594
  %782 = vmatprep.subr.bf16.mxu0 0
  %783 = vmatpush1.bf16.msra.mxu0 %v595
  %784 = vmatprep.subr.bf16.mxu0 0
  %785 = vmatpush1.bf16.msra.mxu0 %v596
  %786 = vmatprep.subr.bf16.mxu0 0
  %787 = vmatpush1.bf16.msra.mxu0 %v597
  %788 = vmatprep.subr.bf16.mxu0 0
  %789 = vmatpush1.bf16.msra.mxu0 %v598
  %790 = vmatprep.subr.bf16.mxu0 0
  %791 = vmatpush1.bf16.msra.mxu0 %v599
  %792 = vmatprep.subr.bf16.mxu0 0
  %793 = vmatpush1.bf16.msra.mxu0 %v600
  %794 = vmatprep.mubr.bf16.mxu0 %v248
  %795 = vmatmul.mubr.bf16.gmra.mrb[0].mxu0 %v247
  %v796 = vpop.f32.mrb[0].mxu0
  %v797 = vadd.f32 %v748, %v796
  %v798 = vpop.f32.mrb[0].mxu0
  %v799 = vpop.f32.mrb[0].mxu0
  %v800 = vadd.f32 %v751, %v799
  %v801 = vpop.f32.mrb[0].mxu0
  %802 = vmatprep.mubr.bf16.mxu0 %v257
  %803 = vmatmul.mubr.bf16.gmra.mrb[0].mxu0 %v256
  %v804 = vpop.f32.mrb[0].mxu0
  %v805 = vadd.f32 %v756, %v804
  %v806 = vpop.f32.mrb[0].mxu0
  %v807 = vpop.f32.mrb[0].mxu0
  %v808 = vadd.f32 %v759, %v807
  %v809 = vpop.f32.mrb[0].mxu0
  %810 = vdwg.mxu0
  %811 = vmatprep.subr.bf16.mxu0 0
  %812 = vmatpush1.bf16.msra.mxu0 %v601
  %813 = vmatprep.subr.bf16.mxu0 0
  %814 = vmatpush1.bf16.msra.mxu0 %v602
  %815 = vmatprep.subr.bf16.mxu0 0
  %816 = vmatpush1.bf16.msra.mxu0 %v603
  %817 = vmatprep.subr.bf16.mxu0 0
  %818 = vmatpush1.bf16.msra.mxu0 %v604
  %819 = vmatprep.subr.bf16.mxu0 0
  %820 = vmatpush1.bf16.msra.mxu0 %v605
  %821 = vmatprep.subr.bf16.mxu0 0
  %822 = vmatpush1.bf16.msra.mxu0 %v606
  %823 = vmatprep.subr.bf16.mxu0 0
  %824 = vmatpush1.bf16.msra.mxu0 %v607
  %825 = vmatprep.subr.bf16.mxu0 0
  %826 = vmatpush1.bf16.msra.mxu0 %v608
  %827 = vmatprep.subr.bf16.mxu0 0
  %828 = vmatpush1.bf16.msra.mxu0 %v609
  %829 = vmatprep.subr.bf16.mxu0 0
  %830 = vmatpush1.bf16.msra.mxu0 %v610
  %831 = vmatprep.subr.bf16.mxu0 0
  %832 = vmatpush1.bf16.msra.mxu0 %v611
  %833 = vmatprep.subr.bf16.mxu0 0
  %834 = vmatpush1.bf16.msra.mxu0 %v612
  %835 = vmatprep.subr.bf16.mxu0 0
  %836 = vmatpush1.bf16.msra.mxu0 %v613
  %837 = vmatprep.subr.bf16.mxu0 0
  %838 = vmatpush1.bf16.msra.mxu0 %v614
  %839 = vmatprep.subr.bf16.mxu0 0
  %840 = vmatpush1.bf16.msra.mxu0 %v615
  %841 = vmatprep.subr.bf16.mxu0 0
  %842 = vmatpush1.bf16.msra.mxu0 %v616
  %843 = vmatprep.mubr.bf16.mxu0 %v250
  %844 = vmatmul.mubr.bf16.gmra.mrb[0].mxu0 %v249
  %v845 = vpop.f32.mrb[0].mxu0
  %v846 = vadd.f32 %v797, %v845
  %v847 = vpop.f32.mrb[0].mxu0
  %v848 = vpop.f32.mrb[0].mxu0
  %v849 = vadd.f32 %v800, %v848
  %v850 = vpop.f32.mrb[0].mxu0
  %851 = vmatprep.mubr.bf16.mxu0 %v259
  %852 = vmatmul.mubr.bf16.gmra.mrb[0].mxu0 %v258
  %v853 = vpop.f32.mrb[0].mxu0
  %v854 = vadd.f32 %v805, %v853
  %v855 = vpop.f32.mrb[0].mxu0
  %v856 = vpop.f32.mrb[0].mxu0
  %v857 = vadd.f32 %v808, %v856
  %v858 = vpop.f32.mrb[0].mxu0
  %859 = vdwg.mxu0
  %860 = vmatprep.subr.bf16.mxu0 0
  %861 = vmatpush1.bf16.msra.mxu0 %v617
  %862 = vmatprep.subr.bf16.mxu0 0
  %863 = vmatpush1.bf16.msra.mxu0 %v618
  %864 = vmatprep.subr.bf16.mxu0 0
  %865 = vmatpush1.bf16.msra.mxu0 %v619
  %866 = vmatprep.subr.bf16.mxu0 0
  %867 = vmatpush1.bf16.msra.mxu0 %v620
  %868 = vmatprep.subr.bf16.mxu0 0
  %869 = vmatpush1.bf16.msra.mxu0 %v621
  %870 = vmatprep.subr.bf16.mxu0 0
  %871 = vmatpush1.bf16.msra.mxu0 %v622
  %872 = vmatprep.subr.bf16.mxu0 0
  %873 = vmatpush1.bf16.msra.mxu0 %v623
  %874 = vmatprep.subr.bf16.mxu0 0
  %875 = vmatpush1.bf16.msra.mxu0 %v624
  %876 = vmatprep.subr.bf16.mxu0 0
  %877 = vmatpush1.bf16.msra.mxu0 %v625
  %878 = vmatprep.subr.bf16.mxu0 0
  %879 = vmatpush1.bf16.msra.mxu0 %v626
  %880 = vmatprep.subr.bf16.mxu0 0
  %881 = vmatpush1.bf16.msra.mxu0 %v627
  %882 = vmatprep.subr.bf16.mxu0 0
  %883 = vmatpush1.bf16.msra.mxu0 %v628
  %884 = vmatprep.subr.bf16.mxu0 0
  %885 = vmatpush1.bf16.msra.mxu0 %v629
  %886 = vmatprep.subr.bf16.mxu0 0
  %887 = vmatpush1.bf16.msra.mxu0 %v630
  %888 = vmatprep.subr.bf16.mxu0 0
  %889 = vmatpush1.bf16.msra.mxu0 %v631
  %890 = vmatprep.subr.bf16.mxu0 0
  %891 = vmatpush1.bf16.msra.mxu0 %v632
  %892 = vmatprep.mubr.bf16.mxu0 %v252
  %893 = vmatmul.mubr.bf16.gmra.mrb[0].mxu0 %v251
  %v894 = vpop.f32.mrb[0].mxu0
  %v895 = vadd.f32 %v846, %v894
  %v896 = vpop.f32.mrb[0].mxu0
  %v897 = vpop.f32.mrb[0].mxu0
  %v898 = vadd.f32 %v849, %v897
  %v899 = vpop.f32.mrb[0].mxu0
  %900 = vmatprep.mubr.bf16.mxu0 %v261
  %901 = vmatmul.mubr.bf16.gmra.mrb[0].mxu0 %v260
  %v902 = vpop.f32.mrb[0].mxu0
  %v903 = vadd.f32 %v854, %v902
  %v904 = vpop.f32.mrb[0].mxu0
  %v905 = vpop.f32.mrb[0].mxu0
  %v906 = vadd.f32 %v857, %v905
  %v907 = vpop.f32.mrb[0].mxu0
  %908 = vdwg.mxu0
  %909 = vmatprep.subr.bf16.mxu0 0
  %910 = vmatpush1.bf16.msra.mxu0 %v633
  %911 = vmatprep.subr.bf16.mxu0 0
  %912 = vmatpush1.bf16.msra.mxu0 %v634
  %913 = vmatprep.subr.bf16.mxu0 0
  %914 = vmatpush1.bf16.msra.mxu0 %v635
  %915 = vmatprep.subr.bf16.mxu0 0
  %916 = vmatpush1.bf16.msra.mxu0 %v636
  %917 = vmatprep.subr.bf16.mxu0 0
  %918 = vmatpush1.bf16.msra.mxu0 %v637
  %919 = vmatprep.subr.bf16.mxu0 0
  %920 = vmatpush1.bf16.msra.mxu0 %v638
  %921 = vmatprep.subr.bf16.mxu0 0
  %922 = vmatpush1.bf16.msra.mxu0 %v639
  %923 = vmatprep.subr.bf16.mxu0 0
  %924 = vmatpush1.bf16.msra.mxu0 %v640
  %925 = vmatprep.subr.bf16.mxu0 0
  %926 = vmatpush1.bf16.msra.mxu0 0
  %927 = vmatprep.subr.bf16.mxu0 0
  %928 = vmatpush1.bf16.msra.mxu0 0
  %929 = vmatprep.subr.bf16.mxu0 0
  %930 = vmatpush1.bf16.msra.mxu0 0
  %931 = vmatprep.subr.bf16.mxu0 0
  %932 = vmatpush1.bf16.msra.mxu0 0
  %933 = vmatprep.subr.bf16.mxu0 0
  %934 = vmatpush1.bf16.msra.mxu0 0
  %935 = vmatprep.subr.bf16.mxu0 0
  %936 = vmatpush1.bf16.msra.mxu0 0
  %937 = vmatprep.subr.bf16.mxu0 0
  %938 = vmatpush1.bf16.msra.mxu0 0
  %939 = vmatprep.subr.bf16.mxu0 0
  %940 = vmatpush1.bf16.msra.mxu0 0
  %941 = vmatprep.mubr.bf16.mxu0 0
  %942 = vmatmul.mubr.bf16.gmra.mrb[0].mxu0 %v253
  %v943 = vpop.f32.mrb[0].mxu0
  %v944 = vadd.f32 %v895, %v943
  %v945 = vpop.f32.mrb[0].mxu0
  %v946 = vpop.f32.mrb[0].mxu0
  %v947 = vadd.f32 %v898, %v946
  %v948 = vpop.f32.mrb[0].mxu0
  %949 = vmatprep.mubr.bf16.mxu0 0
  %950 = vmatmul.mubr.bf16.gmra.mrb[0].mxu0 %v262
  %v951 = vpop.f32.mrb[0].mxu0
  %v952 = vadd.f32 %v903, %v951
  %v953 = vpop.f32.mrb[0].mxu0
  %v954 = vpop.f32.mrb[0].mxu0
  %v955 = vadd.f32 %v906, %v954
  %v956 = vpop.f32.mrb[0].mxu0
  %957 = vdwg.mxu0
  %vm958 = vcmp.gt.f32.partialorder %v944, 0.0
  %vm959 = vcmp.gt.f32.partialorder %v947, 0.0
  %vm960 = vcmp.gt.f32.partialorder %v952, 0.0
  %vm961 = vcmp.gt.f32.partialorder %v955, 0.0
  %v962 = vmul.f32 %v944, 0.1
  %v963 = vmul.f32 %v947, 0.1
  %v964 = vmul.f32 %v952, 0.1
  %v965 = vmul.f32 %v955, 0.1
  %v966 = vsel %vm958, %v944, %v962
  %v967 = vsel %vm959, %v947, %v963
  %v968 = vsel %vm960, %v952, %v964
  %v969 = vsel %vm961, %v955, %v965
  %v970 = vld [vmem:[%s3] sm:$0xf]
  %v971 = vld [vmem:[%s3 + $0x4] sm:$0xf]
  %v972 = vld [vmem:[%s3 + $0x8] sm:$0xf]
  %v973 = vld [vmem:[%s3 + $0xc] sm:$0xf]
  %v974 = vunpack.c.l.bf16 %v970
  %v975 = vunpack.c.l.bf16 %v971
  %v976 = vunpack.c.l.bf16 %v972
  %v977 = vunpack.c.l.bf16 %v973
  %v978 = vadd.f32 %v966, %v974
  %v979 = vadd.f32 %v967, %v975
  %v980 = vadd.f32 %v968, %v976
  %v981 = vadd.f32 %v969, %v977
  %v982 = vpack.c.bf16 %v979, %v978
  %v983 = vpack.c.bf16 %v981, %v980
  %v986 = vunpack.c.l.b16 %v982
  %v987 = vunpack.c.h.b16 %v982
  %v988 = vunpack.c.l.b16 %v983
  %v989 = vunpack.c.h.b16 %v983
  %v990 = vpack.c.b16 %v986, %v986
  %v991 = vpack.c.b16 %v987, %v987
  %v992 = vpack.c.b16 %v988, %v988
  %v993 = vpack.c.b16 %v989, %v989
  %998 = vst [vmem:[%s4] sm:$0xf] %v990
  %999 = vst [vmem:[%s4 + $0x4] sm:$0xf] %v991
  %1000 = vst [vmem:[%s4 + $0x8] sm:$0xf] %v992
  %1001 = vst [vmem:[%s4 + $0xc] sm:$0xf] %v993
  // Predicated region
  $region18: #{yolov3_forward.11} parent=0 // pred_check
    _
  $region19: #{yolov3_forward.11} parent=0 // pred_check_branch
    %1003 = sbr.rel (0) target = $region21
  $region20: #{yolov3_forward.11} parent=0 // pred_region
    _
  $region21: #{yolov3_forward.11} parent=0 // pred_fallthru
    _
  // Predicated region
  $region22: #{yolov3_forward.11} parent=0 // pred_check
    _
  $region23: #{yolov3_forward.11} parent=0 // pred_check_branch
    %1005 = sbr.rel (0) target = $region25
  $region24: #{yolov3_forward.11} parent=0 // pred_region
    _
  $region25: #{yolov3_forward.11} parent=0 // pred_fallthru
    _

// kernel: yolov3_forward.13
$region0: #{yolov3_forward.13}
  #allocation0 [shape = 'u32[]', space=smem, size = 0x4, offset = 0x4, fixed_abs, tag = 'smem constant byte address 0x4 - core index']
  #allocation1 [shape = 'u32[144,128]{1,0:T(1,128)}', space=vmem, size = 0x12000, scoped, tag = 'internal scratch']
  %s0 = inlined_call_operand.vmem [shape: bf16[128,2304], index: 0, kind: input, shape index: {}]
  %s1 = inlined_call_operand.vmem [shape: bf16[2304,128], index: 1, kind: input, shape index: {}]
  %s2 = inlined_call_operand.vmem [shape: f32[1,128], index: 2, kind: input, shape index: {}]
  %s3 = inlined_call_operand.vmem [shape: bf16[128,128], index: 3, kind: input, shape index: {}]
  %s4 = inlined_call_operand.vmem [shape: f32[1,128], index: 4, kind: input, shape index: {}]
  %s5 = inlined_call_operand.vmem [shape: f32[128,128], index: 5, kind: output, shape index: {}]
  %s6 = sld [smem:[#allocation0]]
  $region30: #{yolov3_forward.13} parent=0
    _
  %s8 = ssub.s32 1, %s6
  %s9 = scalar_select 0, %s8, %s6
  // Predicated region
  $region2: #{yolov3_forward.13} parent=0 // pred_check
    _
  $region3: #{yolov3_forward.13} parent=0 // pred_check_branch
    %11 = sbr.rel (0) target = $region5
  $region4: #{yolov3_forward.13} parent=0 // pred_region
    _
  $region5: #{yolov3_forward.13} parent=0 // pred_fallthru
    _
  // Predicated region
  $region6: #{yolov3_forward.13} parent=0 // pred_check
    _
  $region7: #{yolov3_forward.13} parent=0 // pred_check_branch
    %13 = sbr.rel (0) target = $region9
  $region8: #{yolov3_forward.13} parent=0 // pred_region
    _
  $region9: #{yolov3_forward.13} parent=0 // pred_fallthru
    _
  // Predicated region
  $region10: #{yolov3_forward.13} parent=0 // pred_check
    _
  $region11: #{yolov3_forward.13} parent=0 // pred_check_branch
    %15 = sbr.rel (0) target = $region13
  $region12: #{yolov3_forward.13} parent=0 // pred_region
    _
  $region13: #{yolov3_forward.13} parent=0 // pred_fallthru
    _
  // Predicated region
  $region14: #{yolov3_forward.13} parent=0 // pred_check
    _
  $region15: #{yolov3_forward.13} parent=0 // pred_check_branch
    %17 = sbr.rel (0) target = $region17
  $region16: #{yolov3_forward.13} parent=0 // pred_region
    _
  $region17: #{yolov3_forward.13} parent=0 // pred_fallthru
    _
  // Predicated region
  $region18: #{yolov3_forward.13} parent=0 // pred_check
    _
  $region19: #{yolov3_forward.13} parent=0 // pred_check_branch
    %19 = sbr.rel (0) target = $region21
  $region20: #{yolov3_forward.13} parent=0 // pred_region
    _
  $region21: #{yolov3_forward.13} parent=0 // pred_fallthru
    _
  %v21 = vld [vmem:[%s0] sm:$0xff]
  %v22 = vld [vmem:[%s0 + $0x8] sm:$0xff]
  %v23 = vld [vmem:[%s0 + $0x10] sm:$0xff]
  %v24 = vld [vmem:[%s0 + $0x18] sm:$0xff]
  %v25 = vld [vmem:[%s0 + $0x20] sm:$0xff]
  %v26 = vld [vmem:[%s0 + $0x28] sm:$0xff]
  %v27 = vld [vmem:[%s0 + $0x30] sm:$0xff]
  %v28 = vld [vmem:[%s0 + $0x38] sm:$0xff]
  %v29 = vld [vmem:[%s0 + $0x40] sm:$0xff]
  %v30 = vld [vmem:[%s0 + $0x48] sm:$0xff]
  %v31 = vld [vmem:[%s0 + $0x50] sm:$0xff]
  %v32 = vld [vmem:[%s0 + $0x58] sm:$0xff]
  %v33 = vld [vmem:[%s0 + $0x60] sm:$0xff]
  %v34 = vld [vmem:[%s0 + $0x68] sm:$0xff]
  %v35 = vld [vmem:[%s0 + $0x70] sm:$0xff]
  %v36 = vld [vmem:[%s0 + $0x78] sm:$0xff]
  %v37 = vld [vmem:[%s0 + $0x80] sm:$0xff]
  %v38 = vld [vmem:[%s0 + $0x88] sm:$0xff]
  %v39 = vld [vmem:[%s0 + $0x90] sm:$0xff]
  %v40 = vld [vmem:[%s0 + $0x98] sm:$0xff]
  %v41 = vld [vmem:[%s0 + $0xa0] sm:$0xff]
  %v42 = vld [vmem:[%s0 + $0xa8] sm:$0xff]
  %v43 = vld [vmem:[%s0 + $0xb0] sm:$0xff]
  %v44 = vld [vmem:[%s0 + $0xb8] sm:$0xff]
  %v45 = vld [vmem:[%s0 + $0xc0] sm:$0xff]
  %v46 = vld [vmem:[%s0 + $0xc8] sm:$0xff]
  %v47 = vld [vmem:[%s0 + $0xd0] sm:$0xff]
  %v48 = vld [vmem:[%s0 + $0xd8] sm:$0xff]
  %v49 = vld [vmem:[%s0 + $0xe0] sm:$0xff]
  %v50 = vld [vmem:[%s0 + $0xe8] sm:$0xff]
  %v51 = vld [vmem:[%s0 + $0xf0] sm:$0xff]
  %v52 = vld [vmem:[%s0 + $0xf8] sm:$0xff]
  %v53 = vld [vmem:[%s0 + $0x100] sm:$0xff]
  %v54 = vld [vmem:[%s0 + $0x108] sm:$0xff]
  %v55 = vld [vmem:[%s0 + $0x110] sm:$0xff]
  %v56 = vld [vmem:[%s0 + $0x118] sm:$0xff]
  %v57 = vld [vmem:[%s0 + $0x120] sm:$0xff]
  %v58 = vld [vmem:[%s0 + $0x128] sm:$0xff]
  %v59 = vld [vmem:[%s0 + $0x130] sm:$0xff]
  %v60 = vld [vmem:[%s0 + $0x138] sm:$0xff]
  %v61 = vld [vmem:[%s0 + $0x140] sm:$0xff]
  %v62 = vld [vmem:[%s0 + $0x148] sm:$0xff]
  %v63 = vld [vmem:[%s0 + $0x150] sm:$0xff]
  %v64 = vld [vmem:[%s0 + $0x158] sm:$0xff]
  %v65 = vld [vmem:[%s0 + $0x160] sm:$0xff]
  %v66 = vld [vmem:[%s0 + $0x168] sm:$0xff]
  %v67 = vld [vmem:[%s0 + $0x170] sm:$0xff]
  %v68 = vld [vmem:[%s0 + $0x178] sm:$0xff]
  %v69 = vld [vmem:[%s0 + $0x180] sm:$0xff]
  %v70 = vld [vmem:[%s0 + $0x188] sm:$0xff]
  %v71 = vld [vmem:[%s0 + $0x190] sm:$0xff]
  %v72 = vld [vmem:[%s0 + $0x198] sm:$0xff]
  %v73 = vld [vmem:[%s0 + $0x1a0] sm:$0xff]
  %v74 = vld [vmem:[%s0 + $0x1a8] sm:$0xff]
  %v75 = vld [vmem:[%s0 + $0x1b0] sm:$0xff]
  %v76 = vld [vmem:[%s0 + $0x1b8] sm:$0xff]
  %v77 = vld [vmem:[%s0 + $0x1c0] sm:$0xff]
  %v78 = vld [vmem:[%s0 + $0x1c8] sm:$0xff]
  %v79 = vld [vmem:[%s0 + $0x1d0] sm:$0xff]
  %v80 = vld [vmem:[%s0 + $0x1d8] sm:$0xff]
  %v81 = vld [vmem:[%s0 + $0x1e0] sm:$0xff]
  %v82 = vld [vmem:[%s0 + $0x1e8] sm:$0xff]
  %v83 = vld [vmem:[%s0 + $0x1f0] sm:$0xff]
  %v84 = vld [vmem:[%s0 + $0x1f8] sm:$0xff]
  %v85 = vld [vmem:[%s0 + $0x200] sm:$0xff]
  %v86 = vld [vmem:[%s0 + $0x208] sm:$0xff]
  %v87 = vld [vmem:[%s0 + $0x210] sm:$0xff]
  %v88 = vld [vmem:[%s0 + $0x218] sm:$0xff]
  %v89 = vld [vmem:[%s0 + $0x220] sm:$0xff]
  %v90 = vld [vmem:[%s0 + $0x228] sm:$0xff]
  %v91 = vld [vmem:[%s0 + $0x230] sm:$0xff]
  %v92 = vld [vmem:[%s0 + $0x238] sm:$0xff]
  %v93 = vld [vmem:[%s0 + $0x240] sm:$0xff]
  %v94 = vld [vmem:[%s0 + $0x248] sm:$0xff]
  %v95 = vld [vmem:[%s0 + $0x250] sm:$0xff]
  %v96 = vld [vmem:[%s0 + $0x258] sm:$0xff]
  %v97 = vld [vmem:[%s0 + $0x260] sm:$0xff]
  %v98 = vld [vmem:[%s0 + $0x268] sm:$0xff]
  %v99 = vld [vmem:[%s0 + $0x270] sm:$0xff]
  %v100 = vld [vmem:[%s0 + $0x278] sm:$0xff]
  %v101 = vld [vmem:[%s0 + $0x280] sm:$0xff]
  %v102 = vld [vmem:[%s0 + $0x288] sm:$0xff]
  %v103 = vld [vmem:[%s0 + $0x290] sm:$0xff]
  %v104 = vld [vmem:[%s0 + $0x298] sm:$0xff]
  %v105 = vld [vmem:[%s0 + $0x2a0] sm:$0xff]
  %v106 = vld [vmem:[%s0 + $0x2a8] sm:$0xff]
  %v107 = vld [vmem:[%s0 + $0x2b0] sm:$0xff]
  %v108 = vld [vmem:[%s0 + $0x2b8] sm:$0xff]
  %v109 = vld [vmem:[%s0 + $0x2c0] sm:$0xff]
  %v110 = vld [vmem:[%s0 + $0x2c8] sm:$0xff]
  %v111 = vld [vmem:[%s0 + $0x2d0] sm:$0xff]
  %v112 = vld [vmem:[%s0 + $0x2d8] sm:$0xff]
  %v113 = vld [vmem:[%s0 + $0x2e0] sm:$0xff]
  %v114 = vld [vmem:[%s0 + $0x2e8] sm:$0xff]
  %v115 = vld [vmem:[%s0 + $0x2f0] sm:$0xff]
  %v116 = vld [vmem:[%s0 + $0x2f8] sm:$0xff]
  %v117 = vld [vmem:[%s0 + $0x300] sm:$0xff]
  %v118 = vld [vmem:[%s0 + $0x308] sm:$0xff]
  %v119 = vld [vmem:[%s0 + $0x310] sm:$0xff]
  %v120 = vld [vmem:[%s0 + $0x318] sm:$0xff]
  %v121 = vld [vmem:[%s0 + $0x320] sm:$0xff]
  %v122 = vld [vmem:[%s0 + $0x328] sm:$0xff]
  %v123 = vld [vmem:[%s0 + $0x330] sm:$0xff]
  %v124 = vld [vmem:[%s0 + $0x338] sm:$0xff]
  %v125 = vld [vmem:[%s0 + $0x340] sm:$0xff]
  %v126 = vld [vmem:[%s0 + $0x348] sm:$0xff]
  %v127 = vld [vmem:[%s0 + $0x350] sm:$0xff]
  %v128 = vld [vmem:[%s0 + $0x358] sm:$0xff]
  %v129 = vld [vmem:[%s0 + $0x360] sm:$0xff]
  %v130 = vld [vmem:[%s0 + $0x368] sm:$0xff]
  %v131 = vld [vmem:[%s0 + $0x370] sm:$0xff]
  %v132 = vld [vmem:[%s0 + $0x378] sm:$0xff]
  %v133 = vld [vmem:[%s0 + $0x380] sm:$0xff]
  %v134 = vld [vmem:[%s0 + $0x388] sm:$0xff]
  %v135 = vld [vmem:[%s0 + $0x390] sm:$0xff]
  %v136 = vld [vmem:[%s0 + $0x398] sm:$0xff]
  %v137 = vld [vmem:[%s0 + $0x3a0] sm:$0xff]
  %v138 = vld [vmem:[%s0 + $0x3a8] sm:$0xff]
  %v139 = vld [vmem:[%s0 + $0x3b0] sm:$0xff]
  %v140 = vld [vmem:[%s0 + $0x3b8] sm:$0xff]
  %v141 = vld [vmem:[%s0 + $0x3c0] sm:$0xff]
  %v142 = vld [vmem:[%s0 + $0x3c8] sm:$0xff]
  %v143 = vld [vmem:[%s0 + $0x3d0] sm:$0xff]
  %v144 = vld [vmem:[%s0 + $0x3d8] sm:$0xff]
  %v145 = vld [vmem:[%s0 + $0x3e0] sm:$0xff]
  %v146 = vld [vmem:[%s0 + $0x3e8] sm:$0xff]
  %v147 = vld [vmem:[%s0 + $0x3f0] sm:$0xff]
  %v148 = vld [vmem:[%s0 + $0x3f8] sm:$0xff]
  %v149 = vld [vmem:[%s0 + $0x400] sm:$0xff]
  %v150 = vld [vmem:[%s0 + $0x408] sm:$0xff]
  %v151 = vld [vmem:[%s0 + $0x410] sm:$0xff]
  %v152 = vld [vmem:[%s0 + $0x418] sm:$0xff]
  %v153 = vld [vmem:[%s0 + $0x420] sm:$0xff]
  %v154 = vld [vmem:[%s0 + $0x428] sm:$0xff]
  %v155 = vld [vmem:[%s0 + $0x430] sm:$0xff]
  %v156 = vld [vmem:[%s0 + $0x438] sm:$0xff]
  %v157 = vld [vmem:[%s0 + $0x440] sm:$0xff]
  %v158 = vld [vmem:[%s0 + $0x448] sm:$0xff]
  %v159 = vld [vmem:[%s0 + $0x450] sm:$0xff]
  %v160 = vld [vmem:[%s0 + $0x458] sm:$0xff]
  %v161 = vld [vmem:[%s0 + $0x460] sm:$0xff]
  %v162 = vld [vmem:[%s0 + $0x468] sm:$0xff]
  %v163 = vld [vmem:[%s0 + $0x470] sm:$0xff]
  %v164 = vld [vmem:[%s0 + $0x478] sm:$0xff]
  %v165 = vld [vmem:[%s1] sm:$0xf]
  %v166 = vld [vmem:[%s1 + $0x4] sm:$0xf]
  %v167 = vld [vmem:[%s1 + $0x8] sm:$0xf]
  %v168 = vld [vmem:[%s1 + $0xc] sm:$0xf]
  %v169 = vld [vmem:[%s1 + $0x10] sm:$0xf]
  %v170 = vld [vmem:[%s1 + $0x14] sm:$0xf]
  %v171 = vld [vmem:[%s1 + $0x18] sm:$0xf]
  %v172 = vld [vmem:[%s1 + $0x1c] sm:$0xf]
  %v173 = vld [vmem:[%s1 + $0x20] sm:$0xf]
  %v174 = vld [vmem:[%s1 + $0x24] sm:$0xf]
  %v175 = vld [vmem:[%s1 + $0x28] sm:$0xf]
  %v176 = vld [vmem:[%s1 + $0x2c] sm:$0xf]
  %v177 = vld [vmem:[%s1 + $0x30] sm:$0xf]
  %v178 = vld [vmem:[%s1 + $0x34] sm:$0xf]
  %v179 = vld [vmem:[%s1 + $0x38] sm:$0xf]
  %v180 = vld [vmem:[%s1 + $0x3c] sm:$0xf]
  %v181 = vld [vmem:[%s1 + $0x40] sm:$0xf]
  %v182 = vld [vmem:[%s1 + $0x44] sm:$0xf]
  %v183 = vld [vmem:[%s1 + $0x48] sm:$0xf]
  %v184 = vld [vmem:[%s1 + $0x4c] sm:$0xf]
  %v185 = vld [vmem:[%s1 + $0x50] sm:$0xf]
  %v186 = vld [vmem:[%s1 + $0x54] sm:$0xf]
  %v187 = vld [vmem:[%s1 + $0x58] sm:$0xf]
  %v188 = vld [vmem:[%s1 + $0x5c] sm:$0xf]
  %v189 = vld [vmem:[%s1 + $0x60] sm:$0xf]
  %v190 = vld [vmem:[%s1 + $0x64] sm:$0xf]
  %v191 = vld [vmem:[%s1 + $0x68] sm:$0xf]
  %v192 = vld [vmem:[%s1 + $0x6c] sm:$0xf]
  %v193 = vld [vmem:[%s1 + $0x70] sm:$0xf]
  %v194 = vld [vmem:[%s1 + $0x74] sm:$0xf]
  %v195 = vld [vmem:[%s1 + $0x78] sm:$0xf]
  %v196 = vld [vmem:[%s1 + $0x7c] sm:$0xf]
  %v197 = vld [vmem:[%s1 + $0x80] sm:$0xf]
  %v198 = vld [vmem:[%s1 + $0x84] sm:$0xf]
  %v199 = vld [vmem:[%s1 + $0x88] sm:$0xf]
  %v200 = vld [vmem:[%s1 + $0x8c] sm:$0xf]
  %v201 = vld [vmem:[%s1 + $0x90] sm:$0xf]
  %v202 = vld [vmem:[%s1 + $0x94] sm:$0xf]
  %v203 = vld [vmem:[%s1 + $0x98] sm:$0xf]
  %v204 = vld [vmem:[%s1 + $0x9c] sm:$0xf]
  %v205 = vld [vmem:[%s1 + $0xa0] sm:$0xf]
  %v206 = vld [vmem:[%s1 + $0xa4] sm:$0xf]
  %v207 = vld [vmem:[%s1 + $0xa8] sm:$0xf]
  %v208 = vld [vmem:[%s1 + $0xac] sm:$0xf]
  %v209 = vld [vmem:[%s1 + $0xb0] sm:$0xf]
  %v210 = vld [vmem:[%s1 + $0xb4] sm:$0xf]
  %v211 = vld [vmem:[%s1 + $0xb8] sm:$0xf]
  %v212 = vld [vmem:[%s1 + $0xbc] sm:$0xf]
  %v213 = vld [vmem:[%s1 + $0xc0] sm:$0xf]
  %v214 = vld [vmem:[%s1 + $0xc4] sm:$0xf]
  %v215 = vld [vmem:[%s1 + $0xc8] sm:$0xf]
  %v216 = vld [vmem:[%s1 + $0xcc] sm:$0xf]
  %v217 = vld [vmem:[%s1 + $0xd0] sm:$0xf]
  %v218 = vld [vmem:[%s1 + $0xd4] sm:$0xf]
  %v219 = vld [vmem:[%s1 + $0xd8] sm:$0xf]
  %v220 = vld [vmem:[%s1 + $0xdc] sm:$0xf]
  %v221 = vld [vmem:[%s1 + $0xe0] sm:$0xf]
  %v222 = vld [vmem:[%s1 + $0xe4] sm:$0xf]
  %v223 = vld [vmem:[%s1 + $0xe8] sm:$0xf]
  %v224 = vld [vmem:[%s1 + $0xec] sm:$0xf]
  %v225 = vld [vmem:[%s1 + $0xf0] sm:$0xf]
  %v226 = vld [vmem:[%s1 + $0xf4] sm:$0xf]
  %v227 = vld [vmem:[%s1 + $0xf8] sm:$0xf]
  %v228 = vld [vmem:[%s1 + $0xfc] sm:$0xf]
  %v229 = vld [vmem:[%s1 + $0x100] sm:$0xf]
  %v230 = vld [vmem:[%s1 + $0x104] sm:$0xf]
  %v231 = vld [vmem:[%s1 + $0x108] sm:$0xf]
  %v232 = vld [vmem:[%s1 + $0x10c] sm:$0xf]
  %v233 = vld [vmem:[%s1 + $0x110] sm:$0xf]
  %v234 = vld [vmem:[%s1 + $0x114] sm:$0xf]
  %v235 = vld [vmem:[%s1 + $0x118] sm:$0xf]
  %v236 = vld [vmem:[%s1 + $0x11c] sm:$0xf]
  %v237 = vld [vmem:[%s1 + $0x120] sm:$0xf]
  %v238 = vld [vmem:[%s1 + $0x124] sm:$0xf]
  %v239 = vld [vmem:[%s1 + $0x128] sm:$0xf]
  %v240 = vld [vmem:[%s1 + $0x12c] sm:$0xf]
  %v241 = vld [vmem:[%s1 + $0x130] sm:$0xf]
  %v242 = vld [vmem:[%s1 + $0x134] sm:$0xf]
  %v243 = vld [vmem:[%s1 + $0x138] sm:$0xf]
  %v244 = vld [vmem:[%s1 + $0x13c] sm:$0xf]
  %v245 = vld [vmem:[%s1 + $0x140] sm:$0xf]
  %v246 = vld [vmem:[%s1 + $0x144] sm:$0xf]
  %v247 = vld [vmem:[%s1 + $0x148] sm:$0xf]
  %v248 = vld [vmem:[%s1 + $0x14c] sm:$0xf]
  %v249 = vld [vmem:[%s1 + $0x150] sm:$0xf]
  %v250 = vld [vmem:[%s1 + $0x154] sm:$0xf]
  %v251 = vld [vmem:[%s1 + $0x158] sm:$0xf]
  %v252 = vld [vmem:[%s1 + $0x15c] sm:$0xf]
  %v253 = vld [vmem:[%s1 + $0x160] sm:$0xf]
  %v254 = vld [vmem:[%s1 + $0x164] sm:$0xf]
  %v255 = vld [vmem:[%s1 + $0x168] sm:$0xf]
  %v256 = vld [vmem:[%s1 + $0x16c] sm:$0xf]
  %v257 = vld [vmem:[%s1 + $0x170] sm:$0xf]
  %v258 = vld [vmem:[%s1 + $0x174] sm:$0xf]
  %v259 = vld [vmem:[%s1 + $0x178] sm:$0xf]
  %v260 = vld [vmem:[%s1 + $0x17c] sm:$0xf]
  %v261 = vld [vmem:[%s1 + $0x180] sm:$0xf]
  %v262 = vld [vmem:[%s1 + $0x184] sm:$0xf]
  %v263 = vld [vmem:[%s1 + $0x188] sm:$0xf]
  %v264 = vld [vmem:[%s1 + $0x18c] sm:$0xf]
  %v265 = vld [vmem:[%s1 + $0x190] sm:$0xf]
  %v266 = vld [vmem:[%s1 + $0x194] sm:$0xf]
  %v267 = vld [vmem:[%s1 + $0x198] sm:$0xf]
  %v268 = vld [vmem:[%s1 + $0x19c] sm:$0xf]
  %v269 = vld [vmem:[%s1 + $0x1a0] sm:$0xf]
  %v270 = vld [vmem:[%s1 + $0x1a4] sm:$0xf]
  %v271 = vld [vmem:[%s1 + $0x1a8] sm:$0xf]
  %v272 = vld [vmem:[%s1 + $0x1ac] sm:$0xf]
  %v273 = vld [vmem:[%s1 + $0x1b0] sm:$0xf]
  %v274 = vld [vmem:[%s1 + $0x1b4] sm:$0xf]
  %v275 = vld [vmem:[%s1 + $0x1b8] sm:$0xf]
  %v276 = vld [vmem:[%s1 + $0x1bc] sm:$0xf]
  %v277 = vld [vmem:[%s1 + $0x1c0] sm:$0xf]
  %v278 = vld [vmem:[%s1 + $0x1c4] sm:$0xf]
  %v279 = vld [vmem:[%s1 + $0x1c8] sm:$0xf]
  %v280 = vld [vmem:[%s1 + $0x1cc] sm:$0xf]
  %v281 = vld [vmem:[%s1 + $0x1d0] sm:$0xf]
  %v282 = vld [vmem:[%s1 + $0x1d4] sm:$0xf]
  %v283 = vld [vmem:[%s1 + $0x1d8] sm:$0xf]
  %v284 = vld [vmem:[%s1 + $0x1dc] sm:$0xf]
  %v285 = vld [vmem:[%s1 + $0x1e0] sm:$0xf]
  %v286 = vld [vmem:[%s1 + $0x1e4] sm:$0xf]
  %v287 = vld [vmem:[%s1 + $0x1e8] sm:$0xf]
  %v288 = vld [vmem:[%s1 + $0x1ec] sm:$0xf]
  %v289 = vld [vmem:[%s1 + $0x1f0] sm:$0xf]
  %v290 = vld [vmem:[%s1 + $0x1f4] sm:$0xf]
  %v291 = vld [vmem:[%s1 + $0x1f8] sm:$0xf]
  %v292 = vld [vmem:[%s1 + $0x1fc] sm:$0xf]
  %v293 = vld [vmem:[%s1 + $0x200] sm:$0xf]
  %v294 = vld [vmem:[%s1 + $0x204] sm:$0xf]
  %v295 = vld [vmem:[%s1 + $0x208] sm:$0xf]
  %v296 = vld [vmem:[%s1 + $0x20c] sm:$0xf]
  %v297 = vld [vmem:[%s1 + $0x210] sm:$0xf]
  %v298 = vld [vmem:[%s1 + $0x214] sm:$0xf]
  %v299 = vld [vmem:[%s1 + $0x218] sm:$0xf]
  %v300 = vld [vmem:[%s1 + $0x21c] sm:$0xf]
  %v301 = vld [vmem:[%s1 + $0x220] sm:$0xf]
  %v302 = vld [vmem:[%s1 + $0x224] sm:$0xf]
  %v303 = vld [vmem:[%s1 + $0x228] sm:$0xf]
  %v304 = vld [vmem:[%s1 + $0x22c] sm:$0xf]
  %v305 = vld [vmem:[%s1 + $0x230] sm:$0xf]
  %v306 = vld [vmem:[%s1 + $0x234] sm:$0xf]
  %v307 = vld [vmem:[%s1 + $0x238] sm:$0xf]
  %v308 = vld [vmem:[%s1 + $0x23c] sm:$0xf]
  %v309 = vld [vmem:[%s1 + $0x240] sm:$0xf]
  %v310 = vld [vmem:[%s1 + $0x244] sm:$0xf]
  %v311 = vld [vmem:[%s1 + $0x248] sm:$0xf]
  %v312 = vld [vmem:[%s1 + $0x24c] sm:$0xf]
  %v313 = vld [vmem:[%s1 + $0x250] sm:$0xf]
  %v314 = vld [vmem:[%s1 + $0x254] sm:$0xf]
  %v315 = vld [vmem:[%s1 + $0x258] sm:$0xf]
  %v316 = vld [vmem:[%s1 + $0x25c] sm:$0xf]
  %v317 = vld [vmem:[%s1 + $0x260] sm:$0xf]
  %v318 = vld [vmem:[%s1 + $0x264] sm:$0xf]
  %v319 = vld [vmem:[%s1 + $0x268] sm:$0xf]
  %v320 = vld [vmem:[%s1 + $0x26c] sm:$0xf]
  %v321 = vld [vmem:[%s1 + $0x270] sm:$0xf]
  %v322 = vld [vmem:[%s1 + $0x274] sm:$0xf]
  %v323 = vld [vmem:[%s1 + $0x278] sm:$0xf]
  %v324 = vld [vmem:[%s1 + $0x27c] sm:$0xf]
  %v325 = vld [vmem:[%s1 + $0x280] sm:$0xf]
  %v326 = vld [vmem:[%s1 + $0x284] sm:$0xf]
  %v327 = vld [vmem:[%s1 + $0x288] sm:$0xf]
  %v328 = vld [vmem:[%s1 + $0x28c] sm:$0xf]
  %v329 = vld [vmem:[%s1 + $0x290] sm:$0xf]
  %v330 = vld [vmem:[%s1 + $0x294] sm:$0xf]
  %v331 = vld [vmem:[%s1 + $0x298] sm:$0xf]
  %v332 = vld [vmem:[%s1 + $0x29c] sm:$0xf]
  %v333 = vld [vmem:[%s1 + $0x2a0] sm:$0xf]
  %v334 = vld [vmem:[%s1 + $0x2a4] sm:$0xf]
  %v335 = vld [vmem:[%s1 + $0x2a8] sm:$0xf]
  %v336 = vld [vmem:[%s1 + $0x2ac] sm:$0xf]
  %v337 = vld [vmem:[%s1 + $0x2b0] sm:$0xf]
  %v338 = vld [vmem:[%s1 + $0x2b4] sm:$0xf]
  %v339 = vld [vmem:[%s1 + $0x2b8] sm:$0xf]
  %v340 = vld [vmem:[%s1 + $0x2bc] sm:$0xf]
  %v341 = vld [vmem:[%s1 + $0x2c0] sm:$0xf]
  %v342 = vld [vmem:[%s1 + $0x2c4] sm:$0xf]
  %v343 = vld [vmem:[%s1 + $0x2c8] sm:$0xf]
  %v344 = vld [vmem:[%s1 + $0x2cc] sm:$0xf]
  %v345 = vld [vmem:[%s1 + $0x2d0] sm:$0xf]
  %v346 = vld [vmem:[%s1 + $0x2d4] sm:$0xf]
  %v347 = vld [vmem:[%s1 + $0x2d8] sm:$0xf]
  %v348 = vld [vmem:[%s1 + $0x2dc] sm:$0xf]
  %v349 = vld [vmem:[%s1 + $0x2e0] sm:$0xf]
  %v350 = vld [vmem:[%s1 + $0x2e4] sm:$0xf]
  %v351 = vld [vmem:[%s1 + $0x2e8] sm:$0xf]
  %v352 = vld [vmem:[%s1 + $0x2ec] sm:$0xf]
  %v353 = vld [vmem:[%s1 + $0x2f0] sm:$0xf]
  %v354 = vld [vmem:[%s1 + $0x2f4] sm:$0xf]
  %v355 = vld [vmem:[%s1 + $0x2f8] sm:$0xf]
  %v356 = vld [vmem:[%s1 + $0x2fc] sm:$0xf]
  %v357 = vld [vmem:[%s1 + $0x300] sm:$0xf]
  %v358 = vld [vmem:[%s1 + $0x304] sm:$0xf]
  %v359 = vld [vmem:[%s1 + $0x308] sm:$0xf]
  %v360 = vld [vmem:[%s1 + $0x30c] sm:$0xf]
  %v361 = vld [vmem:[%s1 + $0x310] sm:$0xf]
  %v362 = vld [vmem:[%s1 + $0x314] sm:$0xf]
  %v363 = vld [vmem:[%s1 + $0x318] sm:$0xf]
  %v364 = vld [vmem:[%s1 + $0x31c] sm:$0xf]
  %v365 = vld [vmem:[%s1 + $0x320] sm:$0xf]
  %v366 = vld [vmem:[%s1 + $0x324] sm:$0xf]
  %v367 = vld [vmem:[%s1 + $0x328] sm:$0xf]
  %v368 = vld [vmem:[%s1 + $0x32c] sm:$0xf]
  %v369 = vld [vmem:[%s1 + $0x330] sm:$0xf]
  %v370 = vld [vmem:[%s1 + $0x334] sm:$0xf]
  %v371 = vld [vmem:[%s1 + $0x338] sm:$0xf]
  %v372 = vld [vmem:[%s1 + $0x33c] sm:$0xf]
  %v373 = vld [vmem:[%s1 + $0x340] sm:$0xf]
  %v374 = vld [vmem:[%s1 + $0x344] sm:$0xf]
  %v375 = vld [vmem:[%s1 + $0x348] sm:$0xf]
  %v376 = vld [vmem:[%s1 + $0x34c] sm:$0xf]
  %v377 = vld [vmem:[%s1 + $0x350] sm:$0xf]
  %v378 = vld [vmem:[%s1 + $0x354] sm:$0xf]
  %v379 = vld [vmem:[%s1 + $0x358] sm:$0xf]
  %v380 = vld [vmem:[%s1 + $0x35c] sm:$0xf]
  %v381 = vld [vmem:[%s1 + $0x360] sm:$0xf]
  %v382 = vld [vmem:[%s1 + $0x364] sm:$0xf]
  %v383 = vld [vmem:[%s1 + $0x368] sm:$0xf]
  %v384 = vld [vmem:[%s1 + $0x36c] sm:$0xf]
  %v385 = vld [vmem:[%s1 + $0x370] sm:$0xf]
  %v386 = vld [vmem:[%s1 + $0x374] sm:$0xf]
  %v387 = vld [vmem:[%s1 + $0x378] sm:$0xf]
  %v388 = vld [vmem:[%s1 + $0x37c] sm:$0xf]
  %v389 = vld [vmem:[%s1 + $0x380] sm:$0xf]
  %v390 = vld [vmem:[%s1 + $0x384] sm:$0xf]
  %v391 = vld [vmem:[%s1 + $0x388] sm:$0xf]
  %v392 = vld [vmem:[%s1 + $0x38c] sm:$0xf]
  %v393 = vld [vmem:[%s1 + $0x390] sm:$0xf]
  %v394 = vld [vmem:[%s1 + $0x394] sm:$0xf]
  %v395 = vld [vmem:[%s1 + $0x398] sm:$0xf]
  %v396 = vld [vmem:[%s1 + $0x39c] sm:$0xf]
  %v397 = vld [vmem:[%s1 + $0x3a0] sm:$0xf]
  %v398 = vld [vmem:[%s1 + $0x3a4] sm:$0xf]
  %v399 = vld [vmem:[%s1 + $0x3a8] sm:$0xf]
  %v400 = vld [vmem:[%s1 + $0x3ac] sm:$0xf]
  %v401 = vld [vmem:[%s1 + $0x3b0] sm:$0xf]
  %v402 = vld [vmem:[%s1 + $0x3b4] sm:$0xf]
  %v403 = vld [vmem:[%s1 + $0x3b8] sm:$0xf]
  %v404 = vld [vmem:[%s1 + $0x3bc] sm:$0xf]
  %v405 = vld [vmem:[%s1 + $0x3c0] sm:$0xf]
  %v406 = vld [vmem:[%s1 + $0x3c4] sm:$0xf]
  %v407 = vld [vmem:[%s1 + $0x3c8] sm:$0xf]
  %v408 = vld [vmem:[%s1 + $0x3cc] sm:$0xf]
  %v409 = vld [vmem:[%s1 + $0x3d0] sm:$0xf]
  %v410 = vld [vmem:[%s1 + $0x3d4] sm:$0xf]
  %v411 = vld [vmem:[%s1 + $0x3d8] sm:$0xf]
  %v412 = vld [vmem:[%s1 + $0x3dc] sm:$0xf]
  %v413 = vld [vmem:[%s1 + $0x3e0] sm:$0xf]
  %v414 = vld [vmem:[%s1 + $0x3e4] sm:$0xf]
  %v415 = vld [vmem:[%s1 + $0x3e8] sm:$0xf]
  %v416 = vld [vmem:[%s1 + $0x3ec] sm:$0xf]
  %v417 = vld [vmem:[%s1 + $0x3f0] sm:$0xf]
  %v418 = vld [vmem:[%s1 + $0x3f4] sm:$0xf]
  %v419 = vld [vmem:[%s1 + $0x3f8] sm:$0xf]
  %v420 = vld [vmem:[%s1 + $0x3fc] sm:$0xf]
  %v421 = vld [vmem:[%s1 + $0x400] sm:$0xf]
  %v422 = vld [vmem:[%s1 + $0x404] sm:$0xf]
  %v423 = vld [vmem:[%s1 + $0x408] sm:$0xf]
  %v424 = vld [vmem:[%s1 + $0x40c] sm:$0xf]
  %v425 = vld [vmem:[%s1 + $0x410] sm:$0xf]
  %v426 = vld [vmem:[%s1 + $0x414] sm:$0xf]
  %v427 = vld [vmem:[%s1 + $0x418] sm:$0xf]
  %v428 = vld [vmem:[%s1 + $0x41c] sm:$0xf]
  %v429 = vld [vmem:[%s1 + $0x420] sm:$0xf]
  %v430 = vld [vmem:[%s1 + $0x424] sm:$0xf]
  %v431 = vld [vmem:[%s1 + $0x428] sm:$0xf]
  %v432 = vld [vmem:[%s1 + $0x42c] sm:$0xf]
  %v433 = vld [vmem:[%s1 + $0x430] sm:$0xf]
  %v434 = vld [vmem:[%s1 + $0x434] sm:$0xf]
  %v435 = vld [vmem:[%s1 + $0x438] sm:$0xf]
  %v436 = vld [vmem:[%s1 + $0x43c] sm:$0xf]
  %v437 = vld [vmem:[%s1 + $0x440] sm:$0xf]
  %v438 = vld [vmem:[%s1 + $0x444] sm:$0xf]
  %v439 = vld [vmem:[%s1 + $0x448] sm:$0xf]
  %v440 = vld [vmem:[%s1 + $0x44c] sm:$0xf]
  %v441 = vld [vmem:[%s1 + $0x450] sm:$0xf]
  %v442 = vld [vmem:[%s1 + $0x454] sm:$0xf]
  %v443 = vld [vmem:[%s1 + $0x458] sm:$0xf]
  %v444 = vld [vmem:[%s1 + $0x45c] sm:$0xf]
  %v445 = vld [vmem:[%s1 + $0x460] sm:$0xf]
  %v446 = vld [vmem:[%s1 + $0x464] sm:$0xf]
  %v447 = vld [vmem:[%s1 + $0x468] sm:$0xf]
  %v448 = vld [vmem:[%s1 + $0x46c] sm:$0xf]
  %v449 = vld [vmem:[%s1 + $0x470] sm:$0xf]
  %v450 = vld [vmem:[%s1 + $0x474] sm:$0xf]
  %v451 = vld [vmem:[%s1 + $0x478] sm:$0xf]
  %v452 = vld [vmem:[%s1 + $0x47c] sm:$0xf]
  %v453 = vld [vmem:[%s2] sm:$0x1]
  %v455 = vlaneseq
  %v456 = vshrl.u32 %v455, 7
  %v457 = vsub.s32 0, %v456
  %v458 = vrot.slane %v453, %v457
  %v604 = vunpack.c.l.b16 %v21
  %v605 = vunpack.c.h.b16 %v21
  %v606 = vunpack.c.l.b16 %v22
  %v607 = vunpack.c.h.b16 %v22
  %v608 = vunpack.c.l.b16 %v23
  %v609 = vunpack.c.h.b16 %v23
  %v610 = vunpack.c.l.b16 %v24
  %v611 = vunpack.c.h.b16 %v24
  %v612 = vunpack.c.l.b16 %v25
  %v613 = vunpack.c.h.b16 %v25
  %v614 = vunpack.c.l.b16 %v26
  %v615 = vunpack.c.h.b16 %v26
  %v616 = vunpack.c.l.b16 %v27
  %v617 = vunpack.c.h.b16 %v27
  %v618 = vunpack.c.l.b16 %v28
  %v619 = vunpack.c.h.b16 %v28
  %v620 = vunpack.c.l.b16 %v29
  %v621 = vunpack.c.h.b16 %v29
  %v622 = vunpack.c.l.b16 %v30
  %v623 = vunpack.c.h.b16 %v30
  %v624 = vunpack.c.l.b16 %v31
  %v625 = vunpack.c.h.b16 %v31
  %v626 = vunpack.c.l.b16 %v32
  %v627 = vunpack.c.h.b16 %v32
  %v628 = vunpack.c.l.b16 %v33
  %v629 = vunpack.c.h.b16 %v33
  %v630 = vunpack.c.l.b16 %v34
  %v631 = vunpack.c.h.b16 %v34
  %v632 = vunpack.c.l.b16 %v35
  %v633 = vunpack.c.h.b16 %v35
  %v634 = vunpack.c.l.b16 %v36
  %v635 = vunpack.c.h.b16 %v36
  %v636 = vunpack.c.l.b16 %v37
  %v637 = vunpack.c.h.b16 %v37
  %v638 = vunpack.c.l.b16 %v38
  %v639 = vunpack.c.h.b16 %v38
  %v640 = vunpack.c.l.b16 %v39
  %v641 = vunpack.c.h.b16 %v39
  %v642 = vunpack.c.l.b16 %v40
  %v643 = vunpack.c.h.b16 %v40
  %v644 = vunpack.c.l.b16 %v41
  %v645 = vunpack.c.h.b16 %v41
  %v646 = vunpack.c.l.b16 %v42
  %v647 = vunpack.c.h.b16 %v42
  %v648 = vunpack.c.l.b16 %v43
  %v649 = vunpack.c.h.b16 %v43
  %v650 = vunpack.c.l.b16 %v44
  %v651 = vunpack.c.h.b16 %v44
  %v652 = vunpack.c.l.b16 %v45
  %v653 = vunpack.c.h.b16 %v45
  %v654 = vunpack.c.l.b16 %v46
  %v655 = vunpack.c.h.b16 %v46
  %v656 = vunpack.c.l.b16 %v47
  %v657 = vunpack.c.h.b16 %v47
  %v658 = vunpack.c.l.b16 %v48
  %v659 = vunpack.c.h.b16 %v48
  %v660 = vunpack.c.l.b16 %v49
  %v661 = vunpack.c.h.b16 %v49
  %v662 = vunpack.c.l.b16 %v50
  %v663 = vunpack.c.h.b16 %v50
  %v664 = vunpack.c.l.b16 %v51
  %v665 = vunpack.c.h.b16 %v51
  %v666 = vunpack.c.l.b16 %v52
  %v667 = vunpack.c.h.b16 %v52
  %v668 = vunpack.c.l.b16 %v53
  %v669 = vunpack.c.h.b16 %v53
  %v670 = vunpack.c.l.b16 %v54
  %v671 = vunpack.c.h.b16 %v54
  %v672 = vunpack.c.l.b16 %v55
  %v673 = vunpack.c.h.b16 %v55
  %v674 = vunpack.c.l.b16 %v56
  %v675 = vunpack.c.h.b16 %v56
  %v676 = vunpack.c.l.b16 %v57
  %v677 = vunpack.c.h.b16 %v57
  %v678 = vunpack.c.l.b16 %v58
  %v679 = vunpack.c.h.b16 %v58
  %v680 = vunpack.c.l.b16 %v59
  %v681 = vunpack.c.h.b16 %v59
  %v682 = vunpack.c.l.b16 %v60
  %v683 = vunpack.c.h.b16 %v60
  %v684 = vunpack.c.l.b16 %v61
  %v685 = vunpack.c.h.b16 %v61
  %v686 = vunpack.c.l.b16 %v62
  %v687 = vunpack.c.h.b16 %v62
  %v688 = vunpack.c.l.b16 %v63
  %v689 = vunpack.c.h.b16 %v63
  %v690 = vunpack.c.l.b16 %v64
  %v691 = vunpack.c.h.b16 %v64
  %v692 = vunpack.c.l.b16 %v65
  %v693 = vunpack.c.h.b16 %v65
  %v694 = vunpack.c.l.b16 %v66
  %v695 = vunpack.c.h.b16 %v66
  %v696 = vunpack.c.l.b16 %v67
  %v697 = vunpack.c.h.b16 %v67
  %v698 = vunpack.c.l.b16 %v68
  %v699 = vunpack.c.h.b16 %v68
  %v700 = vunpack.c.l.b16 %v69
  %v701 = vunpack.c.h.b16 %v69
  %v702 = vunpack.c.l.b16 %v70
  %v703 = vunpack.c.h.b16 %v70
  %v704 = vunpack.c.l.b16 %v71
  %v705 = vunpack.c.h.b16 %v71
  %v706 = vunpack.c.l.b16 %v72
  %v707 = vunpack.c.h.b16 %v72
  %v708 = vunpack.c.l.b16 %v73
  %v709 = vunpack.c.h.b16 %v73
  %v710 = vunpack.c.l.b16 %v74
  %v711 = vunpack.c.h.b16 %v74
  %v712 = vunpack.c.l.b16 %v75
  %v713 = vunpack.c.h.b16 %v75
  %v714 = vunpack.c.l.b16 %v76
  %v715 = vunpack.c.h.b16 %v76
  %v716 = vunpack.c.l.b16 %v77
  %v717 = vunpack.c.h.b16 %v77
  %v718 = vunpack.c.l.b16 %v78
  %v719 = vunpack.c.h.b16 %v78
  %v720 = vunpack.c.l.b16 %v79
  %v721 = vunpack.c.h.b16 %v79
  %v722 = vunpack.c.l.b16 %v80
  %v723 = vunpack.c.h.b16 %v80
  %v724 = vunpack.c.l.b16 %v81
  %v725 = vunpack.c.h.b16 %v81
  %v726 = vunpack.c.l.b16 %v82
  %v727 = vunpack.c.h.b16 %v82
  %v728 = vunpack.c.l.b16 %v83
  %v729 = vunpack.c.h.b16 %v83
  %v730 = vunpack.c.l.b16 %v84
  %v731 = vunpack.c.h.b16 %v84
  %v732 = vunpack.c.l.b16 %v85
  %v733 = vunpack.c.h.b16 %v85
  %v734 = vunpack.c.l.b16 %v86
  %v735 = vunpack.c.h.b16 %v86
  %v736 = vunpack.c.l.b16 %v87
  %v737 = vunpack.c.h.b16 %v87
  %v738 = vunpack.c.l.b16 %v88
  %v739 = vunpack.c.h.b16 %v88
  %v740 = vunpack.c.l.b16 %v89
  %v741 = vunpack.c.h.b16 %v89
  %v742 = vunpack.c.l.b16 %v90
  %v743 = vunpack.c.h.b16 %v90
  %v744 = vunpack.c.l.b16 %v91
  %v745 = vunpack.c.h.b16 %v91
  %v746 = vunpack.c.l.b16 %v92
  %v747 = vunpack.c.h.b16 %v92
  %v748 = vunpack.c.l.b16 %v93
  %v749 = vunpack.c.h.b16 %v93
  %v750 = vunpack.c.l.b16 %v94
  %v751 = vunpack.c.h.b16 %v94
  %v752 = vunpack.c.l.b16 %v95
  %v753 = vunpack.c.h.b16 %v95
  %v754 = vunpack.c.l.b16 %v96
  %v755 = vunpack.c.h.b16 %v96
  %v756 = vunpack.c.l.b16 %v97
  %v757 = vunpack.c.h.b16 %v97
  %v758 = vunpack.c.l.b16 %v98
  %v759 = vunpack.c.h.b16 %v98
  %v760 = vunpack.c.l.b16 %v99
  %v761 = vunpack.c.h.b16 %v99
  %v762 = vunpack.c.l.b16 %v100
  %v763 = vunpack.c.h.b16 %v100
  %v764 = vunpack.c.l.b16 %v101
  %v765 = vunpack.c.h.b16 %v101
  %v766 = vunpack.c.l.b16 %v102
  %v767 = vunpack.c.h.b16 %v102
  %v768 = vunpack.c.l.b16 %v103
  %v769 = vunpack.c.h.b16 %v103
  %v770 = vunpack.c.l.b16 %v104
  %v771 = vunpack.c.h.b16 %v104
  %v772 = vunpack.c.l.b16 %v105
  %v773 = vunpack.c.h.b16 %v105
  %v774 = vunpack.c.l.b16 %v106
  %v775 = vunpack.c.h.b16 %v106
  %v776 = vunpack.c.l.b16 %v107
  %v777 = vunpack.c.h.b16 %v107
  %v778 = vunpack.c.l.b16 %v108
  %v779 = vunpack.c.h.b16 %v108
  %v780 = vunpack.c.l.b16 %v109
  %v781 = vunpack.c.h.b16 %v109
  %v782 = vunpack.c.l.b16 %v110
  %v783 = vunpack.c.h.b16 %v110
  %v784 = vunpack.c.l.b16 %v111
  %v785 = vunpack.c.h.b16 %v111
  %v786 = vunpack.c.l.b16 %v112
  %v787 = vunpack.c.h.b16 %v112
  %v788 = vunpack.c.l.b16 %v113
  %v789 = vunpack.c.h.b16 %v113
  %v790 = vunpack.c.l.b16 %v114
  %v791 = vunpack.c.h.b16 %v114
  %v792 = vunpack.c.l.b16 %v115
  %v793 = vunpack.c.h.b16 %v115
  %v794 = vunpack.c.l.b16 %v116
  %v795 = vunpack.c.h.b16 %v116
  %v796 = vunpack.c.l.b16 %v117
  %v797 = vunpack.c.h.b16 %v117
  %v798 = vunpack.c.l.b16 %v118
  %v799 = vunpack.c.h.b16 %v118
  %v800 = vunpack.c.l.b16 %v119
  %v801 = vunpack.c.h.b16 %v119
  %v802 = vunpack.c.l.b16 %v120
  %v803 = vunpack.c.h.b16 %v120
  %v804 = vunpack.c.l.b16 %v121
  %v805 = vunpack.c.h.b16 %v121
  %v806 = vunpack.c.l.b16 %v122
  %v807 = vunpack.c.h.b16 %v122
  %v808 = vunpack.c.l.b16 %v123
  %v809 = vunpack.c.h.b16 %v123
  %v810 = vunpack.c.l.b16 %v124
  %v811 = vunpack.c.h.b16 %v124
  %v812 = vunpack.c.l.b16 %v125
  %v813 = vunpack.c.h.b16 %v125
  %v814 = vunpack.c.l.b16 %v126
  %v815 = vunpack.c.h.b16 %v126
  %v816 = vunpack.c.l.b16 %v127
  %v817 = vunpack.c.h.b16 %v127
  %v818 = vunpack.c.l.b16 %v128
  %v819 = vunpack.c.h.b16 %v128
  %v820 = vunpack.c.l.b16 %v129
  %v821 = vunpack.c.h.b16 %v129
  %v822 = vunpack.c.l.b16 %v130
  %v823 = vunpack.c.h.b16 %v130
  %v824 = vunpack.c.l.b16 %v131
  %v825 = vunpack.c.h.b16 %v131
  %v826 = vunpack.c.l.b16 %v132
  %v827 = vunpack.c.h.b16 %v132
  %v828 = vunpack.c.l.b16 %v133
  %v829 = vunpack.c.h.b16 %v133
  %v830 = vunpack.c.l.b16 %v134
  %v831 = vunpack.c.h.b16 %v134
  %v832 = vunpack.c.l.b16 %v135
  %v833 = vunpack.c.h.b16 %v135
  %v834 = vunpack.c.l.b16 %v136
  %v835 = vunpack.c.h.b16 %v136
  %v836 = vunpack.c.l.b16 %v137
  %v837 = vunpack.c.h.b16 %v137
  %v838 = vunpack.c.l.b16 %v138
  %v839 = vunpack.c.h.b16 %v138
  %v840 = vunpack.c.l.b16 %v139
  %v841 = vunpack.c.h.b16 %v139
  %v842 = vunpack.c.l.b16 %v140
  %v843 = vunpack.c.h.b16 %v140
  %v844 = vunpack.c.l.b16 %v141
  %v845 = vunpack.c.h.b16 %v141
  %v846 = vunpack.c.l.b16 %v142
  %v847 = vunpack.c.h.b16 %v142
  %v848 = vunpack.c.l.b16 %v143
  %v849 = vunpack.c.h.b16 %v143
  %v850 = vunpack.c.l.b16 %v144
  %v851 = vunpack.c.h.b16 %v144
  %v852 = vunpack.c.l.b16 %v145
  %v853 = vunpack.c.h.b16 %v145
  %v854 = vunpack.c.l.b16 %v146
  %v855 = vunpack.c.h.b16 %v146
  %v856 = vunpack.c.l.b16 %v147
  %v857 = vunpack.c.h.b16 %v147
  %v858 = vunpack.c.l.b16 %v148
  %v859 = vunpack.c.h.b16 %v148
  %v860 = vunpack.c.l.b16 %v149
  %v861 = vunpack.c.h.b16 %v149
  %v862 = vunpack.c.l.b16 %v150
  %v863 = vunpack.c.h.b16 %v150
  %v864 = vunpack.c.l.b16 %v151
  %v865 = vunpack.c.h.b16 %v151
  %v866 = vunpack.c.l.b16 %v152
  %v867 = vunpack.c.h.b16 %v152
  %v868 = vunpack.c.l.b16 %v153
  %v869 = vunpack.c.h.b16 %v153
  %v870 = vunpack.c.l.b16 %v154
  %v871 = vunpack.c.h.b16 %v154
  %v872 = vunpack.c.l.b16 %v155
  %v873 = vunpack.c.h.b16 %v155
  %v874 = vunpack.c.l.b16 %v156
  %v875 = vunpack.c.h.b16 %v156
  %v876 = vunpack.c.l.b16 %v157
  %v877 = vunpack.c.h.b16 %v157
  %v878 = vunpack.c.l.b16 %v158
  %v879 = vunpack.c.h.b16 %v158
  %v880 = vunpack.c.l.b16 %v159
  %v881 = vunpack.c.h.b16 %v159
  %v882 = vunpack.c.l.b16 %v160
  %v883 = vunpack.c.h.b16 %v160
  %v884 = vunpack.c.l.b16 %v161
  %v885 = vunpack.c.h.b16 %v161
  %v886 = vunpack.c.l.b16 %v162
  %v887 = vunpack.c.h.b16 %v162
  %v888 = vunpack.c.l.b16 %v163
  %v889 = vunpack.c.h.b16 %v163
  %v890 = vunpack.c.l.b16 %v164
  %v891 = vunpack.c.h.b16 %v164
  %v892 = vpack.c.b16 %v622, %v604
  %v893 = vpack.c.b16 %v623, %v605
  %v894 = vpack.c.b16 %v624, %v606
  %v895 = vpack.c.b16 %v625, %v607
  %v896 = vpack.c.b16 %v626, %v608
  %v897 = vpack.c.b16 %v627, %v609
  %v898 = vpack.c.b16 %v628, %v610
  %v899 = vpack.c.b16 %v629, %v611
  %v900 = vpack.c.b16 %v630, %v612
  %v901 = vpack.c.b16 %v631, %v613
  %v902 = vpack.c.b16 %v632, %v614
  %v903 = vpack.c.b16 %v633, %v615
  %v904 = vpack.c.b16 %v634, %v616
  %v905 = vpack.c.b16 %v635, %v617
  %v906 = vpack.c.b16 %v636, %v618
  %v907 = vpack.c.b16 %v637, %v619
  %v908 = vpack.c.b16 %v638, %v620
  %v909 = vpack.c.b16 %v639, %v621
  %v910 = vpack.c.b16 %v658, %v640
  %v911 = vpack.c.b16 %v659, %v641
  %v912 = vpack.c.b16 %v660, %v642
  %v913 = vpack.c.b16 %v661, %v643
  %v914 = vpack.c.b16 %v662, %v644
  %v915 = vpack.c.b16 %v663, %v645
  %v916 = vpack.c.b16 %v664, %v646
  %v917 = vpack.c.b16 %v665, %v647
  %v918 = vpack.c.b16 %v666, %v648
  %v919 = vpack.c.b16 %v667, %v649
  %v920 = vpack.c.b16 %v668, %v650
  %v921 = vpack.c.b16 %v669, %v651
  %v922 = vpack.c.b16 %v670, %v652
  %v923 = vpack.c.b16 %v671, %v653
  %v924 = vpack.c.b16 %v672, %v654
  %v925 = vpack.c.b16 %v673, %v655
  %v926 = vpack.c.b16 %v674, %v656
  %v927 = vpack.c.b16 %v675, %v657
  %v928 = vpack.c.b16 %v694, %v676
  %v929 = vpack.c.b16 %v695, %v677
  %v930 = vpack.c.b16 %v696, %v678
  %v931 = vpack.c.b16 %v697, %v679
  %v932 = vpack.c.b16 %v698, %v680
  %v933 = vpack.c.b16 %v699, %v681
  %v934 = vpack.c.b16 %v700, %v682
  %v935 = vpack.c.b16 %v701, %v683
  %v936 = vpack.c.b16 %v702, %v684
  %v937 = vpack.c.b16 %v703, %v685
  %v938 = vpack.c.b16 %v704, %v686
  %v939 = vpack.c.b16 %v705, %v687
  %v940 = vpack.c.b16 %v706, %v688
  %v941 = vpack.c.b16 %v707, %v689
  %v942 = vpack.c.b16 %v708, %v690
  %v943 = vpack.c.b16 %v709, %v691
  %v944 = vpack.c.b16 %v710, %v692
  %v945 = vpack.c.b16 %v711, %v693
  %v946 = vpack.c.b16 %v730, %v712
  %v947 = vpack.c.b16 %v731, %v713
  %v948 = vpack.c.b16 %v732, %v714
  %v949 = vpack.c.b16 %v733, %v715
  %v950 = vpack.c.b16 %v734, %v716
  %v951 = vpack.c.b16 %v735, %v717
  %v952 = vpack.c.b16 %v736, %v718
  %v953 = vpack.c.b16 %v737, %v719
  %v954 = vpack.c.b16 %v738, %v720
  %v955 = vpack.c.b16 %v739, %v721
  %v956 = vpack.c.b16 %v740, %v722
  %v957 = vpack.c.b16 %v741, %v723
  %v958 = vpack.c.b16 %v742, %v724
  %v959 = vpack.c.b16 %v743, %v725
  %v960 = vpack.c.b16 %v744, %v726
  %v961 = vpack.c.b16 %v745, %v727
  %v962 = vpack.c.b16 %v746, %v728
  %v963 = vpack.c.b16 %v747, %v729
  %v964 = vpack.c.b16 %v766, %v748
  %v965 = vpack.c.b16 %v767, %v749
  %v966 = vpack.c.b16 %v768, %v750
  %v967 = vpack.c.b16 %v769, %v751
  %v968 = vpack.c.b16 %v770, %v752
  %v969 = vpack.c.b16 %v771, %v753
  %v970 = vpack.c.b16 %v772, %v754
  %v971 = vpack.c.b16 %v773, %v755
  %v972 = vpack.c.b16 %v774, %v756
  %v973 = vpack.c.b16 %v775, %v757
  %v974 = vpack.c.b16 %v776, %v758
  %v975 = vpack.c.b16 %v777, %v759
  %v976 = vpack.c.b16 %v778, %v760
  %v977 = vpack.c.b16 %v779, %v761
  %v978 = vpack.c.b16 %v780, %v762
  %v979 = vpack.c.b16 %v781, %v763
  %v980 = vpack.c.b16 %v782, %v764
  %v981 = vpack.c.b16 %v783, %v765
  %v982 = vpack.c.b16 %v802, %v784
  %v983 = vpack.c.b16 %v803, %v785
  %v984 = vpack.c.b16 %v804, %v786
  %v985 = vpack.c.b16 %v805, %v787
  %v986 = vpack.c.b16 %v806, %v788
  %v987 = vpack.c.b16 %v807, %v789
  %v988 = vpack.c.b16 %v808, %v790
  %v989 = vpack.c.b16 %v809, %v791
  %v990 = vpack.c.b16 %v810, %v792
  %v991 = vpack.c.b16 %v811, %v793
  %v992 = vpack.c.b16 %v812, %v794
  %v993 = vpack.c.b16 %v813, %v795
  %v994 = vpack.c.b16 %v814, %v796
  %v995 = vpack.c.b16 %v815, %v797
  %v996 = vpack.c.b16 %v816, %v798
  %v997 = vpack.c.b16 %v817, %v799
  %v998 = vpack.c.b16 %v818, %v800
  %v999 = vpack.c.b16 %v819, %v801
  %v1000 = vpack.c.b16 %v838, %v820
  %v1001 = vpack.c.b16 %v839, %v821
  %v1002 = vpack.c.b16 %v840, %v822
  %v1003 = vpack.c.b16 %v841, %v823
  %v1004 = vpack.c.b16 %v842, %v824
  %v1005 = vpack.c.b16 %v843, %v825
  %v1006 = vpack.c.b16 %v844, %v826
  %v1007 = vpack.c.b16 %v845, %v827
  %v1008 = vpack.c.b16 %v846, %v828
  %v1009 = vpack.c.b16 %v847, %v829
  %v1010 = vpack.c.b16 %v848, %v830
  %v1011 = vpack.c.b16 %v849, %v831
  %v1012 = vpack.c.b16 %v850, %v832
  %v1013 = vpack.c.b16 %v851, %v833
  %v1014 = vpack.c.b16 %v852, %v834
  %v1015 = vpack.c.b16 %v853, %v835
  %v1016 = vpack.c.b16 %v854, %v836
  %v1017 = vpack.c.b16 %v855, %v837
  %v1018 = vpack.c.b16 %v874, %v856
  %v1019 = vpack.c.b16 %v875, %v857
  %v1020 = vpack.c.b16 %v876, %v858
  %v1021 = vpack.c.b16 %v877, %v859
  %v1022 = vpack.c.b16 %v878, %v860
  %v1023 = vpack.c.b16 %v879, %v861
  %v1024 = vpack.c.b16 %v880, %v862
  %v1025 = vpack.c.b16 %v881, %v863
  %v1026 = vpack.c.b16 %v882, %v864
  %v1027 = vpack.c.b16 %v883, %v865
  %v1028 = vpack.c.b16 %v884, %v866
  %v1029 = vpack.c.b16 %v885, %v867
  %v1030 = vpack.c.b16 %v886, %v868
  %v1031 = vpack.c.b16 %v887, %v869
  %v1032 = vpack.c.b16 %v888, %v870
  %v1033 = vpack.c.b16 %v889, %v871
  %v1034 = vpack.c.b16 %v890, %v872
  %v1035 = vpack.c.b16 %v891, %v873
  %v1468 = vunpack.c.l.b16 %v165
  %v1469 = vunpack.c.l.b16 %v166
  %v1470 = vunpack.c.l.b16 %v167
  %v1471 = vunpack.c.l.b16 %v168
  %v1472 = vunpack.c.l.b16 %v169
  %v1473 = vunpack.c.l.b16 %v170
  %v1474 = vunpack.c.l.b16 %v171
  %v1475 = vunpack.c.l.b16 %v172
  %v1476 = vunpack.c.l.b16 %v173
  %v1477 = vunpack.c.l.b16 %v174
  %v1478 = vunpack.c.l.b16 %v175
  %v1479 = vunpack.c.l.b16 %v176
  %v1480 = vunpack.c.l.b16 %v177
  %v1481 = vunpack.c.l.b16 %v178
  %v1482 = vunpack.c.l.b16 %v179
  %v1483 = vunpack.c.l.b16 %v180
  %v1484 = vunpack.c.l.b16 %v181
  %v1485 = vunpack.c.l.b16 %v182
  %v1486 = vunpack.c.l.b16 %v183
  %v1487 = vunpack.c.l.b16 %v184
  %v1488 = vunpack.c.l.b16 %v185
  %v1489 = vunpack.c.l.b16 %v186
  %v1490 = vunpack.c.l.b16 %v187
  %v1491 = vunpack.c.l.b16 %v188
  %v1492 = vunpack.c.l.b16 %v189
  %v1493 = vunpack.c.l.b16 %v190
  %v1494 = vunpack.c.l.b16 %v191
  %v1495 = vunpack.c.l.b16 %v192
  %v1496 = vunpack.c.l.b16 %v193
  %v1497 = vunpack.c.l.b16 %v194
  %v1498 = vunpack.c.l.b16 %v195
  %v1499 = vunpack.c.l.b16 %v196
  %v1500 = vunpack.c.l.b16 %v197
  %v1501 = vunpack.c.l.b16 %v198
  %v1502 = vunpack.c.l.b16 %v199
  %v1503 = vunpack.c.l.b16 %v200
  %v1504 = vunpack.c.l.b16 %v201
  %v1505 = vunpack.c.l.b16 %v202
  %v1506 = vunpack.c.l.b16 %v203
  %v1507 = vunpack.c.l.b16 %v204
  %v1508 = vunpack.c.l.b16 %v205
  %v1509 = vunpack.c.l.b16 %v206
  %v1510 = vunpack.c.l.b16 %v207
  %v1511 = vunpack.c.l.b16 %v208
  %v1512 = vunpack.c.l.b16 %v209
  %v1513 = vunpack.c.l.b16 %v210
  %v1514 = vunpack.c.l.b16 %v211
  %v1515 = vunpack.c.l.b16 %v212
  %v1516 = vunpack.c.l.b16 %v213
  %v1517 = vunpack.c.l.b16 %v214
  %v1518 = vunpack.c.l.b16 %v215
  %v1519 = vunpack.c.l.b16 %v216
  %v1520 = vunpack.c.l.b16 %v217
  %v1521 = vunpack.c.l.b16 %v218
  %v1522 = vunpack.c.l.b16 %v219
  %v1523 = vunpack.c.l.b16 %v220
  %v1524 = vunpack.c.l.b16 %v221
  %v1525 = vunpack.c.l.b16 %v222
  %v1526 = vunpack.c.l.b16 %v223
  %v1527 = vunpack.c.l.b16 %v224
  %v1528 = vunpack.c.l.b16 %v225
  %v1529 = vunpack.c.l.b16 %v226
  %v1530 = vunpack.c.l.b16 %v227
  %v1531 = vunpack.c.l.b16 %v228
  %v1532 = vunpack.c.l.b16 %v229
  %v1533 = vunpack.c.l.b16 %v230
  %v1534 = vunpack.c.l.b16 %v231
  %v1535 = vunpack.c.l.b16 %v232
  %v1536 = vunpack.c.l.b16 %v233
  %v1537 = vunpack.c.l.b16 %v234
  %v1538 = vunpack.c.l.b16 %v235
  %v1539 = vunpack.c.l.b16 %v236
  %v1540 = vunpack.c.l.b16 %v237
  %v1541 = vunpack.c.l.b16 %v238
  %v1542 = vunpack.c.l.b16 %v239
  %v1543 = vunpack.c.l.b16 %v240
  %v1544 = vunpack.c.l.b16 %v241
  %v1545 = vunpack.c.l.b16 %v242
  %v1546 = vunpack.c.l.b16 %v243
  %v1547 = vunpack.c.l.b16 %v244
  %v1548 = vunpack.c.l.b16 %v245
  %v1549 = vunpack.c.l.b16 %v246
  %v1550 = vunpack.c.l.b16 %v247
  %v1551 = vunpack.c.l.b16 %v248
  %v1552 = vunpack.c.l.b16 %v249
  %v1553 = vunpack.c.l.b16 %v250
  %v1554 = vunpack.c.l.b16 %v251
  %v1555 = vunpack.c.l.b16 %v252
  %v1556 = vunpack.c.l.b16 %v253
  %v1557 = vunpack.c.l.b16 %v254
  %v1558 = vunpack.c.l.b16 %v255
  %v1559 = vunpack.c.l.b16 %v256
  %v1560 = vunpack.c.l.b16 %v257
  %v1561 = vunpack.c.l.b16 %v258
  %v1562 = vunpack.c.l.b16 %v259
  %v1563 = vunpack.c.l.b16 %v260
  %v1564 = vunpack.c.l.b16 %v261
  %v1565 = vunpack.c.l.b16 %v262
  %v1566 = vunpack.c.l.b16 %v263
  %v1567 = vunpack.c.l.b16 %v264
  %v1568 = vunpack.c.l.b16 %v265
  %v1569 = vunpack.c.l.b16 %v266
  %v1570 = vunpack.c.l.b16 %v267
  %v1571 = vunpack.c.l.b16 %v268
  %v1572 = vunpack.c.l.b16 %v269
  %v1573 = vunpack.c.l.b16 %v270
  %v1574 = vunpack.c.l.b16 %v271
  %v1575 = vunpack.c.l.b16 %v272
  %v1576 = vunpack.c.l.b16 %v273
  %v1577 = vunpack.c.l.b16 %v274
  %v1578 = vunpack.c.l.b16 %v275
  %v1579 = vunpack.c.l.b16 %v276
  %v1580 = vunpack.c.l.b16 %v277
  %v1581 = vunpack.c.l.b16 %v278
  %v1582 = vunpack.c.l.b16 %v279
  %v1583 = vunpack.c.l.b16 %v280
  %v1584 = vunpack.c.l.b16 %v281
  %v1585 = vunpack.c.l.b16 %v282
  %v1586 = vunpack.c.l.b16 %v283
  %v1587 = vunpack.c.l.b16 %v284
  %v1588 = vunpack.c.l.b16 %v285
  %v1589 = vunpack.c.l.b16 %v286
  %v1590 = vunpack.c.l.b16 %v287
  %v1591 = vunpack.c.l.b16 %v288
  %v1592 = vunpack.c.l.b16 %v289
  %v1593 = vunpack.c.l.b16 %v290
  %v1594 = vunpack.c.l.b16 %v291
  %v1595 = vunpack.c.l.b16 %v292
  %v1596 = vunpack.c.l.b16 %v293
  %v1597 = vunpack.c.l.b16 %v294
  %v1598 = vunpack.c.l.b16 %v295
  %v1599 = vunpack.c.l.b16 %v296
  %v1600 = vunpack.c.l.b16 %v297
  %v1601 = vunpack.c.l.b16 %v298
  %v1602 = vunpack.c.l.b16 %v299
  %v1603 = vunpack.c.l.b16 %v300
  %v1604 = vunpack.c.l.b16 %v301
  %v1605 = vunpack.c.l.b16 %v302
  %v1606 = vunpack.c.l.b16 %v303
  %v1607 = vunpack.c.l.b16 %v304
  %v1608 = vunpack.c.l.b16 %v305
  %v1609 = vunpack.c.l.b16 %v306
  %v1610 = vunpack.c.l.b16 %v307
  %v1611 = vunpack.c.l.b16 %v308
  %v1612 = vunpack.c.l.b16 %v309
  %v1613 = vunpack.c.l.b16 %v310
  %v1614 = vunpack.c.l.b16 %v311
  %v1615 = vunpack.c.l.b16 %v312
  %v1616 = vunpack.c.l.b16 %v313
  %v1617 = vunpack.c.l.b16 %v314
  %v1618 = vunpack.c.l.b16 %v315
  %v1619 = vunpack.c.l.b16 %v316
  %v1620 = vunpack.c.l.b16 %v317
  %v1621 = vunpack.c.l.b16 %v318
  %v1622 = vunpack.c.l.b16 %v319
  %v1623 = vunpack.c.l.b16 %v320
  %v1624 = vunpack.c.l.b16 %v321
  %v1625 = vunpack.c.l.b16 %v322
  %v1626 = vunpack.c.l.b16 %v323
  %v1627 = vunpack.c.l.b16 %v324
  %v1628 = vunpack.c.l.b16 %v325
  %v1629 = vunpack.c.l.b16 %v326
  %v1630 = vunpack.c.l.b16 %v327
  %v1631 = vunpack.c.l.b16 %v328
  %v1632 = vunpack.c.l.b16 %v329
  %v1633 = vunpack.c.l.b16 %v330
  %v1634 = vunpack.c.l.b16 %v331
  %v1635 = vunpack.c.l.b16 %v332
  %v1636 = vunpack.c.l.b16 %v333
  %v1637 = vunpack.c.l.b16 %v334
  %v1638 = vunpack.c.l.b16 %v335
  %v1639 = vunpack.c.l.b16 %v336
  %v1640 = vunpack.c.l.b16 %v337
  %v1641 = vunpack.c.l.b16 %v338
  %v1642 = vunpack.c.l.b16 %v339
  %v1643 = vunpack.c.l.b16 %v340
  %v1644 = vunpack.c.l.b16 %v341
  %v1645 = vunpack.c.l.b16 %v342
  %v1646 = vunpack.c.l.b16 %v343
  %v1647 = vunpack.c.l.b16 %v344
  %v1648 = vunpack.c.l.b16 %v345
  %v1649 = vunpack.c.l.b16 %v346
  %v1650 = vunpack.c.l.b16 %v347
  %v1651 = vunpack.c.l.b16 %v348
  %v1652 = vunpack.c.l.b16 %v349
  %v1653 = vunpack.c.l.b16 %v350
  %v1654 = vunpack.c.l.b16 %v351
  %v1655 = vunpack.c.l.b16 %v352
  %v1656 = vunpack.c.l.b16 %v353
  %v1657 = vunpack.c.l.b16 %v354
  %v1658 = vunpack.c.l.b16 %v355
  %v1659 = vunpack.c.l.b16 %v356
  %v1660 = vunpack.c.l.b16 %v357
  %v1661 = vunpack.c.l.b16 %v358
  %v1662 = vunpack.c.l.b16 %v359
  %v1663 = vunpack.c.l.b16 %v360
  %v1664 = vunpack.c.l.b16 %v361
  %v1665 = vunpack.c.l.b16 %v362
  %v1666 = vunpack.c.l.b16 %v363
  %v1667 = vunpack.c.l.b16 %v364
  %v1668 = vunpack.c.l.b16 %v365
  %v1669 = vunpack.c.l.b16 %v366
  %v1670 = vunpack.c.l.b16 %v367
  %v1671 = vunpack.c.l.b16 %v368
  %v1672 = vunpack.c.l.b16 %v369
  %v1673 = vunpack.c.l.b16 %v370
  %v1674 = vunpack.c.l.b16 %v371
  %v1675 = vunpack.c.l.b16 %v372
  %v1676 = vunpack.c.l.b16 %v373
  %v1677 = vunpack.c.l.b16 %v374
  %v1678 = vunpack.c.l.b16 %v375
  %v1679 = vunpack.c.l.b16 %v376
  %v1680 = vunpack.c.l.b16 %v377
  %v1681 = vunpack.c.l.b16 %v378
  %v1682 = vunpack.c.l.b16 %v379
  %v1683 = vunpack.c.l.b16 %v380
  %v1684 = vunpack.c.l.b16 %v381
  %v1685 = vunpack.c.l.b16 %v382
  %v1686 = vunpack.c.l.b16 %v383
  %v1687 = vunpack.c.l.b16 %v384
  %v1688 = vunpack.c.l.b16 %v385
  %v1689 = vunpack.c.l.b16 %v386
  %v1690 = vunpack.c.l.b16 %v387
  %v1691 = vunpack.c.l.b16 %v388
  %v1692 = vunpack.c.l.b16 %v389
  %v1693 = vunpack.c.l.b16 %v390
  %v1694 = vunpack.c.l.b16 %v391
  %v1695 = vunpack.c.l.b16 %v392
  %v1696 = vunpack.c.l.b16 %v393
  %v1697 = vunpack.c.l.b16 %v394
  %v1698 = vunpack.c.l.b16 %v395
  %v1699 = vunpack.c.l.b16 %v396
  %v1700 = vunpack.c.l.b16 %v397
  %v1701 = vunpack.c.l.b16 %v398
  %v1702 = vunpack.c.l.b16 %v399
  %v1703 = vunpack.c.l.b16 %v400
  %v1704 = vunpack.c.l.b16 %v401
  %v1705 = vunpack.c.l.b16 %v402
  %v1706 = vunpack.c.l.b16 %v403
  %v1707 = vunpack.c.l.b16 %v404
  %v1708 = vunpack.c.l.b16 %v405
  %v1709 = vunpack.c.l.b16 %v406
  %v1710 = vunpack.c.l.b16 %v407
  %v1711 = vunpack.c.l.b16 %v408
  %v1712 = vunpack.c.l.b16 %v409
  %v1713 = vunpack.c.l.b16 %v410
  %v1714 = vunpack.c.l.b16 %v411
  %v1715 = vunpack.c.l.b16 %v412
  %v1716 = vunpack.c.l.b16 %v413
  %v1717 = vunpack.c.l.b16 %v414
  %v1718 = vunpack.c.l.b16 %v415
  %v1719 = vunpack.c.l.b16 %v416
  %v1720 = vunpack.c.l.b16 %v417
  %v1721 = vunpack.c.l.b16 %v418
  %v1722 = vunpack.c.l.b16 %v419
  %v1723 = vunpack.c.l.b16 %v420
  %v1724 = vunpack.c.l.b16 %v421
  %v1725 = vunpack.c.l.b16 %v422
  %v1726 = vunpack.c.l.b16 %v423
  %v1727 = vunpack.c.l.b16 %v424
  %v1728 = vunpack.c.l.b16 %v425
  %v1729 = vunpack.c.l.b16 %v426
  %v1730 = vunpack.c.l.b16 %v427
  %v1731 = vunpack.c.l.b16 %v428
  %v1732 = vunpack.c.l.b16 %v429
  %v1733 = vunpack.c.l.b16 %v430
  %v1734 = vunpack.c.l.b16 %v431
  %v1735 = vunpack.c.l.b16 %v432
  %v1736 = vunpack.c.l.b16 %v433
  %v1737 = vunpack.c.l.b16 %v434
  %v1738 = vunpack.c.l.b16 %v435
  %v1739 = vunpack.c.l.b16 %v436
  %v1740 = vunpack.c.l.b16 %v437
  %v1741 = vunpack.c.l.b16 %v438
  %v1742 = vunpack.c.l.b16 %v439
  %v1743 = vunpack.c.l.b16 %v440
  %v1744 = vunpack.c.l.b16 %v441
  %v1745 = vunpack.c.l.b16 %v442
  %v1746 = vunpack.c.l.b16 %v443
  %v1747 = vunpack.c.l.b16 %v444
  %v1748 = vunpack.c.l.b16 %v445
  %v1749 = vunpack.c.l.b16 %v446
  %v1750 = vunpack.c.l.b16 %v447
  %v1751 = vunpack.c.l.b16 %v448
  %v1752 = vunpack.c.l.b16 %v449
  %v1753 = vunpack.c.l.b16 %v450
  %v1754 = vunpack.c.l.b16 %v451
  %v1755 = vunpack.c.l.b16 %v452
  %v1756 = vpack.c.b16 %v1469, %v1468
  %v1757 = vpack.c.b16 %v1471, %v1470
  %v1758 = vpack.c.b16 %v1473, %v1472
  %v1759 = vpack.c.b16 %v1475, %v1474
  %v1760 = vpack.c.b16 %v1477, %v1476
  %v1761 = vpack.c.b16 %v1479, %v1478
  %v1762 = vpack.c.b16 %v1481, %v1480
  %v1763 = vpack.c.b16 %v1483, %v1482
  %v1764 = vpack.c.b16 %v1485, %v1484
  %v1765 = vpack.c.b16 %v1487, %v1486
  %v1766 = vpack.c.b16 %v1489, %v1488
  %v1767 = vpack.c.b16 %v1491, %v1490
  %v1768 = vpack.c.b16 %v1493, %v1492
  %v1769 = vpack.c.b16 %v1495, %v1494
  %v1770 = vpack.c.b16 %v1497, %v1496
  %v1771 = vpack.c.b16 %v1499, %v1498
  %v1772 = vpack.c.b16 %v1501, %v1500
  %v1773 = vpack.c.b16 %v1503, %v1502
  %v1774 = vpack.c.b16 %v1505, %v1504
  %v1775 = vpack.c.b16 %v1507, %v1506
  %v1776 = vpack.c.b16 %v1509, %v1508
  %v1777 = vpack.c.b16 %v1511, %v1510
  %v1778 = vpack.c.b16 %v1513, %v1512
  %v1779 = vpack.c.b16 %v1515, %v1514
  %v1780 = vpack.c.b16 %v1517, %v1516
  %v1781 = vpack.c.b16 %v1519, %v1518
  %v1782 = vpack.c.b16 %v1521, %v1520
  %v1783 = vpack.c.b16 %v1523, %v1522
  %v1784 = vpack.c.b16 %v1525, %v1524
  %v1785 = vpack.c.b16 %v1527, %v1526
  %v1786 = vpack.c.b16 %v1529, %v1528
  %v1787 = vpack.c.b16 %v1531, %v1530
  %v1788 = vpack.c.b16 %v1533, %v1532
  %v1789 = vpack.c.b16 %v1535, %v1534
  %v1790 = vpack.c.b16 %v1537, %v1536
  %v1791 = vpack.c.b16 %v1539, %v1538
  %v1792 = vpack.c.b16 %v1541, %v1540
  %v1793 = vpack.c.b16 %v1543, %v1542
  %v1794 = vpack.c.b16 %v1545, %v1544
  %v1795 = vpack.c.b16 %v1547, %v1546
  %v1796 = vpack.c.b16 %v1549, %v1548
  %v1797 = vpack.c.b16 %v1551, %v1550
  %v1798 = vpack.c.b16 %v1553, %v1552
  %v1799 = vpack.c.b16 %v1555, %v1554
  %v1800 = vpack.c.b16 %v1557, %v1556
  %v1801 = vpack.c.b16 %v1559, %v1558
  %v1802 = vpack.c.b16 %v1561, %v1560
  %v1803 = vpack.c.b16 %v1563, %v1562
  %v1804 = vpack.c.b16 %v1565, %v1564
  %v1805 = vpack.c.b16 %v1567, %v1566
  %v1806 = vpack.c.b16 %v1569, %v1568
  %v1807 = vpack.c.b16 %v1571, %v1570
  %v1808 = vpack.c.b16 %v1573, %v1572
  %v1809 = vpack.c.b16 %v1575, %v1574
  %v1810 = vpack.c.b16 %v1577, %v1576
  %v1811 = vpack.c.b16 %v1579, %v1578
  %v1812 = vpack.c.b16 %v1581, %v1580
  %v1813 = vpack.c.b16 %v1583, %v1582
  %v1814 = vpack.c.b16 %v1585, %v1584
  %v1815 = vpack.c.b16 %v1587, %v1586
  %v1816 = vpack.c.b16 %v1589, %v1588
  %v1817 = vpack.c.b16 %v1591, %v1590
  %v1818 = vpack.c.b16 %v1593, %v1592
  %v1819 = vpack.c.b16 %v1595, %v1594
  %v1820 = vpack.c.b16 %v1597, %v1596
  %v1821 = vpack.c.b16 %v1599, %v1598
  %v1822 = vpack.c.b16 %v1601, %v1600
  %v1823 = vpack.c.b16 %v1603, %v1602
  %v1824 = vpack.c.b16 %v1605, %v1604
  %v1825 = vpack.c.b16 %v1607, %v1606
  %v1826 = vpack.c.b16 %v1609, %v1608
  %v1827 = vpack.c.b16 %v1611, %v1610
  %v1828 = vpack.c.b16 %v1613, %v1612
  %v1829 = vpack.c.b16 %v1615, %v1614
  %v1830 = vpack.c.b16 %v1617, %v1616
  %v1831 = vpack.c.b16 %v1619, %v1618
  %v1832 = vpack.c.b16 %v1621, %v1620
  %v1833 = vpack.c.b16 %v1623, %v1622
  %v1834 = vpack.c.b16 %v1625, %v1624
  %v1835 = vpack.c.b16 %v1627, %v1626
  %v1836 = vpack.c.b16 %v1629, %v1628
  %v1837 = vpack.c.b16 %v1631, %v1630
  %v1838 = vpack.c.b16 %v1633, %v1632
  %v1839 = vpack.c.b16 %v1635, %v1634
  %v1840 = vpack.c.b16 %v1637, %v1636
  %v1841 = vpack.c.b16 %v1639, %v1638
  %v1842 = vpack.c.b16 %v1641, %v1640
  %v1843 = vpack.c.b16 %v1643, %v1642
  %v1844 = vpack.c.b16 %v1645, %v1644
  %v1845 = vpack.c.b16 %v1647, %v1646
  %v1846 = vpack.c.b16 %v1649, %v1648
  %v1847 = vpack.c.b16 %v1651, %v1650
  %v1848 = vpack.c.b16 %v1653, %v1652
  %v1849 = vpack.c.b16 %v1655, %v1654
  %v1850 = vpack.c.b16 %v1657, %v1656
  %v1851 = vpack.c.b16 %v1659, %v1658
  %v1852 = vpack.c.b16 %v1661, %v1660
  %v1853 = vpack.c.b16 %v1663, %v1662
  %v1854 = vpack.c.b16 %v1665, %v1664
  %v1855 = vpack.c.b16 %v1667, %v1666
  %v1856 = vpack.c.b16 %v1669, %v1668
  %v1857 = vpack.c.b16 %v1671, %v1670
  %v1858 = vpack.c.b16 %v1673, %v1672
  %v1859 = vpack.c.b16 %v1675, %v1674
  %v1860 = vpack.c.b16 %v1677, %v1676
  %v1861 = vpack.c.b16 %v1679, %v1678
  %v1862 = vpack.c.b16 %v1681, %v1680
  %v1863 = vpack.c.b16 %v1683, %v1682
  %v1864 = vpack.c.b16 %v1685, %v1684
  %v1865 = vpack.c.b16 %v1687, %v1686
  %v1866 = vpack.c.b16 %v1689, %v1688
  %v1867 = vpack.c.b16 %v1691, %v1690
  %v1868 = vpack.c.b16 %v1693, %v1692
  %v1869 = vpack.c.b16 %v1695, %v1694
  %v1870 = vpack.c.b16 %v1697, %v1696
  %v1871 = vpack.c.b16 %v1699, %v1698
  %v1872 = vpack.c.b16 %v1701, %v1700
  %v1873 = vpack.c.b16 %v1703, %v1702
  %v1874 = vpack.c.b16 %v1705, %v1704
  %v1875 = vpack.c.b16 %v1707, %v1706
  %v1876 = vpack.c.b16 %v1709, %v1708
  %v1877 = vpack.c.b16 %v1711, %v1710
  %v1878 = vpack.c.b16 %v1713, %v1712
  %v1879 = vpack.c.b16 %v1715, %v1714
  %v1880 = vpack.c.b16 %v1717, %v1716
  %v1881 = vpack.c.b16 %v1719, %v1718
  %v1882 = vpack.c.b16 %v1721, %v1720
  %v1883 = vpack.c.b16 %v1723, %v1722
  %v1884 = vpack.c.b16 %v1725, %v1724
  %v1885 = vpack.c.b16 %v1727, %v1726
  %v1886 = vpack.c.b16 %v1729, %v1728
  %v1887 = vpack.c.b16 %v1731, %v1730
  %v1888 = vpack.c.b16 %v1733, %v1732
  %v1889 = vpack.c.b16 %v1735, %v1734
  %v1890 = vpack.c.b16 %v1737, %v1736
  %v1891 = vpack.c.b16 %v1739, %v1738
  %v1892 = vpack.c.b16 %v1741, %v1740
  %v1893 = vpack.c.b16 %v1743, %v1742
  %v1894 = vpack.c.b16 %v1745, %v1744
  %v1895 = vpack.c.b16 %v1747, %v1746
  %v1896 = vpack.c.b16 %v1749, %v1748
  %v1897 = vpack.c.b16 %v1751, %v1750
  %v1898 = vpack.c.b16 %v1753, %v1752
  %v1899 = vpack.c.b16 %v1755, %v1754
  %2044 = vmatprep.subr.bf16.mxu0 0
  %2045 = vmatpush1.bf16.msra.mxu0 %v1756
  %2046 = vmatprep.subr.bf16.mxu0 0
  %2047 = vmatpush1.bf16.msra.mxu0 %v1757
  %2048 = vmatprep.subr.bf16.mxu0 0
  %2049 = vmatpush1.bf16.msra.mxu0 %v1758
  %2050 = vmatprep.subr.bf16.mxu0 0
  %2051 = vmatpush1.bf16.msra.mxu0 %v1759
  %2052 = vmatprep.subr.bf16.mxu0 0
  %2053 = vmatpush1.bf16.msra.mxu0 %v1760
  %2054 = vmatprep.subr.bf16.mxu0 0
  %2055 = vmatpush1.bf16.msra.mxu0 %v1761
  %2056 = vmatprep.subr.bf16.mxu0 0
  %2057 = vmatpush1.bf16.msra.mxu0 %v1762
  %2058 = vmatprep.subr.bf16.mxu0 0
  %2059 = vmatpush1.bf16.msra.mxu0 %v1763
  %2060 = vmatprep.subr.bf16.mxu0 0
  %2061 = vmatpush1.bf16.msra.mxu0 %v1764
  %2062 = vmatprep.subr.bf16.mxu0 0
  %2063 = vmatpush1.bf16.msra.mxu0 %v1765
  %2064 = vmatprep.subr.bf16.mxu0 0
  %2065 = vmatpush1.bf16.msra.mxu0 %v1766
  %2066 = vmatprep.subr.bf16.mxu0 0
  %2067 = vmatpush1.bf16.msra.mxu0 %v1767
  %2068 = vmatprep.subr.bf16.mxu0 0
  %2069 = vmatpush1.bf16.msra.mxu0 %v1768
  %2070 = vmatprep.subr.bf16.mxu0 0
  %2071 = vmatpush1.bf16.msra.mxu0 %v1769
  %2072 = vmatprep.subr.bf16.mxu0 0
  %2073 = vmatpush1.bf16.msra.mxu0 %v1770
  %2074 = vmatprep.subr.bf16.mxu0 0
  %2075 = vmatpush1.bf16.msra.mxu0 %v1771
  %2076 = vmatprep.mubr.bf16.mxu0 %v893
  %2077 = vmatmul.mubr.bf16.gmra.mrb[0].mxu0 %v892
  %v2078 = vpop.f32.mrb[0].mxu0
  %v2079 = vadd.f32 %v458, %v2078
  %v2080 = vpop.f32.mrb[0].mxu0
  %v2081 = vpop.f32.mrb[0].mxu0
  %v2082 = vadd.f32 %v458, %v2081
  %v2083 = vpop.f32.mrb[0].mxu0
  %2084 = vmatprep.mubr.bf16.mxu0 %v911
  %2085 = vmatmul.mubr.bf16.gmra.mrb[0].mxu0 %v910
  %v2086 = vpop.f32.mrb[0].mxu0
  %v2087 = vadd.f32 %v458, %v2086
  %v2088 = vpop.f32.mrb[0].mxu0
  %v2089 = vpop.f32.mrb[0].mxu0
  %v2090 = vadd.f32 %v458, %v2089
  %v2091 = vpop.f32.mrb[0].mxu0
  %2092 = vmatprep.mubr.bf16.mxu0 %v929
  %2093 = vmatmul.mubr.bf16.gmra.mrb[0].mxu0 %v928
  %v2094 = vpop.f32.mrb[0].mxu0
  %v2095 = vadd.f32 %v458, %v2094
  %v2096 = vpop.f32.mrb[0].mxu0
  %v2097 = vpop.f32.mrb[0].mxu0
  %v2098 = vadd.f32 %v458, %v2097
  %v2099 = vpop.f32.mrb[0].mxu0
  %2100 = vmatprep.mubr.bf16.mxu0 %v947
  %2101 = vmatmul.mubr.bf16.gmra.mrb[0].mxu0 %v946
  %v2102 = vpop.f32.mrb[0].mxu0
  %v2103 = vadd.f32 %v458, %v2102
  %v2104 = vpop.f32.mrb[0].mxu0
  %v2105 = vpop.f32.mrb[0].mxu0
  %v2106 = vadd.f32 %v458, %v2105
  %v2107 = vpop.f32.mrb[0].mxu0
  %2108 = vmatprep.mubr.bf16.mxu0 %v965
  %2109 = vmatmul.mubr.bf16.gmra.mrb[0].mxu0 %v964
  %v2110 = vpop.f32.mrb[0].mxu0
  %v2111 = vadd.f32 %v458, %v2110
  %v2112 = vpop.f32.mrb[0].mxu0
  %v2113 = vpop.f32.mrb[0].mxu0
  %v2114 = vadd.f32 %v458, %v2113
  %v2115 = vpop.f32.mrb[0].mxu0
  %2116 = vmatprep.mubr.bf16.mxu0 %v983
  %2117 = vmatmul.mubr.bf16.gmra.mrb[0].mxu0 %v982
  %v2118 = vpop.f32.mrb[0].mxu0
  %v2119 = vadd.f32 %v458, %v2118
  %v2120 = vpop.f32.mrb[0].mxu0
  %v2121 = vpop.f32.mrb[0].mxu0
  %v2122 = vadd.f32 %v458, %v2121
  %v2123 = vpop.f32.mrb[0].mxu0
  %2124 = vmatprep.mubr.bf16.mxu0 %v1001
  %2125 = vmatmul.mubr.bf16.gmra.mrb[0].mxu0 %v1000
  %v2126 = vpop.f32.mrb[0].mxu0
  %v2127 = vadd.f32 %v458, %v2126
  %v2128 = vpop.f32.mrb[0].mxu0
  %v2129 = vpop.f32.mrb[0].mxu0
  %v2130 = vadd.f32 %v458, %v2129
  %v2131 = vpop.f32.mrb[0].mxu0
  %2132 = vmatprep.mubr.bf16.mxu0 %v1019
  %2133 = vmatmul.mubr.bf16.gmra.mrb[0].mxu0 %v1018
  %v2134 = vpop.f32.mrb[0].mxu0
  %v2135 = vadd.f32 %v458, %v2134
  %v2136 = vpop.f32.mrb[0].mxu0
  %v2137 = vpop.f32.mrb[0].mxu0
  %v2138 = vadd.f32 %v458, %v2137
  %v2139 = vpop.f32.mrb[0].mxu0
  %2140 = vdwg.mxu0
  %2141 = vmatprep.subr.bf16.mxu0 0
  %2142 = vmatpush1.bf16.msra.mxu0 %v1772
  %2143 = vmatprep.subr.bf16.mxu0 0
  %2144 = vmatpush1.bf16.msra.mxu0 %v1773
  %2145 = vmatprep.subr.bf16.mxu0 0
  %2146 = vmatpush1.bf16.msra.mxu0 %v1774
  %2147 = vmatprep.subr.bf16.mxu0 0
  %2148 = vmatpush1.bf16.msra.mxu0 %v1775
  %2149 = vmatprep.subr.bf16.mxu0 0
  %2150 = vmatpush1.bf16.msra.mxu0 %v1776
  %2151 = vmatprep.subr.bf16.mxu0 0
  %2152 = vmatpush1.bf16.msra.mxu0 %v1777
  %2153 = vmatprep.subr.bf16.mxu0 0
  %2154 = vmatpush1.bf16.msra.mxu0 %v1778
  %2155 = vmatprep.subr.bf16.mxu0 0
  %2156 = vmatpush1.bf16.msra.mxu0 %v1779
  %2157 = vmatprep.subr.bf16.mxu0 0
  %2158 = vmatpush1.bf16.msra.mxu0 %v1780
  %2159 = vmatprep.subr.bf16.mxu0 0
  %2160 = vmatpush1.bf16.msra.mxu0 %v1781
  %2161 = vmatprep.subr.bf16.mxu0 0
  %2162 = vmatpush1.bf16.msra.mxu0 %v1782
  %2163 = vmatprep.subr.bf16.mxu0 0
  %2164 = vmatpush1.bf16.msra.mxu0 %v1783
  %2165 = vmatprep.subr.bf16.mxu0 0
  %2166 = vmatpush1.bf16.msra.mxu0 %v1784
  %2167 = vmatprep.subr.bf16.mxu0 0
  %2168 = vmatpush1.bf16.msra.mxu0 %v1785
  %2169 = vmatprep.subr.bf16.mxu0 0
  %2170 = vmatpush1.bf16.msra.mxu0 %v1786
  %2171 = vmatprep.subr.bf16.mxu0 0
  %2172 = vmatpush1.bf16.msra.mxu0 %v1787
  %2173 = vmatprep.mubr.bf16.mxu0 %v895
  %2174 = vmatmul.mubr.bf16.gmra.mrb[0].mxu0 %v894
  %v2175 = vpop.f32.mrb[0].mxu0
  %v2176 = vadd.f32 %v2079, %v2175
  %v2177 = vpop.f32.mrb[0].mxu0
  %v2178 = vpop.f32.mrb[0].mxu0
  %v2179 = vadd.f32 %v2082, %v2178
  %v2180 = vpop.f32.mrb[0].mxu0
  %2181 = vmatprep.mubr.bf16.mxu0 %v913
  %2182 = vmatmul.mubr.bf16.gmra.mrb[0].mxu0 %v912
  %v2183 = vpop.f32.mrb[0].mxu0
  %v2184 = vadd.f32 %v2087, %v2183
  %v2185 = vpop.f32.mrb[0].mxu0
  %v2186 = vpop.f32.mrb[0].mxu0
  %v2187 = vadd.f32 %v2090, %v2186
  %v2188 = vpop.f32.mrb[0].mxu0
  %2189 = vmatprep.mubr.bf16.mxu0 %v931
  %2190 = vmatmul.mubr.bf16.gmra.mrb[0].mxu0 %v930
  %v2191 = vpop.f32.mrb[0].mxu0
  %v2192 = vadd.f32 %v2095, %v2191
  %v2193 = vpop.f32.mrb[0].mxu0
  %v2194 = vpop.f32.mrb[0].mxu0
  %v2195 = vadd.f32 %v2098, %v2194
  %v2196 = vpop.f32.mrb[0].mxu0
  %2197 = vmatprep.mubr.bf16.mxu0 %v949
  %2198 = vmatmul.mubr.bf16.gmra.mrb[0].mxu0 %v948
  %v2199 = vpop.f32.mrb[0].mxu0
  %v2200 = vadd.f32 %v2103, %v2199
  %v2201 = vpop.f32.mrb[0].mxu0
  %v2202 = vpop.f32.mrb[0].mxu0
  %v2203 = vadd.f32 %v2106, %v2202
  %v2204 = vpop.f32.mrb[0].mxu0
  %2205 = vmatprep.mubr.bf16.mxu0 %v967
  %2206 = vmatmul.mubr.bf16.gmra.mrb[0].mxu0 %v966
  %v2207 = vpop.f32.mrb[0].mxu0
  %v2208 = vadd.f32 %v2111, %v2207
  %v2209 = vpop.f32.mrb[0].mxu0
  %v2210 = vpop.f32.mrb[0].mxu0
  %v2211 = vadd.f32 %v2114, %v2210
  %v2212 = vpop.f32.mrb[0].mxu0
  %2213 = vmatprep.mubr.bf16.mxu0 %v985
  %2214 = vmatmul.mubr.bf16.gmra.mrb[0].mxu0 %v984
  %v2215 = vpop.f32.mrb[0].mxu0
  %v2216 = vadd.f32 %v2119, %v2215
  %v2217 = vpop.f32.mrb[0].mxu0
  %v2218 = vpop.f32.mrb[0].mxu0
  %v2219 = vadd.f32 %v2122, %v2218
  %v2220 = vpop.f32.mrb[0].mxu0
  %2221 = vmatprep.mubr.bf16.mxu0 %v1003
  %2222 = vmatmul.mubr.bf16.gmra.mrb[0].mxu0 %v1002
  %v2223 = vpop.f32.mrb[0].mxu0
  %v2224 = vadd.f32 %v2127, %v2223
  %v2225 = vpop.f32.mrb[0].mxu0
  %v2226 = vpop.f32.mrb[0].mxu0
  %v2227 = vadd.f32 %v2130, %v2226
  %v2228 = vpop.f32.mrb[0].mxu0
  %2229 = vmatprep.mubr.bf16.mxu0 %v1021
  %2230 = vmatmul.mubr.bf16.gmra.mrb[0].mxu0 %v1020
  %v2231 = vpop.f32.mrb[0].mxu0
  %v2232 = vadd.f32 %v2135, %v2231
  %v2233 = vpop.f32.mrb[0].mxu0
  %v2234 = vpop.f32.mrb[0].mxu0
  %v2235 = vadd.f32 %v2138, %v2234
  %v2236 = vpop.f32.mrb[0].mxu0
  %2237 = vdwg.mxu0
  %2238 = vmatprep.subr.bf16.mxu0 0
  %2239 = vmatpush1.bf16.msra.mxu0 %v1788
  %2240 = vmatprep.subr.bf16.mxu0 0
  %2241 = vmatpush1.bf16.msra.mxu0 %v1789
  %2242 = vmatprep.subr.bf16.mxu0 0
  %2243 = vmatpush1.bf16.msra.mxu0 %v1790
  %2244 = vmatprep.subr.bf16.mxu0 0
  %2245 = vmatpush1.bf16.msra.mxu0 %v1791
  %2246 = vmatprep.subr.bf16.mxu0 0
  %2247 = vmatpush1.bf16.msra.mxu0 %v1792
  %2248 = vmatprep.subr.bf16.mxu0 0
  %2249 = vmatpush1.bf16.msra.mxu0 %v1793
  %2250 = vmatprep.subr.bf16.mxu0 0
  %2251 = vmatpush1.bf16.msra.mxu0 %v1794
  %2252 = vmatprep.subr.bf16.mxu0 0
  %2253 = vmatpush1.bf16.msra.mxu0 %v1795
  %2254 = vmatprep.subr.bf16.mxu0 0
  %2255 = vmatpush1.bf16.msra.mxu0 %v1796
  %2256 = vmatprep.subr.bf16.mxu0 0
  %2257 = vmatpush1.bf16.msra.mxu0 %v1797
  %2258 = vmatprep.subr.bf16.mxu0 0
  %2259 = vmatpush1.bf16.msra.mxu0 %v1798
  %2260 = vmatprep.subr.bf16.mxu0 0
  %2261 = vmatpush1.bf16.msra.mxu0 %v1799
  %2262 = vmatprep.subr.bf16.mxu0 0
  %2263 = vmatpush1.bf16.msra.mxu0 %v1800
  %2264 = vmatprep.subr.bf16.mxu0 0
  %2265 = vmatpush1.bf16.msra.mxu0 %v1801
  %2266 = vmatprep.subr.bf16.mxu0 0
  %2267 = vmatpush1.bf16.msra.mxu0 %v1802
  %2268 = vmatprep.subr.bf16.mxu0 0
  %2269 = vmatpush1.bf16.msra.mxu0 %v1803
  %2270 = vmatprep.mubr.bf16.mxu0 %v897
  %2271 = vmatmul.mubr.bf16.gmra.mrb[0].mxu0 %v896
  %v2272 = vpop.f32.mrb[0].mxu0
  %v2273 = vadd.f32 %v2176, %v2272
  %v2274 = vpop.f32.mrb[0].mxu0
  %v2275 = vpop.f32.mrb[0].mxu0
  %v2276 = vadd.f32 %v2179, %v2275
  %v2277 = vpop.f32.mrb[0].mxu0
  %2278 = vmatprep.mubr.bf16.mxu0 %v915
  %2279 = vmatmul.mubr.bf16.gmra.mrb[0].mxu0 %v914
  %v2280 = vpop.f32.mrb[0].mxu0
  %v2281 = vadd.f32 %v2184, %v2280
  %v2282 = vpop.f32.mrb[0].mxu0
  %v2283 = vpop.f32.mrb[0].mxu0
  %v2284 = vadd.f32 %v2187, %v2283
  %v2285 = vpop.f32.mrb[0].mxu0
  %2286 = vmatprep.mubr.bf16.mxu0 %v933
  %2287 = vmatmul.mubr.bf16.gmra.mrb[0].mxu0 %v932
  %v2288 = vpop.f32.mrb[0].mxu0
  %v2289 = vadd.f32 %v2192, %v2288
  %v2290 = vpop.f32.mrb[0].mxu0
  %v2291 = vpop.f32.mrb[0].mxu0
  %v2292 = vadd.f32 %v2195, %v2291
  %v2293 = vpop.f32.mrb[0].mxu0
  %2294 = vmatprep.mubr.bf16.mxu0 %v951
  %2295 = vmatmul.mubr.bf16.gmra.mrb[0].mxu0 %v950
  %v2296 = vpop.f32.mrb[0].mxu0
  %v2297 = vadd.f32 %v2200, %v2296
  %v2298 = vpop.f32.mrb[0].mxu0
  %v2299 = vpop.f32.mrb[0].mxu0
  %v2300 = vadd.f32 %v2203, %v2299
  %v2301 = vpop.f32.mrb[0].mxu0
  %2302 = vmatprep.mubr.bf16.mxu0 %v969
  %2303 = vmatmul.mubr.bf16.gmra.mrb[0].mxu0 %v968
  %v2304 = vpop.f32.mrb[0].mxu0
  %v2305 = vadd.f32 %v2208, %v2304
  %v2306 = vpop.f32.mrb[0].mxu0
  %v2307 = vpop.f32.mrb[0].mxu0
  %v2308 = vadd.f32 %v2211, %v2307
  %v2309 = vpop.f32.mrb[0].mxu0
  %2310 = vmatprep.mubr.bf16.mxu0 %v987
  %2311 = vmatmul.mubr.bf16.gmra.mrb[0].mxu0 %v986
  %v2312 = vpop.f32.mrb[0].mxu0
  %v2313 = vadd.f32 %v2216, %v2312
  %v2314 = vpop.f32.mrb[0].mxu0
  %v2315 = vpop.f32.mrb[0].mxu0
  %v2316 = vadd.f32 %v2219, %v2315
  %v2317 = vpop.f32.mrb[0].mxu0
  %2318 = vmatprep.mubr.bf16.mxu0 %v1005
  %2319 = vmatmul.mubr.bf16.gmra.mrb[0].mxu0 %v1004
  %v2320 = vpop.f32.mrb[0].mxu0
  %v2321 = vadd.f32 %v2224, %v2320
  %v2322 = vpop.f32.mrb[0].mxu0
  %v2323 = vpop.f32.mrb[0].mxu0
  %v2324 = vadd.f32 %v2227, %v2323
  %v2325 = vpop.f32.mrb[0].mxu0
  %2326 = vmatprep.mubr.bf16.mxu0 %v1023
  %2327 = vmatmul.mubr.bf16.gmra.mrb[0].mxu0 %v1022
  %v2328 = vpop.f32.mrb[0].mxu0
  %v2329 = vadd.f32 %v2232, %v2328
  %v2330 = vpop.f32.mrb[0].mxu0
  %v2331 = vpop.f32.mrb[0].mxu0
  %v2332 = vadd.f32 %v2235, %v2331
  %v2333 = vpop.f32.mrb[0].mxu0
  %2334 = vdwg.mxu0
  %2335 = vmatprep.subr.bf16.mxu0 0
  %2336 = vmatpush1.bf16.msra.mxu0 %v1804
  %2337 = vmatprep.subr.bf16.mxu0 0
  %2338 = vmatpush1.bf16.msra.mxu0 %v1805
  %2339 = vmatprep.subr.bf16.mxu0 0
  %2340 = vmatpush1.bf16.msra.mxu0 %v1806
  %2341 = vmatprep.subr.bf16.mxu0 0
  %2342 = vmatpush1.bf16.msra.mxu0 %v1807
  %2343 = vmatprep.subr.bf16.mxu0 0
  %2344 = vmatpush1.bf16.msra.mxu0 %v1808
  %2345 = vmatprep.subr.bf16.mxu0 0
  %2346 = vmatpush1.bf16.msra.mxu0 %v1809
  %2347 = vmatprep.subr.bf16.mxu0 0
  %2348 = vmatpush1.bf16.msra.mxu0 %v1810
  %2349 = vmatprep.subr.bf16.mxu0 0
  %2350 = vmatpush1.bf16.msra.mxu0 %v1811
  %2351 = vmatprep.subr.bf16.mxu0 0
  %2352 = vmatpush1.bf16.msra.mxu0 %v1812
  %2353 = vmatprep.subr.bf16.mxu0 0
  %2354 = vmatpush1.bf16.msra.mxu0 %v1813
  %2355 = vmatprep.subr.bf16.mxu0 0
  %2356 = vmatpush1.bf16.msra.mxu0 %v1814
  %2357 = vmatprep.subr.bf16.mxu0 0
  %2358 = vmatpush1.bf16.msra.mxu0 %v1815
  %2359 = vmatprep.subr.bf16.mxu0 0
  %2360 = vmatpush1.bf16.msra.mxu0 %v1816
  %2361 = vmatprep.subr.bf16.mxu0 0
  %2362 = vmatpush1.bf16.msra.mxu0 %v1817
  %2363 = vmatprep.subr.bf16.mxu0 0
  %2364 = vmatpush1.bf16.msra.mxu0 %v1818
  %2365 = vmatprep.subr.bf16.mxu0 0
  %2366 = vmatpush1.bf16.msra.mxu0 %v1819
  %2367 = vmatprep.mubr.bf16.mxu0 %v899
  %2368 = vmatmul.mubr.bf16.gmra.mrb[0].mxu0 %v898
  %v2369 = vpop.f32.mrb[0].mxu0
  %v2370 = vadd.f32 %v2273, %v2369
  %v2371 = vpop.f32.mrb[0].mxu0
  %v2372 = vpop.f32.mrb[0].mxu0
  %v2373 = vadd.f32 %v2276, %v2372
  %v2374 = vpop.f32.mrb[0].mxu0
  %2375 = vmatprep.mubr.bf16.mxu0 %v917
  %2376 = vmatmul.mubr.bf16.gmra.mrb[0].mxu0 %v916
  %v2377 = vpop.f32.mrb[0].mxu0
  %v2378 = vadd.f32 %v2281, %v2377
  %v2379 = vpop.f32.mrb[0].mxu0
  %v2380 = vpop.f32.mrb[0].mxu0
  %v2381 = vadd.f32 %v2284, %v2380
  %v2382 = vpop.f32.mrb[0].mxu0
  %2383 = vmatprep.mubr.bf16.mxu0 %v935
  %2384 = vmatmul.mubr.bf16.gmra.mrb[0].mxu0 %v934
  %v2385 = vpop.f32.mrb[0].mxu0
  %v2386 = vadd.f32 %v2289, %v2385
  %v2387 = vpop.f32.mrb[0].mxu0
  %v2388 = vpop.f32.mrb[0].mxu0
  %v2389 = vadd.f32 %v2292, %v2388
  %v2390 = vpop.f32.mrb[0].mxu0
  %2391 = vmatprep.mubr.bf16.mxu0 %v953
  %2392 = vmatmul.mubr.bf16.gmra.mrb[0].mxu0 %v952
  %v2393 = vpop.f32.mrb[0].mxu0
  %v2394 = vadd.f32 %v2297, %v2393
  %v2395 = vpop.f32.mrb[0].mxu0
  %v2396 = vpop.f32.mrb[0].mxu0
  %v2397 = vadd.f32 %v2300, %v2396
  %v2398 = vpop.f32.mrb[0].mxu0
  %2399 = vmatprep.mubr.bf16.mxu0 %v971
  %2400 = vmatmul.mubr.bf16.gmra.mrb[0].mxu0 %v970
  %v2401 = vpop.f32.mrb[0].mxu0
  %v2402 = vadd.f32 %v2305, %v2401
  %v2403 = vpop.f32.mrb[0].mxu0
  %v2404 = vpop.f32.mrb[0].mxu0
  %v2405 = vadd.f32 %v2308, %v2404
  %v2406 = vpop.f32.mrb[0].mxu0
  %2407 = vmatprep.mubr.bf16.mxu0 %v989
  %2408 = vmatmul.mubr.bf16.gmra.mrb[0].mxu0 %v988
  %v2409 = vpop.f32.mrb[0].mxu0
  %v2410 = vadd.f32 %v2313, %v2409
  %v2411 = vpop.f32.mrb[0].mxu0
  %v2412 = vpop.f32.mrb[0].mxu0
  %v2413 = vadd.f32 %v2316, %v2412
  %v2414 = vpop.f32.mrb[0].mxu0
  %2415 = vmatprep.mubr.bf16.mxu0 %v1007
  %2416 = vmatmul.mubr.bf16.gmra.mrb[0].mxu0 %v1006
  %v2417 = vpop.f32.mrb[0].mxu0
  %v2418 = vadd.f32 %v2321, %v2417
  %v2419 = vpop.f32.mrb[0].mxu0
  %v2420 = vpop.f32.mrb[0].mxu0
  %v2421 = vadd.f32 %v2324, %v2420
  %v2422 = vpop.f32.mrb[0].mxu0
  %2423 = vmatprep.mubr.bf16.mxu0 %v1025
  %2424 = vmatmul.mubr.bf16.gmra.mrb[0].mxu0 %v1024
  %v2425 = vpop.f32.mrb[0].mxu0
  %v2426 = vadd.f32 %v2329, %v2425
  %v2427 = vpop.f32.mrb[0].mxu0
  %v2428 = vpop.f32.mrb[0].mxu0
  %v2429 = vadd.f32 %v2332, %v2428
  %v2430 = vpop.f32.mrb[0].mxu0
  %2431 = vdwg.mxu0
  %2432 = vmatprep.subr.bf16.mxu0 0
  %2433 = vmatpush1.bf16.msra.mxu0 %v1820
  %2434 = vmatprep.subr.bf16.mxu0 0
  %2435 = vmatpush1.bf16.msra.mxu0 %v1821
  %2436 = vmatprep.subr.bf16.mxu0 0
  %2437 = vmatpush1.bf16.msra.mxu0 %v1822
  %2438 = vmatprep.subr.bf16.mxu0 0
  %2439 = vmatpush1.bf16.msra.mxu0 %v1823
  %2440 = vmatprep.subr.bf16.mxu0 0
  %2441 = vmatpush1.bf16.msra.mxu0 %v1824
  %2442 = vmatprep.subr.bf16.mxu0 0
  %2443 = vmatpush1.bf16.msra.mxu0 %v1825
  %2444 = vmatprep.subr.bf16.mxu0 0
  %2445 = vmatpush1.bf16.msra.mxu0 %v1826
  %2446 = vmatprep.subr.bf16.mxu0 0
  %2447 = vmatpush1.bf16.msra.mxu0 %v1827
  %2448 = vmatprep.subr.bf16.mxu0 0
  %2449 = vmatpush1.bf16.msra.mxu0 %v1828
  %2450 = vmatprep.subr.bf16.mxu0 0
  %2451 = vmatpush1.bf16.msra.mxu0 %v1829
  %2452 = vmatprep.subr.bf16.mxu0 0
  %2453 = vmatpush1.bf16.msra.mxu0 %v1830
  %2454 = vmatprep.subr.bf16.mxu0 0
  %2455 = vmatpush1.bf16.msra.mxu0 %v1831
  %2456 = vmatprep.subr.bf16.mxu0 0
  %2457 = vmatpush1.bf16.msra.mxu0 %v1832
  %2458 = vmatprep.subr.bf16.mxu0 0
  %2459 = vmatpush1.bf16.msra.mxu0 %v1833
  %2460 = vmatprep.subr.bf16.mxu0 0
  %2461 = vmatpush1.bf16.msra.mxu0 %v1834
  %2462 = vmatprep.subr.bf16.mxu0 0
  %2463 = vmatpush1.bf16.msra.mxu0 %v1835
  %2464 = vmatprep.mubr.bf16.mxu0 %v901
  %2465 = vmatmul.mubr.bf16.gmra.mrb[0].mxu0 %v900
  %v2466 = vpop.f32.mrb[0].mxu0
  %v2467 = vadd.f32 %v2370, %v2466
  %v2468 = vpop.f32.mrb[0].mxu0
  %v2469 = vpop.f32.mrb[0].mxu0
  %v2470 = vadd.f32 %v2373, %v2469
  %v2471 = vpop.f32.mrb[0].mxu0
  %2472 = vmatprep.mubr.bf16.mxu0 %v919
  %2473 = vmatmul.mubr.bf16.gmra.mrb[0].mxu0 %v918
  %v2474 = vpop.f32.mrb[0].mxu0
  %v2475 = vadd.f32 %v2378, %v2474
  %v2476 = vpop.f32.mrb[0].mxu0
  %v2477 = vpop.f32.mrb[0].mxu0
  %v2478 = vadd.f32 %v2381, %v2477
  %v2479 = vpop.f32.mrb[0].mxu0
  %2480 = vmatprep.mubr.bf16.mxu0 %v937
  %2481 = vmatmul.mubr.bf16.gmra.mrb[0].mxu0 %v936
  %v2482 = vpop.f32.mrb[0].mxu0
  %v2483 = vadd.f32 %v2386, %v2482
  %v2484 = vpop.f32.mrb[0].mxu0
  %v2485 = vpop.f32.mrb[0].mxu0
  %v2486 = vadd.f32 %v2389, %v2485
  %v2487 = vpop.f32.mrb[0].mxu0
  %2488 = vmatprep.mubr.bf16.mxu0 %v955
  %2489 = vmatmul.mubr.bf16.gmra.mrb[0].mxu0 %v954
  %v2490 = vpop.f32.mrb[0].mxu0
  %v2491 = vadd.f32 %v2394, %v2490
  %v2492 = vpop.f32.mrb[0].mxu0
  %v2493 = vpop.f32.mrb[0].mxu0
  %v2494 = vadd.f32 %v2397, %v2493
  %v2495 = vpop.f32.mrb[0].mxu0
  %2496 = vmatprep.mubr.bf16.mxu0 %v973
  %2497 = vmatmul.mubr.bf16.gmra.mrb[0].mxu0 %v972
  %v2498 = vpop.f32.mrb[0].mxu0
  %v2499 = vadd.f32 %v2402, %v2498
  %v2500 = vpop.f32.mrb[0].mxu0
  %v2501 = vpop.f32.mrb[0].mxu0
  %v2502 = vadd.f32 %v2405, %v2501
  %v2503 = vpop.f32.mrb[0].mxu0
  %2504 = vmatprep.mubr.bf16.mxu0 %v991
  %2505 = vmatmul.mubr.bf16.gmra.mrb[0].mxu0 %v990
  %v2506 = vpop.f32.mrb[0].mxu0
  %v2507 = vadd.f32 %v2410, %v2506
  %v2508 = vpop.f32.mrb[0].mxu0
  %v2509 = vpop.f32.mrb[0].mxu0
  %v2510 = vadd.f32 %v2413, %v2509
  %v2511 = vpop.f32.mrb[0].mxu0
  %2512 = vmatprep.mubr.bf16.mxu0 %v1009
  %2513 = vmatmul.mubr.bf16.gmra.mrb[0].mxu0 %v1008
  %v2514 = vpop.f32.mrb[0].mxu0
  %v2515 = vadd.f32 %v2418, %v2514
  %v2516 = vpop.f32.mrb[0].mxu0
  %v2517 = vpop.f32.mrb[0].mxu0
  %v2518 = vadd.f32 %v2421, %v2517
  %v2519 = vpop.f32.mrb[0].mxu0
  %2520 = vmatprep.mubr.bf16.mxu0 %v1027
  %2521 = vmatmul.mubr.bf16.gmra.mrb[0].mxu0 %v1026
  %v2522 = vpop.f32.mrb[0].mxu0
  %v2523 = vadd.f32 %v2426, %v2522
  %v2524 = vpop.f32.mrb[0].mxu0
  %v2525 = vpop.f32.mrb[0].mxu0
  %v2526 = vadd.f32 %v2429, %v2525
  %v2527 = vpop.f32.mrb[0].mxu0
  %2528 = vdwg.mxu0
  %2529 = vmatprep.subr.bf16.mxu0 0
  %2530 = vmatpush1.bf16.msra.mxu0 %v1836
  %2531 = vmatprep.subr.bf16.mxu0 0
  %2532 = vmatpush1.bf16.msra.mxu0 %v1837
  %2533 = vmatprep.subr.bf16.mxu0 0
  %2534 = vmatpush1.bf16.msra.mxu0 %v1838
  %2535 = vmatprep.subr.bf16.mxu0 0
  %2536 = vmatpush1.bf16.msra.mxu0 %v1839
  %2537 = vmatprep.subr.bf16.mxu0 0
  %2538 = vmatpush1.bf16.msra.mxu0 %v1840
  %2539 = vmatprep.subr.bf16.mxu0 0
  %2540 = vmatpush1.bf16.msra.mxu0 %v1841
  %2541 = vmatprep.subr.bf16.mxu0 0
  %2542 = vmatpush1.bf16.msra.mxu0 %v1842
  %2543 = vmatprep.subr.bf16.mxu0 0
  %2544 = vmatpush1.bf16.msra.mxu0 %v1843
  %2545 = vmatprep.subr.bf16.mxu0 0
  %2546 = vmatpush1.bf16.msra.mxu0 %v1844
  %2547 = vmatprep.subr.bf16.mxu0 0
  %2548 = vmatpush1.bf16.msra.mxu0 %v1845
  %2549 = vmatprep.subr.bf16.mxu0 0
  %2550 = vmatpush1.bf16.msra.mxu0 %v1846
  %2551 = vmatprep.subr.bf16.mxu0 0
  %2552 = vmatpush1.bf16.msra.mxu0 %v1847
  %2553 = vmatprep.subr.bf16.mxu0 0
  %2554 = vmatpush1.bf16.msra.mxu0 %v1848
  %2555 = vmatprep.subr.bf16.mxu0 0
  %2556 = vmatpush1.bf16.msra.mxu0 %v1849
  %2557 = vmatprep.subr.bf16.mxu0 0
  %2558 = vmatpush1.bf16.msra.mxu0 %v1850
  %2559 = vmatprep.subr.bf16.mxu0 0
  %2560 = vmatpush1.bf16.msra.mxu0 %v1851
  %2561 = vmatprep.mubr.bf16.mxu0 %v903
  %2562 = vmatmul.mubr.bf16.gmra.mrb[0].mxu0 %v902
  %v2563 = vpop.f32.mrb[0].mxu0
  %v2564 = vadd.f32 %v2467, %v2563
  %v2565 = vpop.f32.mrb[0].mxu0
  %v2566 = vpop.f32.mrb[0].mxu0
  %v2567 = vadd.f32 %v2470, %v2566
  %v2568 = vpop.f32.mrb[0].mxu0
  %2569 = vmatprep.mubr.bf16.mxu0 %v921
  %2570 = vmatmul.mubr.bf16.gmra.mrb[0].mxu0 %v920
  %v2571 = vpop.f32.mrb[0].mxu0
  %v2572 = vadd.f32 %v2475, %v2571
  %v2573 = vpop.f32.mrb[0].mxu0
  %v2574 = vpop.f32.mrb[0].mxu0
  %v2575 = vadd.f32 %v2478, %v2574
  %v2576 = vpop.f32.mrb[0].mxu0
  %2577 = vmatprep.mubr.bf16.mxu0 %v939
  %2578 = vmatmul.mubr.bf16.gmra.mrb[0].mxu0 %v938
  %v2579 = vpop.f32.mrb[0].mxu0
  %v2580 = vadd.f32 %v2483, %v2579
  %v2581 = vpop.f32.mrb[0].mxu0
  %v2582 = vpop.f32.mrb[0].mxu0
  %v2583 = vadd.f32 %v2486, %v2582
  %v2584 = vpop.f32.mrb[0].mxu0
  %2585 = vmatprep.mubr.bf16.mxu0 %v957
  %2586 = vmatmul.mubr.bf16.gmra.mrb[0].mxu0 %v956
  %v2587 = vpop.f32.mrb[0].mxu0
  %v2588 = vadd.f32 %v2491, %v2587
  %v2589 = vpop.f32.mrb[0].mxu0
  %v2590 = vpop.f32.mrb[0].mxu0
  %v2591 = vadd.f32 %v2494, %v2590
  %v2592 = vpop.f32.mrb[0].mxu0
  %2593 = vmatprep.mubr.bf16.mxu0 %v975
  %2594 = vmatmul.mubr.bf16.gmra.mrb[0].mxu0 %v974
  %v2595 = vpop.f32.mrb[0].mxu0
  %v2596 = vadd.f32 %v2499, %v2595
  %v2597 = vpop.f32.mrb[0].mxu0
  %v2598 = vpop.f32.mrb[0].mxu0
  %v2599 = vadd.f32 %v2502, %v2598
  %v2600 = vpop.f32.mrb[0].mxu0
  %2601 = vmatprep.mubr.bf16.mxu0 %v993
  %2602 = vmatmul.mubr.bf16.gmra.mrb[0].mxu0 %v992
  %v2603 = vpop.f32.mrb[0].mxu0
  %v2604 = vadd.f32 %v2507, %v2603
  %v2605 = vpop.f32.mrb[0].mxu0
  %v2606 = vpop.f32.mrb[0].mxu0
  %v2607 = vadd.f32 %v2510, %v2606
  %v2608 = vpop.f32.mrb[0].mxu0
  %2609 = vmatprep.mubr.bf16.mxu0 %v1011
  %2610 = vmatmul.mubr.bf16.gmra.mrb[0].mxu0 %v1010
  %v2611 = vpop.f32.mrb[0].mxu0
  %v2612 = vadd.f32 %v2515, %v2611
  %v2613 = vpop.f32.mrb[0].mxu0
  %v2614 = vpop.f32.mrb[0].mxu0
  %v2615 = vadd.f32 %v2518, %v2614
  %v2616 = vpop.f32.mrb[0].mxu0
  %2617 = vmatprep.mubr.bf16.mxu0 %v1029
  %2618 = vmatmul.mubr.bf16.gmra.mrb[0].mxu0 %v1028
  %v2619 = vpop.f32.mrb[0].mxu0
  %v2620 = vadd.f32 %v2523, %v2619
  %v2621 = vpop.f32.mrb[0].mxu0
  %v2622 = vpop.f32.mrb[0].mxu0
  %v2623 = vadd.f32 %v2526, %v2622
  %v2624 = vpop.f32.mrb[0].mxu0
  %2625 = vdwg.mxu0
  %2626 = vmatprep.subr.bf16.mxu0 0
  %2627 = vmatpush1.bf16.msra.mxu0 %v1852
  %2628 = vmatprep.subr.bf16.mxu0 0
  %2629 = vmatpush1.bf16.msra.mxu0 %v1853
  %2630 = vmatprep.subr.bf16.mxu0 0
  %2631 = vmatpush1.bf16.msra.mxu0 %v1854
  %2632 = vmatprep.subr.bf16.mxu0 0
  %2633 = vmatpush1.bf16.msra.mxu0 %v1855
  %2634 = vmatprep.subr.bf16.mxu0 0
  %2635 = vmatpush1.bf16.msra.mxu0 %v1856
  %2636 = vmatprep.subr.bf16.mxu0 0
  %2637 = vmatpush1.bf16.msra.mxu0 %v1857
  %2638 = vmatprep.subr.bf16.mxu0 0
  %2639 = vmatpush1.bf16.msra.mxu0 %v1858
  %2640 = vmatprep.subr.bf16.mxu0 0
  %2641 = vmatpush1.bf16.msra.mxu0 %v1859
  %2642 = vmatprep.subr.bf16.mxu0 0
  %2643 = vmatpush1.bf16.msra.mxu0 %v1860
  %2644 = vmatprep.subr.bf16.mxu0 0
  %2645 = vmatpush1.bf16.msra.mxu0 %v1861
  %2646 = vmatprep.subr.bf16.mxu0 0
  %2647 = vmatpush1.bf16.msra.mxu0 %v1862
  %2648 = vmatprep.subr.bf16.mxu0 0
  %2649 = vmatpush1.bf16.msra.mxu0 %v1863
  %2650 = vmatprep.subr.bf16.mxu0 0
  %2651 = vmatpush1.bf16.msra.mxu0 %v1864
  %2652 = vmatprep.subr.bf16.mxu0 0
  %2653 = vmatpush1.bf16.msra.mxu0 %v1865
  %2654 = vmatprep.subr.bf16.mxu0 0
  %2655 = vmatpush1.bf16.msra.mxu0 %v1866
  %2656 = vmatprep.subr.bf16.mxu0 0
  %2657 = vmatpush1.bf16.msra.mxu0 %v1867
  %2658 = vmatprep.mubr.bf16.mxu0 %v905
  %2659 = vmatmul.mubr.bf16.gmra.mrb[0].mxu0 %v904
  %v2660 = vpop.f32.mrb[0].mxu0
  %v2661 = vadd.f32 %v2564, %v2660
  %v2662 = vpop.f32.mrb[0].mxu0
  %v2663 = vpop.f32.mrb[0].mxu0
  %v2664 = vadd.f32 %v2567, %v2663
  %v2665 = vpop.f32.mrb[0].mxu0
  %2666 = vmatprep.mubr.bf16.mxu0 %v923
  %2667 = vmatmul.mubr.bf16.gmra.mrb[0].mxu0 %v922
  %v2668 = vpop.f32.mrb[0].mxu0
  %v2669 = vadd.f32 %v2572, %v2668
  %v2670 = vpop.f32.mrb[0].mxu0
  %v2671 = vpop.f32.mrb[0].mxu0
  %v2672 = vadd.f32 %v2575, %v2671
  %v2673 = vpop.f32.mrb[0].mxu0
  %2674 = vmatprep.mubr.bf16.mxu0 %v941
  %2675 = vmatmul.mubr.bf16.gmra.mrb[0].mxu0 %v940
  %v2676 = vpop.f32.mrb[0].mxu0
  %v2677 = vadd.f32 %v2580, %v2676
  %v2678 = vpop.f32.mrb[0].mxu0
  %v2679 = vpop.f32.mrb[0].mxu0
  %v2680 = vadd.f32 %v2583, %v2679
  %v2681 = vpop.f32.mrb[0].mxu0
  %2682 = vmatprep.mubr.bf16.mxu0 %v959
  %2683 = vmatmul.mubr.bf16.gmra.mrb[0].mxu0 %v958
  %v2684 = vpop.f32.mrb[0].mxu0
  %v2685 = vadd.f32 %v2588, %v2684
  %v2686 = vpop.f32.mrb[0].mxu0
  %v2687 = vpop.f32.mrb[0].mxu0
  %v2688 = vadd.f32 %v2591, %v2687
  %v2689 = vpop.f32.mrb[0].mxu0
  %2690 = vmatprep.mubr.bf16.mxu0 %v977
  %2691 = vmatmul.mubr.bf16.gmra.mrb[0].mxu0 %v976
  %v2692 = vpop.f32.mrb[0].mxu0
  %v2693 = vadd.f32 %v2596, %v2692
  %v2694 = vpop.f32.mrb[0].mxu0
  %v2695 = vpop.f32.mrb[0].mxu0
  %v2696 = vadd.f32 %v2599, %v2695
  %v2697 = vpop.f32.mrb[0].mxu0
  %2698 = vmatprep.mubr.bf16.mxu0 %v995
  %2699 = vmatmul.mubr.bf16.gmra.mrb[0].mxu0 %v994
  %v2700 = vpop.f32.mrb[0].mxu0
  %v2701 = vadd.f32 %v2604, %v2700
  %v2702 = vpop.f32.mrb[0].mxu0
  %v2703 = vpop.f32.mrb[0].mxu0
  %v2704 = vadd.f32 %v2607, %v2703
  %v2705 = vpop.f32.mrb[0].mxu0
  %2706 = vmatprep.mubr.bf16.mxu0 %v1013
  %2707 = vmatmul.mubr.bf16.gmra.mrb[0].mxu0 %v1012
  %v2708 = vpop.f32.mrb[0].mxu0
  %v2709 = vadd.f32 %v2612, %v2708
  %v2710 = vpop.f32.mrb[0].mxu0
  %v2711 = vpop.f32.mrb[0].mxu0
  %v2712 = vadd.f32 %v2615, %v2711
  %v2713 = vpop.f32.mrb[0].mxu0
  %2714 = vmatprep.mubr.bf16.mxu0 %v1031
  %2715 = vmatmul.mubr.bf16.gmra.mrb[0].mxu0 %v1030
  %v2716 = vpop.f32.mrb[0].mxu0
  %v2717 = vadd.f32 %v2620, %v2716
  %v2718 = vpop.f32.mrb[0].mxu0
  %v2719 = vpop.f32.mrb[0].mxu0
  %v2720 = vadd.f32 %v2623, %v2719
  %v2721 = vpop.f32.mrb[0].mxu0
  %2722 = vdwg.mxu0
  %2723 = vmatprep.subr.bf16.mxu0 0
  %2724 = vmatpush1.bf16.msra.mxu0 %v1868
  %2725 = vmatprep.subr.bf16.mxu0 0
  %2726 = vmatpush1.bf16.msra.mxu0 %v1869
  %2727 = vmatprep.subr.bf16.mxu0 0
  %2728 = vmatpush1.bf16.msra.mxu0 %v1870
  %2729 = vmatprep.subr.bf16.mxu0 0
  %2730 = vmatpush1.bf16.msra.mxu0 %v1871
  %2731 = vmatprep.subr.bf16.mxu0 0
  %2732 = vmatpush1.bf16.msra.mxu0 %v1872
  %2733 = vmatprep.subr.bf16.mxu0 0
  %2734 = vmatpush1.bf16.msra.mxu0 %v1873
  %2735 = vmatprep.subr.bf16.mxu0 0
  %2736 = vmatpush1.bf16.msra.mxu0 %v1874
  %2737 = vmatprep.subr.bf16.mxu0 0
  %2738 = vmatpush1.bf16.msra.mxu0 %v1875
  %2739 = vmatprep.subr.bf16.mxu0 0
  %2740 = vmatpush1.bf16.msra.mxu0 %v1876
  %2741 = vmatprep.subr.bf16.mxu0 0
  %2742 = vmatpush1.bf16.msra.mxu0 %v1877
  %2743 = vmatprep.subr.bf16.mxu0 0
  %2744 = vmatpush1.bf16.msra.mxu0 %v1878
  %2745 = vmatprep.subr.bf16.mxu0 0
  %2746 = vmatpush1.bf16.msra.mxu0 %v1879
  %2747 = vmatprep.subr.bf16.mxu0 0
  %2748 = vmatpush1.bf16.msra.mxu0 %v1880
  %2749 = vmatprep.subr.bf16.mxu0 0
  %2750 = vmatpush1.bf16.msra.mxu0 %v1881
  %2751 = vmatprep.subr.bf16.mxu0 0
  %2752 = vmatpush1.bf16.msra.mxu0 %v1882
  %2753 = vmatprep.subr.bf16.mxu0 0
  %2754 = vmatpush1.bf16.msra.mxu0 %v1883
  %2755 = vmatprep.mubr.bf16.mxu0 %v907
  %2756 = vmatmul.mubr.bf16.gmra.mrb[0].mxu0 %v906
  %v2757 = vpop.f32.mrb[0].mxu0
  %v2758 = vadd.f32 %v2661, %v2757
  %v2759 = vpop.f32.mrb[0].mxu0
  %v2760 = vpop.f32.mrb[0].mxu0
  %v2761 = vadd.f32 %v2664, %v2760
  %v2762 = vpop.f32.mrb[0].mxu0
  %2763 = vmatprep.mubr.bf16.mxu0 %v925
  %2764 = vmatmul.mubr.bf16.gmra.mrb[0].mxu0 %v924
  %v2765 = vpop.f32.mrb[0].mxu0
  %v2766 = vadd.f32 %v2669, %v2765
  %v2767 = vpop.f32.mrb[0].mxu0
  %v2768 = vpop.f32.mrb[0].mxu0
  %v2769 = vadd.f32 %v2672, %v2768
  %v2770 = vpop.f32.mrb[0].mxu0
  %2771 = vmatprep.mubr.bf16.mxu0 %v943
  %2772 = vmatmul.mubr.bf16.gmra.mrb[0].mxu0 %v942
  %v2773 = vpop.f32.mrb[0].mxu0
  %v2774 = vadd.f32 %v2677, %v2773
  %v2775 = vpop.f32.mrb[0].mxu0
  %v2776 = vpop.f32.mrb[0].mxu0
  %v2777 = vadd.f32 %v2680, %v2776
  %v2778 = vpop.f32.mrb[0].mxu0
  %2779 = vmatprep.mubr.bf16.mxu0 %v961
  %2780 = vmatmul.mubr.bf16.gmra.mrb[0].mxu0 %v960
  %v2781 = vpop.f32.mrb[0].mxu0
  %v2782 = vadd.f32 %v2685, %v2781
  %v2783 = vpop.f32.mrb[0].mxu0
  %v2784 = vpop.f32.mrb[0].mxu0
  %v2785 = vadd.f32 %v2688, %v2784
  %v2786 = vpop.f32.mrb[0].mxu0
  %2787 = vmatprep.mubr.bf16.mxu0 %v979
  %2788 = vmatmul.mubr.bf16.gmra.mrb[0].mxu0 %v978
  %v2789 = vpop.f32.mrb[0].mxu0
  %v2790 = vadd.f32 %v2693, %v2789
  %v2791 = vpop.f32.mrb[0].mxu0
  %v2792 = vpop.f32.mrb[0].mxu0
  %v2793 = vadd.f32 %v2696, %v2792
  %v2794 = vpop.f32.mrb[0].mxu0
  %2795 = vmatprep.mubr.bf16.mxu0 %v997
  %2796 = vmatmul.mubr.bf16.gmra.mrb[0].mxu0 %v996
  %v2797 = vpop.f32.mrb[0].mxu0
  %v2798 = vadd.f32 %v2701, %v2797
  %v2799 = vpop.f32.mrb[0].mxu0
  %v2800 = vpop.f32.mrb[0].mxu0
  %v2801 = vadd.f32 %v2704, %v2800
  %v2802 = vpop.f32.mrb[0].mxu0
  %2803 = vmatprep.mubr.bf16.mxu0 %v1015
  %2804 = vmatmul.mubr.bf16.gmra.mrb[0].mxu0 %v1014
  %v2805 = vpop.f32.mrb[0].mxu0
  %v2806 = vadd.f32 %v2709, %v2805
  %v2807 = vpop.f32.mrb[0].mxu0
  %v2808 = vpop.f32.mrb[0].mxu0
  %v2809 = vadd.f32 %v2712, %v2808
  %v2810 = vpop.f32.mrb[0].mxu0
  %2811 = vmatprep.mubr.bf16.mxu0 %v1033
  %2812 = vmatmul.mubr.bf16.gmra.mrb[0].mxu0 %v1032
  %v2813 = vpop.f32.mrb[0].mxu0
  %v2814 = vadd.f32 %v2717, %v2813
  %v2815 = vpop.f32.mrb[0].mxu0
  %v2816 = vpop.f32.mrb[0].mxu0
  %v2817 = vadd.f32 %v2720, %v2816
  %v2818 = vpop.f32.mrb[0].mxu0
  %2819 = vdwg.mxu0
  %2820 = vmatprep.subr.bf16.mxu0 0
  %2821 = vmatpush1.bf16.msra.mxu0 %v1884
  %2822 = vmatprep.subr.bf16.mxu0 0
  %2823 = vmatpush1.bf16.msra.mxu0 %v1885
  %2824 = vmatprep.subr.bf16.mxu0 0
  %2825 = vmatpush1.bf16.msra.mxu0 %v1886
  %2826 = vmatprep.subr.bf16.mxu0 0
  %2827 = vmatpush1.bf16.msra.mxu0 %v1887
  %2828 = vmatprep.subr.bf16.mxu0 0
  %2829 = vmatpush1.bf16.msra.mxu0 %v1888
  %2830 = vmatprep.subr.bf16.mxu0 0
  %2831 = vmatpush1.bf16.msra.mxu0 %v1889
  %2832 = vmatprep.subr.bf16.mxu0 0
  %2833 = vmatpush1.bf16.msra.mxu0 %v1890
  %2834 = vmatprep.subr.bf16.mxu0 0
  %2835 = vmatpush1.bf16.msra.mxu0 %v1891
  %2836 = vmatprep.subr.bf16.mxu0 0
  %2837 = vmatpush1.bf16.msra.mxu0 %v1892
  %2838 = vmatprep.subr.bf16.mxu0 0
  %2839 = vmatpush1.bf16.msra.mxu0 %v1893
  %2840 = vmatprep.subr.bf16.mxu0 0
  %2841 = vmatpush1.bf16.msra.mxu0 %v1894
  %2842 = vmatprep.subr.bf16.mxu0 0
  %2843 = vmatpush1.bf16.msra.mxu0 %v1895
  %2844 = vmatprep.subr.bf16.mxu0 0
  %2845 = vmatpush1.bf16.msra.mxu0 %v1896
  %2846 = vmatprep.subr.bf16.mxu0 0
  %2847 = vmatpush1.bf16.msra.mxu0 %v1897
  %2848 = vmatprep.subr.bf16.mxu0 0
  %2849 = vmatpush1.bf16.msra.mxu0 %v1898
  %2850 = vmatprep.subr.bf16.mxu0 0
  %2851 = vmatpush1.bf16.msra.mxu0 %v1899
  %2852 = vmatprep.mubr.bf16.mxu0 %v909
  %2853 = vmatmul.mubr.bf16.gmra.mrb[0].mxu0 %v908
  %v2854 = vpop.f32.mrb[0].mxu0
  %v2855 = vadd.f32 %v2758, %v2854
  %v2856 = vpop.f32.mrb[0].mxu0
  %v2857 = vpop.f32.mrb[0].mxu0
  %v2858 = vadd.f32 %v2761, %v2857
  %v2859 = vpop.f32.mrb[0].mxu0
  %2860 = vmatprep.mubr.bf16.mxu0 %v927
  %2861 = vmatmul.mubr.bf16.gmra.mrb[0].mxu0 %v926
  %v2862 = vpop.f32.mrb[0].mxu0
  %v2863 = vadd.f32 %v2766, %v2862
  %v2864 = vpop.f32.mrb[0].mxu0
  %v2865 = vpop.f32.mrb[0].mxu0
  %v2866 = vadd.f32 %v2769, %v2865
  %v2867 = vpop.f32.mrb[0].mxu0
  %2868 = vmatprep.mubr.bf16.mxu0 %v945
  %2869 = vmatmul.mubr.bf16.gmra.mrb[0].mxu0 %v944
  %v2870 = vpop.f32.mrb[0].mxu0
  %v2871 = vadd.f32 %v2774, %v2870
  %v2872 = vpop.f32.mrb[0].mxu0
  %v2873 = vpop.f32.mrb[0].mxu0
  %v2874 = vadd.f32 %v2777, %v2873
  %v2875 = vpop.f32.mrb[0].mxu0
  %2876 = vmatprep.mubr.bf16.mxu0 %v963
  %2877 = vmatmul.mubr.bf16.gmra.mrb[0].mxu0 %v962
  %v2878 = vpop.f32.mrb[0].mxu0
  %v2879 = vadd.f32 %v2782, %v2878
  %v2880 = vpop.f32.mrb[0].mxu0
  %v2881 = vpop.f32.mrb[0].mxu0
  %v2882 = vadd.f32 %v2785, %v2881
  %v2883 = vpop.f32.mrb[0].mxu0
  %2884 = vmatprep.mubr.bf16.mxu0 %v981
  %2885 = vmatmul.mubr.bf16.gmra.mrb[0].mxu0 %v980
  %v2886 = vpop.f32.mrb[0].mxu0
  %v2887 = vadd.f32 %v2790, %v2886
  %v2888 = vpop.f32.mrb[0].mxu0
  %v2889 = vpop.f32.mrb[0].mxu0
  %v2890 = vadd.f32 %v2793, %v2889
  %v2891 = vpop.f32.mrb[0].mxu0
  %2892 = vmatprep.mubr.bf16.mxu0 %v999
  %2893 = vmatmul.mubr.bf16.gmra.mrb[0].mxu0 %v998
  %v2894 = vpop.f32.mrb[0].mxu0
  %v2895 = vadd.f32 %v2798, %v2894
  %v2896 = vpop.f32.mrb[0].mxu0
  %v2897 = vpop.f32.mrb[0].mxu0
  %v2898 = vadd.f32 %v2801, %v2897
  %v2899 = vpop.f32.mrb[0].mxu0
  %2900 = vmatprep.mubr.bf16.mxu0 %v1017
  %2901 = vmatmul.mubr.bf16.gmra.mrb[0].mxu0 %v1016
  %v2902 = vpop.f32.mrb[0].mxu0
  %v2903 = vadd.f32 %v2806, %v2902
  %v2904 = vpop.f32.mrb[0].mxu0
  %v2905 = vpop.f32.mrb[0].mxu0
  %v2906 = vadd.f32 %v2809, %v2905
  %v2907 = vpop.f32.mrb[0].mxu0
  %2908 = vmatprep.mubr.bf16.mxu0 %v1035
  %2909 = vmatmul.mubr.bf16.gmra.mrb[0].mxu0 %v1034
  %v2910 = vpop.f32.mrb[0].mxu0
  %v2911 = vadd.f32 %v2814, %v2910
  %v2912 = vpop.f32.mrb[0].mxu0
  %v2913 = vpop.f32.mrb[0].mxu0
  %v2914 = vadd.f32 %v2817, %v2913
  %v2915 = vpop.f32.mrb[0].mxu0
  %2916 = vdwg.mxu0
  %vm2917 = vcmp.gt.f32.partialorder %v2855, 0.0
  %vm2918 = vcmp.gt.f32.partialorder %v2858, 0.0
  %vm2919 = vcmp.gt.f32.partialorder %v2863, 0.0
  %vm2920 = vcmp.gt.f32.partialorder %v2866, 0.0
  %vm2921 = vcmp.gt.f32.partialorder %v2871, 0.0
  %vm2922 = vcmp.gt.f32.partialorder %v2874, 0.0
  %vm2923 = vcmp.gt.f32.partialorder %v2879, 0.0
  %vm2924 = vcmp.gt.f32.partialorder %v2882, 0.0
  %vm2925 = vcmp.gt.f32.partialorder %v2887, 0.0
  %vm2926 = vcmp.gt.f32.partialorder %v2890, 0.0
  %vm2927 = vcmp.gt.f32.partialorder %v2895, 0.0
  %vm2928 = vcmp.gt.f32.partialorder %v2898, 0.0
  %vm2929 = vcmp.gt.f32.partialorder %v2903, 0.0
  %vm2930 = vcmp.gt.f32.partialorder %v2906, 0.0
  %vm2931 = vcmp.gt.f32.partialorder %v2911, 0.0
  %vm2932 = vcmp.gt.f32.partialorder %v2914, 0.0
  %v2933 = vmul.f32 %v2855, 0.1
  %v2934 = vmul.f32 %v2858, 0.1
  %v2935 = vmul.f32 %v2863, 0.1
  %v2936 = vmul.f32 %v2866, 0.1
  %v2937 = vmul.f32 %v2871, 0.1
  %v2938 = vmul.f32 %v2874, 0.1
  %v2939 = vmul.f32 %v2879, 0.1
  %v2940 = vmul.f32 %v2882, 0.1
  %v2941 = vmul.f32 %v2887, 0.1
  %v2942 = vmul.f32 %v2890, 0.1
  %v2943 = vmul.f32 %v2895, 0.1
  %v2944 = vmul.f32 %v2898, 0.1
  %v2945 = vmul.f32 %v2903, 0.1
  %v2946 = vmul.f32 %v2906, 0.1
  %v2947 = vmul.f32 %v2911, 0.1
  %v2948 = vmul.f32 %v2914, 0.1
  %v2949 = vsel %vm2917, %v2855, %v2933
  %v2950 = vsel %vm2918, %v2858, %v2934
  %v2951 = vsel %vm2919, %v2863, %v2935
  %v2952 = vsel %vm2920, %v2866, %v2936
  %v2953 = vsel %vm2921, %v2871, %v2937
  %v2954 = vsel %vm2922, %v2874, %v2938
  %v2955 = vsel %vm2923, %v2879, %v2939
  %v2956 = vsel %vm2924, %v2882, %v2940
  %v2957 = vsel %vm2925, %v2887, %v2941
  %v2958 = vsel %vm2926, %v2890, %v2942
  %v2959 = vsel %vm2927, %v2895, %v2943
  %v2960 = vsel %vm2928, %v2898, %v2944
  %v2961 = vsel %vm2929, %v2903, %v2945
  %v2962 = vsel %vm2930, %v2906, %v2946
  %v2963 = vsel %vm2931, %v2911, %v2947
  %v2964 = vsel %vm2932, %v2914, %v2948
  %v2965 = vpack.c.bf16 %v2950, %v2949
  %v2966 = vpack.c.bf16 %v2952, %v2951
  %v2967 = vpack.c.bf16 %v2954, %v2953
  %v2968 = vpack.c.bf16 %v2956, %v2955
  %v2969 = vpack.c.bf16 %v2958, %v2957
  %v2970 = vpack.c.bf16 %v2960, %v2959
  %v2971 = vpack.c.bf16 %v2962, %v2961
  %v2972 = vpack.c.bf16 %v2964, %v2963
  %v2973 = vld [vmem:[%s3] sm:$0xf]
  %v2974 = vld [vmem:[%s3 + $0x4] sm:$0xf]
  %v2975 = vld [vmem:[%s3 + $0x8] sm:$0xf]
  %v2976 = vld [vmem:[%s3 + $0xc] sm:$0xf]
  %v2977 = vld [vmem:[%s3 + $0x10] sm:$0xf]
  %v2978 = vld [vmem:[%s3 + $0x14] sm:$0xf]
  %v2979 = vld [vmem:[%s3 + $0x18] sm:$0xf]
  %v2980 = vld [vmem:[%s3 + $0x1c] sm:$0xf]
  %v2981 = vld [vmem:[%s3 + $0x20] sm:$0xf]
  %v2982 = vld [vmem:[%s3 + $0x24] sm:$0xf]
  %v2983 = vld [vmem:[%s3 + $0x28] sm:$0xf]
  %v2984 = vld [vmem:[%s3 + $0x2c] sm:$0xf]
  %v2985 = vld [vmem:[%s3 + $0x30] sm:$0xf]
  %v2986 = vld [vmem:[%s3 + $0x34] sm:$0xf]
  %v2987 = vld [vmem:[%s3 + $0x38] sm:$0xf]
  %v2988 = vld [vmem:[%s3 + $0x3c] sm:$0xf]
  %v2989 = vld [vmem:[%s4] sm:$0x1]
  %v2991 = vlaneseq
  %v2992 = vshrl.u32 %v2991, 7
  %v2993 = vsub.s32 0, %v2992
  %v2994 = vrot.slane %v2989, %v2993
  %v3012 = vunpack.c.l.b16 %v2973
  %v3013 = vunpack.c.l.b16 %v2974
  %v3014 = vunpack.c.l.b16 %v2975
  %v3015 = vunpack.c.l.b16 %v2976
  %v3016 = vunpack.c.l.b16 %v2977
  %v3017 = vunpack.c.l.b16 %v2978
  %v3018 = vunpack.c.l.b16 %v2979
  %v3019 = vunpack.c.l.b16 %v2980
  %v3020 = vunpack.c.l.b16 %v2981
  %v3021 = vunpack.c.l.b16 %v2982
  %v3022 = vunpack.c.l.b16 %v2983
  %v3023 = vunpack.c.l.b16 %v2984
  %v3024 = vunpack.c.l.b16 %v2985
  %v3025 = vunpack.c.l.b16 %v2986
  %v3026 = vunpack.c.l.b16 %v2987
  %v3027 = vunpack.c.l.b16 %v2988
  %v3028 = vpack.c.b16 %v3013, %v3012
  %v3029 = vpack.c.b16 %v3015, %v3014
  %v3030 = vpack.c.b16 %v3017, %v3016
  %v3031 = vpack.c.b16 %v3019, %v3018
  %v3032 = vpack.c.b16 %v3021, %v3020
  %v3033 = vpack.c.b16 %v3023, %v3022
  %v3034 = vpack.c.b16 %v3025, %v3024
  %v3035 = vpack.c.b16 %v3027, %v3026
  %3044 = vmatprep.subr.bf16.mxu0 0
  %3045 = vmatpush1.bf16.msra.mxu0 %v3028
  %3046 = vmatprep.subr.bf16.mxu0 0
  %3047 = vmatpush1.bf16.msra.mxu0 %v3029
  %3048 = vmatprep.subr.bf16.mxu0 0
  %3049 = vmatpush1.bf16.msra.mxu0 %v3030
  %3050 = vmatprep.subr.bf16.mxu0 0
  %3051 = vmatpush1.bf16.msra.mxu0 %v3031
  %3052 = vmatprep.subr.bf16.mxu0 0
  %3053 = vmatpush1.bf16.msra.mxu0 %v3032
  %3054 = vmatprep.subr.bf16.mxu0 0
  %3055 = vmatpush1.bf16.msra.mxu0 %v3033
  %3056 = vmatprep.subr.bf16.mxu0 0
  %3057 = vmatpush1.bf16.msra.mxu0 %v3034
  %3058 = vmatprep.subr.bf16.mxu0 0
  %3059 = vmatpush1.bf16.msra.mxu0 %v3035
  %3060 = vmatprep.subr.bf16.mxu0 0
  %3061 = vmatpush1.bf16.msra.mxu0 0
  %3062 = vmatprep.subr.bf16.mxu0 0
  %3063 = vmatpush1.bf16.msra.mxu0 0
  %3064 = vmatprep.subr.bf16.mxu0 0
  %3065 = vmatpush1.bf16.msra.mxu0 0
  %3066 = vmatprep.subr.bf16.mxu0 0
  %3067 = vmatpush1.bf16.msra.mxu0 0
  %3068 = vmatprep.subr.bf16.mxu0 0
  %3069 = vmatpush1.bf16.msra.mxu0 0
  %3070 = vmatprep.subr.bf16.mxu0 0
  %3071 = vmatpush1.bf16.msra.mxu0 0
  %3072 = vmatprep.subr.bf16.mxu0 0
  %3073 = vmatpush1.bf16.msra.mxu0 0
  %3074 = vmatprep.subr.bf16.mxu0 0
  %3075 = vmatpush1.bf16.msra.mxu0 0
  %3076 = vmatprep.mubr.bf16.mxu0 0
  %3077 = vmatmul.mubr.bf16.gmra.mrb[0].mxu0 %v2965
  %v3078 = vpop.f32.mrb[0].mxu0
  %v3079 = vadd.f32 %v2994, %v3078
  %v3080 = vpop.f32.mrb[0].mxu0
  %v3081 = vpop.f32.mrb[0].mxu0
  %v3082 = vadd.f32 %v2994, %v3081
  %v3083 = vpop.f32.mrb[0].mxu0
  %3084 = vmatprep.mubr.bf16.mxu0 0
  %3085 = vmatmul.mubr.bf16.gmra.mrb[0].mxu0 %v2966
  %v3086 = vpop.f32.mrb[0].mxu0
  %v3087 = vadd.f32 %v2994, %v3086
  %v3088 = vpop.f32.mrb[0].mxu0
  %v3089 = vpop.f32.mrb[0].mxu0
  %v3090 = vadd.f32 %v2994, %v3089
  %v3091 = vpop.f32.mrb[0].mxu0
  %3092 = vmatprep.mubr.bf16.mxu0 0
  %3093 = vmatmul.mubr.bf16.gmra.mrb[0].mxu0 %v2967
  %v3094 = vpop.f32.mrb[0].mxu0
  %v3095 = vadd.f32 %v2994, %v3094
  %v3096 = vpop.f32.mrb[0].mxu0
  %v3097 = vpop.f32.mrb[0].mxu0
  %v3098 = vadd.f32 %v2994, %v3097
  %v3099 = vpop.f32.mrb[0].mxu0
  %3100 = vmatprep.mubr.bf16.mxu0 0
  %3101 = vmatmul.mubr.bf16.gmra.mrb[0].mxu0 %v2968
  %v3102 = vpop.f32.mrb[0].mxu0
  %v3103 = vadd.f32 %v2994, %v3102
  %v3104 = vpop.f32.mrb[0].mxu0
  %v3105 = vpop.f32.mrb[0].mxu0
  %v3106 = vadd.f32 %v2994, %v3105
  %v3107 = vpop.f32.mrb[0].mxu0
  %3108 = vmatprep.mubr.bf16.mxu0 0
  %3109 = vmatmul.mubr.bf16.gmra.mrb[0].mxu0 %v2969
  %v3110 = vpop.f32.mrb[0].mxu0
  %v3111 = vadd.f32 %v2994, %v3110
  %v3112 = vpop.f32.mrb[0].mxu0
  %v3113 = vpop.f32.mrb[0].mxu0
  %v3114 = vadd.f32 %v2994, %v3113
  %v3115 = vpop.f32.mrb[0].mxu0
  %3116 = vmatprep.mubr.bf16.mxu0 0
  %3117 = vmatmul.mubr.bf16.gmra.mrb[0].mxu0 %v2970
  %v3118 = vpop.f32.mrb[0].mxu0
  %v3119 = vadd.f32 %v2994, %v3118
  %v3120 = vpop.f32.mrb[0].mxu0
  %v3121 = vpop.f32.mrb[0].mxu0
  %v3122 = vadd.f32 %v2994, %v3121
  %v3123 = vpop.f32.mrb[0].mxu0
  %3124 = vmatprep.mubr.bf16.mxu0 0
  %3125 = vmatmul.mubr.bf16.gmra.mrb[0].mxu0 %v2971
  %v3126 = vpop.f32.mrb[0].mxu0
  %v3127 = vadd.f32 %v2994, %v3126
  %v3128 = vpop.f32.mrb[0].mxu0
  %v3129 = vpop.f32.mrb[0].mxu0
  %v3130 = vadd.f32 %v2994, %v3129
  %v3131 = vpop.f32.mrb[0].mxu0
  %3132 = vmatprep.mubr.bf16.mxu0 0
  %3133 = vmatmul.mubr.bf16.gmra.mrb[0].mxu0 %v2972
  %v3134 = vpop.f32.mrb[0].mxu0
  %v3135 = vadd.f32 %v2994, %v3134
  %v3136 = vpop.f32.mrb[0].mxu0
  %v3137 = vpop.f32.mrb[0].mxu0
  %v3138 = vadd.f32 %v2994, %v3137
  %v3139 = vpop.f32.mrb[0].mxu0
  %3140 = vdwg.mxu0
  %3141 = vst [vmem:[%s5] sm:$0xff] %v3079
  %3142 = vst [vmem:[%s5 + $0x8] sm:$0xff] %v3082
  %3143 = vst [vmem:[%s5 + $0x10] sm:$0xff] %v3087
  %3144 = vst [vmem:[%s5 + $0x18] sm:$0xff] %v3090
  %3145 = vst [vmem:[%s5 + $0x20] sm:$0xff] %v3095
  %3146 = vst [vmem:[%s5 + $0x28] sm:$0xff] %v3098
  %3147 = vst [vmem:[%s5 + $0x30] sm:$0xff] %v3103
  %3148 = vst [vmem:[%s5 + $0x38] sm:$0xff] %v3106
  %3149 = vst [vmem:[%s5 + $0x40] sm:$0xff] %v3111
  %3150 = vst [vmem:[%s5 + $0x48] sm:$0xff] %v3114
  %3151 = vst [vmem:[%s5 + $0x50] sm:$0xff] %v3119
  %3152 = vst [vmem:[%s5 + $0x58] sm:$0xff] %v3122
  %3153 = vst [vmem:[%s5 + $0x60] sm:$0xff] %v3127
  %3154 = vst [vmem:[%s5 + $0x68] sm:$0xff] %v3130
  %3155 = vst [vmem:[%s5 + $0x70] sm:$0xff] %v3135
  %3156 = vst [vmem:[%s5 + $0x78] sm:$0xff] %v3138
  // Predicated region
  $region22: #{yolov3_forward.13} parent=0 // pred_check
    _
  $region23: #{yolov3_forward.13} parent=0 // pred_check_branch
    %3158 = sbr.rel (0) target = $region25
  $region24: #{yolov3_forward.13} parent=0 // pred_region
    _
  $region25: #{yolov3_forward.13} parent=0 // pred_fallthru
    _
  // Predicated region
  $region26: #{yolov3_forward.13} parent=0 // pred_check
    _
  $region27: #{yolov3_forward.13} parent=0 // pred_check_branch
    %3160 = sbr.rel (0) target = $region29
  $region28: #{yolov3_forward.13} parent=0 // pred_region
    _
  $region29: #{yolov3_forward.13} parent=0 // pred_fallthru
    _

</llo_original>
